<compile_context>
chip_gen: v5e
topology: v5e:2x2
jax: 0.10.0
libtpu: 0.0.40
codegen_flags: <defaults>
</compile_context>

<pallas_src>
import math
import jax
import jax.numpy as jnp
from jax.experimental import pallas as pl
from jax.experimental.pallas import tpu as pltpu


NEG_SLOPE = 0.01  # F.leaky_relu(negative_slope=0.01) in modelAE.decoder


def _leaky_relu(v, slope=NEG_SLOPE):
    return jnp.where(v >= 0, v, slope * v)


# --------------------------------------------------------------------------- #
# Kernel
# --------------------------------------------------------------------------- #
def decoder_kernel(x_ref,
                   w1_ref, b1_ref,
                   w2_ref, b2_ref,
                   w3_ref, b3_ref,
                   w4_ref, b4_ref,
                   o_ref,
                   l2_scr, acc_scr):
    """Grid = (batch tile i, d3 chunk k).  k is the inner ('arbitrary') axis."""
    k = pl.program_id(1)

    @pl.when(k == 0)
    def _():
        # Layers 1-2: run once per batch tile, cache l2 (bf16) for all chunks.
        x = x_ref[...].astype(jnp.bfloat16)
        l1 = jnp.dot(x, w1_ref[...], preferred_element_type=jnp.float32) + b1_ref[...]
        l1 = _leaky_relu(l1)
        l2 = jnp.dot(l1.astype(jnp.bfloat16), w2_ref[...],
                     preferred_element_type=jnp.float32) + b2_ref[...]
        l2 = _leaky_relu(l2)
        l2_scr[...] = l2.astype(jnp.bfloat16)
        acc_scr[...] = jnp.zeros_like(acc_scr)

    # Layers 3-4 over the current d3 chunk.
    l3 = jnp.dot(l2_scr[...], w3_ref[...],
                 preferred_element_type=jnp.float32) + b3_ref[...]
    l3 = _leaky_relu(l3)
    acc_scr[...] += jnp.dot(l3.astype(jnp.bfloat16), w4_ref[...],
                            preferred_element_type=jnp.float32)

    @pl.when(k == pl.num_programs(1) - 1)
    def _():
        o_ref[...] = (acc_scr[...] + b4_ref[...]).astype(o_ref.dtype)


# --------------------------------------------------------------------------- #
# Tiling / VMEM budgeting
# --------------------------------------------------------------------------- #
def _round_up(x, m):
    return ((x + m - 1) // m) * m


def _vmem_capacity_bytes():
    try:
        return int(pltpu.get_tpu_info().vmem_capacity_bytes)
    except Exception:
        return 64 << 20  # conservative fallback (v7x per-TensorCore VMEM)


def _estimate_vmem(tb, tk3, n_k, n_steps, D_in, d1, d2, d4_pad, x_bytes):
    """Rough resident-VMEM estimate for one grid step of the kernel."""
    # Resident, constant-index (single-buffered) weights/biases: W1, W2, b1, b2, b4.
    need = 2 * (D_in * d1 + d1 * d2) + 4 * (d1 + d2 + d4_pad)
    # Streamed W3 column tile / b3 / W4 row tile (double-buffered only when >1 chunk).
    w_bufs = 1 if n_k == 1 else 2
    need += w_bufs * (2 * d2 * tk3 + 4 * tk3 + 2 * tk3 * d4_pad)
    # Input / output batch tiles.
    io_bufs = 1 if n_steps == 1 else 2
    need += io_bufs * tb * (D_in * x_bytes + d4_pad * 4)
    # VMEM scratch: l2 cache (bf16) + l4 accumulator (f32).
    need += tb * (d2 * 2 + d4_pad * 4)
    # Transient activations (f32 intermediates + bf16 matmul-operand copies).
    need += tb * (2 * D_in + 6 * d1 + 4 * d2 + 6 * tk3)
    return need


def _choose_tiling(B, D_in, d1, d2, d3, d4_pad, x_bytes, budget, tb=None, tk3=None):
    """Pick (batch tile, d3 chunk) that fits the VMEM budget."""
    b8 = _round_up(max(B, 1), 8)

    if tb is not None:
        tb_cands = [tb]
    else:
        tb_cands = ([b8] if b8 <= 512 else []) + [t for t in (256, 128, 64, 32, 16, 8) if t < b8]
        if not tb_cands:
            tb_cands = [b8]

    if tk3 is not None:
        tk_cands = [tk3]
    else:
        tk_cands = [d3]
        t = d3
        while t % 2 == 0 and (t // 2) % 128 == 0:
            t //= 2
            tk_cands.append(t)

    def est(tb_c, tk_c):
        n_k = max(d3 // tk_c, 1)
        n_steps = pl.cdiv(B, tb_c)
        return _estimate_vmem(tb_c, tk_c, n_k, n_steps, D_in, d1, d2, d4_pad, x_bytes)

    # Pass 1: prefer all weights resident (single weight fetch for the whole grid)
    # as long as the batch tile stays MXU-friendly.
    min_full_tb = min(64, b8)
    if tk_cands[0] == d3:
        for tb_c in tb_cands:
            if tb_c < min_full_tb:
                continue
            e = est(tb_c, d3)
            if e <= budget:
                return tb_c, d3, e

    # Pass 2: stream W3/W4 in d3 chunks; largest batch tile / chunk that fits.
    for tb_c in tb_cands:
        for tk_c in tk_cands:
            e = est(tb_c, tk_c)
            if e <= budget:
                return tb_c, tk_c, e

    # Fallback: smallest configuration (vmem_limit is raised toward capacity below).
    tb_c, tk_c = tb_cands[-1], tk_cands[-1]
    return tb_c, tk_c, est(tb_c, tk_c)


def _spec(shape, index_map, mode=None):
    if mode is None:
        return pl.BlockSpec(shape, index_map)
    return pl.BlockSpec(shape, index_map, pipeline_mode=mode)


# --------------------------------------------------------------------------- #
# Wrapper
# --------------------------------------------------------------------------- #
def decoder_forward(inputs, params, *, ef_dim, p_dim, tb=None, tk3=None,
                    out_dtype=jnp.float32):
    """inputs: (B, ef_dim*8) f32 (or bf16 from the producer). Returns (B, 4, p_dim)."""
    B, D_in = inputs.shape
    assert D_in == ef_dim * 8

    w1, b1, w2, b2, w3, b3, w4, b4 = params
    d1, d2, d3, d4 = ef_dim * 16, ef_dim * 32, ef_dim * 64, p_dim * 4

    # Lane-dense stores: pad the output feature dim up to a multiple of 128.
    d4_pad = _round_up(d4, 128)
    if d4_pad != d4:
        w4 = jnp.pad(w4, ((0, 0), (0, d4_pad - d4)))
        b4 = jnp.pad(b4, ((0, 0), (0, d4_pad - d4)))

    capacity = _vmem_capacity_bytes()
    budget = int(capacity * 3) // 4
    x_bytes = jnp.dtype(inputs.dtype).itemsize
    tb, tk3, need = _choose_tiling(B, D_in, d1, d2, d3, d4_pad, x_bytes, budget,
                                   tb=tb, tk3=tk3)
    assert d3 % tk3 == 0, (d3, tk3)
    n_k = d3 // tk3
    n_steps = pl.cdiv(B, tb)
    B_pad = n_steps * tb
    if B_pad != B:
        inputs = jnp.pad(inputs, ((0, B_pad - B), (0, 0)))

    single = pl.Buffered(1)                       # constant-index: no overlap to buy
    w34_mode = single if n_k == 1 else None       # streamed chunks: keep double-buffering
    x_mode = single if n_steps == 1 else None

    flops = 2 * B_pad * (D_in * d1 + d1 * d2 + d2 * d3 + d3 * d4_pad)
    w34_fetches = 1 if n_k == 1 else n_steps
    bytes_accessed = (x_bytes * B_pad * D_in + 4 * B_pad * d4_pad
                      + 2 * (D_in * d1 + d1 * d2) + 4 * (d1 + d2 + d4_pad)
                      + w34_fetches * (2 * d2 * d3 + 4 * d3 + 2 * d3 * d4_pad))

    vmem_limit = int(min(capacity, max(need + need // 2 + (4 << 20), 32 << 20)))

    out = pl.pallas_call(
        decoder_kernel,
        out_shape=jax.ShapeDtypeStruct((B_pad, d4_pad), out_dtype),
        grid_spec=pltpu.PrefetchScalarGridSpec(
            num_scalar_prefetch=0,
            grid=(n_steps, n_k),
            in_specs=[
                _spec((tb, D_in), lambda i, k: (i, 0), x_mode),       # x tile
                _spec((D_in, d1), lambda i, k: (0, 0), single),       # W1
                _spec((1, d1),    lambda i, k: (0, 0), single),       # b1
                _spec((d1, d2),   lambda i, k: (0, 0), single),       # W2
                _spec((1, d2),    lambda i, k: (0, 0), single),       # b2
                _spec((d2, tk3),  lambda i, k: (0, k), w34_mode),     # W3 column chunk
                _spec((1, tk3),   lambda i, k: (0, k), w34_mode),     # b3 chunk
                _spec((tk3, d4_pad), lambda i, k: (k, 0), w34_mode),  # W4 row chunk
                _spec((1, d4_pad),   lambda i, k: (0, 0), single),    # b4
            ],
            out_specs=pl.BlockSpec((tb, d4_pad), lambda i, k: (i, 0)),
            scratch_shapes=[
                pltpu.VMEM((tb, d2), jnp.bfloat16),      # cached l2
                pltpu.VMEM((tb, d4_pad), jnp.float32),   # l4 accumulator
            ],
        ),
        compiler_params=pltpu.CompilerParams(
            dimension_semantics=("parallel", "arbitrary"),
            vmem_limit_bytes=vmem_limit),
        cost_estimate=pl.CostEstimate(
            flops=int(flops), transcendentals=0,
            bytes_accessed=int(bytes_accessed)),
    )(inputs, w1, b1, w2, b2, w3, b3, w4, b4)

    # Drop batch / lane padding, then l4.view(-1, 4, p_dim).
    return out[:B, :d4].reshape(-1, 4, p_dim)


# --------------------------------------------------------------------------- #
# Params + pure-JAX reference
# --------------------------------------------------------------------------- #
def init_decoder_params(key, ef_dim, p_dim):
    """Xavier-uniform weights (gain=1) stored as (in, out) bf16, zero f32 biases."""
    dims = [ef_dim * 8, ef_dim * 16, ef_dim * 32, ef_dim * 64, p_dim * 4]
    params = []
    keys = jax.random.split(key, 4)
    for k, fan_in, fan_out in zip(keys, dims[:-1], dims[1:]):
        limit = math.sqrt(6.0 / (fan_in + fan_out))
        w = jax.random.uniform(k, (fan_in, fan_out), jnp.float32, -limit, limit)
        params += [w.astype(jnp.bfloat16), jnp.zeros((1, fan_out), jnp.float32)]
    return tuple(params)


def decoder_reference(inputs, params, p_dim):
    """Pure-JAX reference with the same bf16-operand / f32-accumulate numerics."""
    # TODO(synk): validate bf16-weight drift against a pure-f32 PyTorch reference
    # with appropriate tolerance if exact f32 weight fidelity is required.
    w1, b1, w2, b2, w3, b3, w4, b4 = params

    def lin(x, w, b):
        return jnp.dot(x.astype(jnp.bfloat16), w.astype(jnp.bfloat16),
                       preferred_element_type=jnp.float32) + b

    l1 = jax.nn.leaky_relu(lin(inputs, w1, b1), NEG_SLOPE)
    l2 = jax.nn.leaky_relu(lin(l1, w2, b2), NEG_SLOPE)
    l3 = jax.nn.leaky_relu(lin(l2, w3, b3), NEG_SLOPE)
    l4 = lin(l3, w4, b4)
    return l4.reshape(-1, 4, p_dim)


# --------------------------------------------------------------------------- #
# Self-test
# --------------------------------------------------------------------------- #
if __name__ == "__main__":
    ef_dim, p_dim = 16, 32     # D_in=128, hidden=256/512/1024, d4=128
    batch = 200                # not a tile multiple: exercises batch padding

    key = jax.random.PRNGKey(0)
    k_in, k_par = jax.random.split(key)
    inputs = jax.random.normal(k_in, (batch, ef_dim * 8), jnp.float32)
    params = init_decoder_params(k_par, ef_dim, p_dim)

    ref = decoder_reference(inputs, params, p_dim)

    # Path 1: everything resident in VMEM (single d3 chunk, single batch tile).
    out = jax.block_until_ready(
        decoder_forward(inputs, params, ef_dim=ef_dim, p_dim=p_dim))
    assert out.shape == (batch, 4, p_dim), out.shape
    assert jnp.allclose(out, ref, atol=2e-2, rtol=2e-2), "fused path mismatch"

    # Path 2: force the streamed-W3/W4 configuration (multiple batch tiles and
    # d3 chunks) that is used when the weights exceed the VMEM budget
    # (large ef_dim, especially on v7x's 64 MiB VMEM).
    out2 = jax.block_until_ready(
        decoder_forward(inputs, params, ef_dim=ef_dim, p_dim=p_dim, tb=64, tk3=256))
    assert out2.shape == (batch, 4, p_dim), out2.shape
    assert jnp.allclose(out2, ref, atol=2e-2, rtol=2e-2), "chunked path mismatch"

    print("KERNEL_OK")
</pallas_src>

<mosaic_0001>
module attributes {stable_mosaic.version = 11 : i64} {
  func.func @decoder_kernel(%arg0: i32, %arg1: i32, %arg2: memref<200x128xf32, #tpu.memory_space<vmem>>, %arg3: memref<128x256xbf16, #tpu.memory_space<vmem>>, %arg4: memref<1x256xf32, #tpu.memory_space<vmem>>, %arg5: memref<256x512xbf16, #tpu.memory_space<vmem>>, %arg6: memref<1x512xf32, #tpu.memory_space<vmem>>, %arg7: memref<512x1024xbf16, #tpu.memory_space<vmem>>, %arg8: memref<1x1024xf32, #tpu.memory_space<vmem>>, %arg9: memref<1024x128xbf16, #tpu.memory_space<vmem>>, %arg10: memref<1x128xf32, #tpu.memory_space<vmem>>, %arg11: memref<200x128xf32, #tpu.memory_space<vmem>>, %arg12: memref<200x512xbf16, #tpu.memory_space<vmem>>, %arg13: memref<200x128xf32, #tpu.memory_space<vmem>>) attributes {dimension_semantics = [#tpu.dimension_semantics<parallel>, #tpu.dimension_semantics<arbitrary>], iteration_bounds = array<i64: 1, 1>, scalar_prefetch = 0 : i64, scratch_operands = 2 : i64, tpu.core_type = #tpu.core_type<tc>, window_params = [{pipeline_mode = #tpu.pipeline_mode<synchronous>, transform_indices = @transform_0, window_bounds = array<i64: 200, 128>}, {pipeline_mode = #tpu.pipeline_mode<synchronous>, transform_indices = @transform_1, window_bounds = array<i64: 128, 256>}, {pipeline_mode = #tpu.pipeline_mode<synchronous>, transform_indices = @transform_2, window_bounds = array<i64: 1, 256>}, {pipeline_mode = #tpu.pipeline_mode<synchronous>, transform_indices = @transform_3, window_bounds = array<i64: 256, 512>}, {pipeline_mode = #tpu.pipeline_mode<synchronous>, transform_indices = @transform_4, window_bounds = array<i64: 1, 512>}, {pipeline_mode = #tpu.pipeline_mode<synchronous>, transform_indices = @transform_5, window_bounds = array<i64: 512, 1024>}, {pipeline_mode = #tpu.pipeline_mode<synchronous>, transform_indices = @transform_6, window_bounds = array<i64: 1, 1024>}, {pipeline_mode = #tpu.pipeline_mode<synchronous>, transform_indices = @transform_7, window_bounds = array<i64: 1024, 128>}, {pipeline_mode = #tpu.pipeline_mode<synchronous>, transform_indices = @transform_8, window_bounds = array<i64: 1, 128>}, {transform_indices = @transform_9, window_bounds = array<i64: 200, 128>}]} {
    %c0_i32 = arith.constant 0 : i32
    %0 = arith.cmpi eq, %arg1, %c0_i32 : i32
    %1 = arith.extui %0 : i1 to i32
    %c0_i32_0 = arith.constant 0 : i32
    %2 = arith.cmpi ne, %1, %c0_i32_0 : i32
    scf.if %2 {
      %c0_17 = arith.constant 0 : index
      %c0_18 = arith.constant 0 : index
      %23 = vector.load %arg2[%c0_17, %c0_18] : memref<200x128xf32, #tpu.memory_space<vmem>>, vector<200x128xf32>
      %24 = arith.truncf %23 : vector<200x128xf32> to vector<200x128xbf16>
      %c0_19 = arith.constant 0 : index
      %c0_20 = arith.constant 0 : index
      %25 = vector.load %arg3[%c0_19, %c0_20] : memref<128x256xbf16, #tpu.memory_space<vmem>>, vector<128x256xbf16>
      %cst_21 = arith.constant dense<0.000000e+00> : vector<200x256xf32>
      %26 = tpu.matmul %24, %25, %cst_21 {dimension_numbers = #tpu.dot_dimension_numbers<[1], [0], [0], [1], [0, 0, 1, 1], [], []>} : vector<200x128xbf16>, vector<128x256xbf16>, vector<200x256xf32> -> vector<200x256xf32>
      %c0_22 = arith.constant 0 : index
      %c0_23 = arith.constant 0 : index
      %27 = vector.load %arg4[%c0_22, %c0_23] : memref<1x256xf32, #tpu.memory_space<vmem>>, vector<1x256xf32>
      %28 = vector.broadcast %27 : vector<1x256xf32> to vector<200x256xf32>
      %29 = arith.addf %26, %28 : vector<200x256xf32>
      %cst_24 = arith.constant 0.000000e+00 : f32
      %30 = vector.broadcast %cst_24 : f32 to vector<200x256xf32>
      %31 = arith.cmpf oge, %29, %30 : vector<200x256xf32>
      %cst_25 = arith.constant 0.00999999977 : f32
      %32 = vector.broadcast %cst_25 : f32 to vector<200x256xf32>
      %33 = arith.mulf %32, %29 : vector<200x256xf32>
      %34 = arith.select %31, %29, %33 : vector<200x256xi1>, vector<200x256xf32>
      %35 = arith.truncf %34 : vector<200x256xf32> to vector<200x256xbf16>
      %c0_26 = arith.constant 0 : index
      %c0_27 = arith.constant 0 : index
      %36 = vector.load %arg5[%c0_26, %c0_27] : memref<256x512xbf16, #tpu.memory_space<vmem>>, vector<256x512xbf16>
      %cst_28 = arith.constant dense<0.000000e+00> : vector<200x512xf32>
      %37 = tpu.matmul %35, %36, %cst_28 {dimension_numbers = #tpu.dot_dimension_numbers<[1], [0], [0], [1], [0, 0, 1, 1], [], []>} : vector<200x256xbf16>, vector<256x512xbf16>, vector<200x512xf32> -> vector<200x512xf32>
      %c0_29 = arith.constant 0 : index
      %c0_30 = arith.constant 0 : index
      %38 = vector.load %arg6[%c0_29, %c0_30] : memref<1x512xf32, #tpu.memory_space<vmem>>, vector<1x512xf32>
      %39 = vector.broadcast %38 : vector<1x512xf32> to vector<200x512xf32>
      %40 = arith.addf %37, %39 : vector<200x512xf32>
      %cst_31 = arith.constant 0.000000e+00 : f32
      %41 = vector.broadcast %cst_31 : f32 to vector<200x512xf32>
      %42 = arith.cmpf oge, %40, %41 : vector<200x512xf32>
      %cst_32 = arith.constant 0.00999999977 : f32
      %43 = vector.broadcast %cst_32 : f32 to vector<200x512xf32>
      %44 = arith.mulf %43, %40 : vector<200x512xf32>
      %45 = arith.select %42, %40, %44 : vector<200x512xi1>, vector<200x512xf32>
      %46 = arith.truncf %45 : vector<200x512xf32> to vector<200x512xbf16>
      %c0_33 = arith.constant 0 : index
      %c0_34 = arith.constant 0 : index
      %47 = vector.load %arg12[%c0_33, %c0_34] : memref<200x512xbf16, #tpu.memory_space<vmem>>, vector<200x512xbf16>
      tpu.vector_store %arg12[%c0_33, %c0_34], %46 {strides = array<i32>} : memref<200x512xbf16, #tpu.memory_space<vmem>>, vector<200x512xbf16>,
      %cst_35 = arith.constant 0.000000e+00 : f32
      %48 = vector.broadcast %cst_35 : f32 to vector<200x128xf32>
      %c0_36 = arith.constant 0 : index
      %c0_37 = arith.constant 0 : index
      %49 = vector.load %arg13[%c0_36, %c0_37] : memref<200x128xf32, #tpu.memory_space<vmem>>, vector<200x128xf32>
      tpu.vector_store %arg13[%c0_36, %c0_37], %48 {strides = array<i32>} : memref<200x128xf32, #tpu.memory_space<vmem>>, vector<200x128xf32>,
    } else {
    }
    %c0 = arith.constant 0 : index
    %c0_1 = arith.constant 0 : index
    %3 = vector.load %arg12[%c0, %c0_1] : memref<200x512xbf16, #tpu.memory_space<vmem>>, vector<200x512xbf16>
    %c0_2 = arith.constant 0 : index
    %c0_3 = arith.constant 0 : index
    %4 = vector.load %arg7[%c0_2, %c0_3] : memref<512x1024xbf16, #tpu.memory_space<vmem>>, vector<512x1024xbf16>
    %cst = arith.constant dense<0.000000e+00> : vector<200x1024xf32>
    %5 = tpu.matmul %3, %4, %cst {dimension_numbers = #tpu.dot_dimension_numbers<[1], [0], [0], [1], [0, 0, 1, 1], [], []>} : vector<200x512xbf16>, vector<512x1024xbf16>, vector<200x1024xf32> -> vector<200x1024xf32>
    %c0_4 = arith.constant 0 : index
    %c0_5 = arith.constant 0 : index
    %6 = vector.load %arg8[%c0_4, %c0_5] : memref<1x1024xf32, #tpu.memory_space<vmem>>, vector<1x1024xf32>
    %7 = vector.broadcast %6 : vector<1x1024xf32> to vector<200x1024xf32>
    %8 = arith.addf %5, %7 : vector<200x1024xf32>
    %cst_6 = arith.constant 0.000000e+00 : f32
    %9 = vector.broadcast %cst_6 : f32 to vector<200x1024xf32>
    %10 = arith.cmpf oge, %8, %9 : vector<200x1024xf32>
    %cst_7 = arith.constant 0.00999999977 : f32
    %11 = vector.broadcast %cst_7 : f32 to vector<200x1024xf32>
    %12 = arith.mulf %11, %8 : vector<200x1024xf32>
    %13 = arith.select %10, %8, %12 : vector<200x1024xi1>, vector<200x1024xf32>
    %c0_8 = arith.constant 0 : index
    %c0_9 = arith.constant 0 : index
    %14 = vector.load %arg13[%c0_8, %c0_9] : memref<200x128xf32, #tpu.memory_space<vmem>>, vector<200x128xf32>
    %15 = arith.truncf %13 : vector<200x1024xf32> to vector<200x1024xbf16>
    %c0_10 = arith.constant 0 : index
    %c0_11 = arith.constant 0 : index
    %16 = vector.load %arg9[%c0_10, %c0_11] : memref<1024x128xbf16, #tpu.memory_space<vmem>>, vector<1024x128xbf16>
    %cst_12 = arith.constant dense<0.000000e+00> : vector<200x128xf32>
    %17 = tpu.matmul %15, %16, %cst_12 {dimension_numbers = #tpu.dot_dimension_numbers<[1], [0], [0], [1], [0, 0, 1, 1], [], []>} : vector<200x1024xbf16>, vector<1024x128xbf16>, vector<200x128xf32> -> vector<200x128xf32>
    %18 = arith.addf %14, %17 : vector<200x128xf32>
    %c0_13 = arith.constant 0 : index
    %c0_14 = arith.constant 0 : index
    %19 = vector.load %arg13[%c0_13, %c0_14] : memref<200x128xf32, #tpu.memory_space<vmem>>, vector<200x128xf32>
    tpu.vector_store %arg13[%c0_13, %c0_14], %18 {strides = array<i32>} : memref<200x128xf32, #tpu.memory_space<vmem>>, vector<200x128xf32>,
    %c0_i32_15 = arith.constant 0 : i32
    %20 = arith.cmpi eq, %arg1, %c0_i32_15 : i32
    %21 = arith.extui %20 : i1 to i32
    %c0_i32_16 = arith.constant 0 : i32
    %22 = arith.cmpi ne, %21, %c0_i32_16 : i32
    scf.if %22 {
      %c0_17 = arith.constant 0 : index
      %c0_18 = arith.constant 0 : index
      %23 = vector.load %arg13[%c0_17, %c0_18] : memref<200x128xf32, #tpu.memory_space<vmem>>, vector<200x128xf32>
      %c0_19 = arith.constant 0 : index
      %c0_20 = arith.constant 0 : index
      %24 = vector.load %arg10[%c0_19, %c0_20] : memref<1x128xf32, #tpu.memory_space<vmem>>, vector<1x128xf32>
      %25 = vector.broadcast %24 : vector<1x128xf32> to vector<200x128xf32>
      %26 = arith.addf %23, %25 : vector<200x128xf32>
      %c0_21 = arith.constant 0 : index
      %c0_22 = arith.constant 0 : index
      %27 = vector.load %arg11[%c0_21, %c0_22] : memref<200x128xf32, #tpu.memory_space<vmem>>, vector<200x128xf32>
      tpu.vector_store %arg11[%c0_21, %c0_22], %26 {strides = array<i32>} : memref<200x128xf32, #tpu.memory_space<vmem>>, vector<200x128xf32>,
    } else {
    }
    return
  }
  func.func @transform_0(%arg0: i32, %arg1: i32) -> (i32, i32) {
    %c0_i32 = arith.constant 0 : i32
    %c0_i32_0 = arith.constant 0 : i32
    return %arg0, %c0_i32 : i32, i32
  }
  func.func @transform_1(%arg0: i32, %arg1: i32) -> (i32, i32) {
    %c0_i32 = arith.constant 0 : i32
    %c0_i32_0 = arith.constant 0 : i32
    %c0_i32_1 = arith.constant 0 : i32
    return %c0_i32, %c0_i32_0 : i32, i32
  }
  func.func @transform_2(%arg0: i32, %arg1: i32) -> (i32, i32) {
    %c0_i32 = arith.constant 0 : i32
    %c0_i32_0 = arith.constant 0 : i32
    %c0_i32_1 = arith.constant 0 : i32
    return %c0_i32, %c0_i32_0 : i32, i32
  }
  func.func @transform_3(%arg0: i32, %arg1: i32) -> (i32, i32) {
    %c0_i32 = arith.constant 0 : i32
    %c0_i32_0 = arith.constant 0 : i32
    %c0_i32_1 = arith.constant 0 : i32
    return %c0_i32, %c0_i32_0 : i32, i32
  }
  func.func @transform_4(%arg0: i32, %arg1: i32) -> (i32, i32) {
    %c0_i32 = arith.constant 0 : i32
    %c0_i32_0 = arith.constant 0 : i32
    %c0_i32_1 = arith.constant 0 : i32
    return %c0_i32, %c0_i32_0 : i32, i32
  }
  func.func @transform_5(%arg0: i32, %arg1: i32) -> (i32, i32) {
    %c0_i32 = arith.constant 0 : i32
    %c0_i32_0 = arith.constant 0 : i32
    return %c0_i32, %arg1 : i32, i32
  }
  func.func @transform_6(%arg0: i32, %arg1: i32) -> (i32, i32) {
    %c0_i32 = arith.constant 0 : i32
    %c0_i32_0 = arith.constant 0 : i32
    return %c0_i32, %arg1 : i32, i32
  }
  func.func @transform_7(%arg0: i32, %arg1: i32) -> (i32, i32) {
    %c0_i32 = arith.constant 0 : i32
    %c0_i32_0 = arith.constant 0 : i32
    return %arg1, %c0_i32 : i32, i32
  }
  func.func @transform_8(%arg0: i32, %arg1: i32) -> (i32, i32) {
    %c0_i32 = arith.constant 0 : i32
    %c0_i32_0 = arith.constant 0 : i32
    %c0_i32_1 = arith.constant 0 : i32
    return %c0_i32, %c0_i32_0 : i32, i32
  }
  func.func @transform_9(%arg0: i32, %arg1: i32) -> (i32, i32) {
    %c0_i32 = arith.constant 0 : i32
    %c0_i32_0 = arith.constant 0 : i32
    return %arg0, %c0_i32 : i32, i32
  }
}

</mosaic_0001>

<llo_original>
// kernel: tpu_custom_call.1
$region0: #{tpu_custom_call.1}
  #allocation0 [shape = 'u32[]', space=smem, size = 0x4, offset = 0x4, fixed_abs, tag = 'smem constant byte address 0x4 - core index']
  #allocation1 [shape = 'u32[72,128]{1,0:T(1,128)}', space=vmem, size = 0x9000, scoped, tag = 'internal scratch']
  #allocation2 [shape = 'bf16[200,512]{1,0:T(8,128)(2,1)}', space=vmem, size = 0x32000, scoped, tag = 'scratch operand']
  #allocation3 [shape = 'f32[200,128]{1,0:T(8,128)}', space=vmem, size = 0x19000, scoped, tag = 'scratch operand']
  %s0 = inlined_call_operand.hbm [shape: f32[200,128], index: 0, kind: input, shape index: {}]
  %s1 = inlined_call_operand.hbm [shape: bf16[128,256], index: 1, kind: input, shape index: {}]
  %s2 = inlined_call_operand.hbm [shape: f32[1,256], index: 2, kind: input, shape index: {}]
  %s3 = inlined_call_operand.hbm [shape: bf16[256,512], index: 3, kind: input, shape index: {}]
  %s4 = inlined_call_operand.hbm [shape: f32[1,512], index: 4, kind: input, shape index: {}]
  %s5 = inlined_call_operand.hbm [shape: bf16[512,1024], index: 5, kind: input, shape index: {}]
  %s6 = inlined_call_operand.hbm [shape: f32[1,1024], index: 6, kind: input, shape index: {}]
  %s7 = inlined_call_operand.hbm [shape: bf16[1024,128], index: 7, kind: input, shape index: {}]
  %s8 = inlined_call_operand.vmem [shape: f32[1,128], index: 8, kind: input, shape index: {}]
  %s9 = inlined_call_operand.hbm [shape: f32[200,128], index: 9, kind: output, shape index: {}]
  %s10 = sld [smem:[#allocation0]]
  $region86: #{tpu_custom_call.1} parent=0
    _
  %s12 = ssub.s32 1, %s10
  %s13 = scalar_select 0, %s12, %s10
  $region1: #{tpu_custom_call.1} parent=0
    #allocation4 [shape = 'u8[102400]{0}', space=vmem, size = 0x19000, scoped, tag = 'input window, operand 0, single buffered']
    #allocation5 [shape = 's32[1]{0}', space=sflag, size = 0x4, scoped, tag = 'scoped memory for tpu_custom_call.1']
    #allocation6 [shape = 's32[1]{0}', space=sflag, size = 0x4, scoped, tag = 'scoped memory for tpu_custom_call.1']
    #allocation7 [shape = 'u8[65536]{0}', space=vmem, size = 0x10000, scoped, tag = 'input window, operand 1, single buffered']
    #allocation8 [shape = 's32[1]{0}', space=sflag, size = 0x4, scoped, tag = 'scoped memory for tpu_custom_call.1']
    #allocation9 [shape = 'u8[1024]{0}', space=vmem, size = 0x400, scoped, tag = 'input window, operand 2, single buffered']
    #allocation10 [shape = 'u8[262144]{0}', space=vmem, size = 0x40000, scoped, tag = 'input window, operand 3, single buffered']
    #allocation11 [shape = 's32[1]{0}', space=sflag, size = 0x4, scoped, tag = 'scoped memory for tpu_custom_call.1']
    #allocation12 [shape = 'u8[2048]{0}', space=vmem, size = 0x800, scoped, tag = 'input window, operand 4, single buffered']
    #allocation13 [shape = 'u8[1048576]{0}', space=vmem, size = 0x100000, scoped, tag = 'input window, operand 5, single buffered']
    #allocation14 [shape = 's32[1]{0}', space=sflag, size = 0x4, scoped, tag = 'scoped memory for tpu_custom_call.1']
    #allocation15 [shape = 'u8[4096]{0}', space=vmem, size = 0x1000, scoped, tag = 'input window, operand 6, single buffered']
    #allocation16 [shape = 'u8[262144]{0}', space=vmem, size = 0x40000, scoped, tag = 'input window, operand 7, single buffered']
    #allocation17 [shape = 's32[1]{0}', space=sflag, size = 0x4, scoped, tag = 'scoped memory for tpu_custom_call.1']
    #allocation18 [shape = 'u8[102400]{0}', space=vmem, size = 0x19000, scoped, tag = 'output window, operand 0, single buffered']
    %14 = vsyncpa [#allocation5], 0
    %15 = vsyncpa [#allocation8], 0
    %16 = vsyncpa [#allocation11], 0
    %17 = vsyncpa [#allocation14], 0
    %18 = vsyncpa [#allocation17], 0
    %19 = vsyncpa [#allocation6], 0
    // Predicated region
    $region2: #{tpu_custom_call.1} parent=1 // pred_check
      _
    $region3: #{tpu_custom_call.1} parent=1 // pred_check_branch
      %21 = sbr.rel (0) target = $region5
    $region4: #{tpu_custom_call.1} parent=1 // pred_region
      %23 = vsyncadd [#allocation5], 0
      %s24 = sshll.u32 %s0, 4
      %s25 = int_to_ptr.hbm [resolvable:$true] %s24
      %s26 = sshll.u32 [#allocation4], 4
      %s27 = int_to_ptr.vmem [resolvable:$true] %s26
      %32 = dma.hbm_to_vmem [thread:$0]  %s25, 3200, %s27, [#allocation5], 128, 128, 8
    $region5: #{tpu_custom_call.1} parent=1 // pred_fallthru
      _
    // Predicated region
    $region6: #{tpu_custom_call.1} parent=1 // pred_check
      _
    $region7: #{tpu_custom_call.1} parent=1 // pred_check_branch
      %34 = sbr.rel (0) target = $region9
    $region8: #{tpu_custom_call.1} parent=1 // pred_region
      %36 = vsyncadd [#allocation8], 0
      %s37 = sshll.u32 %s1, 4
      %s38 = int_to_ptr.hbm [resolvable:$true] %s37
      %s39 = sshll.u32 [#allocation7], 4
      %s40 = int_to_ptr.vmem [resolvable:$true] %s39
      %45 = dma.hbm_to_vmem [thread:$0]  %s38, 2048, %s40, [#allocation8], 128, 128, 8
    $region9: #{tpu_custom_call.1} parent=1 // pred_fallthru
      _
    // Predicated region
    $region10: #{tpu_custom_call.1} parent=1 // pred_check
      _
    $region11: #{tpu_custom_call.1} parent=1 // pred_check_branch
      %47 = sbr.rel (0) target = $region13
    $region12: #{tpu_custom_call.1} parent=1 // pred_region
      %49 = vsyncadd [#allocation8], 0
      %s51 = sshll.u32 %s2, 4
      %s52 = int_to_ptr.hbm [resolvable:$true] %s51
      %s53 = sshll.u32 [#allocation9], 4
      %s54 = int_to_ptr.vmem [resolvable:$true] %s53
      %56 = dma.hbm_to_vmem [thread:$0]  %s52, 32, %s54, [#allocation8]
    $region13: #{tpu_custom_call.1} parent=1 // pred_fallthru
      _
    // Predicated region
    $region14: #{tpu_custom_call.1} parent=1 // pred_check
      _
    $region15: #{tpu_custom_call.1} parent=1 // pred_check_branch
      %58 = sbr.rel (0) target = $region17
    $region16: #{tpu_custom_call.1} parent=1 // pred_region
      %60 = vsyncadd [#allocation11], 0
      %s61 = sshll.u32 %s3, 4
      %s62 = int_to_ptr.hbm [resolvable:$true] %s61
      %s63 = sshll.u32 [#allocation10], 4
      %s64 = int_to_ptr.vmem [resolvable:$true] %s63
      %69 = dma.hbm_to_vmem [thread:$0]  %s62, 8192, %s64, [#allocation11], 256, 256, 16
    $region17: #{tpu_custom_call.1} parent=1 // pred_fallthru
      _
    // Predicated region
    $region18: #{tpu_custom_call.1} parent=1 // pred_check
      _
    $region19: #{tpu_custom_call.1} parent=1 // pred_check_branch
      %71 = sbr.rel (0) target = $region21
    $region20: #{tpu_custom_call.1} parent=1 // pred_region
      %73 = vsyncadd [#allocation11], 0
      %s75 = sshll.u32 %s4, 4
      %s76 = int_to_ptr.hbm [resolvable:$true] %s75
      %s77 = sshll.u32 [#allocation12], 4
      %s78 = int_to_ptr.vmem [resolvable:$true] %s77
      %80 = dma.hbm_to_vmem [thread:$0]  %s76, 64, %s78, [#allocation11]
    $region21: #{tpu_custom_call.1} parent=1 // pred_fallthru
      _
    // Predicated region
    $region22: #{tpu_custom_call.1} parent=1 // pred_check
      _
    $region23: #{tpu_custom_call.1} parent=1 // pred_check_branch
      %82 = sbr.rel (0) target = $region25
    $region24: #{tpu_custom_call.1} parent=1 // pred_region
      %84 = vsyncadd [#allocation14], 0
      %s85 = sshll.u32 %s5, 4
      %s86 = int_to_ptr.hbm [resolvable:$true] %s85
      %s87 = sshll.u32 [#allocation13], 4
      %s88 = int_to_ptr.vmem [resolvable:$true] %s87
      %93 = dma.hbm_to_vmem [thread:$0]  %s86, 32768, %s88, [#allocation14], 512, 512, 32
    $region25: #{tpu_custom_call.1} parent=1 // pred_fallthru
      _
    // Predicated region
    $region26: #{tpu_custom_call.1} parent=1 // pred_check
      _
    $region27: #{tpu_custom_call.1} parent=1 // pred_check_branch
      %95 = sbr.rel (0) target = $region29
    $region28: #{tpu_custom_call.1} parent=1 // pred_region
      %97 = vsyncadd [#allocation14], 0
      %s99 = sshll.u32 %s6, 4
      %s100 = int_to_ptr.hbm [resolvable:$true] %s99
      %s101 = sshll.u32 [#allocation15], 4
      %s102 = int_to_ptr.vmem [resolvable:$true] %s101
      %104 = dma.hbm_to_vmem [thread:$0]  %s100, 128, %s102, [#allocation14]
    $region29: #{tpu_custom_call.1} parent=1 // pred_fallthru
      _
    // Predicated region
    $region30: #{tpu_custom_call.1} parent=1 // pred_check
      _
    $region31: #{tpu_custom_call.1} parent=1 // pred_check_branch
      %106 = sbr.rel (0) target = $region33
    $region32: #{tpu_custom_call.1} parent=1 // pred_region
      %108 = vsyncadd [#allocation17], 0
      %s109 = sshll.u32 %s7, 4
      %s110 = int_to_ptr.hbm [resolvable:$true] %s109
      %s111 = sshll.u32 [#allocation16], 4
      %s112 = int_to_ptr.vmem [resolvable:$true] %s111
      %117 = dma.hbm_to_vmem [thread:$0]  %s110, 8192, %s112, [#allocation17], 64, 64, 4
    $region33: #{tpu_custom_call.1} parent=1 // pred_fallthru
      _
    // Predicated region
    $region34: #{tpu_custom_call.1} parent=1 // pred_check
      _
    $region35: #{tpu_custom_call.1} parent=1 // pred_check_branch
      %119 = sbr.rel (0) target = $region37
    $region36: #{tpu_custom_call.1} parent=1 // pred_region
      _
    $region37: #{tpu_custom_call.1} parent=1 // pred_fallthru
      _
    // Predicated region
    $region38: #{tpu_custom_call.1} parent=1 // pred_check
      _
    $region39: #{tpu_custom_call.1} parent=1 // pred_check_branch
      %121 = sbr.rel (0) target = $region41
    $region40: #{tpu_custom_call.1} parent=1 // pred_region
      %123 = dma.done [#allocation5], 3200
    $region41: #{tpu_custom_call.1} parent=1 // pred_fallthru
      _
    // Predicated region
    $region42: #{tpu_custom_call.1} parent=1 // pred_check
      _
    $region43: #{tpu_custom_call.1} parent=1 // pred_check_branch
      %125 = sbr.rel (0) target = $region45
    $region44: #{tpu_custom_call.1} parent=1 // pred_region
      %127 = dma.done [#allocation8], 2048
    $region45: #{tpu_custom_call.1} parent=1 // pred_fallthru
      _
    // Predicated region
    $region46: #{tpu_custom_call.1} parent=1 // pred_check
      _
    $region47: #{tpu_custom_call.1} parent=1 // pred_check_branch
      %129 = sbr.rel (0) target = $region49
    $region48: #{tpu_custom_call.1} parent=1 // pred_region
      %131 = dma.done [#allocation8], 32
    $region49: #{tpu_custom_call.1} parent=1 // pred_fallthru
      _
    // Predicated region
    $region50: #{tpu_custom_call.1} parent=1 // pred_check
      _
    $region51: #{tpu_custom_call.1} parent=1 // pred_check_branch
      %133 = sbr.rel (0) target = $region53
    $region52: #{tpu_custom_call.1} parent=1 // pred_region
      %135 = dma.done [#allocation11], 8192
    $region53: #{tpu_custom_call.1} parent=1 // pred_fallthru
      _
    // Predicated region
    $region54: #{tpu_custom_call.1} parent=1 // pred_check
      _
    $region55: #{tpu_custom_call.1} parent=1 // pred_check_branch
      %137 = sbr.rel (0) target = $region57
    $region56: #{tpu_custom_call.1} parent=1 // pred_region
      %139 = dma.done [#allocation11], 64
    $region57: #{tpu_custom_call.1} parent=1 // pred_fallthru
      _
    // Predicated region
    $region58: #{tpu_custom_call.1} parent=1 // pred_check
      _
    $region59: #{tpu_custom_call.1} parent=1 // pred_check_branch
      %141 = sbr.rel (0) target = $region61
    $region60: #{tpu_custom_call.1} parent=1 // pred_region
      %143 = dma.done [#allocation14], 32768
    $region61: #{tpu_custom_call.1} parent=1 // pred_fallthru
      _
    // Predicated region
    $region62: #{tpu_custom_call.1} parent=1 // pred_check
      _
    $region63: #{tpu_custom_call.1} parent=1 // pred_check_branch
      %145 = sbr.rel (0) target = $region65
    $region64: #{tpu_custom_call.1} parent=1 // pred_region
      %147 = dma.done [#allocation14], 128
    $region65: #{tpu_custom_call.1} parent=1 // pred_fallthru
      _
    // Predicated region
    $region66: #{tpu_custom_call.1} parent=1 // pred_check
      _
    $region67: #{tpu_custom_call.1} parent=1 // pred_check_branch
      %149 = sbr.rel (0) target = $region69
    $region68: #{tpu_custom_call.1} parent=1 // pred_region
      %151 = dma.done [#allocation17], 8192
    $region69: #{tpu_custom_call.1} parent=1 // pred_fallthru
      _
    %p152 = scmp.eq.s32.totalorder 0, 0
    // Predicated region
    $region70: #{tpu_custom_call.1} parent=1 // pred_check
      %p153 = pneg %p152
    $region71: #{tpu_custom_call.1} parent=1 // pred_check_branch
      %155 = sbr.rel (%p153) target = $region73
    $region72: #{tpu_custom_call.1} parent=1 // pred_region
      %v156 = vld [vmem:[#allocation4] sm:$0xff]
      %v157 = vld [vmem:[#allocation4 + $0x8] sm:$0xff]
      %v158 = vld [vmem:[#allocation4 + $0x10] sm:$0xff]
      %v159 = vld [vmem:[#allocation4 + $0x18] sm:$0xff]
      %v160 = vld [vmem:[#allocation4 + $0x20] sm:$0xff]
      %v161 = vld [vmem:[#allocation4 + $0x28] sm:$0xff]
      %v162 = vld [vmem:[#allocation4 + $0x30] sm:$0xff]
      %v163 = vld [vmem:[#allocation4 + $0x38] sm:$0xff]
      %v164 = vld [vmem:[#allocation4 + $0x40] sm:$0xff]
      %v165 = vld [vmem:[#allocation4 + $0x48] sm:$0xff]
      %v166 = vld [vmem:[#allocation4 + $0x50] sm:$0xff]
      %v167 = vld [vmem:[#allocation4 + $0x58] sm:$0xff]
      %v168 = vld [vmem:[#allocation4 + $0x60] sm:$0xff]
      %v169 = vld [vmem:[#allocation4 + $0x68] sm:$0xff]
      %v170 = vld [vmem:[#allocation4 + $0x70] sm:$0xff]
      %v171 = vld [vmem:[#allocation4 + $0x78] sm:$0xff]
      %v172 = vld [vmem:[#allocation4 + $0x80] sm:$0xff]
      %v173 = vld [vmem:[#allocation4 + $0x88] sm:$0xff]
      %v174 = vld [vmem:[#allocation4 + $0x90] sm:$0xff]
      %v175 = vld [vmem:[#allocation4 + $0x98] sm:$0xff]
      %v176 = vld [vmem:[#allocation4 + $0xa0] sm:$0xff]
      %v177 = vld [vmem:[#allocation4 + $0xa8] sm:$0xff]
      %v178 = vld [vmem:[#allocation4 + $0xb0] sm:$0xff]
      %v179 = vld [vmem:[#allocation4 + $0xb8] sm:$0xff]
      %v180 = vld [vmem:[#allocation4 + $0xc0] sm:$0xff]
      %v181 = vpack.c.bf16 %v157, %v156
      %v182 = vpack.c.bf16 %v159, %v158
      %v183 = vpack.c.bf16 %v161, %v160
      %v184 = vpack.c.bf16 %v163, %v162
      %v185 = vpack.c.bf16 %v165, %v164
      %v186 = vpack.c.bf16 %v167, %v166
      %v187 = vpack.c.bf16 %v169, %v168
      %v188 = vpack.c.bf16 %v171, %v170
      %v189 = vpack.c.bf16 %v173, %v172
      %v190 = vpack.c.bf16 %v175, %v174
      %v191 = vpack.c.bf16 %v177, %v176
      %v192 = vpack.c.bf16 %v179, %v178
      %v193 = vpack.c.bf16 %v180, %v180
      %v194 = vld [vmem:[#allocation7] sm:$0xff]
      %v195 = vld [vmem:[#allocation7 + $0x8] sm:$0xff]
      %v196 = vld [vmem:[#allocation7 + $0x10] sm:$0xff]
      %v197 = vld [vmem:[#allocation7 + $0x18] sm:$0xff]
      %v198 = vld [vmem:[#allocation7 + $0x20] sm:$0xff]
      %v199 = vld [vmem:[#allocation7 + $0x28] sm:$0xff]
      %v200 = vld [vmem:[#allocation7 + $0x30] sm:$0xff]
      %v201 = vld [vmem:[#allocation7 + $0x38] sm:$0xff]
      %v202 = vld [vmem:[#allocation7 + $0x40] sm:$0xff]
      %v203 = vld [vmem:[#allocation7 + $0x48] sm:$0xff]
      %v204 = vld [vmem:[#allocation7 + $0x50] sm:$0xff]
      %v205 = vld [vmem:[#allocation7 + $0x58] sm:$0xff]
      %v206 = vld [vmem:[#allocation7 + $0x60] sm:$0xff]
      %v207 = vld [vmem:[#allocation7 + $0x68] sm:$0xff]
      %v208 = vld [vmem:[#allocation7 + $0x70] sm:$0xff]
      %v209 = vld [vmem:[#allocation7 + $0x78] sm:$0xff]
      %v210 = vld [vmem:[#allocation9] sm:$0x3]
      %v212 = vperm.slane %v210, 0
      %v213 = vperm.slane %v210, 1
      %v232 = vunpack.c.l.b16 %v194
      %v233 = vunpack.c.h.b16 %v194
      %v234 = vunpack.c.l.b16 %v195
      %v235 = vunpack.c.h.b16 %v195
      %v236 = vunpack.c.l.b16 %v196
      %v237 = vunpack.c.h.b16 %v196
      %v238 = vunpack.c.l.b16 %v197
      %v239 = vunpack.c.h.b16 %v197
      %v240 = vunpack.c.l.b16 %v198
      %v241 = vunpack.c.h.b16 %v198
      %v242 = vunpack.c.l.b16 %v199
      %v243 = vunpack.c.h.b16 %v199
      %v244 = vunpack.c.l.b16 %v200
      %v245 = vunpack.c.h.b16 %v200
      %v246 = vunpack.c.l.b16 %v201
      %v247 = vunpack.c.h.b16 %v201
      %v248 = vunpack.c.l.b16 %v202
      %v249 = vunpack.c.h.b16 %v202
      %v250 = vunpack.c.l.b16 %v203
      %v251 = vunpack.c.h.b16 %v203
      %v252 = vunpack.c.l.b16 %v204
      %v253 = vunpack.c.h.b16 %v204
      %v254 = vunpack.c.l.b16 %v205
      %v255 = vunpack.c.h.b16 %v205
      %v256 = vunpack.c.l.b16 %v206
      %v257 = vunpack.c.h.b16 %v206
      %v258 = vunpack.c.l.b16 %v207
      %v259 = vunpack.c.h.b16 %v207
      %v260 = vunpack.c.l.b16 %v208
      %v261 = vunpack.c.h.b16 %v208
      %v262 = vunpack.c.l.b16 %v209
      %v263 = vunpack.c.h.b16 %v209
      %v264 = vpack.c.b16 %v234, %v232
      %v265 = vpack.c.b16 %v235, %v233
      %v266 = vpack.c.b16 %v238, %v236
      %v267 = vpack.c.b16 %v239, %v237
      %v268 = vpack.c.b16 %v242, %v240
      %v269 = vpack.c.b16 %v243, %v241
      %v270 = vpack.c.b16 %v246, %v244
      %v271 = vpack.c.b16 %v247, %v245
      %v272 = vpack.c.b16 %v250, %v248
      %v273 = vpack.c.b16 %v251, %v249
      %v274 = vpack.c.b16 %v254, %v252
      %v275 = vpack.c.b16 %v255, %v253
      %v276 = vpack.c.b16 %v258, %v256
      %v277 = vpack.c.b16 %v259, %v257
      %v278 = vpack.c.b16 %v262, %v260
      %v279 = vpack.c.b16 %v263, %v261
      %296 = vmatpush.bf16.msra.mxu0 %v278
      %297 = vmatpush.bf16.msra.mxu0 %v276
      %298 = vmatpush.bf16.msra.mxu0 %v274
      %299 = vmatpush.bf16.msra.mxu0 %v272
      %300 = vmatpush.bf16.msra.mxu0 %v270
      %301 = vmatpush.bf16.msra.mxu0 %v268
      %302 = vmatpush.bf16.msra.mxu0 %v266
      %303 = vmatpush.bf16.msra.mxu0 %v264
      %304 = vmatmul.bf16.gmra.mxu0 %v181
      %v305 = vpop.f32.mrf.mxu0
      %v306 = vadd.f32 %v212, %v305
      %v307 = vpop.f32.mrf.mxu0
      %v308 = vadd.f32 %v212, %v307
      %309 = vmatmul.bf16.gmra.mxu0 %v182
      %v310 = vpop.f32.mrf.mxu0
      %v311 = vadd.f32 %v212, %v310
      %v312 = vpop.f32.mrf.mxu0
      %v313 = vadd.f32 %v212, %v312
      %314 = vmatmul.bf16.gmra.mxu0 %v183
      %v315 = vpop.f32.mrf.mxu0
      %v316 = vadd.f32 %v212, %v315
      %v317 = vpop.f32.mrf.mxu0
      %v318 = vadd.f32 %v212, %v317
      %319 = vmatmul.bf16.gmra.mxu0 %v184
      %v320 = vpop.f32.mrf.mxu0
      %v321 = vadd.f32 %v212, %v320
      %v322 = vpop.f32.mrf.mxu0
      %v323 = vadd.f32 %v212, %v322
      %324 = vmatmul.bf16.gmra.mxu0 %v185
      %v325 = vpop.f32.mrf.mxu0
      %v326 = vadd.f32 %v212, %v325
      %v327 = vpop.f32.mrf.mxu0
      %v328 = vadd.f32 %v212, %v327
      %329 = vmatmul.bf16.gmra.mxu0 %v186
      %v330 = vpop.f32.mrf.mxu0
      %v331 = vadd.f32 %v212, %v330
      %v332 = vpop.f32.mrf.mxu0
      %v333 = vadd.f32 %v212, %v332
      %334 = vmatmul.bf16.gmra.mxu0 %v187
      %v335 = vpop.f32.mrf.mxu0
      %v336 = vadd.f32 %v212, %v335
      %v337 = vpop.f32.mrf.mxu0
      %v338 = vadd.f32 %v212, %v337
      %339 = vmatmul.bf16.gmra.mxu0 %v188
      %v340 = vpop.f32.mrf.mxu0
      %v341 = vadd.f32 %v212, %v340
      %v342 = vpop.f32.mrf.mxu0
      %v343 = vadd.f32 %v212, %v342
      %344 = vmatmul.bf16.gmra.mxu0 %v189
      %v345 = vpop.f32.mrf.mxu0
      %v346 = vadd.f32 %v212, %v345
      %v347 = vpop.f32.mrf.mxu0
      %v348 = vadd.f32 %v212, %v347
      %349 = vmatmul.bf16.gmra.mxu0 %v190
      %v350 = vpop.f32.mrf.mxu0
      %v351 = vadd.f32 %v212, %v350
      %v352 = vpop.f32.mrf.mxu0
      %v353 = vadd.f32 %v212, %v352
      %354 = vmatmul.bf16.gmra.mxu0 %v191
      %v355 = vpop.f32.mrf.mxu0
      %v356 = vadd.f32 %v212, %v355
      %v357 = vpop.f32.mrf.mxu0
      %v358 = vadd.f32 %v212, %v357
      %359 = vmatmul.bf16.gmra.mxu0 %v192
      %v360 = vpop.f32.mrf.mxu0
      %v361 = vadd.f32 %v212, %v360
      %v362 = vpop.f32.mrf.mxu0
      %v363 = vadd.f32 %v212, %v362
      %364 = vmatmul.bf16.gmra.mxu0 %v193
      %v365 = vpop.f32.mrf.mxu0
      %v366 = vadd.f32 %v212, %v365
      %v367 = vpop.f32.mrf.mxu0
      %368 = vdwg.mxu0
      %369 = vmatpush.bf16.msra.mxu0 %v279
      %370 = vmatpush.bf16.msra.mxu0 %v277
      %371 = vmatpush.bf16.msra.mxu0 %v275
      %372 = vmatpush.bf16.msra.mxu0 %v273
      %373 = vmatpush.bf16.msra.mxu0 %v271
      %374 = vmatpush.bf16.msra.mxu0 %v269
      %375 = vmatpush.bf16.msra.mxu0 %v267
      %376 = vmatpush.bf16.msra.mxu0 %v265
      %377 = vmatmul.bf16.gmra.mxu0 %v181
      %v378 = vpop.f32.mrf.mxu0
      %v379 = vadd.f32 %v213, %v378
      %v380 = vpop.f32.mrf.mxu0
      %v381 = vadd.f32 %v213, %v380
      %382 = vmatmul.bf16.gmra.mxu0 %v182
      %v383 = vpop.f32.mrf.mxu0
      %v384 = vadd.f32 %v213, %v383
      %v385 = vpop.f32.mrf.mxu0
      %v386 = vadd.f32 %v213, %v385
      %387 = vmatmul.bf16.gmra.mxu0 %v183
      %v388 = vpop.f32.mrf.mxu0
      %v389 = vadd.f32 %v213, %v388
      %v390 = vpop.f32.mrf.mxu0
      %v391 = vadd.f32 %v213, %v390
      %392 = vmatmul.bf16.gmra.mxu0 %v184
      %v393 = vpop.f32.mrf.mxu0
      %v394 = vadd.f32 %v213, %v393
      %v395 = vpop.f32.mrf.mxu0
      %v396 = vadd.f32 %v213, %v395
      %397 = vmatmul.bf16.gmra.mxu0 %v185
      %v398 = vpop.f32.mrf.mxu0
      %v399 = vadd.f32 %v213, %v398
      %v400 = vpop.f32.mrf.mxu0
      %v401 = vadd.f32 %v213, %v400
      %402 = vmatmul.bf16.gmra.mxu0 %v186
      %v403 = vpop.f32.mrf.mxu0
      %v404 = vadd.f32 %v213, %v403
      %v405 = vpop.f32.mrf.mxu0
      %v406 = vadd.f32 %v213, %v405
      %407 = vmatmul.bf16.gmra.mxu0 %v187
      %v408 = vpop.f32.mrf.mxu0
      %v409 = vadd.f32 %v213, %v408
      %v410 = vpop.f32.mrf.mxu0
      %v411 = vadd.f32 %v213, %v410
      %412 = vmatmul.bf16.gmra.mxu0 %v188
      %v413 = vpop.f32.mrf.mxu0
      %v414 = vadd.f32 %v213, %v413
      %v415 = vpop.f32.mrf.mxu0
      %v416 = vadd.f32 %v213, %v415
      %417 = vmatmul.bf16.gmra.mxu0 %v189
      %v418 = vpop.f32.mrf.mxu0
      %v419 = vadd.f32 %v213, %v418
      %v420 = vpop.f32.mrf.mxu0
      %v421 = vadd.f32 %v213, %v420
      %422 = vmatmul.bf16.gmra.mxu0 %v190
      %v423 = vpop.f32.mrf.mxu0
      %v424 = vadd.f32 %v213, %v423
      %v425 = vpop.f32.mrf.mxu0
      %v426 = vadd.f32 %v213, %v425
      %427 = vmatmul.bf16.gmra.mxu0 %v191
      %v428 = vpop.f32.mrf.mxu0
      %v429 = vadd.f32 %v213, %v428
      %v430 = vpop.f32.mrf.mxu0
      %v431 = vadd.f32 %v213, %v430
      %432 = vmatmul.bf16.gmra.mxu0 %v192
      %v433 = vpop.f32.mrf.mxu0
      %v434 = vadd.f32 %v213, %v433
      %v435 = vpop.f32.mrf.mxu0
      %v436 = vadd.f32 %v213, %v435
      %437 = vmatmul.bf16.gmra.mxu0 %v193
      %v438 = vpop.f32.mrf.mxu0
      %v439 = vadd.f32 %v213, %v438
      %v440 = vpop.f32.mrf.mxu0
      %441 = vdwg.mxu0
      %vm442 = vcmp.ge.f32.partialorder %v306, 0.0
      %vm443 = vcmp.ge.f32.partialorder %v379, 0.0
      %vm444 = vcmp.ge.f32.partialorder %v308, 0.0
      %vm445 = vcmp.ge.f32.partialorder %v381, 0.0
      %vm446 = vcmp.ge.f32.partialorder %v311, 0.0
      %vm447 = vcmp.ge.f32.partialorder %v384, 0.0
      %vm448 = vcmp.ge.f32.partialorder %v313, 0.0
      %vm449 = vcmp.ge.f32.partialorder %v386, 0.0
      %vm450 = vcmp.ge.f32.partialorder %v316, 0.0
      %vm451 = vcmp.ge.f32.partialorder %v389, 0.0
      %vm452 = vcmp.ge.f32.partialorder %v318, 0.0
      %vm453 = vcmp.ge.f32.partialorder %v391, 0.0
      %vm454 = vcmp.ge.f32.partialorder %v321, 0.0
      %vm455 = vcmp.ge.f32.partialorder %v394, 0.0
      %vm456 = vcmp.ge.f32.partialorder %v323, 0.0
      %vm457 = vcmp.ge.f32.partialorder %v396, 0.0
      %vm458 = vcmp.ge.f32.partialorder %v326, 0.0
      %vm459 = vcmp.ge.f32.partialorder %v399, 0.0
      %vm460 = vcmp.ge.f32.partialorder %v328, 0.0
      %vm461 = vcmp.ge.f32.partialorder %v401, 0.0
      %vm462 = vcmp.ge.f32.partialorder %v331, 0.0
      %vm463 = vcmp.ge.f32.partialorder %v404, 0.0
      %vm464 = vcmp.ge.f32.partialorder %v333, 0.0
      %vm465 = vcmp.ge.f32.partialorder %v406, 0.0
      %vm466 = vcmp.ge.f32.partialorder %v336, 0.0
      %vm467 = vcmp.ge.f32.partialorder %v409, 0.0
      %vm468 = vcmp.ge.f32.partialorder %v338, 0.0
      %vm469 = vcmp.ge.f32.partialorder %v411, 0.0
      %vm470 = vcmp.ge.f32.partialorder %v341, 0.0
      %vm471 = vcmp.ge.f32.partialorder %v414, 0.0
      %vm472 = vcmp.ge.f32.partialorder %v343, 0.0
      %vm473 = vcmp.ge.f32.partialorder %v416, 0.0
      %vm474 = vcmp.ge.f32.partialorder %v346, 0.0
      %vm475 = vcmp.ge.f32.partialorder %v419, 0.0
      %vm476 = vcmp.ge.f32.partialorder %v348, 0.0
      %vm477 = vcmp.ge.f32.partialorder %v421, 0.0
      %vm478 = vcmp.ge.f32.partialorder %v351, 0.0
      %vm479 = vcmp.ge.f32.partialorder %v424, 0.0
      %vm480 = vcmp.ge.f32.partialorder %v353, 0.0
      %vm481 = vcmp.ge.f32.partialorder %v426, 0.0
      %vm482 = vcmp.ge.f32.partialorder %v356, 0.0
      %vm483 = vcmp.ge.f32.partialorder %v429, 0.0
      %vm484 = vcmp.ge.f32.partialorder %v358, 0.0
      %vm485 = vcmp.ge.f32.partialorder %v431, 0.0
      %vm486 = vcmp.ge.f32.partialorder %v361, 0.0
      %vm487 = vcmp.ge.f32.partialorder %v434, 0.0
      %vm488 = vcmp.ge.f32.partialorder %v363, 0.0
      %vm489 = vcmp.ge.f32.partialorder %v436, 0.0
      %vm490 = vcmp.ge.f32.partialorder %v366, 0.0
      %vm491 = vcmp.ge.f32.partialorder %v439, 0.0
      %v492 = vmul.f32 %v306, 0.01
      %v493 = vmul.f32 %v379, 0.01
      %v494 = vmul.f32 %v308, 0.01
      %v495 = vmul.f32 %v381, 0.01
      %v496 = vmul.f32 %v311, 0.01
      %v497 = vmul.f32 %v384, 0.01
      %v498 = vmul.f32 %v313, 0.01
      %v499 = vmul.f32 %v386, 0.01
      %v500 = vmul.f32 %v316, 0.01
      %v501 = vmul.f32 %v389, 0.01
      %v502 = vmul.f32 %v318, 0.01
      %v503 = vmul.f32 %v391, 0.01
      %v504 = vmul.f32 %v321, 0.01
      %v505 = vmul.f32 %v394, 0.01
      %v506 = vmul.f32 %v323, 0.01
      %v507 = vmul.f32 %v396, 0.01
      %v508 = vmul.f32 %v326, 0.01
      %v509 = vmul.f32 %v399, 0.01
      %v510 = vmul.f32 %v328, 0.01
      %v511 = vmul.f32 %v401, 0.01
      %v512 = vmul.f32 %v331, 0.01
      %v513 = vmul.f32 %v404, 0.01
      %v514 = vmul.f32 %v333, 0.01
      %v515 = vmul.f32 %v406, 0.01
      %v516 = vmul.f32 %v336, 0.01
      %v517 = vmul.f32 %v409, 0.01
      %v518 = vmul.f32 %v338, 0.01
      %v519 = vmul.f32 %v411, 0.01
      %v520 = vmul.f32 %v341, 0.01
      %v521 = vmul.f32 %v414, 0.01
      %v522 = vmul.f32 %v343, 0.01
      %v523 = vmul.f32 %v416, 0.01
      %v524 = vmul.f32 %v346, 0.01
      %v525 = vmul.f32 %v419, 0.01
      %v526 = vmul.f32 %v348, 0.01
      %v527 = vmul.f32 %v421, 0.01
      %v528 = vmul.f32 %v351, 0.01
      %v529 = vmul.f32 %v424, 0.01
      %v530 = vmul.f32 %v353, 0.01
      %v531 = vmul.f32 %v426, 0.01
      %v532 = vmul.f32 %v356, 0.01
      %v533 = vmul.f32 %v429, 0.01
      %v534 = vmul.f32 %v358, 0.01
      %v535 = vmul.f32 %v431, 0.01
      %v536 = vmul.f32 %v361, 0.01
      %v537 = vmul.f32 %v434, 0.01
      %v538 = vmul.f32 %v363, 0.01
      %v539 = vmul.f32 %v436, 0.01
      %v540 = vmul.f32 %v366, 0.01
      %v541 = vmul.f32 %v439, 0.01
      %v542 = vsel %vm442, %v306, %v492
      %v543 = vsel %vm443, %v379, %v493
      %v544 = vsel %vm444, %v308, %v494
      %v545 = vsel %vm445, %v381, %v495
      %v546 = vsel %vm446, %v311, %v496
      %v547 = vsel %vm447, %v384, %v497
      %v548 = vsel %vm448, %v313, %v498
      %v549 = vsel %vm449, %v386, %v499
      %v550 = vsel %vm450, %v316, %v500
      %v551 = vsel %vm451, %v389, %v501
      %v552 = vsel %vm452, %v318, %v502
      %v553 = vsel %vm453, %v391, %v503
      %v554 = vsel %vm454, %v321, %v504
      %v555 = vsel %vm455, %v394, %v505
      %v556 = vsel %vm456, %v323, %v506
      %v557 = vsel %vm457, %v396, %v507
      %v558 = vsel %vm458, %v326, %v508
      %v559 = vsel %vm459, %v399, %v509
      %v560 = vsel %vm460, %v328, %v510
      %v561 = vsel %vm461, %v401, %v511
      %v562 = vsel %vm462, %v331, %v512
      %v563 = vsel %vm463, %v404, %v513
      %v564 = vsel %vm464, %v333, %v514
      %v565 = vsel %vm465, %v406, %v515
      %v566 = vsel %vm466, %v336, %v516
      %v567 = vsel %vm467, %v409, %v517
      %v568 = vsel %vm468, %v338, %v518
      %v569 = vsel %vm469, %v411, %v519
      %v570 = vsel %vm470, %v341, %v520
      %v571 = vsel %vm471, %v414, %v521
      %v572 = vsel %vm472, %v343, %v522
      %v573 = vsel %vm473, %v416, %v523
      %v574 = vsel %vm474, %v346, %v524
      %v575 = vsel %vm475, %v419, %v525
      %v576 = vsel %vm476, %v348, %v526
      %v577 = vsel %vm477, %v421, %v527
      %v578 = vsel %vm478, %v351, %v528
      %v579 = vsel %vm479, %v424, %v529
      %v580 = vsel %vm480, %v353, %v530
      %v581 = vsel %vm481, %v426, %v531
      %v582 = vsel %vm482, %v356, %v532
      %v583 = vsel %vm483, %v429, %v533
      %v584 = vsel %vm484, %v358, %v534
      %v585 = vsel %vm485, %v431, %v535
      %v586 = vsel %vm486, %v361, %v536
      %v587 = vsel %vm487, %v434, %v537
      %v588 = vsel %vm488, %v363, %v538
      %v589 = vsel %vm489, %v436, %v539
      %v590 = vsel %vm490, %v366, %v540
      %v591 = vsel %vm491, %v439, %v541
      %v592 = vpack.c.bf16 %v544, %v542
      %v593 = vpack.c.bf16 %v545, %v543
      %v594 = vpack.c.bf16 %v548, %v546
      %v595 = vpack.c.bf16 %v549, %v547
      %v596 = vpack.c.bf16 %v552, %v550
      %v597 = vpack.c.bf16 %v553, %v551
      %v598 = vpack.c.bf16 %v556, %v554
      %v599 = vpack.c.bf16 %v557, %v555
      %v600 = vpack.c.bf16 %v560, %v558
      %v601 = vpack.c.bf16 %v561, %v559
      %v602 = vpack.c.bf16 %v564, %v562
      %v603 = vpack.c.bf16 %v565, %v563
      %v604 = vpack.c.bf16 %v568, %v566
      %v605 = vpack.c.bf16 %v569, %v567
      %v606 = vpack.c.bf16 %v572, %v570
      %v607 = vpack.c.bf16 %v573, %v571
      %v608 = vpack.c.bf16 %v576, %v574
      %v609 = vpack.c.bf16 %v577, %v575
      %v610 = vpack.c.bf16 %v580, %v578
      %v611 = vpack.c.bf16 %v581, %v579
      %v612 = vpack.c.bf16 %v584, %v582
      %v613 = vpack.c.bf16 %v585, %v583
      %v614 = vpack.c.bf16 %v588, %v586
      %v615 = vpack.c.bf16 %v589, %v587
      %v616 = vpack.c.bf16 %v590, %v590
      %v617 = vpack.c.bf16 %v591, %v591
      %v618 = vld [vmem:[#allocation10] sm:$0xff]
      %v619 = vld [vmem:[#allocation10 + $0x8] sm:$0xff]
      %v620 = vld [vmem:[#allocation10 + $0x10] sm:$0xff]
      %v621 = vld [vmem:[#allocation10 + $0x18] sm:$0xff]
      %v622 = vld [vmem:[#allocation10 + $0x20] sm:$0xff]
      %v623 = vld [vmem:[#allocation10 + $0x28] sm:$0xff]
      %v624 = vld [vmem:[#allocation10 + $0x30] sm:$0xff]
      %v625 = vld [vmem:[#allocation10 + $0x38] sm:$0xff]
      %v626 = vld [vmem:[#allocation10 + $0x40] sm:$0xff]
      %v627 = vld [vmem:[#allocation10 + $0x48] sm:$0xff]
      %v628 = vld [vmem:[#allocation10 + $0x50] sm:$0xff]
      %v629 = vld [vmem:[#allocation10 + $0x58] sm:$0xff]
      %v630 = vld [vmem:[#allocation10 + $0x60] sm:$0xff]
      %v631 = vld [vmem:[#allocation10 + $0x68] sm:$0xff]
      %v632 = vld [vmem:[#allocation10 + $0x70] sm:$0xff]
      %v633 = vld [vmem:[#allocation10 + $0x78] sm:$0xff]
      %v634 = vld [vmem:[#allocation10 + $0x80] sm:$0xff]
      %v635 = vld [vmem:[#allocation10 + $0x88] sm:$0xff]
      %v636 = vld [vmem:[#allocation10 + $0x90] sm:$0xff]
      %v637 = vld [vmem:[#allocation10 + $0x98] sm:$0xff]
      %v638 = vld [vmem:[#allocation10 + $0xa0] sm:$0xff]
      %v639 = vld [vmem:[#allocation10 + $0xa8] sm:$0xff]
      %v640 = vld [vmem:[#allocation10 + $0xb0] sm:$0xff]
      %v641 = vld [vmem:[#allocation10 + $0xb8] sm:$0xff]
      %v642 = vld [vmem:[#allocation10 + $0xc0] sm:$0xff]
      %v643 = vld [vmem:[#allocation10 + $0xc8] sm:$0xff]
      %v644 = vld [vmem:[#allocation10 + $0xd0] sm:$0xff]
      %v645 = vld [vmem:[#allocation10 + $0xd8] sm:$0xff]
      %v646 = vld [vmem:[#allocation10 + $0xe0] sm:$0xff]
      %v647 = vld [vmem:[#allocation10 + $0xe8] sm:$0xff]
      %v648 = vld [vmem:[#allocation10 + $0xf0] sm:$0xff]
      %v649 = vld [vmem:[#allocation10 + $0xf8] sm:$0xff]
      %v650 = vld [vmem:[#allocation10 + $0x100] sm:$0xff]
      %v651 = vld [vmem:[#allocation10 + $0x108] sm:$0xff]
      %v652 = vld [vmem:[#allocation10 + $0x110] sm:$0xff]
      %v653 = vld [vmem:[#allocation10 + $0x118] sm:$0xff]
      %v654 = vld [vmem:[#allocation10 + $0x120] sm:$0xff]
      %v655 = vld [vmem:[#allocation10 + $0x128] sm:$0xff]
      %v656 = vld [vmem:[#allocation10 + $0x130] sm:$0xff]
      %v657 = vld [vmem:[#allocation10 + $0x138] sm:$0xff]
      %v658 = vld [vmem:[#allocation10 + $0x140] sm:$0xff]
      %v659 = vld [vmem:[#allocation10 + $0x148] sm:$0xff]
      %v660 = vld [vmem:[#allocation10 + $0x150] sm:$0xff]
      %v661 = vld [vmem:[#allocation10 + $0x158] sm:$0xff]
      %v662 = vld [vmem:[#allocation10 + $0x160] sm:$0xff]
      %v663 = vld [vmem:[#allocation10 + $0x168] sm:$0xff]
      %v664 = vld [vmem:[#allocation10 + $0x170] sm:$0xff]
      %v665 = vld [vmem:[#allocation10 + $0x178] sm:$0xff]
      %v666 = vld [vmem:[#allocation10 + $0x180] sm:$0xff]
      %v667 = vld [vmem:[#allocation10 + $0x188] sm:$0xff]
      %v668 = vld [vmem:[#allocation10 + $0x190] sm:$0xff]
      %v669 = vld [vmem:[#allocation10 + $0x198] sm:$0xff]
      %v670 = vld [vmem:[#allocation10 + $0x1a0] sm:$0xff]
      %v671 = vld [vmem:[#allocation10 + $0x1a8] sm:$0xff]
      %v672 = vld [vmem:[#allocation10 + $0x1b0] sm:$0xff]
      %v673 = vld [vmem:[#allocation10 + $0x1b8] sm:$0xff]
      %v674 = vld [vmem:[#allocation10 + $0x1c0] sm:$0xff]
      %v675 = vld [vmem:[#allocation10 + $0x1c8] sm:$0xff]
      %v676 = vld [vmem:[#allocation10 + $0x1d0] sm:$0xff]
      %v677 = vld [vmem:[#allocation10 + $0x1d8] sm:$0xff]
      %v678 = vld [vmem:[#allocation10 + $0x1e0] sm:$0xff]
      %v679 = vld [vmem:[#allocation10 + $0x1e8] sm:$0xff]
      %v680 = vld [vmem:[#allocation10 + $0x1f0] sm:$0xff]
      %v681 = vld [vmem:[#allocation10 + $0x1f8] sm:$0xff]
      %v682 = vld [vmem:[#allocation12] sm:$0xf]
      %v684 = vperm.slane %v682, 0
      %v685 = vperm.slane %v682, 1
      %v686 = vperm.slane %v682, 2
      %v687 = vperm.slane %v682, 3
      %v756 = vunpack.c.l.b16 %v618
      %v757 = vunpack.c.h.b16 %v618
      %v758 = vunpack.c.l.b16 %v619
      %v759 = vunpack.c.h.b16 %v619
      %v760 = vunpack.c.l.b16 %v620
      %v761 = vunpack.c.h.b16 %v620
      %v762 = vunpack.c.l.b16 %v621
      %v763 = vunpack.c.h.b16 %v621
      %v764 = vunpack.c.l.b16 %v622
      %v765 = vunpack.c.h.b16 %v622
      %v766 = vunpack.c.l.b16 %v623
      %v767 = vunpack.c.h.b16 %v623
      %v768 = vunpack.c.l.b16 %v624
      %v769 = vunpack.c.h.b16 %v624
      %v770 = vunpack.c.l.b16 %v625
      %v771 = vunpack.c.h.b16 %v625
      %v772 = vunpack.c.l.b16 %v626
      %v773 = vunpack.c.h.b16 %v626
      %v774 = vunpack.c.l.b16 %v627
      %v775 = vunpack.c.h.b16 %v627
      %v776 = vunpack.c.l.b16 %v628
      %v777 = vunpack.c.h.b16 %v628
      %v778 = vunpack.c.l.b16 %v629
      %v779 = vunpack.c.h.b16 %v629
      %v780 = vunpack.c.l.b16 %v630
      %v781 = vunpack.c.h.b16 %v630
      %v782 = vunpack.c.l.b16 %v631
      %v783 = vunpack.c.h.b16 %v631
      %v784 = vunpack.c.l.b16 %v632
      %v785 = vunpack.c.h.b16 %v632
      %v786 = vunpack.c.l.b16 %v633
      %v787 = vunpack.c.h.b16 %v633
      %v788 = vunpack.c.l.b16 %v634
      %v789 = vunpack.c.h.b16 %v634
      %v790 = vunpack.c.l.b16 %v635
      %v791 = vunpack.c.h.b16 %v635
      %v792 = vunpack.c.l.b16 %v636
      %v793 = vunpack.c.h.b16 %v636
      %v794 = vunpack.c.l.b16 %v637
      %v795 = vunpack.c.h.b16 %v637
      %v796 = vunpack.c.l.b16 %v638
      %v797 = vunpack.c.h.b16 %v638
      %v798 = vunpack.c.l.b16 %v639
      %v799 = vunpack.c.h.b16 %v639
      %v800 = vunpack.c.l.b16 %v640
      %v801 = vunpack.c.h.b16 %v640
      %v802 = vunpack.c.l.b16 %v641
      %v803 = vunpack.c.h.b16 %v641
      %v804 = vunpack.c.l.b16 %v642
      %v805 = vunpack.c.h.b16 %v642
      %v806 = vunpack.c.l.b16 %v643
      %v807 = vunpack.c.h.b16 %v643
      %v808 = vunpack.c.l.b16 %v644
      %v809 = vunpack.c.h.b16 %v644
      %v810 = vunpack.c.l.b16 %v645
      %v811 = vunpack.c.h.b16 %v645
      %v812 = vunpack.c.l.b16 %v646
      %v813 = vunpack.c.h.b16 %v646
      %v814 = vunpack.c.l.b16 %v647
      %v815 = vunpack.c.h.b16 %v647
      %v816 = vunpack.c.l.b16 %v648
      %v817 = vunpack.c.h.b16 %v648
      %v818 = vunpack.c.l.b16 %v649
      %v819 = vunpack.c.h.b16 %v649
      %v820 = vunpack.c.l.b16 %v650
      %v821 = vunpack.c.h.b16 %v650
      %v822 = vunpack.c.l.b16 %v651
      %v823 = vunpack.c.h.b16 %v651
      %v824 = vunpack.c.l.b16 %v652
      %v825 = vunpack.c.h.b16 %v652
      %v826 = vunpack.c.l.b16 %v653
      %v827 = vunpack.c.h.b16 %v653
      %v828 = vunpack.c.l.b16 %v654
      %v829 = vunpack.c.h.b16 %v654
      %v830 = vunpack.c.l.b16 %v655
      %v831 = vunpack.c.h.b16 %v655
      %v832 = vunpack.c.l.b16 %v656
      %v833 = vunpack.c.h.b16 %v656
      %v834 = vunpack.c.l.b16 %v657
      %v835 = vunpack.c.h.b16 %v657
      %v836 = vunpack.c.l.b16 %v658
      %v837 = vunpack.c.h.b16 %v658
      %v838 = vunpack.c.l.b16 %v659
      %v839 = vunpack.c.h.b16 %v659
      %v840 = vunpack.c.l.b16 %v660
      %v841 = vunpack.c.h.b16 %v660
      %v842 = vunpack.c.l.b16 %v661
      %v843 = vunpack.c.h.b16 %v661
      %v844 = vunpack.c.l.b16 %v662
      %v845 = vunpack.c.h.b16 %v662
      %v846 = vunpack.c.l.b16 %v663
      %v847 = vunpack.c.h.b16 %v663
      %v848 = vunpack.c.l.b16 %v664
      %v849 = vunpack.c.h.b16 %v664
      %v850 = vunpack.c.l.b16 %v665
      %v851 = vunpack.c.h.b16 %v665
      %v852 = vunpack.c.l.b16 %v666
      %v853 = vunpack.c.h.b16 %v666
      %v854 = vunpack.c.l.b16 %v667
      %v855 = vunpack.c.h.b16 %v667
      %v856 = vunpack.c.l.b16 %v668
      %v857 = vunpack.c.h.b16 %v668
      %v858 = vunpack.c.l.b16 %v669
      %v859 = vunpack.c.h.b16 %v669
      %v860 = vunpack.c.l.b16 %v670
      %v861 = vunpack.c.h.b16 %v670
      %v862 = vunpack.c.l.b16 %v671
      %v863 = vunpack.c.h.b16 %v671
      %v864 = vunpack.c.l.b16 %v672
      %v865 = vunpack.c.h.b16 %v672
      %v866 = vunpack.c.l.b16 %v673
      %v867 = vunpack.c.h.b16 %v673
      %v868 = vunpack.c.l.b16 %v674
      %v869 = vunpack.c.h.b16 %v674
      %v870 = vunpack.c.l.b16 %v675
      %v871 = vunpack.c.h.b16 %v675
      %v872 = vunpack.c.l.b16 %v676
      %v873 = vunpack.c.h.b16 %v676
      %v874 = vunpack.c.l.b16 %v677
      %v875 = vunpack.c.h.b16 %v677
      %v876 = vunpack.c.l.b16 %v678
      %v877 = vunpack.c.h.b16 %v678
      %v878 = vunpack.c.l.b16 %v679
      %v879 = vunpack.c.h.b16 %v679
      %v880 = vunpack.c.l.b16 %v680
      %v881 = vunpack.c.h.b16 %v680
      %v882 = vunpack.c.l.b16 %v681
      %v883 = vunpack.c.h.b16 %v681
      %v884 = vpack.c.b16 %v760, %v756
      %v885 = vpack.c.b16 %v761, %v757
      %v886 = vpack.c.b16 %v762, %v758
      %v887 = vpack.c.b16 %v763, %v759
      %v888 = vpack.c.b16 %v768, %v764
      %v889 = vpack.c.b16 %v769, %v765
      %v890 = vpack.c.b16 %v770, %v766
      %v891 = vpack.c.b16 %v771, %v767
      %v892 = vpack.c.b16 %v776, %v772
      %v893 = vpack.c.b16 %v777, %v773
      %v894 = vpack.c.b16 %v778, %v774
      %v895 = vpack.c.b16 %v779, %v775
      %v896 = vpack.c.b16 %v784, %v780
      %v897 = vpack.c.b16 %v785, %v781
      %v898 = vpack.c.b16 %v786, %v782
      %v899 = vpack.c.b16 %v787, %v783
      %v900 = vpack.c.b16 %v792, %v788
      %v901 = vpack.c.b16 %v793, %v789
      %v902 = vpack.c.b16 %v794, %v790
      %v903 = vpack.c.b16 %v795, %v791
      %v904 = vpack.c.b16 %v800, %v796
      %v905 = vpack.c.b16 %v801, %v797
      %v906 = vpack.c.b16 %v802, %v798
      %v907 = vpack.c.b16 %v803, %v799
      %v908 = vpack.c.b16 %v808, %v804
      %v909 = vpack.c.b16 %v809, %v805
      %v910 = vpack.c.b16 %v810, %v806
      %v911 = vpack.c.b16 %v811, %v807
      %v912 = vpack.c.b16 %v816, %v812
      %v913 = vpack.c.b16 %v817, %v813
      %v914 = vpack.c.b16 %v818, %v814
      %v915 = vpack.c.b16 %v819, %v815
      %v916 = vpack.c.b16 %v824, %v820
      %v917 = vpack.c.b16 %v825, %v821
      %v918 = vpack.c.b16 %v826, %v822
      %v919 = vpack.c.b16 %v827, %v823
      %v920 = vpack.c.b16 %v832, %v828
      %v921 = vpack.c.b16 %v833, %v829
      %v922 = vpack.c.b16 %v834, %v830
      %v923 = vpack.c.b16 %v835, %v831
      %v924 = vpack.c.b16 %v840, %v836
      %v925 = vpack.c.b16 %v841, %v837
      %v926 = vpack.c.b16 %v842, %v838
      %v927 = vpack.c.b16 %v843, %v839
      %v928 = vpack.c.b16 %v848, %v844
      %v929 = vpack.c.b16 %v849, %v845
      %v930 = vpack.c.b16 %v850, %v846
      %v931 = vpack.c.b16 %v851, %v847
      %v932 = vpack.c.b16 %v856, %v852
      %v933 = vpack.c.b16 %v857, %v853
      %v934 = vpack.c.b16 %v858, %v854
      %v935 = vpack.c.b16 %v859, %v855
      %v936 = vpack.c.b16 %v864, %v860
      %v937 = vpack.c.b16 %v865, %v861
      %v938 = vpack.c.b16 %v866, %v862
      %v939 = vpack.c.b16 %v867, %v863
      %v940 = vpack.c.b16 %v872, %v868
      %v941 = vpack.c.b16 %v873, %v869
      %v942 = vpack.c.b16 %v874, %v870
      %v943 = vpack.c.b16 %v875, %v871
      %v944 = vpack.c.b16 %v880, %v876
      %v945 = vpack.c.b16 %v881, %v877
      %v946 = vpack.c.b16 %v882, %v878
      %v947 = vpack.c.b16 %v883, %v879
      %1012 = vmatpush.bf16.msra.mxu0 %v912
      %1013 = vmatpush.bf16.msra.mxu0 %v908
      %1014 = vmatpush.bf16.msra.mxu0 %v904
      %1015 = vmatpush.bf16.msra.mxu0 %v900
      %1016 = vmatpush.bf16.msra.mxu0 %v896
      %1017 = vmatpush.bf16.msra.mxu0 %v892
      %1018 = vmatpush.bf16.msra.mxu0 %v888
      %1019 = vmatpush.bf16.msra.mxu0 %v884
      %1020 = vmatmul.bf16.gmra.mxu0 %v592
      %v1021 = vpop.f32.mrf.mxu0
      %v1022 = vadd.f32 %v684, %v1021
      %v1023 = vpop.f32.mrf.mxu0
      %v1024 = vadd.f32 %v684, %v1023
      %1025 = vmatmul.bf16.gmra.mxu0 %v594
      %v1026 = vpop.f32.mrf.mxu0
      %v1027 = vadd.f32 %v684, %v1026
      %v1028 = vpop.f32.mrf.mxu0
      %v1029 = vadd.f32 %v684, %v1028
      %1030 = vmatmul.bf16.gmra.mxu0 %v596
      %v1031 = vpop.f32.mrf.mxu0
      %v1032 = vadd.f32 %v684, %v1031
      %v1033 = vpop.f32.mrf.mxu0
      %v1034 = vadd.f32 %v684, %v1033
      %1035 = vmatmul.bf16.gmra.mxu0 %v598
      %v1036 = vpop.f32.mrf.mxu0
      %v1037 = vadd.f32 %v684, %v1036
      %v1038 = vpop.f32.mrf.mxu0
      %v1039 = vadd.f32 %v684, %v1038
      %1040 = vmatmul.bf16.gmra.mxu0 %v600
      %v1041 = vpop.f32.mrf.mxu0
      %v1042 = vadd.f32 %v684, %v1041
      %v1043 = vpop.f32.mrf.mxu0
      %v1044 = vadd.f32 %v684, %v1043
      %1045 = vmatmul.bf16.gmra.mxu0 %v602
      %v1046 = vpop.f32.mrf.mxu0
      %v1047 = vadd.f32 %v684, %v1046
      %v1048 = vpop.f32.mrf.mxu0
      %v1049 = vadd.f32 %v684, %v1048
      %1050 = vmatmul.bf16.gmra.mxu0 %v604
      %v1051 = vpop.f32.mrf.mxu0
      %v1052 = vadd.f32 %v684, %v1051
      %v1053 = vpop.f32.mrf.mxu0
      %v1054 = vadd.f32 %v684, %v1053
      %1055 = vmatmul.bf16.gmra.mxu0 %v606
      %v1056 = vpop.f32.mrf.mxu0
      %v1057 = vadd.f32 %v684, %v1056
      %v1058 = vpop.f32.mrf.mxu0
      %v1059 = vadd.f32 %v684, %v1058
      %1060 = vmatmul.bf16.gmra.mxu0 %v608
      %v1061 = vpop.f32.mrf.mxu0
      %v1062 = vadd.f32 %v684, %v1061
      %v1063 = vpop.f32.mrf.mxu0
      %v1064 = vadd.f32 %v684, %v1063
      %1065 = vmatmul.bf16.gmra.mxu0 %v610
      %v1066 = vpop.f32.mrf.mxu0
      %v1067 = vadd.f32 %v684, %v1066
      %v1068 = vpop.f32.mrf.mxu0
      %v1069 = vadd.f32 %v684, %v1068
      %1070 = vmatmul.bf16.gmra.mxu0 %v612
      %v1071 = vpop.f32.mrf.mxu0
      %v1072 = vadd.f32 %v684, %v1071
      %v1073 = vpop.f32.mrf.mxu0
      %v1074 = vadd.f32 %v684, %v1073
      %1075 = vmatmul.bf16.gmra.mxu0 %v614
      %v1076 = vpop.f32.mrf.mxu0
      %v1077 = vadd.f32 %v684, %v1076
      %v1078 = vpop.f32.mrf.mxu0
      %v1079 = vadd.f32 %v684, %v1078
      %1080 = vmatmul.bf16.gmra.mxu0 %v616
      %v1081 = vpop.f32.mrf.mxu0
      %v1082 = vadd.f32 %v684, %v1081
      %v1083 = vpop.f32.mrf.mxu0
      %1084 = vdwg.mxu0
      %1085 = vmatpush.bf16.msra.mxu0 %v944
      %1086 = vmatpush.bf16.msra.mxu0 %v940
      %1087 = vmatpush.bf16.msra.mxu0 %v936
      %1088 = vmatpush.bf16.msra.mxu0 %v932
      %1089 = vmatpush.bf16.msra.mxu0 %v928
      %1090 = vmatpush.bf16.msra.mxu0 %v924
      %1091 = vmatpush.bf16.msra.mxu0 %v920
      %1092 = vmatpush.bf16.msra.mxu0 %v916
      %1093 = vmatmul.bf16.gmra.mxu0 %v593
      %v1094 = vpop.f32.mrf.mxu0
      %v1095 = vadd.f32 %v1022, %v1094
      %v1096 = vpop.f32.mrf.mxu0
      %v1097 = vadd.f32 %v1024, %v1096
      %1098 = vmatmul.bf16.gmra.mxu0 %v595
      %v1099 = vpop.f32.mrf.mxu0
      %v1100 = vadd.f32 %v1027, %v1099
      %v1101 = vpop.f32.mrf.mxu0
      %v1102 = vadd.f32 %v1029, %v1101
      %1103 = vmatmul.bf16.gmra.mxu0 %v597
      %v1104 = vpop.f32.mrf.mxu0
      %v1105 = vadd.f32 %v1032, %v1104
      %v1106 = vpop.f32.mrf.mxu0
      %v1107 = vadd.f32 %v1034, %v1106
      %1108 = vmatmul.bf16.gmra.mxu0 %v599
      %v1109 = vpop.f32.mrf.mxu0
      %v1110 = vadd.f32 %v1037, %v1109
      %v1111 = vpop.f32.mrf.mxu0
      %v1112 = vadd.f32 %v1039, %v1111
      %1113 = vmatmul.bf16.gmra.mxu0 %v601
      %v1114 = vpop.f32.mrf.mxu0
      %v1115 = vadd.f32 %v1042, %v1114
      %v1116 = vpop.f32.mrf.mxu0
      %v1117 = vadd.f32 %v1044, %v1116
      %1118 = vmatmul.bf16.gmra.mxu0 %v603
      %v1119 = vpop.f32.mrf.mxu0
      %v1120 = vadd.f32 %v1047, %v1119
      %v1121 = vpop.f32.mrf.mxu0
      %v1122 = vadd.f32 %v1049, %v1121
      %1123 = vmatmul.bf16.gmra.mxu0 %v605
      %v1124 = vpop.f32.mrf.mxu0
      %v1125 = vadd.f32 %v1052, %v1124
      %v1126 = vpop.f32.mrf.mxu0
      %v1127 = vadd.f32 %v1054, %v1126
      %1128 = vmatmul.bf16.gmra.mxu0 %v607
      %v1129 = vpop.f32.mrf.mxu0
      %v1130 = vadd.f32 %v1057, %v1129
      %v1131 = vpop.f32.mrf.mxu0
      %v1132 = vadd.f32 %v1059, %v1131
      %1133 = vmatmul.bf16.gmra.mxu0 %v609
      %v1134 = vpop.f32.mrf.mxu0
      %v1135 = vadd.f32 %v1062, %v1134
      %v1136 = vpop.f32.mrf.mxu0
      %v1137 = vadd.f32 %v1064, %v1136
      %1138 = vmatmul.bf16.gmra.mxu0 %v611
      %v1139 = vpop.f32.mrf.mxu0
      %v1140 = vadd.f32 %v1067, %v1139
      %v1141 = vpop.f32.mrf.mxu0
      %v1142 = vadd.f32 %v1069, %v1141
      %1143 = vmatmul.bf16.gmra.mxu0 %v613
      %v1144 = vpop.f32.mrf.mxu0
      %v1145 = vadd.f32 %v1072, %v1144
      %v1146 = vpop.f32.mrf.mxu0
      %v1147 = vadd.f32 %v1074, %v1146
      %1148 = vmatmul.bf16.gmra.mxu0 %v615
      %v1149 = vpop.f32.mrf.mxu0
      %v1150 = vadd.f32 %v1077, %v1149
      %v1151 = vpop.f32.mrf.mxu0
      %v1152 = vadd.f32 %v1079, %v1151
      %1153 = vmatmul.bf16.gmra.mxu0 %v617
      %v1154 = vpop.f32.mrf.mxu0
      %v1155 = vadd.f32 %v1082, %v1154
      %v1156 = vpop.f32.mrf.mxu0
      %1157 = vdwg.mxu0
      %1158 = vmatpush.bf16.msra.mxu0 %v913
      %1159 = vmatpush.bf16.msra.mxu0 %v909
      %1160 = vmatpush.bf16.msra.mxu0 %v905
      %1161 = vmatpush.bf16.msra.mxu0 %v901
      %1162 = vmatpush.bf16.msra.mxu0 %v897
      %1163 = vmatpush.bf16.msra.mxu0 %v893
      %1164 = vmatpush.bf16.msra.mxu0 %v889
      %1165 = vmatpush.bf16.msra.mxu0 %v885
      %1166 = vmatmul.bf16.gmra.mxu0 %v592
      %v1167 = vpop.f32.mrf.mxu0
      %v1168 = vadd.f32 %v685, %v1167
      %v1169 = vpop.f32.mrf.mxu0
      %v1170 = vadd.f32 %v685, %v1169
      %1171 = vmatmul.bf16.gmra.mxu0 %v594
      %v1172 = vpop.f32.mrf.mxu0
      %v1173 = vadd.f32 %v685, %v1172
      %v1174 = vpop.f32.mrf.mxu0
      %v1175 = vadd.f32 %v685, %v1174
      %1176 = vmatmul.bf16.gmra.mxu0 %v596
      %v1177 = vpop.f32.mrf.mxu0
      %v1178 = vadd.f32 %v685, %v1177
      %v1179 = vpop.f32.mrf.mxu0
      %v1180 = vadd.f32 %v685, %v1179
      %1181 = vmatmul.bf16.gmra.mxu0 %v598
      %v1182 = vpop.f32.mrf.mxu0
      %v1183 = vadd.f32 %v685, %v1182
      %v1184 = vpop.f32.mrf.mxu0
      %v1185 = vadd.f32 %v685, %v1184
      %1186 = vmatmul.bf16.gmra.mxu0 %v600
      %v1187 = vpop.f32.mrf.mxu0
      %v1188 = vadd.f32 %v685, %v1187
      %v1189 = vpop.f32.mrf.mxu0
      %v1190 = vadd.f32 %v685, %v1189
      %1191 = vmatmul.bf16.gmra.mxu0 %v602
      %v1192 = vpop.f32.mrf.mxu0
      %v1193 = vadd.f32 %v685, %v1192
      %v1194 = vpop.f32.mrf.mxu0
      %v1195 = vadd.f32 %v685, %v1194
      %1196 = vmatmul.bf16.gmra.mxu0 %v604
      %v1197 = vpop.f32.mrf.mxu0
      %v1198 = vadd.f32 %v685, %v1197
      %v1199 = vpop.f32.mrf.mxu0
      %v1200 = vadd.f32 %v685, %v1199
      %1201 = vmatmul.bf16.gmra.mxu0 %v606
      %v1202 = vpop.f32.mrf.mxu0
      %v1203 = vadd.f32 %v685, %v1202
      %v1204 = vpop.f32.mrf.mxu0
      %v1205 = vadd.f32 %v685, %v1204
      %1206 = vmatmul.bf16.gmra.mxu0 %v608
      %v1207 = vpop.f32.mrf.mxu0
      %v1208 = vadd.f32 %v685, %v1207
      %v1209 = vpop.f32.mrf.mxu0
      %v1210 = vadd.f32 %v685, %v1209
      %1211 = vmatmul.bf16.gmra.mxu0 %v610
      %v1212 = vpop.f32.mrf.mxu0
      %v1213 = vadd.f32 %v685, %v1212
      %v1214 = vpop.f32.mrf.mxu0
      %v1215 = vadd.f32 %v685, %v1214
      %1216 = vmatmul.bf16.gmra.mxu0 %v612
      %v1217 = vpop.f32.mrf.mxu0
      %v1218 = vadd.f32 %v685, %v1217
      %v1219 = vpop.f32.mrf.mxu0
      %v1220 = vadd.f32 %v685, %v1219
      %1221 = vmatmul.bf16.gmra.mxu0 %v614
      %v1222 = vpop.f32.mrf.mxu0
      %v1223 = vadd.f32 %v685, %v1222
      %v1224 = vpop.f32.mrf.mxu0
      %v1225 = vadd.f32 %v685, %v1224
      %1226 = vmatmul.bf16.gmra.mxu0 %v616
      %v1227 = vpop.f32.mrf.mxu0
      %v1228 = vadd.f32 %v685, %v1227
      %v1229 = vpop.f32.mrf.mxu0
      %1230 = vdwg.mxu0
      %1231 = vmatpush.bf16.msra.mxu0 %v945
      %1232 = vmatpush.bf16.msra.mxu0 %v941
      %1233 = vmatpush.bf16.msra.mxu0 %v937
      %1234 = vmatpush.bf16.msra.mxu0 %v933
      %1235 = vmatpush.bf16.msra.mxu0 %v929
      %1236 = vmatpush.bf16.msra.mxu0 %v925
      %1237 = vmatpush.bf16.msra.mxu0 %v921
      %1238 = vmatpush.bf16.msra.mxu0 %v917
      %1239 = vmatmul.bf16.gmra.mxu0 %v593
      %v1240 = vpop.f32.mrf.mxu0
      %v1241 = vadd.f32 %v1168, %v1240
      %v1242 = vpop.f32.mrf.mxu0
      %v1243 = vadd.f32 %v1170, %v1242
      %1244 = vmatmul.bf16.gmra.mxu0 %v595
      %v1245 = vpop.f32.mrf.mxu0
      %v1246 = vadd.f32 %v1173, %v1245
      %v1247 = vpop.f32.mrf.mxu0
      %v1248 = vadd.f32 %v1175, %v1247
      %1249 = vmatmul.bf16.gmra.mxu0 %v597
      %v1250 = vpop.f32.mrf.mxu0
      %v1251 = vadd.f32 %v1178, %v1250
      %v1252 = vpop.f32.mrf.mxu0
      %v1253 = vadd.f32 %v1180, %v1252
      %1254 = vmatmul.bf16.gmra.mxu0 %v599
      %v1255 = vpop.f32.mrf.mxu0
      %v1256 = vadd.f32 %v1183, %v1255
      %v1257 = vpop.f32.mrf.mxu0
      %v1258 = vadd.f32 %v1185, %v1257
      %1259 = vmatmul.bf16.gmra.mxu0 %v601
      %v1260 = vpop.f32.mrf.mxu0
      %v1261 = vadd.f32 %v1188, %v1260
      %v1262 = vpop.f32.mrf.mxu0
      %v1263 = vadd.f32 %v1190, %v1262
      %1264 = vmatmul.bf16.gmra.mxu0 %v603
      %v1265 = vpop.f32.mrf.mxu0
      %v1266 = vadd.f32 %v1193, %v1265
      %v1267 = vpop.f32.mrf.mxu0
      %v1268 = vadd.f32 %v1195, %v1267
      %1269 = vmatmul.bf16.gmra.mxu0 %v605
      %v1270 = vpop.f32.mrf.mxu0
      %v1271 = vadd.f32 %v1198, %v1270
      %v1272 = vpop.f32.mrf.mxu0
      %v1273 = vadd.f32 %v1200, %v1272
      %1274 = vmatmul.bf16.gmra.mxu0 %v607
      %v1275 = vpop.f32.mrf.mxu0
      %v1276 = vadd.f32 %v1203, %v1275
      %v1277 = vpop.f32.mrf.mxu0
      %v1278 = vadd.f32 %v1205, %v1277
      %1279 = vmatmul.bf16.gmra.mxu0 %v609
      %v1280 = vpop.f32.mrf.mxu0
      %v1281 = vadd.f32 %v1208, %v1280
      %v1282 = vpop.f32.mrf.mxu0
      %v1283 = vadd.f32 %v1210, %v1282
      %1284 = vmatmul.bf16.gmra.mxu0 %v611
      %v1285 = vpop.f32.mrf.mxu0
      %v1286 = vadd.f32 %v1213, %v1285
      %v1287 = vpop.f32.mrf.mxu0
      %v1288 = vadd.f32 %v1215, %v1287
      %1289 = vmatmul.bf16.gmra.mxu0 %v613
      %v1290 = vpop.f32.mrf.mxu0
      %v1291 = vadd.f32 %v1218, %v1290
      %v1292 = vpop.f32.mrf.mxu0
      %v1293 = vadd.f32 %v1220, %v1292
      %1294 = vmatmul.bf16.gmra.mxu0 %v615
      %v1295 = vpop.f32.mrf.mxu0
      %v1296 = vadd.f32 %v1223, %v1295
      %v1297 = vpop.f32.mrf.mxu0
      %v1298 = vadd.f32 %v1225, %v1297
      %1299 = vmatmul.bf16.gmra.mxu0 %v617
      %v1300 = vpop.f32.mrf.mxu0
      %v1301 = vadd.f32 %v1228, %v1300
      %v1302 = vpop.f32.mrf.mxu0
      %1303 = vdwg.mxu0
      %1304 = vmatpush.bf16.msra.mxu0 %v914
      %1305 = vmatpush.bf16.msra.mxu0 %v910
      %1306 = vmatpush.bf16.msra.mxu0 %v906
      %1307 = vmatpush.bf16.msra.mxu0 %v902
      %1308 = vmatpush.bf16.msra.mxu0 %v898
      %1309 = vmatpush.bf16.msra.mxu0 %v894
      %1310 = vmatpush.bf16.msra.mxu0 %v890
      %1311 = vmatpush.bf16.msra.mxu0 %v886
      %1312 = vmatmul.bf16.gmra.mxu0 %v592
      %v1313 = vpop.f32.mrf.mxu0
      %v1314 = vadd.f32 %v686, %v1313
      %v1315 = vpop.f32.mrf.mxu0
      %v1316 = vadd.f32 %v686, %v1315
      %1317 = vmatmul.bf16.gmra.mxu0 %v594
      %v1318 = vpop.f32.mrf.mxu0
      %v1319 = vadd.f32 %v686, %v1318
      %v1320 = vpop.f32.mrf.mxu0
      %v1321 = vadd.f32 %v686, %v1320
      %1322 = vmatmul.bf16.gmra.mxu0 %v596
      %v1323 = vpop.f32.mrf.mxu0
      %v1324 = vadd.f32 %v686, %v1323
      %v1325 = vpop.f32.mrf.mxu0
      %v1326 = vadd.f32 %v686, %v1325
      %1327 = vmatmul.bf16.gmra.mxu0 %v598
      %v1328 = vpop.f32.mrf.mxu0
      %v1329 = vadd.f32 %v686, %v1328
      %v1330 = vpop.f32.mrf.mxu0
      %v1331 = vadd.f32 %v686, %v1330
      %1332 = vmatmul.bf16.gmra.mxu0 %v600
      %v1333 = vpop.f32.mrf.mxu0
      %v1334 = vadd.f32 %v686, %v1333
      %v1335 = vpop.f32.mrf.mxu0
      %v1336 = vadd.f32 %v686, %v1335
      %1337 = vmatmul.bf16.gmra.mxu0 %v602
      %v1338 = vpop.f32.mrf.mxu0
      %v1339 = vadd.f32 %v686, %v1338
      %v1340 = vpop.f32.mrf.mxu0
      %v1341 = vadd.f32 %v686, %v1340
      %1342 = vmatmul.bf16.gmra.mxu0 %v604
      %v1343 = vpop.f32.mrf.mxu0
      %v1344 = vadd.f32 %v686, %v1343
      %v1345 = vpop.f32.mrf.mxu0
      %v1346 = vadd.f32 %v686, %v1345
      %1347 = vmatmul.bf16.gmra.mxu0 %v606
      %v1348 = vpop.f32.mrf.mxu0
      %v1349 = vadd.f32 %v686, %v1348
      %v1350 = vpop.f32.mrf.mxu0
      %v1351 = vadd.f32 %v686, %v1350
      %1352 = vmatmul.bf16.gmra.mxu0 %v608
      %v1353 = vpop.f32.mrf.mxu0
      %v1354 = vadd.f32 %v686, %v1353
      %v1355 = vpop.f32.mrf.mxu0
      %v1356 = vadd.f32 %v686, %v1355
      %1357 = vmatmul.bf16.gmra.mxu0 %v610
      %v1358 = vpop.f32.mrf.mxu0
      %v1359 = vadd.f32 %v686, %v1358
      %v1360 = vpop.f32.mrf.mxu0
      %v1361 = vadd.f32 %v686, %v1360
      %1362 = vmatmul.bf16.gmra.mxu0 %v612
      %v1363 = vpop.f32.mrf.mxu0
      %v1364 = vadd.f32 %v686, %v1363
      %v1365 = vpop.f32.mrf.mxu0
      %v1366 = vadd.f32 %v686, %v1365
      %1367 = vmatmul.bf16.gmra.mxu0 %v614
      %v1368 = vpop.f32.mrf.mxu0
      %v1369 = vadd.f32 %v686, %v1368
      %v1370 = vpop.f32.mrf.mxu0
      %v1371 = vadd.f32 %v686, %v1370
      %1372 = vmatmul.bf16.gmra.mxu0 %v616
      %v1373 = vpop.f32.mrf.mxu0
      %v1374 = vadd.f32 %v686, %v1373
      %v1375 = vpop.f32.mrf.mxu0
      %1376 = vdwg.mxu0
      %1377 = vmatpush.bf16.msra.mxu0 %v946
      %1378 = vmatpush.bf16.msra.mxu0 %v942
      %1379 = vmatpush.bf16.msra.mxu0 %v938
      %1380 = vmatpush.bf16.msra.mxu0 %v934
      %1381 = vmatpush.bf16.msra.mxu0 %v930
      %1382 = vmatpush.bf16.msra.mxu0 %v926
      %1383 = vmatpush.bf16.msra.mxu0 %v922
      %1384 = vmatpush.bf16.msra.mxu0 %v918
      %1385 = vmatmul.bf16.gmra.mxu0 %v593
      %v1386 = vpop.f32.mrf.mxu0
      %v1387 = vadd.f32 %v1314, %v1386
      %v1388 = vpop.f32.mrf.mxu0
      %v1389 = vadd.f32 %v1316, %v1388
      %1390 = vmatmul.bf16.gmra.mxu0 %v595
      %v1391 = vpop.f32.mrf.mxu0
      %v1392 = vadd.f32 %v1319, %v1391
      %v1393 = vpop.f32.mrf.mxu0
      %v1394 = vadd.f32 %v1321, %v1393
      %1395 = vmatmul.bf16.gmra.mxu0 %v597
      %v1396 = vpop.f32.mrf.mxu0
      %v1397 = vadd.f32 %v1324, %v1396
      %v1398 = vpop.f32.mrf.mxu0
      %v1399 = vadd.f32 %v1326, %v1398
      %1400 = vmatmul.bf16.gmra.mxu0 %v599
      %v1401 = vpop.f32.mrf.mxu0
      %v1402 = vadd.f32 %v1329, %v1401
      %v1403 = vpop.f32.mrf.mxu0
      %v1404 = vadd.f32 %v1331, %v1403
      %1405 = vmatmul.bf16.gmra.mxu0 %v601
      %v1406 = vpop.f32.mrf.mxu0
      %v1407 = vadd.f32 %v1334, %v1406
      %v1408 = vpop.f32.mrf.mxu0
      %v1409 = vadd.f32 %v1336, %v1408
      %1410 = vmatmul.bf16.gmra.mxu0 %v603
      %v1411 = vpop.f32.mrf.mxu0
      %v1412 = vadd.f32 %v1339, %v1411
      %v1413 = vpop.f32.mrf.mxu0
      %v1414 = vadd.f32 %v1341, %v1413
      %1415 = vmatmul.bf16.gmra.mxu0 %v605
      %v1416 = vpop.f32.mrf.mxu0
      %v1417 = vadd.f32 %v1344, %v1416
      %v1418 = vpop.f32.mrf.mxu0
      %v1419 = vadd.f32 %v1346, %v1418
      %1420 = vmatmul.bf16.gmra.mxu0 %v607
      %v1421 = vpop.f32.mrf.mxu0
      %v1422 = vadd.f32 %v1349, %v1421
      %v1423 = vpop.f32.mrf.mxu0
      %v1424 = vadd.f32 %v1351, %v1423
      %1425 = vmatmul.bf16.gmra.mxu0 %v609
      %v1426 = vpop.f32.mrf.mxu0
      %v1427 = vadd.f32 %v1354, %v1426
      %v1428 = vpop.f32.mrf.mxu0
      %v1429 = vadd.f32 %v1356, %v1428
      %1430 = vmatmul.bf16.gmra.mxu0 %v611
      %v1431 = vpop.f32.mrf.mxu0
      %v1432 = vadd.f32 %v1359, %v1431
      %v1433 = vpop.f32.mrf.mxu0
      %v1434 = vadd.f32 %v1361, %v1433
      %1435 = vmatmul.bf16.gmra.mxu0 %v613
      %v1436 = vpop.f32.mrf.mxu0
      %v1437 = vadd.f32 %v1364, %v1436
      %v1438 = vpop.f32.mrf.mxu0
      %v1439 = vadd.f32 %v1366, %v1438
      %1440 = vmatmul.bf16.gmra.mxu0 %v615
      %v1441 = vpop.f32.mrf.mxu0
      %v1442 = vadd.f32 %v1369, %v1441
      %v1443 = vpop.f32.mrf.mxu0
      %v1444 = vadd.f32 %v1371, %v1443
      %1445 = vmatmul.bf16.gmra.mxu0 %v617
      %v1446 = vpop.f32.mrf.mxu0
      %v1447 = vadd.f32 %v1374, %v1446
      %v1448 = vpop.f32.mrf.mxu0
      %1449 = vdwg.mxu0
      %1450 = vmatpush.bf16.msra.mxu0 %v915
      %1451 = vmatpush.bf16.msra.mxu0 %v911
      %1452 = vmatpush.bf16.msra.mxu0 %v907
      %1453 = vmatpush.bf16.msra.mxu0 %v903
      %1454 = vmatpush.bf16.msra.mxu0 %v899
      %1455 = vmatpush.bf16.msra.mxu0 %v895
      %1456 = vmatpush.bf16.msra.mxu0 %v891
      %1457 = vmatpush.bf16.msra.mxu0 %v887
      %1458 = vmatmul.bf16.gmra.mxu0 %v592
      %v1459 = vpop.f32.mrf.mxu0
      %v1460 = vadd.f32 %v687, %v1459
      %v1461 = vpop.f32.mrf.mxu0
      %v1462 = vadd.f32 %v687, %v1461
      %1463 = vmatmul.bf16.gmra.mxu0 %v594
      %v1464 = vpop.f32.mrf.mxu0
      %v1465 = vadd.f32 %v687, %v1464
      %v1466 = vpop.f32.mrf.mxu0
      %v1467 = vadd.f32 %v687, %v1466
      %1468 = vmatmul.bf16.gmra.mxu0 %v596
      %v1469 = vpop.f32.mrf.mxu0
      %v1470 = vadd.f32 %v687, %v1469
      %v1471 = vpop.f32.mrf.mxu0
      %v1472 = vadd.f32 %v687, %v1471
      %1473 = vmatmul.bf16.gmra.mxu0 %v598
      %v1474 = vpop.f32.mrf.mxu0
      %v1475 = vadd.f32 %v687, %v1474
      %v1476 = vpop.f32.mrf.mxu0
      %v1477 = vadd.f32 %v687, %v1476
      %1478 = vmatmul.bf16.gmra.mxu0 %v600
      %v1479 = vpop.f32.mrf.mxu0
      %v1480 = vadd.f32 %v687, %v1479
      %v1481 = vpop.f32.mrf.mxu0
      %v1482 = vadd.f32 %v687, %v1481
      %1483 = vmatmul.bf16.gmra.mxu0 %v602
      %v1484 = vpop.f32.mrf.mxu0
      %v1485 = vadd.f32 %v687, %v1484
      %v1486 = vpop.f32.mrf.mxu0
      %v1487 = vadd.f32 %v687, %v1486
      %1488 = vmatmul.bf16.gmra.mxu0 %v604
      %v1489 = vpop.f32.mrf.mxu0
      %v1490 = vadd.f32 %v687, %v1489
      %v1491 = vpop.f32.mrf.mxu0
      %v1492 = vadd.f32 %v687, %v1491
      %1493 = vmatmul.bf16.gmra.mxu0 %v606
      %v1494 = vpop.f32.mrf.mxu0
      %v1495 = vadd.f32 %v687, %v1494
      %v1496 = vpop.f32.mrf.mxu0
      %v1497 = vadd.f32 %v687, %v1496
      %1498 = vmatmul.bf16.gmra.mxu0 %v608
      %v1499 = vpop.f32.mrf.mxu0
      %v1500 = vadd.f32 %v687, %v1499
      %v1501 = vpop.f32.mrf.mxu0
      %v1502 = vadd.f32 %v687, %v1501
      %1503 = vmatmul.bf16.gmra.mxu0 %v610
      %v1504 = vpop.f32.mrf.mxu0
      %v1505 = vadd.f32 %v687, %v1504
      %v1506 = vpop.f32.mrf.mxu0
      %v1507 = vadd.f32 %v687, %v1506
      %1508 = vmatmul.bf16.gmra.mxu0 %v612
      %v1509 = vpop.f32.mrf.mxu0
      %v1510 = vadd.f32 %v687, %v1509
      %v1511 = vpop.f32.mrf.mxu0
      %v1512 = vadd.f32 %v687, %v1511
      %1513 = vmatmul.bf16.gmra.mxu0 %v614
      %v1514 = vpop.f32.mrf.mxu0
      %v1515 = vadd.f32 %v687, %v1514
      %v1516 = vpop.f32.mrf.mxu0
      %v1517 = vadd.f32 %v687, %v1516
      %1518 = vmatmul.bf16.gmra.mxu0 %v616
      %v1519 = vpop.f32.mrf.mxu0
      %v1520 = vadd.f32 %v687, %v1519
      %v1521 = vpop.f32.mrf.mxu0
      %1522 = vdwg.mxu0
      %1523 = vmatpush.bf16.msra.mxu0 %v947
      %1524 = vmatpush.bf16.msra.mxu0 %v943
      %1525 = vmatpush.bf16.msra.mxu0 %v939
      %1526 = vmatpush.bf16.msra.mxu0 %v935
      %1527 = vmatpush.bf16.msra.mxu0 %v931
      %1528 = vmatpush.bf16.msra.mxu0 %v927
      %1529 = vmatpush.bf16.msra.mxu0 %v923
      %1530 = vmatpush.bf16.msra.mxu0 %v919
      %1531 = vmatmul.bf16.gmra.mxu0 %v593
      %v1532 = vpop.f32.mrf.mxu0
      %v1533 = vadd.f32 %v1460, %v1532
      %v1534 = vpop.f32.mrf.mxu0
      %v1535 = vadd.f32 %v1462, %v1534
      %1536 = vmatmul.bf16.gmra.mxu0 %v595
      %v1537 = vpop.f32.mrf.mxu0
      %v1538 = vadd.f32 %v1465, %v1537
      %v1539 = vpop.f32.mrf.mxu0
      %v1540 = vadd.f32 %v1467, %v1539
      %1541 = vmatmul.bf16.gmra.mxu0 %v597
      %v1542 = vpop.f32.mrf.mxu0
      %v1543 = vadd.f32 %v1470, %v1542
      %v1544 = vpop.f32.mrf.mxu0
      %v1545 = vadd.f32 %v1472, %v1544
      %1546 = vmatmul.bf16.gmra.mxu0 %v599
      %v1547 = vpop.f32.mrf.mxu0
      %v1548 = vadd.f32 %v1475, %v1547
      %v1549 = vpop.f32.mrf.mxu0
      %v1550 = vadd.f32 %v1477, %v1549
      %1551 = vmatmul.bf16.gmra.mxu0 %v601
      %v1552 = vpop.f32.mrf.mxu0
      %v1553 = vadd.f32 %v1480, %v1552
      %v1554 = vpop.f32.mrf.mxu0
      %v1555 = vadd.f32 %v1482, %v1554
      %1556 = vmatmul.bf16.gmra.mxu0 %v603
      %v1557 = vpop.f32.mrf.mxu0
      %v1558 = vadd.f32 %v1485, %v1557
      %v1559 = vpop.f32.mrf.mxu0
      %v1560 = vadd.f32 %v1487, %v1559
      %1561 = vmatmul.bf16.gmra.mxu0 %v605
      %v1562 = vpop.f32.mrf.mxu0
      %v1563 = vadd.f32 %v1490, %v1562
      %v1564 = vpop.f32.mrf.mxu0
      %v1565 = vadd.f32 %v1492, %v1564
      %1566 = vmatmul.bf16.gmra.mxu0 %v607
      %v1567 = vpop.f32.mrf.mxu0
      %v1568 = vadd.f32 %v1495, %v1567
      %v1569 = vpop.f32.mrf.mxu0
      %v1570 = vadd.f32 %v1497, %v1569
      %1571 = vmatmul.bf16.gmra.mxu0 %v609
      %v1572 = vpop.f32.mrf.mxu0
      %v1573 = vadd.f32 %v1500, %v1572
      %v1574 = vpop.f32.mrf.mxu0
      %v1575 = vadd.f32 %v1502, %v1574
      %1576 = vmatmul.bf16.gmra.mxu0 %v611
      %v1577 = vpop.f32.mrf.mxu0
      %v1578 = vadd.f32 %v1505, %v1577
      %v1579 = vpop.f32.mrf.mxu0
      %v1580 = vadd.f32 %v1507, %v1579
      %1581 = vmatmul.bf16.gmra.mxu0 %v613
      %v1582 = vpop.f32.mrf.mxu0
      %v1583 = vadd.f32 %v1510, %v1582
      %v1584 = vpop.f32.mrf.mxu0
      %v1585 = vadd.f32 %v1512, %v1584
      %1586 = vmatmul.bf16.gmra.mxu0 %v615
      %v1587 = vpop.f32.mrf.mxu0
      %v1588 = vadd.f32 %v1515, %v1587
      %v1589 = vpop.f32.mrf.mxu0
      %v1590 = vadd.f32 %v1517, %v1589
      %1591 = vmatmul.bf16.gmra.mxu0 %v617
      %v1592 = vpop.f32.mrf.mxu0
      %v1593 = vadd.f32 %v1520, %v1592
      %v1594 = vpop.f32.mrf.mxu0
      %1595 = vdwg.mxu0
      %vm1596 = vcmp.ge.f32.partialorder %v1095, 0.0
      %vm1597 = vcmp.ge.f32.partialorder %v1241, 0.0
      %vm1598 = vcmp.ge.f32.partialorder %v1387, 0.0
      %vm1599 = vcmp.ge.f32.partialorder %v1533, 0.0
      %vm1600 = vcmp.ge.f32.partialorder %v1097, 0.0
      %vm1601 = vcmp.ge.f32.partialorder %v1243, 0.0
      %vm1602 = vcmp.ge.f32.partialorder %v1389, 0.0
      %vm1603 = vcmp.ge.f32.partialorder %v1535, 0.0
      %vm1604 = vcmp.ge.f32.partialorder %v1100, 0.0
      %vm1605 = vcmp.ge.f32.partialorder %v1246, 0.0
      %vm1606 = vcmp.ge.f32.partialorder %v1392, 0.0
      %vm1607 = vcmp.ge.f32.partialorder %v1538, 0.0
      %vm1608 = vcmp.ge.f32.partialorder %v1102, 0.0
      %vm1609 = vcmp.ge.f32.partialorder %v1248, 0.0
      %vm1610 = vcmp.ge.f32.partialorder %v1394, 0.0
      %vm1611 = vcmp.ge.f32.partialorder %v1540, 0.0
      %vm1612 = vcmp.ge.f32.partialorder %v1105, 0.0
      %vm1613 = vcmp.ge.f32.partialorder %v1251, 0.0
      %vm1614 = vcmp.ge.f32.partialorder %v1397, 0.0
      %vm1615 = vcmp.ge.f32.partialorder %v1543, 0.0
      %vm1616 = vcmp.ge.f32.partialorder %v1107, 0.0
      %vm1617 = vcmp.ge.f32.partialorder %v1253, 0.0
      %vm1618 = vcmp.ge.f32.partialorder %v1399, 0.0
      %vm1619 = vcmp.ge.f32.partialorder %v1545, 0.0
      %vm1620 = vcmp.ge.f32.partialorder %v1110, 0.0
      %vm1621 = vcmp.ge.f32.partialorder %v1256, 0.0
      %vm1622 = vcmp.ge.f32.partialorder %v1402, 0.0
      %vm1623 = vcmp.ge.f32.partialorder %v1548, 0.0
      %vm1624 = vcmp.ge.f32.partialorder %v1112, 0.0
      %vm1625 = vcmp.ge.f32.partialorder %v1258, 0.0
      %vm1626 = vcmp.ge.f32.partialorder %v1404, 0.0
      %vm1627 = vcmp.ge.f32.partialorder %v1550, 0.0
      %vm1628 = vcmp.ge.f32.partialorder %v1115, 0.0
      %vm1629 = vcmp.ge.f32.partialorder %v1261, 0.0
      %vm1630 = vcmp.ge.f32.partialorder %v1407, 0.0
      %vm1631 = vcmp.ge.f32.partialorder %v1553, 0.0
      %vm1632 = vcmp.ge.f32.partialorder %v1117, 0.0
      %vm1633 = vcmp.ge.f32.partialorder %v1263, 0.0
      %vm1634 = vcmp.ge.f32.partialorder %v1409, 0.0
      %vm1635 = vcmp.ge.f32.partialorder %v1555, 0.0
      %vm1636 = vcmp.ge.f32.partialorder %v1120, 0.0
      %vm1637 = vcmp.ge.f32.partialorder %v1266, 0.0
      %vm1638 = vcmp.ge.f32.partialorder %v1412, 0.0
      %vm1639 = vcmp.ge.f32.partialorder %v1558, 0.0
      %vm1640 = vcmp.ge.f32.partialorder %v1122, 0.0
      %vm1641 = vcmp.ge.f32.partialorder %v1268, 0.0
      %vm1642 = vcmp.ge.f32.partialorder %v1414, 0.0
      %vm1643 = vcmp.ge.f32.partialorder %v1560, 0.0
      %vm1644 = vcmp.ge.f32.partialorder %v1125, 0.0
      %vm1645 = vcmp.ge.f32.partialorder %v1271, 0.0
      %vm1646 = vcmp.ge.f32.partialorder %v1417, 0.0
      %vm1647 = vcmp.ge.f32.partialorder %v1563, 0.0
      %vm1648 = vcmp.ge.f32.partialorder %v1127, 0.0
      %vm1649 = vcmp.ge.f32.partialorder %v1273, 0.0
      %vm1650 = vcmp.ge.f32.partialorder %v1419, 0.0
      %vm1651 = vcmp.ge.f32.partialorder %v1565, 0.0
      %vm1652 = vcmp.ge.f32.partialorder %v1130, 0.0
      %vm1653 = vcmp.ge.f32.partialorder %v1276, 0.0
      %vm1654 = vcmp.ge.f32.partialorder %v1422, 0.0
      %vm1655 = vcmp.ge.f32.partialorder %v1568, 0.0
      %vm1656 = vcmp.ge.f32.partialorder %v1132, 0.0
      %vm1657 = vcmp.ge.f32.partialorder %v1278, 0.0
      %vm1658 = vcmp.ge.f32.partialorder %v1424, 0.0
      %vm1659 = vcmp.ge.f32.partialorder %v1570, 0.0
      %vm1660 = vcmp.ge.f32.partialorder %v1135, 0.0
      %vm1661 = vcmp.ge.f32.partialorder %v1281, 0.0
      %vm1662 = vcmp.ge.f32.partialorder %v1427, 0.0
      %vm1663 = vcmp.ge.f32.partialorder %v1573, 0.0
      %vm1664 = vcmp.ge.f32.partialorder %v1137, 0.0
      %vm1665 = vcmp.ge.f32.partialorder %v1283, 0.0
      %vm1666 = vcmp.ge.f32.partialorder %v1429, 0.0
      %vm1667 = vcmp.ge.f32.partialorder %v1575, 0.0
      %vm1668 = vcmp.ge.f32.partialorder %v1140, 0.0
      %vm1669 = vcmp.ge.f32.partialorder %v1286, 0.0
      %vm1670 = vcmp.ge.f32.partialorder %v1432, 0.0
      %vm1671 = vcmp.ge.f32.partialorder %v1578, 0.0
      %vm1672 = vcmp.ge.f32.partialorder %v1142, 0.0
      %vm1673 = vcmp.ge.f32.partialorder %v1288, 0.0
      %vm1674 = vcmp.ge.f32.partialorder %v1434, 0.0
      %vm1675 = vcmp.ge.f32.partialorder %v1580, 0.0
      %vm1676 = vcmp.ge.f32.partialorder %v1145, 0.0
      %vm1677 = vcmp.ge.f32.partialorder %v1291, 0.0
      %vm1678 = vcmp.ge.f32.partialorder %v1437, 0.0
      %vm1679 = vcmp.ge.f32.partialorder %v1583, 0.0
      %vm1680 = vcmp.ge.f32.partialorder %v1147, 0.0
      %vm1681 = vcmp.ge.f32.partialorder %v1293, 0.0
      %vm1682 = vcmp.ge.f32.partialorder %v1439, 0.0
      %vm1683 = vcmp.ge.f32.partialorder %v1585, 0.0
      %vm1684 = vcmp.ge.f32.partialorder %v1150, 0.0
      %vm1685 = vcmp.ge.f32.partialorder %v1296, 0.0
      %vm1686 = vcmp.ge.f32.partialorder %v1442, 0.0
      %vm1687 = vcmp.ge.f32.partialorder %v1588, 0.0
      %vm1688 = vcmp.ge.f32.partialorder %v1152, 0.0
      %vm1689 = vcmp.ge.f32.partialorder %v1298, 0.0
      %vm1690 = vcmp.ge.f32.partialorder %v1444, 0.0
      %vm1691 = vcmp.ge.f32.partialorder %v1590, 0.0
      %vm1692 = vcmp.ge.f32.partialorder %v1155, 0.0
      %vm1693 = vcmp.ge.f32.partialorder %v1301, 0.0
      %vm1694 = vcmp.ge.f32.partialorder %v1447, 0.0
      %vm1695 = vcmp.ge.f32.partialorder %v1593, 0.0
      %v1696 = vmul.f32 %v1095, 0.01
      %v1697 = vmul.f32 %v1241, 0.01
      %v1698 = vmul.f32 %v1387, 0.01
      %v1699 = vmul.f32 %v1533, 0.01
      %v1700 = vmul.f32 %v1097, 0.01
      %v1701 = vmul.f32 %v1243, 0.01
      %v1702 = vmul.f32 %v1389, 0.01
      %v1703 = vmul.f32 %v1535, 0.01
      %v1704 = vmul.f32 %v1100, 0.01
      %v1705 = vmul.f32 %v1246, 0.01
      %v1706 = vmul.f32 %v1392, 0.01
      %v1707 = vmul.f32 %v1538, 0.01
      %v1708 = vmul.f32 %v1102, 0.01
      %v1709 = vmul.f32 %v1248, 0.01
      %v1710 = vmul.f32 %v1394, 0.01
      %v1711 = vmul.f32 %v1540, 0.01
      %v1712 = vmul.f32 %v1105, 0.01
      %v1713 = vmul.f32 %v1251, 0.01
      %v1714 = vmul.f32 %v1397, 0.01
      %v1715 = vmul.f32 %v1543, 0.01
      %v1716 = vmul.f32 %v1107, 0.01
      %v1717 = vmul.f32 %v1253, 0.01
      %v1718 = vmul.f32 %v1399, 0.01
      %v1719 = vmul.f32 %v1545, 0.01
      %v1720 = vmul.f32 %v1110, 0.01
      %v1721 = vmul.f32 %v1256, 0.01
      %v1722 = vmul.f32 %v1402, 0.01
      %v1723 = vmul.f32 %v1548, 0.01
      %v1724 = vmul.f32 %v1112, 0.01
      %v1725 = vmul.f32 %v1258, 0.01
      %v1726 = vmul.f32 %v1404, 0.01
      %v1727 = vmul.f32 %v1550, 0.01
      %v1728 = vmul.f32 %v1115, 0.01
      %v1729 = vmul.f32 %v1261, 0.01
      %v1730 = vmul.f32 %v1407, 0.01
      %v1731 = vmul.f32 %v1553, 0.01
      %v1732 = vmul.f32 %v1117, 0.01
      %v1733 = vmul.f32 %v1263, 0.01
      %v1734 = vmul.f32 %v1409, 0.01
      %v1735 = vmul.f32 %v1555, 0.01
      %v1736 = vmul.f32 %v1120, 0.01
      %v1737 = vmul.f32 %v1266, 0.01
      %v1738 = vmul.f32 %v1412, 0.01
      %v1739 = vmul.f32 %v1558, 0.01
      %v1740 = vmul.f32 %v1122, 0.01
      %v1741 = vmul.f32 %v1268, 0.01
      %v1742 = vmul.f32 %v1414, 0.01
      %v1743 = vmul.f32 %v1560, 0.01
      %v1744 = vmul.f32 %v1125, 0.01
      %v1745 = vmul.f32 %v1271, 0.01
      %v1746 = vmul.f32 %v1417, 0.01
      %v1747 = vmul.f32 %v1563, 0.01
      %v1748 = vmul.f32 %v1127, 0.01
      %v1749 = vmul.f32 %v1273, 0.01
      %v1750 = vmul.f32 %v1419, 0.01
      %v1751 = vmul.f32 %v1565, 0.01
      %v1752 = vmul.f32 %v1130, 0.01
      %v1753 = vmul.f32 %v1276, 0.01
      %v1754 = vmul.f32 %v1422, 0.01
      %v1755 = vmul.f32 %v1568, 0.01
      %v1756 = vmul.f32 %v1132, 0.01
      %v1757 = vmul.f32 %v1278, 0.01
      %v1758 = vmul.f32 %v1424, 0.01
      %v1759 = vmul.f32 %v1570, 0.01
      %v1760 = vmul.f32 %v1135, 0.01
      %v1761 = vmul.f32 %v1281, 0.01
      %v1762 = vmul.f32 %v1427, 0.01
      %v1763 = vmul.f32 %v1573, 0.01
      %v1764 = vmul.f32 %v1137, 0.01
      %v1765 = vmul.f32 %v1283, 0.01
      %v1766 = vmul.f32 %v1429, 0.01
      %v1767 = vmul.f32 %v1575, 0.01
      %v1768 = vmul.f32 %v1140, 0.01
      %v1769 = vmul.f32 %v1286, 0.01
      %v1770 = vmul.f32 %v1432, 0.01
      %v1771 = vmul.f32 %v1578, 0.01
      %v1772 = vmul.f32 %v1142, 0.01
      %v1773 = vmul.f32 %v1288, 0.01
      %v1774 = vmul.f32 %v1434, 0.01
      %v1775 = vmul.f32 %v1580, 0.01
      %v1776 = vmul.f32 %v1145, 0.01
      %v1777 = vmul.f32 %v1291, 0.01
      %v1778 = vmul.f32 %v1437, 0.01
      %v1779 = vmul.f32 %v1583, 0.01
      %v1780 = vmul.f32 %v1147, 0.01
      %v1781 = vmul.f32 %v1293, 0.01
      %v1782 = vmul.f32 %v1439, 0.01
      %v1783 = vmul.f32 %v1585, 0.01
      %v1784 = vmul.f32 %v1150, 0.01
      %v1785 = vmul.f32 %v1296, 0.01
      %v1786 = vmul.f32 %v1442, 0.01
      %v1787 = vmul.f32 %v1588, 0.01
      %v1788 = vmul.f32 %v1152, 0.01
      %v1789 = vmul.f32 %v1298, 0.01
      %v1790 = vmul.f32 %v1444, 0.01
      %v1791 = vmul.f32 %v1590, 0.01
      %v1792 = vmul.f32 %v1155, 0.01
      %v1793 = vmul.f32 %v1301, 0.01
      %v1794 = vmul.f32 %v1447, 0.01
      %v1795 = vmul.f32 %v1593, 0.01
      %v1796 = vsel %vm1596, %v1095, %v1696
      %v1797 = vsel %vm1597, %v1241, %v1697
      %v1798 = vsel %vm1598, %v1387, %v1698
      %v1799 = vsel %vm1599, %v1533, %v1699
      %v1800 = vsel %vm1600, %v1097, %v1700
      %v1801 = vsel %vm1601, %v1243, %v1701
      %v1802 = vsel %vm1602, %v1389, %v1702
      %v1803 = vsel %vm1603, %v1535, %v1703
      %v1804 = vsel %vm1604, %v1100, %v1704
      %v1805 = vsel %vm1605, %v1246, %v1705
      %v1806 = vsel %vm1606, %v1392, %v1706
      %v1807 = vsel %vm1607, %v1538, %v1707
      %v1808 = vsel %vm1608, %v1102, %v1708
      %v1809 = vsel %vm1609, %v1248, %v1709
      %v1810 = vsel %vm1610, %v1394, %v1710
      %v1811 = vsel %vm1611, %v1540, %v1711
      %v1812 = vsel %vm1612, %v1105, %v1712
      %v1813 = vsel %vm1613, %v1251, %v1713
      %v1814 = vsel %vm1614, %v1397, %v1714
      %v1815 = vsel %vm1615, %v1543, %v1715
      %v1816 = vsel %vm1616, %v1107, %v1716
      %v1817 = vsel %vm1617, %v1253, %v1717
      %v1818 = vsel %vm1618, %v1399, %v1718
      %v1819 = vsel %vm1619, %v1545, %v1719
      %v1820 = vsel %vm1620, %v1110, %v1720
      %v1821 = vsel %vm1621, %v1256, %v1721
      %v1822 = vsel %vm1622, %v1402, %v1722
      %v1823 = vsel %vm1623, %v1548, %v1723
      %v1824 = vsel %vm1624, %v1112, %v1724
      %v1825 = vsel %vm1625, %v1258, %v1725
      %v1826 = vsel %vm1626, %v1404, %v1726
      %v1827 = vsel %vm1627, %v1550, %v1727
      %v1828 = vsel %vm1628, %v1115, %v1728
      %v1829 = vsel %vm1629, %v1261, %v1729
      %v1830 = vsel %vm1630, %v1407, %v1730
      %v1831 = vsel %vm1631, %v1553, %v1731
      %v1832 = vsel %vm1632, %v1117, %v1732
      %v1833 = vsel %vm1633, %v1263, %v1733
      %v1834 = vsel %vm1634, %v1409, %v1734
      %v1835 = vsel %vm1635, %v1555, %v1735
      %v1836 = vsel %vm1636, %v1120, %v1736
      %v1837 = vsel %vm1637, %v1266, %v1737
      %v1838 = vsel %vm1638, %v1412, %v1738
      %v1839 = vsel %vm1639, %v1558, %v1739
      %v1840 = vsel %vm1640, %v1122, %v1740
      %v1841 = vsel %vm1641, %v1268, %v1741
      %v1842 = vsel %vm1642, %v1414, %v1742
      %v1843 = vsel %vm1643, %v1560, %v1743
      %v1844 = vsel %vm1644, %v1125, %v1744
      %v1845 = vsel %vm1645, %v1271, %v1745
      %v1846 = vsel %vm1646, %v1417, %v1746
      %v1847 = vsel %vm1647, %v1563, %v1747
      %v1848 = vsel %vm1648, %v1127, %v1748
      %v1849 = vsel %vm1649, %v1273, %v1749
      %v1850 = vsel %vm1650, %v1419, %v1750
      %v1851 = vsel %vm1651, %v1565, %v1751
      %v1852 = vsel %vm1652, %v1130, %v1752
      %v1853 = vsel %vm1653, %v1276, %v1753
      %v1854 = vsel %vm1654, %v1422, %v1754
      %v1855 = vsel %vm1655, %v1568, %v1755
      %v1856 = vsel %vm1656, %v1132, %v1756
      %v1857 = vsel %vm1657, %v1278, %v1757
      %v1858 = vsel %vm1658, %v1424, %v1758
      %v1859 = vsel %vm1659, %v1570, %v1759
      %v1860 = vsel %vm1660, %v1135, %v1760
      %v1861 = vsel %vm1661, %v1281, %v1761
      %v1862 = vsel %vm1662, %v1427, %v1762
      %v1863 = vsel %vm1663, %v1573, %v1763
      %v1864 = vsel %vm1664, %v1137, %v1764
      %v1865 = vsel %vm1665, %v1283, %v1765
      %v1866 = vsel %vm1666, %v1429, %v1766
      %v1867 = vsel %vm1667, %v1575, %v1767
      %v1868 = vsel %vm1668, %v1140, %v1768
      %v1869 = vsel %vm1669, %v1286, %v1769
      %v1870 = vsel %vm1670, %v1432, %v1770
      %v1871 = vsel %vm1671, %v1578, %v1771
      %v1872 = vsel %vm1672, %v1142, %v1772
      %v1873 = vsel %vm1673, %v1288, %v1773
      %v1874 = vsel %vm1674, %v1434, %v1774
      %v1875 = vsel %vm1675, %v1580, %v1775
      %v1876 = vsel %vm1676, %v1145, %v1776
      %v1877 = vsel %vm1677, %v1291, %v1777
      %v1878 = vsel %vm1678, %v1437, %v1778
      %v1879 = vsel %vm1679, %v1583, %v1779
      %v1880 = vsel %vm1680, %v1147, %v1780
      %v1881 = vsel %vm1681, %v1293, %v1781
      %v1882 = vsel %vm1682, %v1439, %v1782
      %v1883 = vsel %vm1683, %v1585, %v1783
      %v1884 = vsel %vm1684, %v1150, %v1784
      %v1885 = vsel %vm1685, %v1296, %v1785
      %v1886 = vsel %vm1686, %v1442, %v1786
      %v1887 = vsel %vm1687, %v1588, %v1787
      %v1888 = vsel %vm1688, %v1152, %v1788
      %v1889 = vsel %vm1689, %v1298, %v1789
      %v1890 = vsel %vm1690, %v1444, %v1790
      %v1891 = vsel %vm1691, %v1590, %v1791
      %v1892 = vsel %vm1692, %v1155, %v1792
      %v1893 = vsel %vm1693, %v1301, %v1793
      %v1894 = vsel %vm1694, %v1447, %v1794
      %v1895 = vsel %vm1695, %v1593, %v1795
      %v1896 = vpack.c.bf16 %v1797, %v1796
      %v1897 = vpack.c.bf16 %v1799, %v1798
      %v1898 = vpack.c.bf16 %v1801, %v1800
      %v1899 = vpack.c.bf16 %v1803, %v1802
      %v1900 = vpack.c.bf16 %v1805, %v1804
      %v1901 = vpack.c.bf16 %v1807, %v1806
      %v1902 = vpack.c.bf16 %v1809, %v1808
      %v1903 = vpack.c.bf16 %v1811, %v1810
      %v1904 = vpack.c.bf16 %v1813, %v1812
      %v1905 = vpack.c.bf16 %v1815, %v1814
      %v1906 = vpack.c.bf16 %v1817, %v1816
      %v1907 = vpack.c.bf16 %v1819, %v1818
      %v1908 = vpack.c.bf16 %v1821, %v1820
      %v1909 = vpack.c.bf16 %v1823, %v1822
      %v1910 = vpack.c.bf16 %v1825, %v1824
      %v1911 = vpack.c.bf16 %v1827, %v1826
      %v1912 = vpack.c.bf16 %v1829, %v1828
      %v1913 = vpack.c.bf16 %v1831, %v1830
      %v1914 = vpack.c.bf16 %v1833, %v1832
      %v1915 = vpack.c.bf16 %v1835, %v1834
      %v1916 = vpack.c.bf16 %v1837, %v1836
      %v1917 = vpack.c.bf16 %v1839, %v1838
      %v1918 = vpack.c.bf16 %v1841, %v1840
      %v1919 = vpack.c.bf16 %v1843, %v1842
      %v1920 = vpack.c.bf16 %v1845, %v1844
      %v1921 = vpack.c.bf16 %v1847, %v1846
      %v1922 = vpack.c.bf16 %v1849, %v1848
      %v1923 = vpack.c.bf16 %v1851, %v1850
      %v1924 = vpack.c.bf16 %v1853, %v1852
      %v1925 = vpack.c.bf16 %v1855, %v1854
      %v1926 = vpack.c.bf16 %v1857, %v1856
      %v1927 = vpack.c.bf16 %v1859, %v1858
      %v1928 = vpack.c.bf16 %v1861, %v1860
      %v1929 = vpack.c.bf16 %v1863, %v1862
      %v1930 = vpack.c.bf16 %v1865, %v1864
      %v1931 = vpack.c.bf16 %v1867, %v1866
      %v1932 = vpack.c.bf16 %v1869, %v1868
      %v1933 = vpack.c.bf16 %v1871, %v1870
      %v1934 = vpack.c.bf16 %v1873, %v1872
      %v1935 = vpack.c.bf16 %v1875, %v1874
      %v1936 = vpack.c.bf16 %v1877, %v1876
      %v1937 = vpack.c.bf16 %v1879, %v1878
      %v1938 = vpack.c.bf16 %v1881, %v1880
      %v1939 = vpack.c.bf16 %v1883, %v1882
      %v1940 = vpack.c.bf16 %v1885, %v1884
      %v1941 = vpack.c.bf16 %v1887, %v1886
      %v1942 = vpack.c.bf16 %v1889, %v1888
      %v1943 = vpack.c.bf16 %v1891, %v1890
      %v1944 = vpack.c.bf16 %v1893, %v1892
      %v1945 = vpack.c.bf16 %v1895, %v1894
      %1946 = vst [vmem:[#allocation2] sm:$0xff] %v1896
      %1947 = vst [vmem:[#allocation2 + $0x8] sm:$0xff] %v1897
      %1948 = vst [vmem:[#allocation2 + $0x10] sm:$0xff] %v1898
      %1949 = vst [vmem:[#allocation2 + $0x18] sm:$0xff] %v1899
      %1950 = vst [vmem:[#allocation2 + $0x20] sm:$0xff] %v1900
      %1951 = vst [vmem:[#allocation2 + $0x28] sm:$0xff] %v1901
      %1952 = vst [vmem:[#allocation2 + $0x30] sm:$0xff] %v1902
      %1953 = vst [vmem:[#allocation2 + $0x38] sm:$0xff] %v1903
      %1954 = vst [vmem:[#allocation2 + $0x40] sm:$0xff] %v1904
      %1955 = vst [vmem:[#allocation2 + $0x48] sm:$0xff] %v1905
      %1956 = vst [vmem:[#allocation2 + $0x50] sm:$0xff] %v1906
      %1957 = vst [vmem:[#allocation2 + $0x58] sm:$0xff] %v1907
      %1958 = vst [vmem:[#allocation2 + $0x60] sm:$0xff] %v1908
      %1959 = vst [vmem:[#allocation2 + $0x68] sm:$0xff] %v1909
      %1960 = vst [vmem:[#allocation2 + $0x70] sm:$0xff] %v1910
      %1961 = vst [vmem:[#allocation2 + $0x78] sm:$0xff] %v1911
      %1962 = vst [vmem:[#allocation2 + $0x80] sm:$0xff] %v1912
      %1963 = vst [vmem:[#allocation2 + $0x88] sm:$0xff] %v1913
      %1964 = vst [vmem:[#allocation2 + $0x90] sm:$0xff] %v1914
      %1965 = vst [vmem:[#allocation2 + $0x98] sm:$0xff] %v1915
      %1966 = vst [vmem:[#allocation2 + $0xa0] sm:$0xff] %v1916
      %1967 = vst [vmem:[#allocation2 + $0xa8] sm:$0xff] %v1917
      %1968 = vst [vmem:[#allocation2 + $0xb0] sm:$0xff] %v1918
      %1969 = vst [vmem:[#allocation2 + $0xb8] sm:$0xff] %v1919
      %1970 = vst [vmem:[#allocation2 + $0xc0] sm:$0xff] %v1920
      %1971 = vst [vmem:[#allocation2 + $0xc8] sm:$0xff] %v1921
      %1972 = vst [vmem:[#allocation2 + $0xd0] sm:$0xff] %v1922
      %1973 = vst [vmem:[#allocation2 + $0xd8] sm:$0xff] %v1923
      %1974 = vst [vmem:[#allocation2 + $0xe0] sm:$0xff] %v1924
      %1975 = vst [vmem:[#allocation2 + $0xe8] sm:$0xff] %v1925
      %1976 = vst [vmem:[#allocation2 + $0xf0] sm:$0xff] %v1926
      %1977 = vst [vmem:[#allocation2 + $0xf8] sm:$0xff] %v1927
      %1978 = vst [vmem:[#allocation2 + $0x100] sm:$0xff] %v1928
      %1979 = vst [vmem:[#allocation2 + $0x108] sm:$0xff] %v1929
      %1980 = vst [vmem:[#allocation2 + $0x110] sm:$0xff] %v1930
      %1981 = vst [vmem:[#allocation2 + $0x118] sm:$0xff] %v1931
      %1982 = vst [vmem:[#allocation2 + $0x120] sm:$0xff] %v1932
      %1983 = vst [vmem:[#allocation2 + $0x128] sm:$0xff] %v1933
      %1984 = vst [vmem:[#allocation2 + $0x130] sm:$0xff] %v1934
      %1985 = vst [vmem:[#allocation2 + $0x138] sm:$0xff] %v1935
      %1986 = vst [vmem:[#allocation2 + $0x140] sm:$0xff] %v1936
      %1987 = vst [vmem:[#allocation2 + $0x148] sm:$0xff] %v1937
      %1988 = vst [vmem:[#allocation2 + $0x150] sm:$0xff] %v1938
      %1989 = vst [vmem:[#allocation2 + $0x158] sm:$0xff] %v1939
      %1990 = vst [vmem:[#allocation2 + $0x160] sm:$0xff] %v1940
      %1991 = vst [vmem:[#allocation2 + $0x168] sm:$0xff] %v1941
      %1992 = vst [vmem:[#allocation2 + $0x170] sm:$0xff] %v1942
      %1993 = vst [vmem:[#allocation2 + $0x178] sm:$0xff] %v1943
      %1994 = vst [vmem:[#allocation2 + $0x180] sm:$0xff] %v1944
      %1995 = vst [vmem:[#allocation2 + $0x188] sm:$0xff] %v1945
      %1996 = vst [vmem:[#allocation3] sm:$0xff] 0.0
      %1997 = vst [vmem:[#allocation3 + $0x8] sm:$0xff] 0.0
      %1998 = vst [vmem:[#allocation3 + $0x10] sm:$0xff] 0.0
      %1999 = vst [vmem:[#allocation3 + $0x18] sm:$0xff] 0.0
      %2000 = vst [vmem:[#allocation3 + $0x20] sm:$0xff] 0.0
      %2001 = vst [vmem:[#allocation3 + $0x28] sm:$0xff] 0.0
      %2002 = vst [vmem:[#allocation3 + $0x30] sm:$0xff] 0.0
      %2003 = vst [vmem:[#allocation3 + $0x38] sm:$0xff] 0.0
      %2004 = vst [vmem:[#allocation3 + $0x40] sm:$0xff] 0.0
      %2005 = vst [vmem:[#allocation3 + $0x48] sm:$0xff] 0.0
      %2006 = vst [vmem:[#allocation3 + $0x50] sm:$0xff] 0.0
      %2007 = vst [vmem:[#allocation3 + $0x58] sm:$0xff] 0.0
      %2008 = vst [vmem:[#allocation3 + $0x60] sm:$0xff] 0.0
      %2009 = vst [vmem:[#allocation3 + $0x68] sm:$0xff] 0.0
      %2010 = vst [vmem:[#allocation3 + $0x70] sm:$0xff] 0.0
      %2011 = vst [vmem:[#allocation3 + $0x78] sm:$0xff] 0.0
      %2012 = vst [vmem:[#allocation3 + $0x80] sm:$0xff] 0.0
      %2013 = vst [vmem:[#allocation3 + $0x88] sm:$0xff] 0.0
      %2014 = vst [vmem:[#allocation3 + $0x90] sm:$0xff] 0.0
      %2015 = vst [vmem:[#allocation3 + $0x98] sm:$0xff] 0.0
      %2016 = vst [vmem:[#allocation3 + $0xa0] sm:$0xff] 0.0
      %2017 = vst [vmem:[#allocation3 + $0xa8] sm:$0xff] 0.0
      %2018 = vst [vmem:[#allocation3 + $0xb0] sm:$0xff] 0.0
      %2019 = vst [vmem:[#allocation3 + $0xb8] sm:$0xff] 0.0
      %2020 = vst [vmem:[#allocation3 + $0xc0] sm:$0xff] 0.0
    $region73: #{tpu_custom_call.1} parent=1 // pred_fallthru
      _
    %v2021 = vld [vmem:[#allocation2] sm:$0xff]
    %v2022 = vld [vmem:[#allocation2 + $0x8] sm:$0xff]
    %v2023 = vld [vmem:[#allocation2 + $0x10] sm:$0xff]
    %v2024 = vld [vmem:[#allocation2 + $0x18] sm:$0xff]
    %v2025 = vld [vmem:[#allocation2 + $0x20] sm:$0xff]
    %v2026 = vld [vmem:[#allocation2 + $0x28] sm:$0xff]
    %v2027 = vld [vmem:[#allocation2 + $0x30] sm:$0xff]
    %v2028 = vld [vmem:[#allocation2 + $0x38] sm:$0xff]
    %v2029 = vld [vmem:[#allocation2 + $0x40] sm:$0xff]
    %v2030 = vld [vmem:[#allocation2 + $0x48] sm:$0xff]
    %v2031 = vld [vmem:[#allocation2 + $0x50] sm:$0xff]
    %v2032 = vld [vmem:[#allocation2 + $0x58] sm:$0xff]
    %v2033 = vld [vmem:[#allocation2 + $0x60] sm:$0xff]
    %v2034 = vld [vmem:[#allocation2 + $0x68] sm:$0xff]
    %v2035 = vld [vmem:[#allocation2 + $0x70] sm:$0xff]
    %v2036 = vld [vmem:[#allocation2 + $0x78] sm:$0xff]
    %v2037 = vld [vmem:[#allocation2 + $0x80] sm:$0xff]
    %v2038 = vld [vmem:[#allocation2 + $0x88] sm:$0xff]
    %v2039 = vld [vmem:[#allocation2 + $0x90] sm:$0xff]
    %v2040 = vld [vmem:[#allocation2 + $0x98] sm:$0xff]
    %v2041 = vld [vmem:[#allocation2 + $0xa0] sm:$0xff]
    %v2042 = vld [vmem:[#allocation2 + $0xa8] sm:$0xff]
    %v2043 = vld [vmem:[#allocation2 + $0xb0] sm:$0xff]
    %v2044 = vld [vmem:[#allocation2 + $0xb8] sm:$0xff]
    %v2045 = vld [vmem:[#allocation2 + $0xc0] sm:$0xff]
    %v2046 = vld [vmem:[#allocation2 + $0xc8] sm:$0xff]
    %v2047 = vld [vmem:[#allocation2 + $0xd0] sm:$0xff]
    %v2048 = vld [vmem:[#allocation2 + $0xd8] sm:$0xff]
    %v2049 = vld [vmem:[#allocation2 + $0xe0] sm:$0xff]
    %v2050 = vld [vmem:[#allocation2 + $0xe8] sm:$0xff]
    %v2051 = vld [vmem:[#allocation2 + $0xf0] sm:$0xff]
    %v2052 = vld [vmem:[#allocation2 + $0xf8] sm:$0xff]
    %v2053 = vld [vmem:[#allocation2 + $0x100] sm:$0xff]
    %v2054 = vld [vmem:[#allocation2 + $0x108] sm:$0xff]
    %v2055 = vld [vmem:[#allocation2 + $0x110] sm:$0xff]
    %v2056 = vld [vmem:[#allocation2 + $0x118] sm:$0xff]
    %v2057 = vld [vmem:[#allocation2 + $0x120] sm:$0xff]
    %v2058 = vld [vmem:[#allocation2 + $0x128] sm:$0xff]
    %v2059 = vld [vmem:[#allocation2 + $0x130] sm:$0xff]
    %v2060 = vld [vmem:[#allocation2 + $0x138] sm:$0xff]
    %v2061 = vld [vmem:[#allocation2 + $0x140] sm:$0xff]
    %v2062 = vld [vmem:[#allocation2 + $0x148] sm:$0xff]
    %v2063 = vld [vmem:[#allocation2 + $0x150] sm:$0xff]
    %v2064 = vld [vmem:[#allocation2 + $0x158] sm:$0xff]
    %v2065 = vld [vmem:[#allocation2 + $0x160] sm:$0xff]
    %v2066 = vld [vmem:[#allocation2 + $0x168] sm:$0xff]
    %v2067 = vld [vmem:[#allocation2 + $0x170] sm:$0xff]
    %v2068 = vld [vmem:[#allocation2 + $0x178] sm:$0xff]
    %v2069 = vld [vmem:[#allocation2 + $0x180] sm:$0xff]
    %v2070 = vld [vmem:[#allocation2 + $0x188] sm:$0xff]
    %v2071 = vld [vmem:[#allocation13] sm:$0xff]
    %v2072 = vld [vmem:[#allocation13 + $0x8] sm:$0xff]
    %v2073 = vld [vmem:[#allocation13 + $0x10] sm:$0xff]
    %v2074 = vld [vmem:[#allocation13 + $0x18] sm:$0xff]
    %v2075 = vld [vmem:[#allocation13 + $0x20] sm:$0xff]
    %v2076 = vld [vmem:[#allocation13 + $0x28] sm:$0xff]
    %v2077 = vld [vmem:[#allocation13 + $0x30] sm:$0xff]
    %v2078 = vld [vmem:[#allocation13 + $0x38] sm:$0xff]
    %v2079 = vld [vmem:[#allocation13 + $0x40] sm:$0xff]
    %v2080 = vld [vmem:[#allocation13 + $0x48] sm:$0xff]
    %v2081 = vld [vmem:[#allocation13 + $0x50] sm:$0xff]
    %v2082 = vld [vmem:[#allocation13 + $0x58] sm:$0xff]
    %v2083 = vld [vmem:[#allocation13 + $0x60] sm:$0xff]
    %v2084 = vld [vmem:[#allocation13 + $0x68] sm:$0xff]
    %v2085 = vld [vmem:[#allocation13 + $0x70] sm:$0xff]
    %v2086 = vld [vmem:[#allocation13 + $0x78] sm:$0xff]
    %v2087 = vld [vmem:[#allocation13 + $0x80] sm:$0xff]
    %v2088 = vld [vmem:[#allocation13 + $0x88] sm:$0xff]
    %v2089 = vld [vmem:[#allocation13 + $0x90] sm:$0xff]
    %v2090 = vld [vmem:[#allocation13 + $0x98] sm:$0xff]
    %v2091 = vld [vmem:[#allocation13 + $0xa0] sm:$0xff]
    %v2092 = vld [vmem:[#allocation13 + $0xa8] sm:$0xff]
    %v2093 = vld [vmem:[#allocation13 + $0xb0] sm:$0xff]
    %v2094 = vld [vmem:[#allocation13 + $0xb8] sm:$0xff]
    %v2095 = vld [vmem:[#allocation13 + $0xc0] sm:$0xff]
    %v2096 = vld [vmem:[#allocation13 + $0xc8] sm:$0xff]
    %v2097 = vld [vmem:[#allocation13 + $0xd0] sm:$0xff]
    %v2098 = vld [vmem:[#allocation13 + $0xd8] sm:$0xff]
    %v2099 = vld [vmem:[#allocation13 + $0xe0] sm:$0xff]
    %v2100 = vld [vmem:[#allocation13 + $0xe8] sm:$0xff]
    %v2101 = vld [vmem:[#allocation13 + $0xf0] sm:$0xff]
    %v2102 = vld [vmem:[#allocation13 + $0xf8] sm:$0xff]
    %v2103 = vld [vmem:[#allocation13 + $0x100] sm:$0xff]
    %v2104 = vld [vmem:[#allocation13 + $0x108] sm:$0xff]
    %v2105 = vld [vmem:[#allocation13 + $0x110] sm:$0xff]
    %v2106 = vld [vmem:[#allocation13 + $0x118] sm:$0xff]
    %v2107 = vld [vmem:[#allocation13 + $0x120] sm:$0xff]
    %v2108 = vld [vmem:[#allocation13 + $0x128] sm:$0xff]
    %v2109 = vld [vmem:[#allocation13 + $0x130] sm:$0xff]
    %v2110 = vld [vmem:[#allocation13 + $0x138] sm:$0xff]
    %v2111 = vld [vmem:[#allocation13 + $0x140] sm:$0xff]
    %v2112 = vld [vmem:[#allocation13 + $0x148] sm:$0xff]
    %v2113 = vld [vmem:[#allocation13 + $0x150] sm:$0xff]
    %v2114 = vld [vmem:[#allocation13 + $0x158] sm:$0xff]
    %v2115 = vld [vmem:[#allocation13 + $0x160] sm:$0xff]
    %v2116 = vld [vmem:[#allocation13 + $0x168] sm:$0xff]
    %v2117 = vld [vmem:[#allocation13 + $0x170] sm:$0xff]
    %v2118 = vld [vmem:[#allocation13 + $0x178] sm:$0xff]
    %v2119 = vld [vmem:[#allocation13 + $0x180] sm:$0xff]
    %v2120 = vld [vmem:[#allocation13 + $0x188] sm:$0xff]
    %v2121 = vld [vmem:[#allocation13 + $0x190] sm:$0xff]
    %v2122 = vld [vmem:[#allocation13 + $0x198] sm:$0xff]
    %v2123 = vld [vmem:[#allocation13 + $0x1a0] sm:$0xff]
    %v2124 = vld [vmem:[#allocation13 + $0x1a8] sm:$0xff]
    %v2125 = vld [vmem:[#allocation13 + $0x1b0] sm:$0xff]
    %v2126 = vld [vmem:[#allocation13 + $0x1b8] sm:$0xff]
    %v2127 = vld [vmem:[#allocation13 + $0x1c0] sm:$0xff]
    %v2128 = vld [vmem:[#allocation13 + $0x1c8] sm:$0xff]
    %v2129 = vld [vmem:[#allocation13 + $0x1d0] sm:$0xff]
    %v2130 = vld [vmem:[#allocation13 + $0x1d8] sm:$0xff]
    %v2131 = vld [vmem:[#allocation13 + $0x1e0] sm:$0xff]
    %v2132 = vld [vmem:[#allocation13 + $0x1e8] sm:$0xff]
    %v2133 = vld [vmem:[#allocation13 + $0x1f0] sm:$0xff]
    %v2134 = vld [vmem:[#allocation13 + $0x1f8] sm:$0xff]
    %v2135 = vld [vmem:[#allocation13 + $0x200] sm:$0xff]
    %v2136 = vld [vmem:[#allocation13 + $0x208] sm:$0xff]
    %v2137 = vld [vmem:[#allocation13 + $0x210] sm:$0xff]
    %v2138 = vld [vmem:[#allocation13 + $0x218] sm:$0xff]
    %v2139 = vld [vmem:[#allocation13 + $0x220] sm:$0xff]
    %v2140 = vld [vmem:[#allocation13 + $0x228] sm:$0xff]
    %v2141 = vld [vmem:[#allocation13 + $0x230] sm:$0xff]
    %v2142 = vld [vmem:[#allocation13 + $0x238] sm:$0xff]
    %v2143 = vld [vmem:[#allocation13 + $0x240] sm:$0xff]
    %v2144 = vld [vmem:[#allocation13 + $0x248] sm:$0xff]
    %v2145 = vld [vmem:[#allocation13 + $0x250] sm:$0xff]
    %v2146 = vld [vmem:[#allocation13 + $0x258] sm:$0xff]
    %v2147 = vld [vmem:[#allocation13 + $0x260] sm:$0xff]
    %v2148 = vld [vmem:[#allocation13 + $0x268] sm:$0xff]
    %v2149 = vld [vmem:[#allocation13 + $0x270] sm:$0xff]
    %v2150 = vld [vmem:[#allocation13 + $0x278] sm:$0xff]
    %v2151 = vld [vmem:[#allocation13 + $0x280] sm:$0xff]
    %v2152 = vld [vmem:[#allocation13 + $0x288] sm:$0xff]
    %v2153 = vld [vmem:[#allocation13 + $0x290] sm:$0xff]
    %v2154 = vld [vmem:[#allocation13 + $0x298] sm:$0xff]
    %v2155 = vld [vmem:[#allocation13 + $0x2a0] sm:$0xff]
    %v2156 = vld [vmem:[#allocation13 + $0x2a8] sm:$0xff]
    %v2157 = vld [vmem:[#allocation13 + $0x2b0] sm:$0xff]
    %v2158 = vld [vmem:[#allocation13 + $0x2b8] sm:$0xff]
    %v2159 = vld [vmem:[#allocation13 + $0x2c0] sm:$0xff]
    %v2160 = vld [vmem:[#allocation13 + $0x2c8] sm:$0xff]
    %v2161 = vld [vmem:[#allocation13 + $0x2d0] sm:$0xff]
    %v2162 = vld [vmem:[#allocation13 + $0x2d8] sm:$0xff]
    %v2163 = vld [vmem:[#allocation13 + $0x2e0] sm:$0xff]
    %v2164 = vld [vmem:[#allocation13 + $0x2e8] sm:$0xff]
    %v2165 = vld [vmem:[#allocation13 + $0x2f0] sm:$0xff]
    %v2166 = vld [vmem:[#allocation13 + $0x2f8] sm:$0xff]
    %v2167 = vld [vmem:[#allocation13 + $0x300] sm:$0xff]
    %v2168 = vld [vmem:[#allocation13 + $0x308] sm:$0xff]
    %v2169 = vld [vmem:[#allocation13 + $0x310] sm:$0xff]
    %v2170 = vld [vmem:[#allocation13 + $0x318] sm:$0xff]
    %v2171 = vld [vmem:[#allocation13 + $0x320] sm:$0xff]
    %v2172 = vld [vmem:[#allocation13 + $0x328] sm:$0xff]
    %v2173 = vld [vmem:[#allocation13 + $0x330] sm:$0xff]
    %v2174 = vld [vmem:[#allocation13 + $0x338] sm:$0xff]
    %v2175 = vld [vmem:[#allocation13 + $0x340] sm:$0xff]
    %v2176 = vld [vmem:[#allocation13 + $0x348] sm:$0xff]
    %v2177 = vld [vmem:[#allocation13 + $0x350] sm:$0xff]
    %v2178 = vld [vmem:[#allocation13 + $0x358] sm:$0xff]
    %v2179 = vld [vmem:[#allocation13 + $0x360] sm:$0xff]
    %v2180 = vld [vmem:[#allocation13 + $0x368] sm:$0xff]
    %v2181 = vld [vmem:[#allocation13 + $0x370] sm:$0xff]
    %v2182 = vld [vmem:[#allocation13 + $0x378] sm:$0xff]
    %v2183 = vld [vmem:[#allocation13 + $0x380] sm:$0xff]
    %v2184 = vld [vmem:[#allocation13 + $0x388] sm:$0xff]
    %v2185 = vld [vmem:[#allocation13 + $0x390] sm:$0xff]
    %v2186 = vld [vmem:[#allocation13 + $0x398] sm:$0xff]
    %v2187 = vld [vmem:[#allocation13 + $0x3a0] sm:$0xff]
    %v2188 = vld [vmem:[#allocation13 + $0x3a8] sm:$0xff]
    %v2189 = vld [vmem:[#allocation13 + $0x3b0] sm:$0xff]
    %v2190 = vld [vmem:[#allocation13 + $0x3b8] sm:$0xff]
    %v2191 = vld [vmem:[#allocation13 + $0x3c0] sm:$0xff]
    %v2192 = vld [vmem:[#allocation13 + $0x3c8] sm:$0xff]
    %v2193 = vld [vmem:[#allocation13 + $0x3d0] sm:$0xff]
    %v2194 = vld [vmem:[#allocation13 + $0x3d8] sm:$0xff]
    %v2195 = vld [vmem:[#allocation13 + $0x3e0] sm:$0xff]
    %v2196 = vld [vmem:[#allocation13 + $0x3e8] sm:$0xff]
    %v2197 = vld [vmem:[#allocation13 + $0x3f0] sm:$0xff]
    %v2198 = vld [vmem:[#allocation13 + $0x3f8] sm:$0xff]
    %v2199 = vld [vmem:[#allocation13 + $0x400] sm:$0xff]
    %v2200 = vld [vmem:[#allocation13 + $0x408] sm:$0xff]
    %v2201 = vld [vmem:[#allocation13 + $0x410] sm:$0xff]
    %v2202 = vld [vmem:[#allocation13 + $0x418] sm:$0xff]
    %v2203 = vld [vmem:[#allocation13 + $0x420] sm:$0xff]
    %v2204 = vld [vmem:[#allocation13 + $0x428] sm:$0xff]
    %v2205 = vld [vmem:[#allocation13 + $0x430] sm:$0xff]
    %v2206 = vld [vmem:[#allocation13 + $0x438] sm:$0xff]
    %v2207 = vld [vmem:[#allocation13 + $0x440] sm:$0xff]
    %v2208 = vld [vmem:[#allocation13 + $0x448] sm:$0xff]
    %v2209 = vld [vmem:[#allocation13 + $0x450] sm:$0xff]
    %v2210 = vld [vmem:[#allocation13 + $0x458] sm:$0xff]
    %v2211 = vld [vmem:[#allocation13 + $0x460] sm:$0xff]
    %v2212 = vld [vmem:[#allocation13 + $0x468] sm:$0xff]
    %v2213 = vld [vmem:[#allocation13 + $0x470] sm:$0xff]
    %v2214 = vld [vmem:[#allocation13 + $0x478] sm:$0xff]
    %v2215 = vld [vmem:[#allocation13 + $0x480] sm:$0xff]
    %v2216 = vld [vmem:[#allocation13 + $0x488] sm:$0xff]
    %v2217 = vld [vmem:[#allocation13 + $0x490] sm:$0xff]
    %v2218 = vld [vmem:[#allocation13 + $0x498] sm:$0xff]
    %v2219 = vld [vmem:[#allocation13 + $0x4a0] sm:$0xff]
    %v2220 = vld [vmem:[#allocation13 + $0x4a8] sm:$0xff]
    %v2221 = vld [vmem:[#allocation13 + $0x4b0] sm:$0xff]
    %v2222 = vld [vmem:[#allocation13 + $0x4b8] sm:$0xff]
    %v2223 = vld [vmem:[#allocation13 + $0x4c0] sm:$0xff]
    %v2224 = vld [vmem:[#allocation13 + $0x4c8] sm:$0xff]
    %v2225 = vld [vmem:[#allocation13 + $0x4d0] sm:$0xff]
    %v2226 = vld [vmem:[#allocation13 + $0x4d8] sm:$0xff]
    %v2227 = vld [vmem:[#allocation13 + $0x4e0] sm:$0xff]
    %v2228 = vld [vmem:[#allocation13 + $0x4e8] sm:$0xff]
    %v2229 = vld [vmem:[#allocation13 + $0x4f0] sm:$0xff]
    %v2230 = vld [vmem:[#allocation13 + $0x4f8] sm:$0xff]
    %v2231 = vld [vmem:[#allocation13 + $0x500] sm:$0xff]
    %v2232 = vld [vmem:[#allocation13 + $0x508] sm:$0xff]
    %v2233 = vld [vmem:[#allocation13 + $0x510] sm:$0xff]
    %v2234 = vld [vmem:[#allocation13 + $0x518] sm:$0xff]
    %v2235 = vld [vmem:[#allocation13 + $0x520] sm:$0xff]
    %v2236 = vld [vmem:[#allocation13 + $0x528] sm:$0xff]
    %v2237 = vld [vmem:[#allocation13 + $0x530] sm:$0xff]
    %v2238 = vld [vmem:[#allocation13 + $0x538] sm:$0xff]
    %v2239 = vld [vmem:[#allocation13 + $0x540] sm:$0xff]
    %v2240 = vld [vmem:[#allocation13 + $0x548] sm:$0xff]
    %v2241 = vld [vmem:[#allocation13 + $0x550] sm:$0xff]
    %v2242 = vld [vmem:[#allocation13 + $0x558] sm:$0xff]
    %v2243 = vld [vmem:[#allocation13 + $0x560] sm:$0xff]
    %v2244 = vld [vmem:[#allocation13 + $0x568] sm:$0xff]
    %v2245 = vld [vmem:[#allocation13 + $0x570] sm:$0xff]
    %v2246 = vld [vmem:[#allocation13 + $0x578] sm:$0xff]
    %v2247 = vld [vmem:[#allocation13 + $0x580] sm:$0xff]
    %v2248 = vld [vmem:[#allocation13 + $0x588] sm:$0xff]
    %v2249 = vld [vmem:[#allocation13 + $0x590] sm:$0xff]
    %v2250 = vld [vmem:[#allocation13 + $0x598] sm:$0xff]
    %v2251 = vld [vmem:[#allocation13 + $0x5a0] sm:$0xff]
    %v2252 = vld [vmem:[#allocation13 + $0x5a8] sm:$0xff]
    %v2253 = vld [vmem:[#allocation13 + $0x5b0] sm:$0xff]
    %v2254 = vld [vmem:[#allocation13 + $0x5b8] sm:$0xff]
    %v2255 = vld [vmem:[#allocation13 + $0x5c0] sm:$0xff]
    %v2256 = vld [vmem:[#allocation13 + $0x5c8] sm:$0xff]
    %v2257 = vld [vmem:[#allocation13 + $0x5d0] sm:$0xff]
    %v2258 = vld [vmem:[#allocation13 + $0x5d8] sm:$0xff]
    %v2259 = vld [vmem:[#allocation13 + $0x5e0] sm:$0xff]
    %v2260 = vld [vmem:[#allocation13 + $0x5e8] sm:$0xff]
    %v2261 = vld [vmem:[#allocation13 + $0x5f0] sm:$0xff]
    %v2262 = vld [vmem:[#allocation13 + $0x5f8] sm:$0xff]
    %v2263 = vld [vmem:[#allocation13 + $0x600] sm:$0xff]
    %v2264 = vld [vmem:[#allocation13 + $0x608] sm:$0xff]
    %v2265 = vld [vmem:[#allocation13 + $0x610] sm:$0xff]
    %v2266 = vld [vmem:[#allocation13 + $0x618] sm:$0xff]
    %v2267 = vld [vmem:[#allocation13 + $0x620] sm:$0xff]
    %v2268 = vld [vmem:[#allocation13 + $0x628] sm:$0xff]
    %v2269 = vld [vmem:[#allocation13 + $0x630] sm:$0xff]
    %v2270 = vld [vmem:[#allocation13 + $0x638] sm:$0xff]
    %v2271 = vld [vmem:[#allocation13 + $0x640] sm:$0xff]
    %v2272 = vld [vmem:[#allocation13 + $0x648] sm:$0xff]
    %v2273 = vld [vmem:[#allocation13 + $0x650] sm:$0xff]
    %v2274 = vld [vmem:[#allocation13 + $0x658] sm:$0xff]
    %v2275 = vld [vmem:[#allocation13 + $0x660] sm:$0xff]
    %v2276 = vld [vmem:[#allocation13 + $0x668] sm:$0xff]
    %v2277 = vld [vmem:[#allocation13 + $0x670] sm:$0xff]
    %v2278 = vld [vmem:[#allocation13 + $0x678] sm:$0xff]
    %v2279 = vld [vmem:[#allocation13 + $0x680] sm:$0xff]
    %v2280 = vld [vmem:[#allocation13 + $0x688] sm:$0xff]
    %v2281 = vld [vmem:[#allocation13 + $0x690] sm:$0xff]
    %v2282 = vld [vmem:[#allocation13 + $0x698] sm:$0xff]
    %v2283 = vld [vmem:[#allocation13 + $0x6a0] sm:$0xff]
    %v2284 = vld [vmem:[#allocation13 + $0x6a8] sm:$0xff]
    %v2285 = vld [vmem:[#allocation13 + $0x6b0] sm:$0xff]
    %v2286 = vld [vmem:[#allocation13 + $0x6b8] sm:$0xff]
    %v2287 = vld [vmem:[#allocation13 + $0x6c0] sm:$0xff]
    %v2288 = vld [vmem:[#allocation13 + $0x6c8] sm:$0xff]
    %v2289 = vld [vmem:[#allocation13 + $0x6d0] sm:$0xff]
    %v2290 = vld [vmem:[#allocation13 + $0x6d8] sm:$0xff]
    %v2291 = vld [vmem:[#allocation13 + $0x6e0] sm:$0xff]
    %v2292 = vld [vmem:[#allocation13 + $0x6e8] sm:$0xff]
    %v2293 = vld [vmem:[#allocation13 + $0x6f0] sm:$0xff]
    %v2294 = vld [vmem:[#allocation13 + $0x6f8] sm:$0xff]
    %v2295 = vld [vmem:[#allocation13 + $0x700] sm:$0xff]
    %v2296 = vld [vmem:[#allocation13 + $0x708] sm:$0xff]
    %v2297 = vld [vmem:[#allocation13 + $0x710] sm:$0xff]
    %v2298 = vld [vmem:[#allocation13 + $0x718] sm:$0xff]
    %v2299 = vld [vmem:[#allocation13 + $0x720] sm:$0xff]
    %v2300 = vld [vmem:[#allocation13 + $0x728] sm:$0xff]
    %v2301 = vld [vmem:[#allocation13 + $0x730] sm:$0xff]
    %v2302 = vld [vmem:[#allocation13 + $0x738] sm:$0xff]
    %v2303 = vld [vmem:[#allocation13 + $0x740] sm:$0xff]
    %v2304 = vld [vmem:[#allocation13 + $0x748] sm:$0xff]
    %v2305 = vld [vmem:[#allocation13 + $0x750] sm:$0xff]
    %v2306 = vld [vmem:[#allocation13 + $0x758] sm:$0xff]
    %v2307 = vld [vmem:[#allocation13 + $0x760] sm:$0xff]
    %v2308 = vld [vmem:[#allocation13 + $0x768] sm:$0xff]
    %v2309 = vld [vmem:[#allocation13 + $0x770] sm:$0xff]
    %v2310 = vld [vmem:[#allocation13 + $0x778] sm:$0xff]
    %v2311 = vld [vmem:[#allocation13 + $0x780] sm:$0xff]
    %v2312 = vld [vmem:[#allocation13 + $0x788] sm:$0xff]
    %v2313 = vld [vmem:[#allocation13 + $0x790] sm:$0xff]
    %v2314 = vld [vmem:[#allocation13 + $0x798] sm:$0xff]
    %v2315 = vld [vmem:[#allocation13 + $0x7a0] sm:$0xff]
    %v2316 = vld [vmem:[#allocation13 + $0x7a8] sm:$0xff]
    %v2317 = vld [vmem:[#allocation13 + $0x7b0] sm:$0xff]
    %v2318 = vld [vmem:[#allocation13 + $0x7b8] sm:$0xff]
    %v2319 = vld [vmem:[#allocation13 + $0x7c0] sm:$0xff]
    %v2320 = vld [vmem:[#allocation13 + $0x7c8] sm:$0xff]
    %v2321 = vld [vmem:[#allocation13 + $0x7d0] sm:$0xff]
    %v2322 = vld [vmem:[#allocation13 + $0x7d8] sm:$0xff]
    %v2323 = vld [vmem:[#allocation13 + $0x7e0] sm:$0xff]
    %v2324 = vld [vmem:[#allocation13 + $0x7e8] sm:$0xff]
    %v2325 = vld [vmem:[#allocation13 + $0x7f0] sm:$0xff]
    %v2326 = vld [vmem:[#allocation13 + $0x7f8] sm:$0xff]
    %v2327 = vld [vmem:[#allocation15] sm:$0xff]
    %v2329 = vperm.slane %v2327, 0
    %v2330 = vperm.slane %v2327, 1
    %v2331 = vperm.slane %v2327, 2
    %v2332 = vperm.slane %v2327, 3
    %v2333 = vperm.slane %v2327, 4
    %v2334 = vperm.slane %v2327, 5
    %v2335 = vperm.slane %v2327, 6
    %v2336 = vperm.slane %v2327, 7
    %v2395 = vunpack.c.l.b16 %v2021
    %v2396 = vunpack.c.h.b16 %v2021
    %v2397 = vunpack.c.l.b16 %v2022
    %v2398 = vunpack.c.h.b16 %v2022
    %v2399 = vunpack.c.l.b16 %v2023
    %v2400 = vunpack.c.h.b16 %v2023
    %v2401 = vunpack.c.l.b16 %v2024
    %v2402 = vunpack.c.h.b16 %v2024
    %v2403 = vunpack.c.l.b16 %v2025
    %v2404 = vunpack.c.h.b16 %v2025
    %v2405 = vunpack.c.l.b16 %v2026
    %v2406 = vunpack.c.h.b16 %v2026
    %v2407 = vunpack.c.l.b16 %v2027
    %v2408 = vunpack.c.h.b16 %v2027
    %v2409 = vunpack.c.l.b16 %v2028
    %v2410 = vunpack.c.h.b16 %v2028
    %v2411 = vunpack.c.l.b16 %v2029
    %v2412 = vunpack.c.h.b16 %v2029
    %v2413 = vunpack.c.l.b16 %v2030
    %v2414 = vunpack.c.h.b16 %v2030
    %v2415 = vunpack.c.l.b16 %v2031
    %v2416 = vunpack.c.h.b16 %v2031
    %v2417 = vunpack.c.l.b16 %v2032
    %v2418 = vunpack.c.h.b16 %v2032
    %v2419 = vunpack.c.l.b16 %v2033
    %v2420 = vunpack.c.h.b16 %v2033
    %v2421 = vunpack.c.l.b16 %v2034
    %v2422 = vunpack.c.h.b16 %v2034
    %v2423 = vunpack.c.l.b16 %v2035
    %v2424 = vunpack.c.h.b16 %v2035
    %v2425 = vunpack.c.l.b16 %v2036
    %v2426 = vunpack.c.h.b16 %v2036
    %v2427 = vunpack.c.l.b16 %v2037
    %v2428 = vunpack.c.h.b16 %v2037
    %v2429 = vunpack.c.l.b16 %v2038
    %v2430 = vunpack.c.h.b16 %v2038
    %v2431 = vunpack.c.l.b16 %v2039
    %v2432 = vunpack.c.h.b16 %v2039
    %v2433 = vunpack.c.l.b16 %v2040
    %v2434 = vunpack.c.h.b16 %v2040
    %v2435 = vunpack.c.l.b16 %v2041
    %v2436 = vunpack.c.h.b16 %v2041
    %v2437 = vunpack.c.l.b16 %v2042
    %v2438 = vunpack.c.h.b16 %v2042
    %v2439 = vunpack.c.l.b16 %v2043
    %v2440 = vunpack.c.h.b16 %v2043
    %v2441 = vunpack.c.l.b16 %v2044
    %v2442 = vunpack.c.h.b16 %v2044
    %v2443 = vunpack.c.l.b16 %v2045
    %v2444 = vunpack.c.h.b16 %v2045
    %v2445 = vunpack.c.l.b16 %v2046
    %v2446 = vunpack.c.h.b16 %v2046
    %v2447 = vunpack.c.l.b16 %v2047
    %v2448 = vunpack.c.h.b16 %v2047
    %v2449 = vunpack.c.l.b16 %v2048
    %v2450 = vunpack.c.h.b16 %v2048
    %v2451 = vunpack.c.l.b16 %v2049
    %v2452 = vunpack.c.h.b16 %v2049
    %v2453 = vunpack.c.l.b16 %v2050
    %v2454 = vunpack.c.h.b16 %v2050
    %v2455 = vunpack.c.l.b16 %v2051
    %v2456 = vunpack.c.h.b16 %v2051
    %v2457 = vunpack.c.l.b16 %v2052
    %v2458 = vunpack.c.h.b16 %v2052
    %v2459 = vunpack.c.l.b16 %v2053
    %v2460 = vunpack.c.h.b16 %v2053
    %v2461 = vunpack.c.l.b16 %v2054
    %v2462 = vunpack.c.h.b16 %v2054
    %v2463 = vunpack.c.l.b16 %v2055
    %v2464 = vunpack.c.h.b16 %v2055
    %v2465 = vunpack.c.l.b16 %v2056
    %v2466 = vunpack.c.h.b16 %v2056
    %v2467 = vunpack.c.l.b16 %v2057
    %v2468 = vunpack.c.h.b16 %v2057
    %v2469 = vunpack.c.l.b16 %v2058
    %v2470 = vunpack.c.h.b16 %v2058
    %v2471 = vunpack.c.l.b16 %v2059
    %v2472 = vunpack.c.h.b16 %v2059
    %v2473 = vunpack.c.l.b16 %v2060
    %v2474 = vunpack.c.h.b16 %v2060
    %v2475 = vunpack.c.l.b16 %v2061
    %v2476 = vunpack.c.h.b16 %v2061
    %v2477 = vunpack.c.l.b16 %v2062
    %v2478 = vunpack.c.h.b16 %v2062
    %v2479 = vunpack.c.l.b16 %v2063
    %v2480 = vunpack.c.h.b16 %v2063
    %v2481 = vunpack.c.l.b16 %v2064
    %v2482 = vunpack.c.h.b16 %v2064
    %v2483 = vunpack.c.l.b16 %v2065
    %v2484 = vunpack.c.h.b16 %v2065
    %v2485 = vunpack.c.l.b16 %v2066
    %v2486 = vunpack.c.h.b16 %v2066
    %v2487 = vunpack.c.l.b16 %v2067
    %v2488 = vunpack.c.h.b16 %v2067
    %v2489 = vunpack.c.l.b16 %v2068
    %v2490 = vunpack.c.h.b16 %v2068
    %v2491 = vunpack.c.l.b16 %v2069
    %v2492 = vunpack.c.h.b16 %v2069
    %v2493 = vunpack.c.l.b16 %v2070
    %v2494 = vunpack.c.h.b16 %v2070
    %v2495 = vpack.c.b16 %v2399, %v2395
    %v2496 = vpack.c.b16 %v2400, %v2396
    %v2497 = vpack.c.b16 %v2401, %v2397
    %v2498 = vpack.c.b16 %v2402, %v2398
    %v2499 = vpack.c.b16 %v2407, %v2403
    %v2500 = vpack.c.b16 %v2408, %v2404
    %v2501 = vpack.c.b16 %v2409, %v2405
    %v2502 = vpack.c.b16 %v2410, %v2406
    %v2503 = vpack.c.b16 %v2415, %v2411
    %v2504 = vpack.c.b16 %v2416, %v2412
    %v2505 = vpack.c.b16 %v2417, %v2413
    %v2506 = vpack.c.b16 %v2418, %v2414
    %v2507 = vpack.c.b16 %v2423, %v2419
    %v2508 = vpack.c.b16 %v2424, %v2420
    %v2509 = vpack.c.b16 %v2425, %v2421
    %v2510 = vpack.c.b16 %v2426, %v2422
    %v2511 = vpack.c.b16 %v2431, %v2427
    %v2512 = vpack.c.b16 %v2432, %v2428
    %v2513 = vpack.c.b16 %v2433, %v2429
    %v2514 = vpack.c.b16 %v2434, %v2430
    %v2515 = vpack.c.b16 %v2439, %v2435
    %v2516 = vpack.c.b16 %v2440, %v2436
    %v2517 = vpack.c.b16 %v2441, %v2437
    %v2518 = vpack.c.b16 %v2442, %v2438
    %v2519 = vpack.c.b16 %v2447, %v2443
    %v2520 = vpack.c.b16 %v2448, %v2444
    %v2521 = vpack.c.b16 %v2449, %v2445
    %v2522 = vpack.c.b16 %v2450, %v2446
    %v2523 = vpack.c.b16 %v2455, %v2451
    %v2524 = vpack.c.b16 %v2456, %v2452
    %v2525 = vpack.c.b16 %v2457, %v2453
    %v2526 = vpack.c.b16 %v2458, %v2454
    %v2527 = vpack.c.b16 %v2463, %v2459
    %v2528 = vpack.c.b16 %v2464, %v2460
    %v2529 = vpack.c.b16 %v2465, %v2461
    %v2530 = vpack.c.b16 %v2466, %v2462
    %v2531 = vpack.c.b16 %v2471, %v2467
    %v2532 = vpack.c.b16 %v2472, %v2468
    %v2533 = vpack.c.b16 %v2473, %v2469
    %v2534 = vpack.c.b16 %v2474, %v2470
    %v2535 = vpack.c.b16 %v2479, %v2475
    %v2536 = vpack.c.b16 %v2480, %v2476
    %v2537 = vpack.c.b16 %v2481, %v2477
    %v2538 = vpack.c.b16 %v2482, %v2478
    %v2539 = vpack.c.b16 %v2487, %v2483
    %v2540 = vpack.c.b16 %v2488, %v2484
    %v2541 = vpack.c.b16 %v2489, %v2485
    %v2542 = vpack.c.b16 %v2490, %v2486
    %v2543 = vpack.c.b16 %v2491, %v2491
    %v2544 = vpack.c.b16 %v2492, %v2492
    %v2545 = vpack.c.b16 %v2493, %v2493
    %v2546 = vpack.c.b16 %v2494, %v2494
    %v2855 = vunpack.c.l.b16 %v2071
    %v2856 = vunpack.c.h.b16 %v2071
    %v2857 = vunpack.c.l.b16 %v2072
    %v2858 = vunpack.c.h.b16 %v2072
    %v2859 = vunpack.c.l.b16 %v2073
    %v2860 = vunpack.c.h.b16 %v2073
    %v2861 = vunpack.c.l.b16 %v2074
    %v2862 = vunpack.c.h.b16 %v2074
    %v2863 = vunpack.c.l.b16 %v2075
    %v2864 = vunpack.c.h.b16 %v2075
    %v2865 = vunpack.c.l.b16 %v2076
    %v2866 = vunpack.c.h.b16 %v2076
    %v2867 = vunpack.c.l.b16 %v2077
    %v2868 = vunpack.c.h.b16 %v2077
    %v2869 = vunpack.c.l.b16 %v2078
    %v2870 = vunpack.c.h.b16 %v2078
    %v2871 = vunpack.c.l.b16 %v2079
    %v2872 = vunpack.c.h.b16 %v2079
    %v2873 = vunpack.c.l.b16 %v2080
    %v2874 = vunpack.c.h.b16 %v2080
    %v2875 = vunpack.c.l.b16 %v2081
    %v2876 = vunpack.c.h.b16 %v2081
    %v2877 = vunpack.c.l.b16 %v2082
    %v2878 = vunpack.c.h.b16 %v2082
    %v2879 = vunpack.c.l.b16 %v2083
    %v2880 = vunpack.c.h.b16 %v2083
    %v2881 = vunpack.c.l.b16 %v2084
    %v2882 = vunpack.c.h.b16 %v2084
    %v2883 = vunpack.c.l.b16 %v2085
    %v2884 = vunpack.c.h.b16 %v2085
    %v2885 = vunpack.c.l.b16 %v2086
    %v2886 = vunpack.c.h.b16 %v2086
    %v2887 = vunpack.c.l.b16 %v2087
    %v2888 = vunpack.c.h.b16 %v2087
    %v2889 = vunpack.c.l.b16 %v2088
    %v2890 = vunpack.c.h.b16 %v2088
    %v2891 = vunpack.c.l.b16 %v2089
    %v2892 = vunpack.c.h.b16 %v2089
    %v2893 = vunpack.c.l.b16 %v2090
    %v2894 = vunpack.c.h.b16 %v2090
    %v2895 = vunpack.c.l.b16 %v2091
    %v2896 = vunpack.c.h.b16 %v2091
    %v2897 = vunpack.c.l.b16 %v2092
    %v2898 = vunpack.c.h.b16 %v2092
    %v2899 = vunpack.c.l.b16 %v2093
    %v2900 = vunpack.c.h.b16 %v2093
    %v2901 = vunpack.c.l.b16 %v2094
    %v2902 = vunpack.c.h.b16 %v2094
    %v2903 = vunpack.c.l.b16 %v2095
    %v2904 = vunpack.c.h.b16 %v2095
    %v2905 = vunpack.c.l.b16 %v2096
    %v2906 = vunpack.c.h.b16 %v2096
    %v2907 = vunpack.c.l.b16 %v2097
    %v2908 = vunpack.c.h.b16 %v2097
    %v2909 = vunpack.c.l.b16 %v2098
    %v2910 = vunpack.c.h.b16 %v2098
    %v2911 = vunpack.c.l.b16 %v2099
    %v2912 = vunpack.c.h.b16 %v2099
    %v2913 = vunpack.c.l.b16 %v2100
    %v2914 = vunpack.c.h.b16 %v2100
    %v2915 = vunpack.c.l.b16 %v2101
    %v2916 = vunpack.c.h.b16 %v2101
    %v2917 = vunpack.c.l.b16 %v2102
    %v2918 = vunpack.c.h.b16 %v2102
    %v2919 = vunpack.c.l.b16 %v2103
    %v2920 = vunpack.c.h.b16 %v2103
    %v2921 = vunpack.c.l.b16 %v2104
    %v2922 = vunpack.c.h.b16 %v2104
    %v2923 = vunpack.c.l.b16 %v2105
    %v2924 = vunpack.c.h.b16 %v2105
    %v2925 = vunpack.c.l.b16 %v2106
    %v2926 = vunpack.c.h.b16 %v2106
    %v2927 = vunpack.c.l.b16 %v2107
    %v2928 = vunpack.c.h.b16 %v2107
    %v2929 = vunpack.c.l.b16 %v2108
    %v2930 = vunpack.c.h.b16 %v2108
    %v2931 = vunpack.c.l.b16 %v2109
    %v2932 = vunpack.c.h.b16 %v2109
    %v2933 = vunpack.c.l.b16 %v2110
    %v2934 = vunpack.c.h.b16 %v2110
    %v2935 = vunpack.c.l.b16 %v2111
    %v2936 = vunpack.c.h.b16 %v2111
    %v2937 = vunpack.c.l.b16 %v2112
    %v2938 = vunpack.c.h.b16 %v2112
    %v2939 = vunpack.c.l.b16 %v2113
    %v2940 = vunpack.c.h.b16 %v2113
    %v2941 = vunpack.c.l.b16 %v2114
    %v2942 = vunpack.c.h.b16 %v2114
    %v2943 = vunpack.c.l.b16 %v2115
    %v2944 = vunpack.c.h.b16 %v2115
    %v2945 = vunpack.c.l.b16 %v2116
    %v2946 = vunpack.c.h.b16 %v2116
    %v2947 = vunpack.c.l.b16 %v2117
    %v2948 = vunpack.c.h.b16 %v2117
    %v2949 = vunpack.c.l.b16 %v2118
    %v2950 = vunpack.c.h.b16 %v2118
    %v2951 = vunpack.c.l.b16 %v2119
    %v2952 = vunpack.c.h.b16 %v2119
    %v2953 = vunpack.c.l.b16 %v2120
    %v2954 = vunpack.c.h.b16 %v2120
    %v2955 = vunpack.c.l.b16 %v2121
    %v2956 = vunpack.c.h.b16 %v2121
    %v2957 = vunpack.c.l.b16 %v2122
    %v2958 = vunpack.c.h.b16 %v2122
    %v2959 = vunpack.c.l.b16 %v2123
    %v2960 = vunpack.c.h.b16 %v2123
    %v2961 = vunpack.c.l.b16 %v2124
    %v2962 = vunpack.c.h.b16 %v2124
    %v2963 = vunpack.c.l.b16 %v2125
    %v2964 = vunpack.c.h.b16 %v2125
    %v2965 = vunpack.c.l.b16 %v2126
    %v2966 = vunpack.c.h.b16 %v2126
    %v2967 = vunpack.c.l.b16 %v2127
    %v2968 = vunpack.c.h.b16 %v2127
    %v2969 = vunpack.c.l.b16 %v2128
    %v2970 = vunpack.c.h.b16 %v2128
    %v2971 = vunpack.c.l.b16 %v2129
    %v2972 = vunpack.c.h.b16 %v2129
    %v2973 = vunpack.c.l.b16 %v2130
    %v2974 = vunpack.c.h.b16 %v2130
    %v2975 = vunpack.c.l.b16 %v2131
    %v2976 = vunpack.c.h.b16 %v2131
    %v2977 = vunpack.c.l.b16 %v2132
    %v2978 = vunpack.c.h.b16 %v2132
    %v2979 = vunpack.c.l.b16 %v2133
    %v2980 = vunpack.c.h.b16 %v2133
    %v2981 = vunpack.c.l.b16 %v2134
    %v2982 = vunpack.c.h.b16 %v2134
    %v2983 = vunpack.c.l.b16 %v2135
    %v2984 = vunpack.c.h.b16 %v2135
    %v2985 = vunpack.c.l.b16 %v2136
    %v2986 = vunpack.c.h.b16 %v2136
    %v2987 = vunpack.c.l.b16 %v2137
    %v2988 = vunpack.c.h.b16 %v2137
    %v2989 = vunpack.c.l.b16 %v2138
    %v2990 = vunpack.c.h.b16 %v2138
    %v2991 = vunpack.c.l.b16 %v2139
    %v2992 = vunpack.c.h.b16 %v2139
    %v2993 = vunpack.c.l.b16 %v2140
    %v2994 = vunpack.c.h.b16 %v2140
    %v2995 = vunpack.c.l.b16 %v2141
    %v2996 = vunpack.c.h.b16 %v2141
    %v2997 = vunpack.c.l.b16 %v2142
    %v2998 = vunpack.c.h.b16 %v2142
    %v2999 = vunpack.c.l.b16 %v2143
    %v3000 = vunpack.c.h.b16 %v2143
    %v3001 = vunpack.c.l.b16 %v2144
    %v3002 = vunpack.c.h.b16 %v2144
    %v3003 = vunpack.c.l.b16 %v2145
    %v3004 = vunpack.c.h.b16 %v2145
    %v3005 = vunpack.c.l.b16 %v2146
    %v3006 = vunpack.c.h.b16 %v2146
    %v3007 = vunpack.c.l.b16 %v2147
    %v3008 = vunpack.c.h.b16 %v2147
    %v3009 = vunpack.c.l.b16 %v2148
    %v3010 = vunpack.c.h.b16 %v2148
    %v3011 = vunpack.c.l.b16 %v2149
    %v3012 = vunpack.c.h.b16 %v2149
    %v3013 = vunpack.c.l.b16 %v2150
    %v3014 = vunpack.c.h.b16 %v2150
    %v3015 = vunpack.c.l.b16 %v2151
    %v3016 = vunpack.c.h.b16 %v2151
    %v3017 = vunpack.c.l.b16 %v2152
    %v3018 = vunpack.c.h.b16 %v2152
    %v3019 = vunpack.c.l.b16 %v2153
    %v3020 = vunpack.c.h.b16 %v2153
    %v3021 = vunpack.c.l.b16 %v2154
    %v3022 = vunpack.c.h.b16 %v2154
    %v3023 = vunpack.c.l.b16 %v2155
    %v3024 = vunpack.c.h.b16 %v2155
    %v3025 = vunpack.c.l.b16 %v2156
    %v3026 = vunpack.c.h.b16 %v2156
    %v3027 = vunpack.c.l.b16 %v2157
    %v3028 = vunpack.c.h.b16 %v2157
    %v3029 = vunpack.c.l.b16 %v2158
    %v3030 = vunpack.c.h.b16 %v2158
    %v3031 = vunpack.c.l.b16 %v2159
    %v3032 = vunpack.c.h.b16 %v2159
    %v3033 = vunpack.c.l.b16 %v2160
    %v3034 = vunpack.c.h.b16 %v2160
    %v3035 = vunpack.c.l.b16 %v2161
    %v3036 = vunpack.c.h.b16 %v2161
    %v3037 = vunpack.c.l.b16 %v2162
    %v3038 = vunpack.c.h.b16 %v2162
    %v3039 = vunpack.c.l.b16 %v2163
    %v3040 = vunpack.c.h.b16 %v2163
    %v3041 = vunpack.c.l.b16 %v2164
    %v3042 = vunpack.c.h.b16 %v2164
    %v3043 = vunpack.c.l.b16 %v2165
    %v3044 = vunpack.c.h.b16 %v2165
    %v3045 = vunpack.c.l.b16 %v2166
    %v3046 = vunpack.c.h.b16 %v2166
    %v3047 = vunpack.c.l.b16 %v2167
    %v3048 = vunpack.c.h.b16 %v2167
    %v3049 = vunpack.c.l.b16 %v2168
    %v3050 = vunpack.c.h.b16 %v2168
    %v3051 = vunpack.c.l.b16 %v2169
    %v3052 = vunpack.c.h.b16 %v2169
    %v3053 = vunpack.c.l.b16 %v2170
    %v3054 = vunpack.c.h.b16 %v2170
    %v3055 = vunpack.c.l.b16 %v2171
    %v3056 = vunpack.c.h.b16 %v2171
    %v3057 = vunpack.c.l.b16 %v2172
    %v3058 = vunpack.c.h.b16 %v2172
    %v3059 = vunpack.c.l.b16 %v2173
    %v3060 = vunpack.c.h.b16 %v2173
    %v3061 = vunpack.c.l.b16 %v2174
    %v3062 = vunpack.c.h.b16 %v2174
    %v3063 = vunpack.c.l.b16 %v2175
    %v3064 = vunpack.c.h.b16 %v2175
    %v3065 = vunpack.c.l.b16 %v2176
    %v3066 = vunpack.c.h.b16 %v2176
    %v3067 = vunpack.c.l.b16 %v2177
    %v3068 = vunpack.c.h.b16 %v2177
    %v3069 = vunpack.c.l.b16 %v2178
    %v3070 = vunpack.c.h.b16 %v2178
    %v3071 = vunpack.c.l.b16 %v2179
    %v3072 = vunpack.c.h.b16 %v2179
    %v3073 = vunpack.c.l.b16 %v2180
    %v3074 = vunpack.c.h.b16 %v2180
    %v3075 = vunpack.c.l.b16 %v2181
    %v3076 = vunpack.c.h.b16 %v2181
    %v3077 = vunpack.c.l.b16 %v2182
    %v3078 = vunpack.c.h.b16 %v2182
    %v3079 = vunpack.c.l.b16 %v2183
    %v3080 = vunpack.c.h.b16 %v2183
    %v3081 = vunpack.c.l.b16 %v2184
    %v3082 = vunpack.c.h.b16 %v2184
    %v3083 = vunpack.c.l.b16 %v2185
    %v3084 = vunpack.c.h.b16 %v2185
    %v3085 = vunpack.c.l.b16 %v2186
    %v3086 = vunpack.c.h.b16 %v2186
    %v3087 = vunpack.c.l.b16 %v2187
    %v3088 = vunpack.c.h.b16 %v2187
    %v3089 = vunpack.c.l.b16 %v2188
    %v3090 = vunpack.c.h.b16 %v2188
    %v3091 = vunpack.c.l.b16 %v2189
    %v3092 = vunpack.c.h.b16 %v2189
    %v3093 = vunpack.c.l.b16 %v2190
    %v3094 = vunpack.c.h.b16 %v2190
    %v3095 = vunpack.c.l.b16 %v2191
    %v3096 = vunpack.c.h.b16 %v2191
    %v3097 = vunpack.c.l.b16 %v2192
    %v3098 = vunpack.c.h.b16 %v2192
    %v3099 = vunpack.c.l.b16 %v2193
    %v3100 = vunpack.c.h.b16 %v2193
    %v3101 = vunpack.c.l.b16 %v2194
    %v3102 = vunpack.c.h.b16 %v2194
    %v3103 = vunpack.c.l.b16 %v2195
    %v3104 = vunpack.c.h.b16 %v2195
    %v3105 = vunpack.c.l.b16 %v2196
    %v3106 = vunpack.c.h.b16 %v2196
    %v3107 = vunpack.c.l.b16 %v2197
    %v3108 = vunpack.c.h.b16 %v2197
    %v3109 = vunpack.c.l.b16 %v2198
    %v3110 = vunpack.c.h.b16 %v2198
    %v3111 = vunpack.c.l.b16 %v2199
    %v3112 = vunpack.c.h.b16 %v2199
    %v3113 = vunpack.c.l.b16 %v2200
    %v3114 = vunpack.c.h.b16 %v2200
    %v3115 = vunpack.c.l.b16 %v2201
    %v3116 = vunpack.c.h.b16 %v2201
    %v3117 = vunpack.c.l.b16 %v2202
    %v3118 = vunpack.c.h.b16 %v2202
    %v3119 = vunpack.c.l.b16 %v2203
    %v3120 = vunpack.c.h.b16 %v2203
    %v3121 = vunpack.c.l.b16 %v2204
    %v3122 = vunpack.c.h.b16 %v2204
    %v3123 = vunpack.c.l.b16 %v2205
    %v3124 = vunpack.c.h.b16 %v2205
    %v3125 = vunpack.c.l.b16 %v2206
    %v3126 = vunpack.c.h.b16 %v2206
    %v3127 = vunpack.c.l.b16 %v2207
    %v3128 = vunpack.c.h.b16 %v2207
    %v3129 = vunpack.c.l.b16 %v2208
    %v3130 = vunpack.c.h.b16 %v2208
    %v3131 = vunpack.c.l.b16 %v2209
    %v3132 = vunpack.c.h.b16 %v2209
    %v3133 = vunpack.c.l.b16 %v2210
    %v3134 = vunpack.c.h.b16 %v2210
    %v3135 = vunpack.c.l.b16 %v2211
    %v3136 = vunpack.c.h.b16 %v2211
    %v3137 = vunpack.c.l.b16 %v2212
    %v3138 = vunpack.c.h.b16 %v2212
    %v3139 = vunpack.c.l.b16 %v2213
    %v3140 = vunpack.c.h.b16 %v2213
    %v3141 = vunpack.c.l.b16 %v2214
    %v3142 = vunpack.c.h.b16 %v2214
    %v3143 = vunpack.c.l.b16 %v2215
    %v3144 = vunpack.c.h.b16 %v2215
    %v3145 = vunpack.c.l.b16 %v2216
    %v3146 = vunpack.c.h.b16 %v2216
    %v3147 = vunpack.c.l.b16 %v2217
    %v3148 = vunpack.c.h.b16 %v2217
    %v3149 = vunpack.c.l.b16 %v2218
    %v3150 = vunpack.c.h.b16 %v2218
    %v3151 = vunpack.c.l.b16 %v2219
    %v3152 = vunpack.c.h.b16 %v2219
    %v3153 = vunpack.c.l.b16 %v2220
    %v3154 = vunpack.c.h.b16 %v2220
    %v3155 = vunpack.c.l.b16 %v2221
    %v3156 = vunpack.c.h.b16 %v2221
    %v3157 = vunpack.c.l.b16 %v2222
    %v3158 = vunpack.c.h.b16 %v2222
    %v3159 = vunpack.c.l.b16 %v2223
    %v3160 = vunpack.c.h.b16 %v2223
    %v3161 = vunpack.c.l.b16 %v2224
    %v3162 = vunpack.c.h.b16 %v2224
    %v3163 = vunpack.c.l.b16 %v2225
    %v3164 = vunpack.c.h.b16 %v2225
    %v3165 = vunpack.c.l.b16 %v2226
    %v3166 = vunpack.c.h.b16 %v2226
    %v3167 = vunpack.c.l.b16 %v2227
    %v3168 = vunpack.c.h.b16 %v2227
    %v3169 = vunpack.c.l.b16 %v2228
    %v3170 = vunpack.c.h.b16 %v2228
    %v3171 = vunpack.c.l.b16 %v2229
    %v3172 = vunpack.c.h.b16 %v2229
    %v3173 = vunpack.c.l.b16 %v2230
    %v3174 = vunpack.c.h.b16 %v2230
    %v3175 = vunpack.c.l.b16 %v2231
    %v3176 = vunpack.c.h.b16 %v2231
    %v3177 = vunpack.c.l.b16 %v2232
    %v3178 = vunpack.c.h.b16 %v2232
    %v3179 = vunpack.c.l.b16 %v2233
    %v3180 = vunpack.c.h.b16 %v2233
    %v3181 = vunpack.c.l.b16 %v2234
    %v3182 = vunpack.c.h.b16 %v2234
    %v3183 = vunpack.c.l.b16 %v2235
    %v3184 = vunpack.c.h.b16 %v2235
    %v3185 = vunpack.c.l.b16 %v2236
    %v3186 = vunpack.c.h.b16 %v2236
    %v3187 = vunpack.c.l.b16 %v2237
    %v3188 = vunpack.c.h.b16 %v2237
    %v3189 = vunpack.c.l.b16 %v2238
    %v3190 = vunpack.c.h.b16 %v2238
    %v3191 = vunpack.c.l.b16 %v2239
    %v3192 = vunpack.c.h.b16 %v2239
    %v3193 = vunpack.c.l.b16 %v2240
    %v3194 = vunpack.c.h.b16 %v2240
    %v3195 = vunpack.c.l.b16 %v2241
    %v3196 = vunpack.c.h.b16 %v2241
    %v3197 = vunpack.c.l.b16 %v2242
    %v3198 = vunpack.c.h.b16 %v2242
    %v3199 = vunpack.c.l.b16 %v2243
    %v3200 = vunpack.c.h.b16 %v2243
    %v3201 = vunpack.c.l.b16 %v2244
    %v3202 = vunpack.c.h.b16 %v2244
    %v3203 = vunpack.c.l.b16 %v2245
    %v3204 = vunpack.c.h.b16 %v2245
    %v3205 = vunpack.c.l.b16 %v2246
    %v3206 = vunpack.c.h.b16 %v2246
    %v3207 = vunpack.c.l.b16 %v2247
    %v3208 = vunpack.c.h.b16 %v2247
    %v3209 = vunpack.c.l.b16 %v2248
    %v3210 = vunpack.c.h.b16 %v2248
    %v3211 = vunpack.c.l.b16 %v2249
    %v3212 = vunpack.c.h.b16 %v2249
    %v3213 = vunpack.c.l.b16 %v2250
    %v3214 = vunpack.c.h.b16 %v2250
    %v3215 = vunpack.c.l.b16 %v2251
    %v3216 = vunpack.c.h.b16 %v2251
    %v3217 = vunpack.c.l.b16 %v2252
    %v3218 = vunpack.c.h.b16 %v2252
    %v3219 = vunpack.c.l.b16 %v2253
    %v3220 = vunpack.c.h.b16 %v2253
    %v3221 = vunpack.c.l.b16 %v2254
    %v3222 = vunpack.c.h.b16 %v2254
    %v3223 = vunpack.c.l.b16 %v2255
    %v3224 = vunpack.c.h.b16 %v2255
    %v3225 = vunpack.c.l.b16 %v2256
    %v3226 = vunpack.c.h.b16 %v2256
    %v3227 = vunpack.c.l.b16 %v2257
    %v3228 = vunpack.c.h.b16 %v2257
    %v3229 = vunpack.c.l.b16 %v2258
    %v3230 = vunpack.c.h.b16 %v2258
    %v3231 = vunpack.c.l.b16 %v2259
    %v3232 = vunpack.c.h.b16 %v2259
    %v3233 = vunpack.c.l.b16 %v2260
    %v3234 = vunpack.c.h.b16 %v2260
    %v3235 = vunpack.c.l.b16 %v2261
    %v3236 = vunpack.c.h.b16 %v2261
    %v3237 = vunpack.c.l.b16 %v2262
    %v3238 = vunpack.c.h.b16 %v2262
    %v3239 = vunpack.c.l.b16 %v2263
    %v3240 = vunpack.c.h.b16 %v2263
    %v3241 = vunpack.c.l.b16 %v2264
    %v3242 = vunpack.c.h.b16 %v2264
    %v3243 = vunpack.c.l.b16 %v2265
    %v3244 = vunpack.c.h.b16 %v2265
    %v3245 = vunpack.c.l.b16 %v2266
    %v3246 = vunpack.c.h.b16 %v2266
    %v3247 = vunpack.c.l.b16 %v2267
    %v3248 = vunpack.c.h.b16 %v2267
    %v3249 = vunpack.c.l.b16 %v2268
    %v3250 = vunpack.c.h.b16 %v2268
    %v3251 = vunpack.c.l.b16 %v2269
    %v3252 = vunpack.c.h.b16 %v2269
    %v3253 = vunpack.c.l.b16 %v2270
    %v3254 = vunpack.c.h.b16 %v2270
    %v3255 = vunpack.c.l.b16 %v2271
    %v3256 = vunpack.c.h.b16 %v2271
    %v3257 = vunpack.c.l.b16 %v2272
    %v3258 = vunpack.c.h.b16 %v2272
    %v3259 = vunpack.c.l.b16 %v2273
    %v3260 = vunpack.c.h.b16 %v2273
    %v3261 = vunpack.c.l.b16 %v2274
    %v3262 = vunpack.c.h.b16 %v2274
    %v3263 = vunpack.c.l.b16 %v2275
    %v3264 = vunpack.c.h.b16 %v2275
    %v3265 = vunpack.c.l.b16 %v2276
    %v3266 = vunpack.c.h.b16 %v2276
    %v3267 = vunpack.c.l.b16 %v2277
    %v3268 = vunpack.c.h.b16 %v2277
    %v3269 = vunpack.c.l.b16 %v2278
    %v3270 = vunpack.c.h.b16 %v2278
    %v3271 = vunpack.c.l.b16 %v2279
    %v3272 = vunpack.c.h.b16 %v2279
    %v3273 = vunpack.c.l.b16 %v2280
    %v3274 = vunpack.c.h.b16 %v2280
    %v3275 = vunpack.c.l.b16 %v2281
    %v3276 = vunpack.c.h.b16 %v2281
    %v3277 = vunpack.c.l.b16 %v2282
    %v3278 = vunpack.c.h.b16 %v2282
    %v3279 = vunpack.c.l.b16 %v2283
    %v3280 = vunpack.c.h.b16 %v2283
    %v3281 = vunpack.c.l.b16 %v2284
    %v3282 = vunpack.c.h.b16 %v2284
    %v3283 = vunpack.c.l.b16 %v2285
    %v3284 = vunpack.c.h.b16 %v2285
    %v3285 = vunpack.c.l.b16 %v2286
    %v3286 = vunpack.c.h.b16 %v2286
    %v3287 = vunpack.c.l.b16 %v2287
    %v3288 = vunpack.c.h.b16 %v2287
    %v3289 = vunpack.c.l.b16 %v2288
    %v3290 = vunpack.c.h.b16 %v2288
    %v3291 = vunpack.c.l.b16 %v2289
    %v3292 = vunpack.c.h.b16 %v2289
    %v3293 = vunpack.c.l.b16 %v2290
    %v3294 = vunpack.c.h.b16 %v2290
    %v3295 = vunpack.c.l.b16 %v2291
    %v3296 = vunpack.c.h.b16 %v2291
    %v3297 = vunpack.c.l.b16 %v2292
    %v3298 = vunpack.c.h.b16 %v2292
    %v3299 = vunpack.c.l.b16 %v2293
    %v3300 = vunpack.c.h.b16 %v2293
    %v3301 = vunpack.c.l.b16 %v2294
    %v3302 = vunpack.c.h.b16 %v2294
    %v3303 = vunpack.c.l.b16 %v2295
    %v3304 = vunpack.c.h.b16 %v2295
    %v3305 = vunpack.c.l.b16 %v2296
    %v3306 = vunpack.c.h.b16 %v2296
    %v3307 = vunpack.c.l.b16 %v2297
    %v3308 = vunpack.c.h.b16 %v2297
    %v3309 = vunpack.c.l.b16 %v2298
    %v3310 = vunpack.c.h.b16 %v2298
    %v3311 = vunpack.c.l.b16 %v2299
    %v3312 = vunpack.c.h.b16 %v2299
    %v3313 = vunpack.c.l.b16 %v2300
    %v3314 = vunpack.c.h.b16 %v2300
    %v3315 = vunpack.c.l.b16 %v2301
    %v3316 = vunpack.c.h.b16 %v2301
    %v3317 = vunpack.c.l.b16 %v2302
    %v3318 = vunpack.c.h.b16 %v2302
    %v3319 = vunpack.c.l.b16 %v2303
    %v3320 = vunpack.c.h.b16 %v2303
    %v3321 = vunpack.c.l.b16 %v2304
    %v3322 = vunpack.c.h.b16 %v2304
    %v3323 = vunpack.c.l.b16 %v2305
    %v3324 = vunpack.c.h.b16 %v2305
    %v3325 = vunpack.c.l.b16 %v2306
    %v3326 = vunpack.c.h.b16 %v2306
    %v3327 = vunpack.c.l.b16 %v2307
    %v3328 = vunpack.c.h.b16 %v2307
    %v3329 = vunpack.c.l.b16 %v2308
    %v3330 = vunpack.c.h.b16 %v2308
    %v3331 = vunpack.c.l.b16 %v2309
    %v3332 = vunpack.c.h.b16 %v2309
    %v3333 = vunpack.c.l.b16 %v2310
    %v3334 = vunpack.c.h.b16 %v2310
    %v3335 = vunpack.c.l.b16 %v2311
    %v3336 = vunpack.c.h.b16 %v2311
    %v3337 = vunpack.c.l.b16 %v2312
    %v3338 = vunpack.c.h.b16 %v2312
    %v3339 = vunpack.c.l.b16 %v2313
    %v3340 = vunpack.c.h.b16 %v2313
    %v3341 = vunpack.c.l.b16 %v2314
    %v3342 = vunpack.c.h.b16 %v2314
    %v3343 = vunpack.c.l.b16 %v2315
    %v3344 = vunpack.c.h.b16 %v2315
    %v3345 = vunpack.c.l.b16 %v2316
    %v3346 = vunpack.c.h.b16 %v2316
    %v3347 = vunpack.c.l.b16 %v2317
    %v3348 = vunpack.c.h.b16 %v2317
    %v3349 = vunpack.c.l.b16 %v2318
    %v3350 = vunpack.c.h.b16 %v2318
    %v3351 = vunpack.c.l.b16 %v2319
    %v3352 = vunpack.c.h.b16 %v2319
    %v3353 = vunpack.c.l.b16 %v2320
    %v3354 = vunpack.c.h.b16 %v2320
    %v3355 = vunpack.c.l.b16 %v2321
    %v3356 = vunpack.c.h.b16 %v2321
    %v3357 = vunpack.c.l.b16 %v2322
    %v3358 = vunpack.c.h.b16 %v2322
    %v3359 = vunpack.c.l.b16 %v2323
    %v3360 = vunpack.c.h.b16 %v2323
    %v3361 = vunpack.c.l.b16 %v2324
    %v3362 = vunpack.c.h.b16 %v2324
    %v3363 = vunpack.c.l.b16 %v2325
    %v3364 = vunpack.c.h.b16 %v2325
    %v3365 = vunpack.c.l.b16 %v2326
    %v3366 = vunpack.c.h.b16 %v2326
    %v3367 = vpack.c.b16 %v2863, %v2855
    %v3368 = vpack.c.b16 %v2864, %v2856
    %v3369 = vpack.c.b16 %v2865, %v2857
    %v3370 = vpack.c.b16 %v2866, %v2858
    %v3371 = vpack.c.b16 %v2867, %v2859
    %v3372 = vpack.c.b16 %v2868, %v2860
    %v3373 = vpack.c.b16 %v2869, %v2861
    %v3374 = vpack.c.b16 %v2870, %v2862
    %v3375 = vpack.c.b16 %v2879, %v2871
    %v3376 = vpack.c.b16 %v2880, %v2872
    %v3377 = vpack.c.b16 %v2881, %v2873
    %v3378 = vpack.c.b16 %v2882, %v2874
    %v3379 = vpack.c.b16 %v2883, %v2875
    %v3380 = vpack.c.b16 %v2884, %v2876
    %v3381 = vpack.c.b16 %v2885, %v2877
    %v3382 = vpack.c.b16 %v2886, %v2878
    %v3383 = vpack.c.b16 %v2895, %v2887
    %v3384 = vpack.c.b16 %v2896, %v2888
    %v3385 = vpack.c.b16 %v2897, %v2889
    %v3386 = vpack.c.b16 %v2898, %v2890
    %v3387 = vpack.c.b16 %v2899, %v2891
    %v3388 = vpack.c.b16 %v2900, %v2892
    %v3389 = vpack.c.b16 %v2901, %v2893
    %v3390 = vpack.c.b16 %v2902, %v2894
    %v3391 = vpack.c.b16 %v2911, %v2903
    %v3392 = vpack.c.b16 %v2912, %v2904
    %v3393 = vpack.c.b16 %v2913, %v2905
    %v3394 = vpack.c.b16 %v2914, %v2906
    %v3395 = vpack.c.b16 %v2915, %v2907
    %v3396 = vpack.c.b16 %v2916, %v2908
    %v3397 = vpack.c.b16 %v2917, %v2909
    %v3398 = vpack.c.b16 %v2918, %v2910
    %v3399 = vpack.c.b16 %v2927, %v2919
    %v3400 = vpack.c.b16 %v2928, %v2920
    %v3401 = vpack.c.b16 %v2929, %v2921
    %v3402 = vpack.c.b16 %v2930, %v2922
    %v3403 = vpack.c.b16 %v2931, %v2923
    %v3404 = vpack.c.b16 %v2932, %v2924
    %v3405 = vpack.c.b16 %v2933, %v2925
    %v3406 = vpack.c.b16 %v2934, %v2926
    %v3407 = vpack.c.b16 %v2943, %v2935
    %v3408 = vpack.c.b16 %v2944, %v2936
    %v3409 = vpack.c.b16 %v2945, %v2937
    %v3410 = vpack.c.b16 %v2946, %v2938
    %v3411 = vpack.c.b16 %v2947, %v2939
    %v3412 = vpack.c.b16 %v2948, %v2940
    %v3413 = vpack.c.b16 %v2949, %v2941
    %v3414 = vpack.c.b16 %v2950, %v2942
    %v3415 = vpack.c.b16 %v2959, %v2951
    %v3416 = vpack.c.b16 %v2960, %v2952
    %v3417 = vpack.c.b16 %v2961, %v2953
    %v3418 = vpack.c.b16 %v2962, %v2954
    %v3419 = vpack.c.b16 %v2963, %v2955
    %v3420 = vpack.c.b16 %v2964, %v2956
    %v3421 = vpack.c.b16 %v2965, %v2957
    %v3422 = vpack.c.b16 %v2966, %v2958
    %v3423 = vpack.c.b16 %v2975, %v2967
    %v3424 = vpack.c.b16 %v2976, %v2968
    %v3425 = vpack.c.b16 %v2977, %v2969
    %v3426 = vpack.c.b16 %v2978, %v2970
    %v3427 = vpack.c.b16 %v2979, %v2971
    %v3428 = vpack.c.b16 %v2980, %v2972
    %v3429 = vpack.c.b16 %v2981, %v2973
    %v3430 = vpack.c.b16 %v2982, %v2974
    %v3431 = vpack.c.b16 %v2991, %v2983
    %v3432 = vpack.c.b16 %v2992, %v2984
    %v3433 = vpack.c.b16 %v2993, %v2985
    %v3434 = vpack.c.b16 %v2994, %v2986
    %v3435 = vpack.c.b16 %v2995, %v2987
    %v3436 = vpack.c.b16 %v2996, %v2988
    %v3437 = vpack.c.b16 %v2997, %v2989
    %v3438 = vpack.c.b16 %v2998, %v2990
    %v3439 = vpack.c.b16 %v3007, %v2999
    %v3440 = vpack.c.b16 %v3008, %v3000
    %v3441 = vpack.c.b16 %v3009, %v3001
    %v3442 = vpack.c.b16 %v3010, %v3002
    %v3443 = vpack.c.b16 %v3011, %v3003
    %v3444 = vpack.c.b16 %v3012, %v3004
    %v3445 = vpack.c.b16 %v3013, %v3005
    %v3446 = vpack.c.b16 %v3014, %v3006
    %v3447 = vpack.c.b16 %v3023, %v3015
    %v3448 = vpack.c.b16 %v3024, %v3016
    %v3449 = vpack.c.b16 %v3025, %v3017
    %v3450 = vpack.c.b16 %v3026, %v3018
    %v3451 = vpack.c.b16 %v3027, %v3019
    %v3452 = vpack.c.b16 %v3028, %v3020
    %v3453 = vpack.c.b16 %v3029, %v3021
    %v3454 = vpack.c.b16 %v3030, %v3022
    %v3455 = vpack.c.b16 %v3039, %v3031
    %v3456 = vpack.c.b16 %v3040, %v3032
    %v3457 = vpack.c.b16 %v3041, %v3033
    %v3458 = vpack.c.b16 %v3042, %v3034
    %v3459 = vpack.c.b16 %v3043, %v3035
    %v3460 = vpack.c.b16 %v3044, %v3036
    %v3461 = vpack.c.b16 %v3045, %v3037
    %v3462 = vpack.c.b16 %v3046, %v3038
    %v3463 = vpack.c.b16 %v3055, %v3047
    %v3464 = vpack.c.b16 %v3056, %v3048
    %v3465 = vpack.c.b16 %v3057, %v3049
    %v3466 = vpack.c.b16 %v3058, %v3050
    %v3467 = vpack.c.b16 %v3059, %v3051
    %v3468 = vpack.c.b16 %v3060, %v3052
    %v3469 = vpack.c.b16 %v3061, %v3053
    %v3470 = vpack.c.b16 %v3062, %v3054
    %v3471 = vpack.c.b16 %v3071, %v3063
    %v3472 = vpack.c.b16 %v3072, %v3064
    %v3473 = vpack.c.b16 %v3073, %v3065
    %v3474 = vpack.c.b16 %v3074, %v3066
    %v3475 = vpack.c.b16 %v3075, %v3067
    %v3476 = vpack.c.b16 %v3076, %v3068
    %v3477 = vpack.c.b16 %v3077, %v3069
    %v3478 = vpack.c.b16 %v3078, %v3070
    %v3479 = vpack.c.b16 %v3087, %v3079
    %v3480 = vpack.c.b16 %v3088, %v3080
    %v3481 = vpack.c.b16 %v3089, %v3081
    %v3482 = vpack.c.b16 %v3090, %v3082
    %v3483 = vpack.c.b16 %v3091, %v3083
    %v3484 = vpack.c.b16 %v3092, %v3084
    %v3485 = vpack.c.b16 %v3093, %v3085
    %v3486 = vpack.c.b16 %v3094, %v3086
    %v3487 = vpack.c.b16 %v3103, %v3095
    %v3488 = vpack.c.b16 %v3104, %v3096
    %v3489 = vpack.c.b16 %v3105, %v3097
    %v3490 = vpack.c.b16 %v3106, %v3098
    %v3491 = vpack.c.b16 %v3107, %v3099
    %v3492 = vpack.c.b16 %v3108, %v3100
    %v3493 = vpack.c.b16 %v3109, %v3101
    %v3494 = vpack.c.b16 %v3110, %v3102
    %v3495 = vpack.c.b16 %v3119, %v3111
    %v3496 = vpack.c.b16 %v3120, %v3112
    %v3497 = vpack.c.b16 %v3121, %v3113
    %v3498 = vpack.c.b16 %v3122, %v3114
    %v3499 = vpack.c.b16 %v3123, %v3115
    %v3500 = vpack.c.b16 %v3124, %v3116
    %v3501 = vpack.c.b16 %v3125, %v3117
    %v3502 = vpack.c.b16 %v3126, %v3118
    %v3503 = vpack.c.b16 %v3135, %v3127
    %v3504 = vpack.c.b16 %v3136, %v3128
    %v3505 = vpack.c.b16 %v3137, %v3129
    %v3506 = vpack.c.b16 %v3138, %v3130
    %v3507 = vpack.c.b16 %v3139, %v3131
    %v3508 = vpack.c.b16 %v3140, %v3132
    %v3509 = vpack.c.b16 %v3141, %v3133
    %v3510 = vpack.c.b16 %v3142, %v3134
    %v3511 = vpack.c.b16 %v3151, %v3143
    %v3512 = vpack.c.b16 %v3152, %v3144
    %v3513 = vpack.c.b16 %v3153, %v3145
    %v3514 = vpack.c.b16 %v3154, %v3146
    %v3515 = vpack.c.b16 %v3155, %v3147
    %v3516 = vpack.c.b16 %v3156, %v3148
    %v3517 = vpack.c.b16 %v3157, %v3149
    %v3518 = vpack.c.b16 %v3158, %v3150
    %v3519 = vpack.c.b16 %v3167, %v3159
    %v3520 = vpack.c.b16 %v3168, %v3160
    %v3521 = vpack.c.b16 %v3169, %v3161
    %v3522 = vpack.c.b16 %v3170, %v3162
    %v3523 = vpack.c.b16 %v3171, %v3163
    %v3524 = vpack.c.b16 %v3172, %v3164
    %v3525 = vpack.c.b16 %v3173, %v3165
    %v3526 = vpack.c.b16 %v3174, %v3166
    %v3527 = vpack.c.b16 %v3183, %v3175
    %v3528 = vpack.c.b16 %v3184, %v3176
    %v3529 = vpack.c.b16 %v3185, %v3177
    %v3530 = vpack.c.b16 %v3186, %v3178
    %v3531 = vpack.c.b16 %v3187, %v3179
    %v3532 = vpack.c.b16 %v3188, %v3180
    %v3533 = vpack.c.b16 %v3189, %v3181
    %v3534 = vpack.c.b16 %v3190, %v3182
    %v3535 = vpack.c.b16 %v3199, %v3191
    %v3536 = vpack.c.b16 %v3200, %v3192
    %v3537 = vpack.c.b16 %v3201, %v3193
    %v3538 = vpack.c.b16 %v3202, %v3194
    %v3539 = vpack.c.b16 %v3203, %v3195
    %v3540 = vpack.c.b16 %v3204, %v3196
    %v3541 = vpack.c.b16 %v3205, %v3197
    %v3542 = vpack.c.b16 %v3206, %v3198
    %v3543 = vpack.c.b16 %v3215, %v3207
    %v3544 = vpack.c.b16 %v3216, %v3208
    %v3545 = vpack.c.b16 %v3217, %v3209
    %v3546 = vpack.c.b16 %v3218, %v3210
    %v3547 = vpack.c.b16 %v3219, %v3211
    %v3548 = vpack.c.b16 %v3220, %v3212
    %v3549 = vpack.c.b16 %v3221, %v3213
    %v3550 = vpack.c.b16 %v3222, %v3214
    %v3551 = vpack.c.b16 %v3231, %v3223
    %v3552 = vpack.c.b16 %v3232, %v3224
    %v3553 = vpack.c.b16 %v3233, %v3225
    %v3554 = vpack.c.b16 %v3234, %v3226
    %v3555 = vpack.c.b16 %v3235, %v3227
    %v3556 = vpack.c.b16 %v3236, %v3228
    %v3557 = vpack.c.b16 %v3237, %v3229
    %v3558 = vpack.c.b16 %v3238, %v3230
    %v3559 = vpack.c.b16 %v3247, %v3239
    %v3560 = vpack.c.b16 %v3248, %v3240
    %v3561 = vpack.c.b16 %v3249, %v3241
    %v3562 = vpack.c.b16 %v3250, %v3242
    %v3563 = vpack.c.b16 %v3251, %v3243
    %v3564 = vpack.c.b16 %v3252, %v3244
    %v3565 = vpack.c.b16 %v3253, %v3245
    %v3566 = vpack.c.b16 %v3254, %v3246
    %v3567 = vpack.c.b16 %v3263, %v3255
    %v3568 = vpack.c.b16 %v3264, %v3256
    %v3569 = vpack.c.b16 %v3265, %v3257
    %v3570 = vpack.c.b16 %v3266, %v3258
    %v3571 = vpack.c.b16 %v3267, %v3259
    %v3572 = vpack.c.b16 %v3268, %v3260
    %v3573 = vpack.c.b16 %v3269, %v3261
    %v3574 = vpack.c.b16 %v3270, %v3262
    %v3575 = vpack.c.b16 %v3279, %v3271
    %v3576 = vpack.c.b16 %v3280, %v3272
    %v3577 = vpack.c.b16 %v3281, %v3273
    %v3578 = vpack.c.b16 %v3282, %v3274
    %v3579 = vpack.c.b16 %v3283, %v3275
    %v3580 = vpack.c.b16 %v3284, %v3276
    %v3581 = vpack.c.b16 %v3285, %v3277
    %v3582 = vpack.c.b16 %v3286, %v3278
    %v3583 = vpack.c.b16 %v3295, %v3287
    %v3584 = vpack.c.b16 %v3296, %v3288
    %v3585 = vpack.c.b16 %v3297, %v3289
    %v3586 = vpack.c.b16 %v3298, %v3290
    %v3587 = vpack.c.b16 %v3299, %v3291
    %v3588 = vpack.c.b16 %v3300, %v3292
    %v3589 = vpack.c.b16 %v3301, %v3293
    %v3590 = vpack.c.b16 %v3302, %v3294
    %v3591 = vpack.c.b16 %v3311, %v3303
    %v3592 = vpack.c.b16 %v3312, %v3304
    %v3593 = vpack.c.b16 %v3313, %v3305
    %v3594 = vpack.c.b16 %v3314, %v3306
    %v3595 = vpack.c.b16 %v3315, %v3307
    %v3596 = vpack.c.b16 %v3316, %v3308
    %v3597 = vpack.c.b16 %v3317, %v3309
    %v3598 = vpack.c.b16 %v3318, %v3310
    %v3599 = vpack.c.b16 %v3327, %v3319
    %v3600 = vpack.c.b16 %v3328, %v3320
    %v3601 = vpack.c.b16 %v3329, %v3321
    %v3602 = vpack.c.b16 %v3330, %v3322
    %v3603 = vpack.c.b16 %v3331, %v3323
    %v3604 = vpack.c.b16 %v3332, %v3324
    %v3605 = vpack.c.b16 %v3333, %v3325
    %v3606 = vpack.c.b16 %v3334, %v3326
    %v3607 = vpack.c.b16 %v3343, %v3335
    %v3608 = vpack.c.b16 %v3344, %v3336
    %v3609 = vpack.c.b16 %v3345, %v3337
    %v3610 = vpack.c.b16 %v3346, %v3338
    %v3611 = vpack.c.b16 %v3347, %v3339
    %v3612 = vpack.c.b16 %v3348, %v3340
    %v3613 = vpack.c.b16 %v3349, %v3341
    %v3614 = vpack.c.b16 %v3350, %v3342
    %v3615 = vpack.c.b16 %v3359, %v3351
    %v3616 = vpack.c.b16 %v3360, %v3352
    %v3617 = vpack.c.b16 %v3361, %v3353
    %v3618 = vpack.c.b16 %v3362, %v3354
    %v3619 = vpack.c.b16 %v3363, %v3355
    %v3620 = vpack.c.b16 %v3364, %v3356
    %v3621 = vpack.c.b16 %v3365, %v3357
    %v3622 = vpack.c.b16 %v3366, %v3358
    %3879 = vmatpush.bf16.msra.mxu0 %v3423
    %3880 = vmatpush.bf16.msra.mxu0 %v3415
    %3881 = vmatpush.bf16.msra.mxu0 %v3407
    %3882 = vmatpush.bf16.msra.mxu0 %v3399
    %3883 = vmatpush.bf16.msra.mxu0 %v3391
    %3884 = vmatpush.bf16.msra.mxu0 %v3383
    %3885 = vmatpush.bf16.msra.mxu0 %v3375
    %3886 = vmatpush.bf16.msra.mxu0 %v3367
    %3887 = vmatmul.bf16.gmra.mxu0 %v2495
    %v3888 = vpop.f32.mrf.mxu0
    %v3889 = vadd.f32 %v2329, %v3888
    %v3890 = vpop.f32.mrf.mxu0
    %v3891 = vadd.f32 %v2329, %v3890
    %3892 = vmatmul.bf16.gmra.mxu0 %v2499
    %v3893 = vpop.f32.mrf.mxu0
    %v3894 = vadd.f32 %v2329, %v3893
    %v3895 = vpop.f32.mrf.mxu0
    %v3896 = vadd.f32 %v2329, %v3895
    %3897 = vmatmul.bf16.gmra.mxu0 %v2503
    %v3898 = vpop.f32.mrf.mxu0
    %v3899 = vadd.f32 %v2329, %v3898
    %v3900 = vpop.f32.mrf.mxu0
    %v3901 = vadd.f32 %v2329, %v3900
    %3902 = vmatmul.bf16.gmra.mxu0 %v2507
    %v3903 = vpop.f32.mrf.mxu0
    %v3904 = vadd.f32 %v2329, %v3903
    %v3905 = vpop.f32.mrf.mxu0
    %v3906 = vadd.f32 %v2329, %v3905
    %3907 = vmatmul.bf16.gmra.mxu0 %v2511
    %v3908 = vpop.f32.mrf.mxu0
    %v3909 = vadd.f32 %v2329, %v3908
    %v3910 = vpop.f32.mrf.mxu0
    %v3911 = vadd.f32 %v2329, %v3910
    %3912 = vmatmul.bf16.gmra.mxu0 %v2515
    %v3913 = vpop.f32.mrf.mxu0
    %v3914 = vadd.f32 %v2329, %v3913
    %v3915 = vpop.f32.mrf.mxu0
    %v3916 = vadd.f32 %v2329, %v3915
    %3917 = vmatmul.bf16.gmra.mxu0 %v2519
    %v3918 = vpop.f32.mrf.mxu0
    %v3919 = vadd.f32 %v2329, %v3918
    %v3920 = vpop.f32.mrf.mxu0
    %v3921 = vadd.f32 %v2329, %v3920
    %3922 = vmatmul.bf16.gmra.mxu0 %v2523
    %v3923 = vpop.f32.mrf.mxu0
    %v3924 = vadd.f32 %v2329, %v3923
    %v3925 = vpop.f32.mrf.mxu0
    %v3926 = vadd.f32 %v2329, %v3925
    %3927 = vmatmul.bf16.gmra.mxu0 %v2527
    %v3928 = vpop.f32.mrf.mxu0
    %v3929 = vadd.f32 %v2329, %v3928
    %v3930 = vpop.f32.mrf.mxu0
    %v3931 = vadd.f32 %v2329, %v3930
    %3932 = vmatmul.bf16.gmra.mxu0 %v2531
    %v3933 = vpop.f32.mrf.mxu0
    %v3934 = vadd.f32 %v2329, %v3933
    %v3935 = vpop.f32.mrf.mxu0
    %v3936 = vadd.f32 %v2329, %v3935
    %3937 = vmatmul.bf16.gmra.mxu0 %v2535
    %v3938 = vpop.f32.mrf.mxu0
    %v3939 = vadd.f32 %v2329, %v3938
    %v3940 = vpop.f32.mrf.mxu0
    %v3941 = vadd.f32 %v2329, %v3940
    %3942 = vmatmul.bf16.gmra.mxu0 %v2539
    %v3943 = vpop.f32.mrf.mxu0
    %v3944 = vadd.f32 %v2329, %v3943
    %v3945 = vpop.f32.mrf.mxu0
    %v3946 = vadd.f32 %v2329, %v3945
    %3947 = vmatmul.bf16.gmra.mxu0 %v2543
    %v3948 = vpop.f32.mrf.mxu0
    %v3949 = vadd.f32 %v2329, %v3948
    %v3950 = vpop.f32.mrf.mxu0
    %3951 = vdwg.mxu0
    %3952 = vmatpush.bf16.msra.mxu0 %v3487
    %3953 = vmatpush.bf16.msra.mxu0 %v3479
    %3954 = vmatpush.bf16.msra.mxu0 %v3471
    %3955 = vmatpush.bf16.msra.mxu0 %v3463
    %3956 = vmatpush.bf16.msra.mxu0 %v3455
    %3957 = vmatpush.bf16.msra.mxu0 %v3447
    %3958 = vmatpush.bf16.msra.mxu0 %v3439
    %3959 = vmatpush.bf16.msra.mxu0 %v3431
    %3960 = vmatmul.bf16.gmra.mxu0 %v2496
    %v3961 = vpop.f32.mrf.mxu0
    %v3962 = vadd.f32 %v3889, %v3961
    %v3963 = vpop.f32.mrf.mxu0
    %v3964 = vadd.f32 %v3891, %v3963
    %3965 = vmatmul.bf16.gmra.mxu0 %v2500
    %v3966 = vpop.f32.mrf.mxu0
    %v3967 = vadd.f32 %v3894, %v3966
    %v3968 = vpop.f32.mrf.mxu0
    %v3969 = vadd.f32 %v3896, %v3968
    %3970 = vmatmul.bf16.gmra.mxu0 %v2504
    %v3971 = vpop.f32.mrf.mxu0
    %v3972 = vadd.f32 %v3899, %v3971
    %v3973 = vpop.f32.mrf.mxu0
    %v3974 = vadd.f32 %v3901, %v3973
    %3975 = vmatmul.bf16.gmra.mxu0 %v2508
    %v3976 = vpop.f32.mrf.mxu0
    %v3977 = vadd.f32 %v3904, %v3976
    %v3978 = vpop.f32.mrf.mxu0
    %v3979 = vadd.f32 %v3906, %v3978
    %3980 = vmatmul.bf16.gmra.mxu0 %v2512
    %v3981 = vpop.f32.mrf.mxu0
    %v3982 = vadd.f32 %v3909, %v3981
    %v3983 = vpop.f32.mrf.mxu0
    %v3984 = vadd.f32 %v3911, %v3983
    %3985 = vmatmul.bf16.gmra.mxu0 %v2516
    %v3986 = vpop.f32.mrf.mxu0
    %v3987 = vadd.f32 %v3914, %v3986
    %v3988 = vpop.f32.mrf.mxu0
    %v3989 = vadd.f32 %v3916, %v3988
    %3990 = vmatmul.bf16.gmra.mxu0 %v2520
    %v3991 = vpop.f32.mrf.mxu0
    %v3992 = vadd.f32 %v3919, %v3991
    %v3993 = vpop.f32.mrf.mxu0
    %v3994 = vadd.f32 %v3921, %v3993
    %3995 = vmatmul.bf16.gmra.mxu0 %v2524
    %v3996 = vpop.f32.mrf.mxu0
    %v3997 = vadd.f32 %v3924, %v3996
    %v3998 = vpop.f32.mrf.mxu0
    %v3999 = vadd.f32 %v3926, %v3998
    %4000 = vmatmul.bf16.gmra.mxu0 %v2528
    %v4001 = vpop.f32.mrf.mxu0
    %v4002 = vadd.f32 %v3929, %v4001
    %v4003 = vpop.f32.mrf.mxu0
    %v4004 = vadd.f32 %v3931, %v4003
    %4005 = vmatmul.bf16.gmra.mxu0 %v2532
    %v4006 = vpop.f32.mrf.mxu0
    %v4007 = vadd.f32 %v3934, %v4006
    %v4008 = vpop.f32.mrf.mxu0
    %v4009 = vadd.f32 %v3936, %v4008
    %4010 = vmatmul.bf16.gmra.mxu0 %v2536
    %v4011 = vpop.f32.mrf.mxu0
    %v4012 = vadd.f32 %v3939, %v4011
    %v4013 = vpop.f32.mrf.mxu0
    %v4014 = vadd.f32 %v3941, %v4013
    %4015 = vmatmul.bf16.gmra.mxu0 %v2540
    %v4016 = vpop.f32.mrf.mxu0
    %v4017 = vadd.f32 %v3944, %v4016
    %v4018 = vpop.f32.mrf.mxu0
    %v4019 = vadd.f32 %v3946, %v4018
    %4020 = vmatmul.bf16.gmra.mxu0 %v2544
    %v4021 = vpop.f32.mrf.mxu0
    %v4022 = vadd.f32 %v3949, %v4021
    %v4023 = vpop.f32.mrf.mxu0
    %4024 = vdwg.mxu0
    %4025 = vmatpush.bf16.msra.mxu0 %v3551
    %4026 = vmatpush.bf16.msra.mxu0 %v3543
    %4027 = vmatpush.bf16.msra.mxu0 %v3535
    %4028 = vmatpush.bf16.msra.mxu0 %v3527
    %4029 = vmatpush.bf16.msra.mxu0 %v3519
    %4030 = vmatpush.bf16.msra.mxu0 %v3511
    %4031 = vmatpush.bf16.msra.mxu0 %v3503
    %4032 = vmatpush.bf16.msra.mxu0 %v3495
    %4033 = vmatmul.bf16.gmra.mxu0 %v2497
    %v4034 = vpop.f32.mrf.mxu0
    %v4035 = vadd.f32 %v3962, %v4034
    %v4036 = vpop.f32.mrf.mxu0
    %v4037 = vadd.f32 %v3964, %v4036
    %4038 = vmatmul.bf16.gmra.mxu0 %v2501
    %v4039 = vpop.f32.mrf.mxu0
    %v4040 = vadd.f32 %v3967, %v4039
    %v4041 = vpop.f32.mrf.mxu0
    %v4042 = vadd.f32 %v3969, %v4041
    %4043 = vmatmul.bf16.gmra.mxu0 %v2505
    %v4044 = vpop.f32.mrf.mxu0
    %v4045 = vadd.f32 %v3972, %v4044
    %v4046 = vpop.f32.mrf.mxu0
    %v4047 = vadd.f32 %v3974, %v4046
    %4048 = vmatmul.bf16.gmra.mxu0 %v2509
    %v4049 = vpop.f32.mrf.mxu0
    %v4050 = vadd.f32 %v3977, %v4049
    %v4051 = vpop.f32.mrf.mxu0
    %v4052 = vadd.f32 %v3979, %v4051
    %4053 = vmatmul.bf16.gmra.mxu0 %v2513
    %v4054 = vpop.f32.mrf.mxu0
    %v4055 = vadd.f32 %v3982, %v4054
    %v4056 = vpop.f32.mrf.mxu0
    %v4057 = vadd.f32 %v3984, %v4056
    %4058 = vmatmul.bf16.gmra.mxu0 %v2517
    %v4059 = vpop.f32.mrf.mxu0
    %v4060 = vadd.f32 %v3987, %v4059
    %v4061 = vpop.f32.mrf.mxu0
    %v4062 = vadd.f32 %v3989, %v4061
    %4063 = vmatmul.bf16.gmra.mxu0 %v2521
    %v4064 = vpop.f32.mrf.mxu0
    %v4065 = vadd.f32 %v3992, %v4064
    %v4066 = vpop.f32.mrf.mxu0
    %v4067 = vadd.f32 %v3994, %v4066
    %4068 = vmatmul.bf16.gmra.mxu0 %v2525
    %v4069 = vpop.f32.mrf.mxu0
    %v4070 = vadd.f32 %v3997, %v4069
    %v4071 = vpop.f32.mrf.mxu0
    %v4072 = vadd.f32 %v3999, %v4071
    %4073 = vmatmul.bf16.gmra.mxu0 %v2529
    %v4074 = vpop.f32.mrf.mxu0
    %v4075 = vadd.f32 %v4002, %v4074
    %v4076 = vpop.f32.mrf.mxu0
    %v4077 = vadd.f32 %v4004, %v4076
    %4078 = vmatmul.bf16.gmra.mxu0 %v2533
    %v4079 = vpop.f32.mrf.mxu0
    %v4080 = vadd.f32 %v4007, %v4079
    %v4081 = vpop.f32.mrf.mxu0
    %v4082 = vadd.f32 %v4009, %v4081
    %4083 = vmatmul.bf16.gmra.mxu0 %v2537
    %v4084 = vpop.f32.mrf.mxu0
    %v4085 = vadd.f32 %v4012, %v4084
    %v4086 = vpop.f32.mrf.mxu0
    %v4087 = vadd.f32 %v4014, %v4086
    %4088 = vmatmul.bf16.gmra.mxu0 %v2541
    %v4089 = vpop.f32.mrf.mxu0
    %v4090 = vadd.f32 %v4017, %v4089
    %v4091 = vpop.f32.mrf.mxu0
    %v4092 = vadd.f32 %v4019, %v4091
    %4093 = vmatmul.bf16.gmra.mxu0 %v2545
    %v4094 = vpop.f32.mrf.mxu0
    %v4095 = vadd.f32 %v4022, %v4094
    %v4096 = vpop.f32.mrf.mxu0
    %4097 = vdwg.mxu0
    %4098 = vmatpush.bf16.msra.mxu0 %v3615
    %4099 = vmatpush.bf16.msra.mxu0 %v3607
    %4100 = vmatpush.bf16.msra.mxu0 %v3599
    %4101 = vmatpush.bf16.msra.mxu0 %v3591
    %4102 = vmatpush.bf16.msra.mxu0 %v3583
    %4103 = vmatpush.bf16.msra.mxu0 %v3575
    %4104 = vmatpush.bf16.msra.mxu0 %v3567
    %4105 = vmatpush.bf16.msra.mxu0 %v3559
    %4106 = vmatmul.bf16.gmra.mxu0 %v2498
    %v4107 = vpop.f32.mrf.mxu0
    %v4108 = vadd.f32 %v4035, %v4107
    %v4109 = vpop.f32.mrf.mxu0
    %v4110 = vadd.f32 %v4037, %v4109
    %4111 = vmatmul.bf16.gmra.mxu0 %v2502
    %v4112 = vpop.f32.mrf.mxu0
    %v4113 = vadd.f32 %v4040, %v4112
    %v4114 = vpop.f32.mrf.mxu0
    %v4115 = vadd.f32 %v4042, %v4114
    %4116 = vmatmul.bf16.gmra.mxu0 %v2506
    %v4117 = vpop.f32.mrf.mxu0
    %v4118 = vadd.f32 %v4045, %v4117
    %v4119 = vpop.f32.mrf.mxu0
    %v4120 = vadd.f32 %v4047, %v4119
    %4121 = vmatmul.bf16.gmra.mxu0 %v2510
    %v4122 = vpop.f32.mrf.mxu0
    %v4123 = vadd.f32 %v4050, %v4122
    %v4124 = vpop.f32.mrf.mxu0
    %v4125 = vadd.f32 %v4052, %v4124
    %4126 = vmatmul.bf16.gmra.mxu0 %v2514
    %v4127 = vpop.f32.mrf.mxu0
    %v4128 = vadd.f32 %v4055, %v4127
    %v4129 = vpop.f32.mrf.mxu0
    %v4130 = vadd.f32 %v4057, %v4129
    %4131 = vmatmul.bf16.gmra.mxu0 %v2518
    %v4132 = vpop.f32.mrf.mxu0
    %v4133 = vadd.f32 %v4060, %v4132
    %v4134 = vpop.f32.mrf.mxu0
    %v4135 = vadd.f32 %v4062, %v4134
    %4136 = vmatmul.bf16.gmra.mxu0 %v2522
    %v4137 = vpop.f32.mrf.mxu0
    %v4138 = vadd.f32 %v4065, %v4137
    %v4139 = vpop.f32.mrf.mxu0
    %v4140 = vadd.f32 %v4067, %v4139
    %4141 = vmatmul.bf16.gmra.mxu0 %v2526
    %v4142 = vpop.f32.mrf.mxu0
    %v4143 = vadd.f32 %v4070, %v4142
    %v4144 = vpop.f32.mrf.mxu0
    %v4145 = vadd.f32 %v4072, %v4144
    %4146 = vmatmul.bf16.gmra.mxu0 %v2530
    %v4147 = vpop.f32.mrf.mxu0
    %v4148 = vadd.f32 %v4075, %v4147
    %v4149 = vpop.f32.mrf.mxu0
    %v4150 = vadd.f32 %v4077, %v4149
    %4151 = vmatmul.bf16.gmra.mxu0 %v2534
    %v4152 = vpop.f32.mrf.mxu0
    %v4153 = vadd.f32 %v4080, %v4152
    %v4154 = vpop.f32.mrf.mxu0
    %v4155 = vadd.f32 %v4082, %v4154
    %4156 = vmatmul.bf16.gmra.mxu0 %v2538
    %v4157 = vpop.f32.mrf.mxu0
    %v4158 = vadd.f32 %v4085, %v4157
    %v4159 = vpop.f32.mrf.mxu0
    %v4160 = vadd.f32 %v4087, %v4159
    %4161 = vmatmul.bf16.gmra.mxu0 %v2542
    %v4162 = vpop.f32.mrf.mxu0
    %v4163 = vadd.f32 %v4090, %v4162
    %v4164 = vpop.f32.mrf.mxu0
    %v4165 = vadd.f32 %v4092, %v4164
    %4166 = vmatmul.bf16.gmra.mxu0 %v2546
    %v4167 = vpop.f32.mrf.mxu0
    %v4168 = vadd.f32 %v4095, %v4167
    %v4169 = vpop.f32.mrf.mxu0
    %4170 = vdwg.mxu0
    %4171 = vmatpush.bf16.msra.mxu0 %v3424
    %4172 = vmatpush.bf16.msra.mxu0 %v3416
    %4173 = vmatpush.bf16.msra.mxu0 %v3408
    %4174 = vmatpush.bf16.msra.mxu0 %v3400
    %4175 = vmatpush.bf16.msra.mxu0 %v3392
    %4176 = vmatpush.bf16.msra.mxu0 %v3384
    %4177 = vmatpush.bf16.msra.mxu0 %v3376
    %4178 = vmatpush.bf16.msra.mxu0 %v3368
    %4179 = vmatmul.bf16.gmra.mxu0 %v2495
    %v4180 = vpop.f32.mrf.mxu0
    %v4181 = vadd.f32 %v2330, %v4180
    %v4182 = vpop.f32.mrf.mxu0
    %v4183 = vadd.f32 %v2330, %v4182
    %4184 = vmatmul.bf16.gmra.mxu0 %v2499
    %v4185 = vpop.f32.mrf.mxu0
    %v4186 = vadd.f32 %v2330, %v4185
    %v4187 = vpop.f32.mrf.mxu0
    %v4188 = vadd.f32 %v2330, %v4187
    %4189 = vmatmul.bf16.gmra.mxu0 %v2503
    %v4190 = vpop.f32.mrf.mxu0
    %v4191 = vadd.f32 %v2330, %v4190
    %v4192 = vpop.f32.mrf.mxu0
    %v4193 = vadd.f32 %v2330, %v4192
    %4194 = vmatmul.bf16.gmra.mxu0 %v2507
    %v4195 = vpop.f32.mrf.mxu0
    %v4196 = vadd.f32 %v2330, %v4195
    %v4197 = vpop.f32.mrf.mxu0
    %v4198 = vadd.f32 %v2330, %v4197
    %4199 = vmatmul.bf16.gmra.mxu0 %v2511
    %v4200 = vpop.f32.mrf.mxu0
    %v4201 = vadd.f32 %v2330, %v4200
    %v4202 = vpop.f32.mrf.mxu0
    %v4203 = vadd.f32 %v2330, %v4202
    %4204 = vmatmul.bf16.gmra.mxu0 %v2515
    %v4205 = vpop.f32.mrf.mxu0
    %v4206 = vadd.f32 %v2330, %v4205
    %v4207 = vpop.f32.mrf.mxu0
    %v4208 = vadd.f32 %v2330, %v4207
    %4209 = vmatmul.bf16.gmra.mxu0 %v2519
    %v4210 = vpop.f32.mrf.mxu0
    %v4211 = vadd.f32 %v2330, %v4210
    %v4212 = vpop.f32.mrf.mxu0
    %v4213 = vadd.f32 %v2330, %v4212
    %4214 = vmatmul.bf16.gmra.mxu0 %v2523
    %v4215 = vpop.f32.mrf.mxu0
    %v4216 = vadd.f32 %v2330, %v4215
    %v4217 = vpop.f32.mrf.mxu0
    %v4218 = vadd.f32 %v2330, %v4217
    %4219 = vmatmul.bf16.gmra.mxu0 %v2527
    %v4220 = vpop.f32.mrf.mxu0
    %v4221 = vadd.f32 %v2330, %v4220
    %v4222 = vpop.f32.mrf.mxu0
    %v4223 = vadd.f32 %v2330, %v4222
    %4224 = vmatmul.bf16.gmra.mxu0 %v2531
    %v4225 = vpop.f32.mrf.mxu0
    %v4226 = vadd.f32 %v2330, %v4225
    %v4227 = vpop.f32.mrf.mxu0
    %v4228 = vadd.f32 %v2330, %v4227
    %4229 = vmatmul.bf16.gmra.mxu0 %v2535
    %v4230 = vpop.f32.mrf.mxu0
    %v4231 = vadd.f32 %v2330, %v4230
    %v4232 = vpop.f32.mrf.mxu0
    %v4233 = vadd.f32 %v2330, %v4232
    %4234 = vmatmul.bf16.gmra.mxu0 %v2539
    %v4235 = vpop.f32.mrf.mxu0
    %v4236 = vadd.f32 %v2330, %v4235
    %v4237 = vpop.f32.mrf.mxu0
    %v4238 = vadd.f32 %v2330, %v4237
    %4239 = vmatmul.bf16.gmra.mxu0 %v2543
    %v4240 = vpop.f32.mrf.mxu0
    %v4241 = vadd.f32 %v2330, %v4240
    %v4242 = vpop.f32.mrf.mxu0
    %4243 = vdwg.mxu0
    %4244 = vmatpush.bf16.msra.mxu0 %v3488
    %4245 = vmatpush.bf16.msra.mxu0 %v3480
    %4246 = vmatpush.bf16.msra.mxu0 %v3472
    %4247 = vmatpush.bf16.msra.mxu0 %v3464
    %4248 = vmatpush.bf16.msra.mxu0 %v3456
    %4249 = vmatpush.bf16.msra.mxu0 %v3448
    %4250 = vmatpush.bf16.msra.mxu0 %v3440
    %4251 = vmatpush.bf16.msra.mxu0 %v3432
    %4252 = vmatmul.bf16.gmra.mxu0 %v2496
    %v4253 = vpop.f32.mrf.mxu0
    %v4254 = vadd.f32 %v4181, %v4253
    %v4255 = vpop.f32.mrf.mxu0
    %v4256 = vadd.f32 %v4183, %v4255
    %4257 = vmatmul.bf16.gmra.mxu0 %v2500
    %v4258 = vpop.f32.mrf.mxu0
    %v4259 = vadd.f32 %v4186, %v4258
    %v4260 = vpop.f32.mrf.mxu0
    %v4261 = vadd.f32 %v4188, %v4260
    %4262 = vmatmul.bf16.gmra.mxu0 %v2504
    %v4263 = vpop.f32.mrf.mxu0
    %v4264 = vadd.f32 %v4191, %v4263
    %v4265 = vpop.f32.mrf.mxu0
    %v4266 = vadd.f32 %v4193, %v4265
    %4267 = vmatmul.bf16.gmra.mxu0 %v2508
    %v4268 = vpop.f32.mrf.mxu0
    %v4269 = vadd.f32 %v4196, %v4268
    %v4270 = vpop.f32.mrf.mxu0
    %v4271 = vadd.f32 %v4198, %v4270
    %4272 = vmatmul.bf16.gmra.mxu0 %v2512
    %v4273 = vpop.f32.mrf.mxu0
    %v4274 = vadd.f32 %v4201, %v4273
    %v4275 = vpop.f32.mrf.mxu0
    %v4276 = vadd.f32 %v4203, %v4275
    %4277 = vmatmul.bf16.gmra.mxu0 %v2516
    %v4278 = vpop.f32.mrf.mxu0
    %v4279 = vadd.f32 %v4206, %v4278
    %v4280 = vpop.f32.mrf.mxu0
    %v4281 = vadd.f32 %v4208, %v4280
    %4282 = vmatmul.bf16.gmra.mxu0 %v2520
    %v4283 = vpop.f32.mrf.mxu0
    %v4284 = vadd.f32 %v4211, %v4283
    %v4285 = vpop.f32.mrf.mxu0
    %v4286 = vadd.f32 %v4213, %v4285
    %4287 = vmatmul.bf16.gmra.mxu0 %v2524
    %v4288 = vpop.f32.mrf.mxu0
    %v4289 = vadd.f32 %v4216, %v4288
    %v4290 = vpop.f32.mrf.mxu0
    %v4291 = vadd.f32 %v4218, %v4290
    %4292 = vmatmul.bf16.gmra.mxu0 %v2528
    %v4293 = vpop.f32.mrf.mxu0
    %v4294 = vadd.f32 %v4221, %v4293
    %v4295 = vpop.f32.mrf.mxu0
    %v4296 = vadd.f32 %v4223, %v4295
    %4297 = vmatmul.bf16.gmra.mxu0 %v2532
    %v4298 = vpop.f32.mrf.mxu0
    %v4299 = vadd.f32 %v4226, %v4298
    %v4300 = vpop.f32.mrf.mxu0
    %v4301 = vadd.f32 %v4228, %v4300
    %4302 = vmatmul.bf16.gmra.mxu0 %v2536
    %v4303 = vpop.f32.mrf.mxu0
    %v4304 = vadd.f32 %v4231, %v4303
    %v4305 = vpop.f32.mrf.mxu0
    %v4306 = vadd.f32 %v4233, %v4305
    %4307 = vmatmul.bf16.gmra.mxu0 %v2540
    %v4308 = vpop.f32.mrf.mxu0
    %v4309 = vadd.f32 %v4236, %v4308
    %v4310 = vpop.f32.mrf.mxu0
    %v4311 = vadd.f32 %v4238, %v4310
    %4312 = vmatmul.bf16.gmra.mxu0 %v2544
    %v4313 = vpop.f32.mrf.mxu0
    %v4314 = vadd.f32 %v4241, %v4313
    %v4315 = vpop.f32.mrf.mxu0
    %4316 = vdwg.mxu0
    %4317 = vmatpush.bf16.msra.mxu0 %v3552
    %4318 = vmatpush.bf16.msra.mxu0 %v3544
    %4319 = vmatpush.bf16.msra.mxu0 %v3536
    %4320 = vmatpush.bf16.msra.mxu0 %v3528
    %4321 = vmatpush.bf16.msra.mxu0 %v3520
    %4322 = vmatpush.bf16.msra.mxu0 %v3512
    %4323 = vmatpush.bf16.msra.mxu0 %v3504
    %4324 = vmatpush.bf16.msra.mxu0 %v3496
    %4325 = vmatmul.bf16.gmra.mxu0 %v2497
    %v4326 = vpop.f32.mrf.mxu0
    %v4327 = vadd.f32 %v4254, %v4326
    %v4328 = vpop.f32.mrf.mxu0
    %v4329 = vadd.f32 %v4256, %v4328
    %4330 = vmatmul.bf16.gmra.mxu0 %v2501
    %v4331 = vpop.f32.mrf.mxu0
    %v4332 = vadd.f32 %v4259, %v4331
    %v4333 = vpop.f32.mrf.mxu0
    %v4334 = vadd.f32 %v4261, %v4333
    %4335 = vmatmul.bf16.gmra.mxu0 %v2505
    %v4336 = vpop.f32.mrf.mxu0
    %v4337 = vadd.f32 %v4264, %v4336
    %v4338 = vpop.f32.mrf.mxu0
    %v4339 = vadd.f32 %v4266, %v4338
    %4340 = vmatmul.bf16.gmra.mxu0 %v2509
    %v4341 = vpop.f32.mrf.mxu0
    %v4342 = vadd.f32 %v4269, %v4341
    %v4343 = vpop.f32.mrf.mxu0
    %v4344 = vadd.f32 %v4271, %v4343
    %4345 = vmatmul.bf16.gmra.mxu0 %v2513
    %v4346 = vpop.f32.mrf.mxu0
    %v4347 = vadd.f32 %v4274, %v4346
    %v4348 = vpop.f32.mrf.mxu0
    %v4349 = vadd.f32 %v4276, %v4348
    %4350 = vmatmul.bf16.gmra.mxu0 %v2517
    %v4351 = vpop.f32.mrf.mxu0
    %v4352 = vadd.f32 %v4279, %v4351
    %v4353 = vpop.f32.mrf.mxu0
    %v4354 = vadd.f32 %v4281, %v4353
    %4355 = vmatmul.bf16.gmra.mxu0 %v2521
    %v4356 = vpop.f32.mrf.mxu0
    %v4357 = vadd.f32 %v4284, %v4356
    %v4358 = vpop.f32.mrf.mxu0
    %v4359 = vadd.f32 %v4286, %v4358
    %4360 = vmatmul.bf16.gmra.mxu0 %v2525
    %v4361 = vpop.f32.mrf.mxu0
    %v4362 = vadd.f32 %v4289, %v4361
    %v4363 = vpop.f32.mrf.mxu0
    %v4364 = vadd.f32 %v4291, %v4363
    %4365 = vmatmul.bf16.gmra.mxu0 %v2529
    %v4366 = vpop.f32.mrf.mxu0
    %v4367 = vadd.f32 %v4294, %v4366
    %v4368 = vpop.f32.mrf.mxu0
    %v4369 = vadd.f32 %v4296, %v4368
    %4370 = vmatmul.bf16.gmra.mxu0 %v2533
    %v4371 = vpop.f32.mrf.mxu0
    %v4372 = vadd.f32 %v4299, %v4371
    %v4373 = vpop.f32.mrf.mxu0
    %v4374 = vadd.f32 %v4301, %v4373
    %4375 = vmatmul.bf16.gmra.mxu0 %v2537
    %v4376 = vpop.f32.mrf.mxu0
    %v4377 = vadd.f32 %v4304, %v4376
    %v4378 = vpop.f32.mrf.mxu0
    %v4379 = vadd.f32 %v4306, %v4378
    %4380 = vmatmul.bf16.gmra.mxu0 %v2541
    %v4381 = vpop.f32.mrf.mxu0
    %v4382 = vadd.f32 %v4309, %v4381
    %v4383 = vpop.f32.mrf.mxu0
    %v4384 = vadd.f32 %v4311, %v4383
    %4385 = vmatmul.bf16.gmra.mxu0 %v2545
    %v4386 = vpop.f32.mrf.mxu0
    %v4387 = vadd.f32 %v4314, %v4386
    %v4388 = vpop.f32.mrf.mxu0
    %4389 = vdwg.mxu0
    %4390 = vmatpush.bf16.msra.mxu0 %v3616
    %4391 = vmatpush.bf16.msra.mxu0 %v3608
    %4392 = vmatpush.bf16.msra.mxu0 %v3600
    %4393 = vmatpush.bf16.msra.mxu0 %v3592
    %4394 = vmatpush.bf16.msra.mxu0 %v3584
    %4395 = vmatpush.bf16.msra.mxu0 %v3576
    %4396 = vmatpush.bf16.msra.mxu0 %v3568
    %4397 = vmatpush.bf16.msra.mxu0 %v3560
    %4398 = vmatmul.bf16.gmra.mxu0 %v2498
    %v4399 = vpop.f32.mrf.mxu0
    %v4400 = vadd.f32 %v4327, %v4399
    %v4401 = vpop.f32.mrf.mxu0
    %v4402 = vadd.f32 %v4329, %v4401
    %4403 = vmatmul.bf16.gmra.mxu0 %v2502
    %v4404 = vpop.f32.mrf.mxu0
    %v4405 = vadd.f32 %v4332, %v4404
    %v4406 = vpop.f32.mrf.mxu0
    %v4407 = vadd.f32 %v4334, %v4406
    %4408 = vmatmul.bf16.gmra.mxu0 %v2506
    %v4409 = vpop.f32.mrf.mxu0
    %v4410 = vadd.f32 %v4337, %v4409
    %v4411 = vpop.f32.mrf.mxu0
    %v4412 = vadd.f32 %v4339, %v4411
    %4413 = vmatmul.bf16.gmra.mxu0 %v2510
    %v4414 = vpop.f32.mrf.mxu0
    %v4415 = vadd.f32 %v4342, %v4414
    %v4416 = vpop.f32.mrf.mxu0
    %v4417 = vadd.f32 %v4344, %v4416
    %4418 = vmatmul.bf16.gmra.mxu0 %v2514
    %v4419 = vpop.f32.mrf.mxu0
    %v4420 = vadd.f32 %v4347, %v4419
    %v4421 = vpop.f32.mrf.mxu0
    %v4422 = vadd.f32 %v4349, %v4421
    %4423 = vmatmul.bf16.gmra.mxu0 %v2518
    %v4424 = vpop.f32.mrf.mxu0
    %v4425 = vadd.f32 %v4352, %v4424
    %v4426 = vpop.f32.mrf.mxu0
    %v4427 = vadd.f32 %v4354, %v4426
    %4428 = vmatmul.bf16.gmra.mxu0 %v2522
    %v4429 = vpop.f32.mrf.mxu0
    %v4430 = vadd.f32 %v4357, %v4429
    %v4431 = vpop.f32.mrf.mxu0
    %v4432 = vadd.f32 %v4359, %v4431
    %4433 = vmatmul.bf16.gmra.mxu0 %v2526
    %v4434 = vpop.f32.mrf.mxu0
    %v4435 = vadd.f32 %v4362, %v4434
    %v4436 = vpop.f32.mrf.mxu0
    %v4437 = vadd.f32 %v4364, %v4436
    %4438 = vmatmul.bf16.gmra.mxu0 %v2530
    %v4439 = vpop.f32.mrf.mxu0
    %v4440 = vadd.f32 %v4367, %v4439
    %v4441 = vpop.f32.mrf.mxu0
    %v4442 = vadd.f32 %v4369, %v4441
    %4443 = vmatmul.bf16.gmra.mxu0 %v2534
    %v4444 = vpop.f32.mrf.mxu0
    %v4445 = vadd.f32 %v4372, %v4444
    %v4446 = vpop.f32.mrf.mxu0
    %v4447 = vadd.f32 %v4374, %v4446
    %4448 = vmatmul.bf16.gmra.mxu0 %v2538
    %v4449 = vpop.f32.mrf.mxu0
    %v4450 = vadd.f32 %v4377, %v4449
    %v4451 = vpop.f32.mrf.mxu0
    %v4452 = vadd.f32 %v4379, %v4451
    %4453 = vmatmul.bf16.gmra.mxu0 %v2542
    %v4454 = vpop.f32.mrf.mxu0
    %v4455 = vadd.f32 %v4382, %v4454
    %v4456 = vpop.f32.mrf.mxu0
    %v4457 = vadd.f32 %v4384, %v4456
    %4458 = vmatmul.bf16.gmra.mxu0 %v2546
    %v4459 = vpop.f32.mrf.mxu0
    %v4460 = vadd.f32 %v4387, %v4459
    %v4461 = vpop.f32.mrf.mxu0
    %4462 = vdwg.mxu0
    %4463 = vmatpush.bf16.msra.mxu0 %v3425
    %4464 = vmatpush.bf16.msra.mxu0 %v3417
    %4465 = vmatpush.bf16.msra.mxu0 %v3409
    %4466 = vmatpush.bf16.msra.mxu0 %v3401
    %4467 = vmatpush.bf16.msra.mxu0 %v3393
    %4468 = vmatpush.bf16.msra.mxu0 %v3385
    %4469 = vmatpush.bf16.msra.mxu0 %v3377
    %4470 = vmatpush.bf16.msra.mxu0 %v3369
    %4471 = vmatmul.bf16.gmra.mxu0 %v2495
    %v4472 = vpop.f32.mrf.mxu0
    %v4473 = vadd.f32 %v2331, %v4472
    %v4474 = vpop.f32.mrf.mxu0
    %v4475 = vadd.f32 %v2331, %v4474
    %4476 = vmatmul.bf16.gmra.mxu0 %v2499
    %v4477 = vpop.f32.mrf.mxu0
    %v4478 = vadd.f32 %v2331, %v4477
    %v4479 = vpop.f32.mrf.mxu0
    %v4480 = vadd.f32 %v2331, %v4479
    %4481 = vmatmul.bf16.gmra.mxu0 %v2503
    %v4482 = vpop.f32.mrf.mxu0
    %v4483 = vadd.f32 %v2331, %v4482
    %v4484 = vpop.f32.mrf.mxu0
    %v4485 = vadd.f32 %v2331, %v4484
    %4486 = vmatmul.bf16.gmra.mxu0 %v2507
    %v4487 = vpop.f32.mrf.mxu0
    %v4488 = vadd.f32 %v2331, %v4487
    %v4489 = vpop.f32.mrf.mxu0
    %v4490 = vadd.f32 %v2331, %v4489
    %4491 = vmatmul.bf16.gmra.mxu0 %v2511
    %v4492 = vpop.f32.mrf.mxu0
    %v4493 = vadd.f32 %v2331, %v4492
    %v4494 = vpop.f32.mrf.mxu0
    %v4495 = vadd.f32 %v2331, %v4494
    %4496 = vmatmul.bf16.gmra.mxu0 %v2515
    %v4497 = vpop.f32.mrf.mxu0
    %v4498 = vadd.f32 %v2331, %v4497
    %v4499 = vpop.f32.mrf.mxu0
    %v4500 = vadd.f32 %v2331, %v4499
    %4501 = vmatmul.bf16.gmra.mxu0 %v2519
    %v4502 = vpop.f32.mrf.mxu0
    %v4503 = vadd.f32 %v2331, %v4502
    %v4504 = vpop.f32.mrf.mxu0
    %v4505 = vadd.f32 %v2331, %v4504
    %4506 = vmatmul.bf16.gmra.mxu0 %v2523
    %v4507 = vpop.f32.mrf.mxu0
    %v4508 = vadd.f32 %v2331, %v4507
    %v4509 = vpop.f32.mrf.mxu0
    %v4510 = vadd.f32 %v2331, %v4509
    %4511 = vmatmul.bf16.gmra.mxu0 %v2527
    %v4512 = vpop.f32.mrf.mxu0
    %v4513 = vadd.f32 %v2331, %v4512
    %v4514 = vpop.f32.mrf.mxu0
    %v4515 = vadd.f32 %v2331, %v4514
    %4516 = vmatmul.bf16.gmra.mxu0 %v2531
    %v4517 = vpop.f32.mrf.mxu0
    %v4518 = vadd.f32 %v2331, %v4517
    %v4519 = vpop.f32.mrf.mxu0
    %v4520 = vadd.f32 %v2331, %v4519
    %4521 = vmatmul.bf16.gmra.mxu0 %v2535
    %v4522 = vpop.f32.mrf.mxu0
    %v4523 = vadd.f32 %v2331, %v4522
    %v4524 = vpop.f32.mrf.mxu0
    %v4525 = vadd.f32 %v2331, %v4524
    %4526 = vmatmul.bf16.gmra.mxu0 %v2539
    %v4527 = vpop.f32.mrf.mxu0
    %v4528 = vadd.f32 %v2331, %v4527
    %v4529 = vpop.f32.mrf.mxu0
    %v4530 = vadd.f32 %v2331, %v4529
    %4531 = vmatmul.bf16.gmra.mxu0 %v2543
    %v4532 = vpop.f32.mrf.mxu0
    %v4533 = vadd.f32 %v2331, %v4532
    %v4534 = vpop.f32.mrf.mxu0
    %4535 = vdwg.mxu0
    %4536 = vmatpush.bf16.msra.mxu0 %v3489
    %4537 = vmatpush.bf16.msra.mxu0 %v3481
    %4538 = vmatpush.bf16.msra.mxu0 %v3473
    %4539 = vmatpush.bf16.msra.mxu0 %v3465
    %4540 = vmatpush.bf16.msra.mxu0 %v3457
    %4541 = vmatpush.bf16.msra.mxu0 %v3449
    %4542 = vmatpush.bf16.msra.mxu0 %v3441
    %4543 = vmatpush.bf16.msra.mxu0 %v3433
    %4544 = vmatmul.bf16.gmra.mxu0 %v2496
    %v4545 = vpop.f32.mrf.mxu0
    %v4546 = vadd.f32 %v4473, %v4545
    %v4547 = vpop.f32.mrf.mxu0
    %v4548 = vadd.f32 %v4475, %v4547
    %4549 = vmatmul.bf16.gmra.mxu0 %v2500
    %v4550 = vpop.f32.mrf.mxu0
    %v4551 = vadd.f32 %v4478, %v4550
    %v4552 = vpop.f32.mrf.mxu0
    %v4553 = vadd.f32 %v4480, %v4552
    %4554 = vmatmul.bf16.gmra.mxu0 %v2504
    %v4555 = vpop.f32.mrf.mxu0
    %v4556 = vadd.f32 %v4483, %v4555
    %v4557 = vpop.f32.mrf.mxu0
    %v4558 = vadd.f32 %v4485, %v4557
    %4559 = vmatmul.bf16.gmra.mxu0 %v2508
    %v4560 = vpop.f32.mrf.mxu0
    %v4561 = vadd.f32 %v4488, %v4560
    %v4562 = vpop.f32.mrf.mxu0
    %v4563 = vadd.f32 %v4490, %v4562
    %4564 = vmatmul.bf16.gmra.mxu0 %v2512
    %v4565 = vpop.f32.mrf.mxu0
    %v4566 = vadd.f32 %v4493, %v4565
    %v4567 = vpop.f32.mrf.mxu0
    %v4568 = vadd.f32 %v4495, %v4567
    %4569 = vmatmul.bf16.gmra.mxu0 %v2516
    %v4570 = vpop.f32.mrf.mxu0
    %v4571 = vadd.f32 %v4498, %v4570
    %v4572 = vpop.f32.mrf.mxu0
    %v4573 = vadd.f32 %v4500, %v4572
    %4574 = vmatmul.bf16.gmra.mxu0 %v2520
    %v4575 = vpop.f32.mrf.mxu0
    %v4576 = vadd.f32 %v4503, %v4575
    %v4577 = vpop.f32.mrf.mxu0
    %v4578 = vadd.f32 %v4505, %v4577
    %4579 = vmatmul.bf16.gmra.mxu0 %v2524
    %v4580 = vpop.f32.mrf.mxu0
    %v4581 = vadd.f32 %v4508, %v4580
    %v4582 = vpop.f32.mrf.mxu0
    %v4583 = vadd.f32 %v4510, %v4582
    %4584 = vmatmul.bf16.gmra.mxu0 %v2528
    %v4585 = vpop.f32.mrf.mxu0
    %v4586 = vadd.f32 %v4513, %v4585
    %v4587 = vpop.f32.mrf.mxu0
    %v4588 = vadd.f32 %v4515, %v4587
    %4589 = vmatmul.bf16.gmra.mxu0 %v2532
    %v4590 = vpop.f32.mrf.mxu0
    %v4591 = vadd.f32 %v4518, %v4590
    %v4592 = vpop.f32.mrf.mxu0
    %v4593 = vadd.f32 %v4520, %v4592
    %4594 = vmatmul.bf16.gmra.mxu0 %v2536
    %v4595 = vpop.f32.mrf.mxu0
    %v4596 = vadd.f32 %v4523, %v4595
    %v4597 = vpop.f32.mrf.mxu0
    %v4598 = vadd.f32 %v4525, %v4597
    %4599 = vmatmul.bf16.gmra.mxu0 %v2540
    %v4600 = vpop.f32.mrf.mxu0
    %v4601 = vadd.f32 %v4528, %v4600
    %v4602 = vpop.f32.mrf.mxu0
    %v4603 = vadd.f32 %v4530, %v4602
    %4604 = vmatmul.bf16.gmra.mxu0 %v2544
    %v4605 = vpop.f32.mrf.mxu0
    %v4606 = vadd.f32 %v4533, %v4605
    %v4607 = vpop.f32.mrf.mxu0
    %4608 = vdwg.mxu0
    %4609 = vmatpush.bf16.msra.mxu0 %v3553
    %4610 = vmatpush.bf16.msra.mxu0 %v3545
    %4611 = vmatpush.bf16.msra.mxu0 %v3537
    %4612 = vmatpush.bf16.msra.mxu0 %v3529
    %4613 = vmatpush.bf16.msra.mxu0 %v3521
    %4614 = vmatpush.bf16.msra.mxu0 %v3513
    %4615 = vmatpush.bf16.msra.mxu0 %v3505
    %4616 = vmatpush.bf16.msra.mxu0 %v3497
    %4617 = vmatmul.bf16.gmra.mxu0 %v2497
    %v4618 = vpop.f32.mrf.mxu0
    %v4619 = vadd.f32 %v4546, %v4618
    %v4620 = vpop.f32.mrf.mxu0
    %v4621 = vadd.f32 %v4548, %v4620
    %4622 = vmatmul.bf16.gmra.mxu0 %v2501
    %v4623 = vpop.f32.mrf.mxu0
    %v4624 = vadd.f32 %v4551, %v4623
    %v4625 = vpop.f32.mrf.mxu0
    %v4626 = vadd.f32 %v4553, %v4625
    %4627 = vmatmul.bf16.gmra.mxu0 %v2505
    %v4628 = vpop.f32.mrf.mxu0
    %v4629 = vadd.f32 %v4556, %v4628
    %v4630 = vpop.f32.mrf.mxu0
    %v4631 = vadd.f32 %v4558, %v4630
    %4632 = vmatmul.bf16.gmra.mxu0 %v2509
    %v4633 = vpop.f32.mrf.mxu0
    %v4634 = vadd.f32 %v4561, %v4633
    %v4635 = vpop.f32.mrf.mxu0
    %v4636 = vadd.f32 %v4563, %v4635
    %4637 = vmatmul.bf16.gmra.mxu0 %v2513
    %v4638 = vpop.f32.mrf.mxu0
    %v4639 = vadd.f32 %v4566, %v4638
    %v4640 = vpop.f32.mrf.mxu0
    %v4641 = vadd.f32 %v4568, %v4640
    %4642 = vmatmul.bf16.gmra.mxu0 %v2517
    %v4643 = vpop.f32.mrf.mxu0
    %v4644 = vadd.f32 %v4571, %v4643
    %v4645 = vpop.f32.mrf.mxu0
    %v4646 = vadd.f32 %v4573, %v4645
    %4647 = vmatmul.bf16.gmra.mxu0 %v2521
    %v4648 = vpop.f32.mrf.mxu0
    %v4649 = vadd.f32 %v4576, %v4648
    %v4650 = vpop.f32.mrf.mxu0
    %v4651 = vadd.f32 %v4578, %v4650
    %4652 = vmatmul.bf16.gmra.mxu0 %v2525
    %v4653 = vpop.f32.mrf.mxu0
    %v4654 = vadd.f32 %v4581, %v4653
    %v4655 = vpop.f32.mrf.mxu0
    %v4656 = vadd.f32 %v4583, %v4655
    %4657 = vmatmul.bf16.gmra.mxu0 %v2529
    %v4658 = vpop.f32.mrf.mxu0
    %v4659 = vadd.f32 %v4586, %v4658
    %v4660 = vpop.f32.mrf.mxu0
    %v4661 = vadd.f32 %v4588, %v4660
    %4662 = vmatmul.bf16.gmra.mxu0 %v2533
    %v4663 = vpop.f32.mrf.mxu0
    %v4664 = vadd.f32 %v4591, %v4663
    %v4665 = vpop.f32.mrf.mxu0
    %v4666 = vadd.f32 %v4593, %v4665
    %4667 = vmatmul.bf16.gmra.mxu0 %v2537
    %v4668 = vpop.f32.mrf.mxu0
    %v4669 = vadd.f32 %v4596, %v4668
    %v4670 = vpop.f32.mrf.mxu0
    %v4671 = vadd.f32 %v4598, %v4670
    %4672 = vmatmul.bf16.gmra.mxu0 %v2541
    %v4673 = vpop.f32.mrf.mxu0
    %v4674 = vadd.f32 %v4601, %v4673
    %v4675 = vpop.f32.mrf.mxu0
    %v4676 = vadd.f32 %v4603, %v4675
    %4677 = vmatmul.bf16.gmra.mxu0 %v2545
    %v4678 = vpop.f32.mrf.mxu0
    %v4679 = vadd.f32 %v4606, %v4678
    %v4680 = vpop.f32.mrf.mxu0
    %4681 = vdwg.mxu0
    %4682 = vmatpush.bf16.msra.mxu0 %v3617
    %4683 = vmatpush.bf16.msra.mxu0 %v3609
    %4684 = vmatpush.bf16.msra.mxu0 %v3601
    %4685 = vmatpush.bf16.msra.mxu0 %v3593
    %4686 = vmatpush.bf16.msra.mxu0 %v3585
    %4687 = vmatpush.bf16.msra.mxu0 %v3577
    %4688 = vmatpush.bf16.msra.mxu0 %v3569
    %4689 = vmatpush.bf16.msra.mxu0 %v3561
    %4690 = vmatmul.bf16.gmra.mxu0 %v2498
    %v4691 = vpop.f32.mrf.mxu0
    %v4692 = vadd.f32 %v4619, %v4691
    %v4693 = vpop.f32.mrf.mxu0
    %v4694 = vadd.f32 %v4621, %v4693
    %4695 = vmatmul.bf16.gmra.mxu0 %v2502
    %v4696 = vpop.f32.mrf.mxu0
    %v4697 = vadd.f32 %v4624, %v4696
    %v4698 = vpop.f32.mrf.mxu0
    %v4699 = vadd.f32 %v4626, %v4698
    %4700 = vmatmul.bf16.gmra.mxu0 %v2506
    %v4701 = vpop.f32.mrf.mxu0
    %v4702 = vadd.f32 %v4629, %v4701
    %v4703 = vpop.f32.mrf.mxu0
    %v4704 = vadd.f32 %v4631, %v4703
    %4705 = vmatmul.bf16.gmra.mxu0 %v2510
    %v4706 = vpop.f32.mrf.mxu0
    %v4707 = vadd.f32 %v4634, %v4706
    %v4708 = vpop.f32.mrf.mxu0
    %v4709 = vadd.f32 %v4636, %v4708
    %4710 = vmatmul.bf16.gmra.mxu0 %v2514
    %v4711 = vpop.f32.mrf.mxu0
    %v4712 = vadd.f32 %v4639, %v4711
    %v4713 = vpop.f32.mrf.mxu0
    %v4714 = vadd.f32 %v4641, %v4713
    %4715 = vmatmul.bf16.gmra.mxu0 %v2518
    %v4716 = vpop.f32.mrf.mxu0
    %v4717 = vadd.f32 %v4644, %v4716
    %v4718 = vpop.f32.mrf.mxu0
    %v4719 = vadd.f32 %v4646, %v4718
    %4720 = vmatmul.bf16.gmra.mxu0 %v2522
    %v4721 = vpop.f32.mrf.mxu0
    %v4722 = vadd.f32 %v4649, %v4721
    %v4723 = vpop.f32.mrf.mxu0
    %v4724 = vadd.f32 %v4651, %v4723
    %4725 = vmatmul.bf16.gmra.mxu0 %v2526
    %v4726 = vpop.f32.mrf.mxu0
    %v4727 = vadd.f32 %v4654, %v4726
    %v4728 = vpop.f32.mrf.mxu0
    %v4729 = vadd.f32 %v4656, %v4728
    %4730 = vmatmul.bf16.gmra.mxu0 %v2530
    %v4731 = vpop.f32.mrf.mxu0
    %v4732 = vadd.f32 %v4659, %v4731
    %v4733 = vpop.f32.mrf.mxu0
    %v4734 = vadd.f32 %v4661, %v4733
    %4735 = vmatmul.bf16.gmra.mxu0 %v2534
    %v4736 = vpop.f32.mrf.mxu0
    %v4737 = vadd.f32 %v4664, %v4736
    %v4738 = vpop.f32.mrf.mxu0
    %v4739 = vadd.f32 %v4666, %v4738
    %4740 = vmatmul.bf16.gmra.mxu0 %v2538
    %v4741 = vpop.f32.mrf.mxu0
    %v4742 = vadd.f32 %v4669, %v4741
    %v4743 = vpop.f32.mrf.mxu0
    %v4744 = vadd.f32 %v4671, %v4743
    %4745 = vmatmul.bf16.gmra.mxu0 %v2542
    %v4746 = vpop.f32.mrf.mxu0
    %v4747 = vadd.f32 %v4674, %v4746
    %v4748 = vpop.f32.mrf.mxu0
    %v4749 = vadd.f32 %v4676, %v4748
    %4750 = vmatmul.bf16.gmra.mxu0 %v2546
    %v4751 = vpop.f32.mrf.mxu0
    %v4752 = vadd.f32 %v4679, %v4751
    %v4753 = vpop.f32.mrf.mxu0
    %4754 = vdwg.mxu0
    %4755 = vmatpush.bf16.msra.mxu0 %v3426
    %4756 = vmatpush.bf16.msra.mxu0 %v3418
    %4757 = vmatpush.bf16.msra.mxu0 %v3410
    %4758 = vmatpush.bf16.msra.mxu0 %v3402
    %4759 = vmatpush.bf16.msra.mxu0 %v3394
    %4760 = vmatpush.bf16.msra.mxu0 %v3386
    %4761 = vmatpush.bf16.msra.mxu0 %v3378
    %4762 = vmatpush.bf16.msra.mxu0 %v3370
    %4763 = vmatmul.bf16.gmra.mxu0 %v2495
    %v4764 = vpop.f32.mrf.mxu0
    %v4765 = vadd.f32 %v2332, %v4764
    %v4766 = vpop.f32.mrf.mxu0
    %v4767 = vadd.f32 %v2332, %v4766
    %4768 = vmatmul.bf16.gmra.mxu0 %v2499
    %v4769 = vpop.f32.mrf.mxu0
    %v4770 = vadd.f32 %v2332, %v4769
    %v4771 = vpop.f32.mrf.mxu0
    %v4772 = vadd.f32 %v2332, %v4771
    %4773 = vmatmul.bf16.gmra.mxu0 %v2503
    %v4774 = vpop.f32.mrf.mxu0
    %v4775 = vadd.f32 %v2332, %v4774
    %v4776 = vpop.f32.mrf.mxu0
    %v4777 = vadd.f32 %v2332, %v4776
    %4778 = vmatmul.bf16.gmra.mxu0 %v2507
    %v4779 = vpop.f32.mrf.mxu0
    %v4780 = vadd.f32 %v2332, %v4779
    %v4781 = vpop.f32.mrf.mxu0
    %v4782 = vadd.f32 %v2332, %v4781
    %4783 = vmatmul.bf16.gmra.mxu0 %v2511
    %v4784 = vpop.f32.mrf.mxu0
    %v4785 = vadd.f32 %v2332, %v4784
    %v4786 = vpop.f32.mrf.mxu0
    %v4787 = vadd.f32 %v2332, %v4786
    %4788 = vmatmul.bf16.gmra.mxu0 %v2515
    %v4789 = vpop.f32.mrf.mxu0
    %v4790 = vadd.f32 %v2332, %v4789
    %v4791 = vpop.f32.mrf.mxu0
    %v4792 = vadd.f32 %v2332, %v4791
    %4793 = vmatmul.bf16.gmra.mxu0 %v2519
    %v4794 = vpop.f32.mrf.mxu0
    %v4795 = vadd.f32 %v2332, %v4794
    %v4796 = vpop.f32.mrf.mxu0
    %v4797 = vadd.f32 %v2332, %v4796
    %4798 = vmatmul.bf16.gmra.mxu0 %v2523
    %v4799 = vpop.f32.mrf.mxu0
    %v4800 = vadd.f32 %v2332, %v4799
    %v4801 = vpop.f32.mrf.mxu0
    %v4802 = vadd.f32 %v2332, %v4801
    %4803 = vmatmul.bf16.gmra.mxu0 %v2527
    %v4804 = vpop.f32.mrf.mxu0
    %v4805 = vadd.f32 %v2332, %v4804
    %v4806 = vpop.f32.mrf.mxu0
    %v4807 = vadd.f32 %v2332, %v4806
    %4808 = vmatmul.bf16.gmra.mxu0 %v2531
    %v4809 = vpop.f32.mrf.mxu0
    %v4810 = vadd.f32 %v2332, %v4809
    %v4811 = vpop.f32.mrf.mxu0
    %v4812 = vadd.f32 %v2332, %v4811
    %4813 = vmatmul.bf16.gmra.mxu0 %v2535
    %v4814 = vpop.f32.mrf.mxu0
    %v4815 = vadd.f32 %v2332, %v4814
    %v4816 = vpop.f32.mrf.mxu0
    %v4817 = vadd.f32 %v2332, %v4816
    %4818 = vmatmul.bf16.gmra.mxu0 %v2539
    %v4819 = vpop.f32.mrf.mxu0
    %v4820 = vadd.f32 %v2332, %v4819
    %v4821 = vpop.f32.mrf.mxu0
    %v4822 = vadd.f32 %v2332, %v4821
    %4823 = vmatmul.bf16.gmra.mxu0 %v2543
    %v4824 = vpop.f32.mrf.mxu0
    %v4825 = vadd.f32 %v2332, %v4824
    %v4826 = vpop.f32.mrf.mxu0
    %4827 = vdwg.mxu0
    %4828 = vmatpush.bf16.msra.mxu0 %v3490
    %4829 = vmatpush.bf16.msra.mxu0 %v3482
    %4830 = vmatpush.bf16.msra.mxu0 %v3474
    %4831 = vmatpush.bf16.msra.mxu0 %v3466
    %4832 = vmatpush.bf16.msra.mxu0 %v3458
    %4833 = vmatpush.bf16.msra.mxu0 %v3450
    %4834 = vmatpush.bf16.msra.mxu0 %v3442
    %4835 = vmatpush.bf16.msra.mxu0 %v3434
    %4836 = vmatmul.bf16.gmra.mxu0 %v2496
    %v4837 = vpop.f32.mrf.mxu0
    %v4838 = vadd.f32 %v4765, %v4837
    %v4839 = vpop.f32.mrf.mxu0
    %v4840 = vadd.f32 %v4767, %v4839
    %4841 = vmatmul.bf16.gmra.mxu0 %v2500
    %v4842 = vpop.f32.mrf.mxu0
    %v4843 = vadd.f32 %v4770, %v4842
    %v4844 = vpop.f32.mrf.mxu0
    %v4845 = vadd.f32 %v4772, %v4844
    %4846 = vmatmul.bf16.gmra.mxu0 %v2504
    %v4847 = vpop.f32.mrf.mxu0
    %v4848 = vadd.f32 %v4775, %v4847
    %v4849 = vpop.f32.mrf.mxu0
    %v4850 = vadd.f32 %v4777, %v4849
    %4851 = vmatmul.bf16.gmra.mxu0 %v2508
    %v4852 = vpop.f32.mrf.mxu0
    %v4853 = vadd.f32 %v4780, %v4852
    %v4854 = vpop.f32.mrf.mxu0
    %v4855 = vadd.f32 %v4782, %v4854
    %4856 = vmatmul.bf16.gmra.mxu0 %v2512
    %v4857 = vpop.f32.mrf.mxu0
    %v4858 = vadd.f32 %v4785, %v4857
    %v4859 = vpop.f32.mrf.mxu0
    %v4860 = vadd.f32 %v4787, %v4859
    %4861 = vmatmul.bf16.gmra.mxu0 %v2516
    %v4862 = vpop.f32.mrf.mxu0
    %v4863 = vadd.f32 %v4790, %v4862
    %v4864 = vpop.f32.mrf.mxu0
    %v4865 = vadd.f32 %v4792, %v4864
    %4866 = vmatmul.bf16.gmra.mxu0 %v2520
    %v4867 = vpop.f32.mrf.mxu0
    %v4868 = vadd.f32 %v4795, %v4867
    %v4869 = vpop.f32.mrf.mxu0
    %v4870 = vadd.f32 %v4797, %v4869
    %4871 = vmatmul.bf16.gmra.mxu0 %v2524
    %v4872 = vpop.f32.mrf.mxu0
    %v4873 = vadd.f32 %v4800, %v4872
    %v4874 = vpop.f32.mrf.mxu0
    %v4875 = vadd.f32 %v4802, %v4874
    %4876 = vmatmul.bf16.gmra.mxu0 %v2528
    %v4877 = vpop.f32.mrf.mxu0
    %v4878 = vadd.f32 %v4805, %v4877
    %v4879 = vpop.f32.mrf.mxu0
    %v4880 = vadd.f32 %v4807, %v4879
    %4881 = vmatmul.bf16.gmra.mxu0 %v2532
    %v4882 = vpop.f32.mrf.mxu0
    %v4883 = vadd.f32 %v4810, %v4882
    %v4884 = vpop.f32.mrf.mxu0
    %v4885 = vadd.f32 %v4812, %v4884
    %4886 = vmatmul.bf16.gmra.mxu0 %v2536
    %v4887 = vpop.f32.mrf.mxu0
    %v4888 = vadd.f32 %v4815, %v4887
    %v4889 = vpop.f32.mrf.mxu0
    %v4890 = vadd.f32 %v4817, %v4889
    %4891 = vmatmul.bf16.gmra.mxu0 %v2540
    %v4892 = vpop.f32.mrf.mxu0
    %v4893 = vadd.f32 %v4820, %v4892
    %v4894 = vpop.f32.mrf.mxu0
    %v4895 = vadd.f32 %v4822, %v4894
    %4896 = vmatmul.bf16.gmra.mxu0 %v2544
    %v4897 = vpop.f32.mrf.mxu0
    %v4898 = vadd.f32 %v4825, %v4897
    %v4899 = vpop.f32.mrf.mxu0
    %4900 = vdwg.mxu0
    %4901 = vmatpush.bf16.msra.mxu0 %v3554
    %4902 = vmatpush.bf16.msra.mxu0 %v3546
    %4903 = vmatpush.bf16.msra.mxu0 %v3538
    %4904 = vmatpush.bf16.msra.mxu0 %v3530
    %4905 = vmatpush.bf16.msra.mxu0 %v3522
    %4906 = vmatpush.bf16.msra.mxu0 %v3514
    %4907 = vmatpush.bf16.msra.mxu0 %v3506
    %4908 = vmatpush.bf16.msra.mxu0 %v3498
    %4909 = vmatmul.bf16.gmra.mxu0 %v2497
    %v4910 = vpop.f32.mrf.mxu0
    %v4911 = vadd.f32 %v4838, %v4910
    %v4912 = vpop.f32.mrf.mxu0
    %v4913 = vadd.f32 %v4840, %v4912
    %4914 = vmatmul.bf16.gmra.mxu0 %v2501
    %v4915 = vpop.f32.mrf.mxu0
    %v4916 = vadd.f32 %v4843, %v4915
    %v4917 = vpop.f32.mrf.mxu0
    %v4918 = vadd.f32 %v4845, %v4917
    %4919 = vmatmul.bf16.gmra.mxu0 %v2505
    %v4920 = vpop.f32.mrf.mxu0
    %v4921 = vadd.f32 %v4848, %v4920
    %v4922 = vpop.f32.mrf.mxu0
    %v4923 = vadd.f32 %v4850, %v4922
    %4924 = vmatmul.bf16.gmra.mxu0 %v2509
    %v4925 = vpop.f32.mrf.mxu0
    %v4926 = vadd.f32 %v4853, %v4925
    %v4927 = vpop.f32.mrf.mxu0
    %v4928 = vadd.f32 %v4855, %v4927
    %4929 = vmatmul.bf16.gmra.mxu0 %v2513
    %v4930 = vpop.f32.mrf.mxu0
    %v4931 = vadd.f32 %v4858, %v4930
    %v4932 = vpop.f32.mrf.mxu0
    %v4933 = vadd.f32 %v4860, %v4932
    %4934 = vmatmul.bf16.gmra.mxu0 %v2517
    %v4935 = vpop.f32.mrf.mxu0
    %v4936 = vadd.f32 %v4863, %v4935
    %v4937 = vpop.f32.mrf.mxu0
    %v4938 = vadd.f32 %v4865, %v4937
    %4939 = vmatmul.bf16.gmra.mxu0 %v2521
    %v4940 = vpop.f32.mrf.mxu0
    %v4941 = vadd.f32 %v4868, %v4940
    %v4942 = vpop.f32.mrf.mxu0
    %v4943 = vadd.f32 %v4870, %v4942
    %4944 = vmatmul.bf16.gmra.mxu0 %v2525
    %v4945 = vpop.f32.mrf.mxu0
    %v4946 = vadd.f32 %v4873, %v4945
    %v4947 = vpop.f32.mrf.mxu0
    %v4948 = vadd.f32 %v4875, %v4947
    %4949 = vmatmul.bf16.gmra.mxu0 %v2529
    %v4950 = vpop.f32.mrf.mxu0
    %v4951 = vadd.f32 %v4878, %v4950
    %v4952 = vpop.f32.mrf.mxu0
    %v4953 = vadd.f32 %v4880, %v4952
    %4954 = vmatmul.bf16.gmra.mxu0 %v2533
    %v4955 = vpop.f32.mrf.mxu0
    %v4956 = vadd.f32 %v4883, %v4955
    %v4957 = vpop.f32.mrf.mxu0
    %v4958 = vadd.f32 %v4885, %v4957
    %4959 = vmatmul.bf16.gmra.mxu0 %v2537
    %v4960 = vpop.f32.mrf.mxu0
    %v4961 = vadd.f32 %v4888, %v4960
    %v4962 = vpop.f32.mrf.mxu0
    %v4963 = vadd.f32 %v4890, %v4962
    %4964 = vmatmul.bf16.gmra.mxu0 %v2541
    %v4965 = vpop.f32.mrf.mxu0
    %v4966 = vadd.f32 %v4893, %v4965
    %v4967 = vpop.f32.mrf.mxu0
    %v4968 = vadd.f32 %v4895, %v4967
    %4969 = vmatmul.bf16.gmra.mxu0 %v2545
    %v4970 = vpop.f32.mrf.mxu0
    %v4971 = vadd.f32 %v4898, %v4970
    %v4972 = vpop.f32.mrf.mxu0
    %4973 = vdwg.mxu0
    %4974 = vmatpush.bf16.msra.mxu0 %v3618
    %4975 = vmatpush.bf16.msra.mxu0 %v3610
    %4976 = vmatpush.bf16.msra.mxu0 %v3602
    %4977 = vmatpush.bf16.msra.mxu0 %v3594
    %4978 = vmatpush.bf16.msra.mxu0 %v3586
    %4979 = vmatpush.bf16.msra.mxu0 %v3578
    %4980 = vmatpush.bf16.msra.mxu0 %v3570
    %4981 = vmatpush.bf16.msra.mxu0 %v3562
    %4982 = vmatmul.bf16.gmra.mxu0 %v2498
    %v4983 = vpop.f32.mrf.mxu0
    %v4984 = vadd.f32 %v4911, %v4983
    %v4985 = vpop.f32.mrf.mxu0
    %v4986 = vadd.f32 %v4913, %v4985
    %4987 = vmatmul.bf16.gmra.mxu0 %v2502
    %v4988 = vpop.f32.mrf.mxu0
    %v4989 = vadd.f32 %v4916, %v4988
    %v4990 = vpop.f32.mrf.mxu0
    %v4991 = vadd.f32 %v4918, %v4990
    %4992 = vmatmul.bf16.gmra.mxu0 %v2506
    %v4993 = vpop.f32.mrf.mxu0
    %v4994 = vadd.f32 %v4921, %v4993
    %v4995 = vpop.f32.mrf.mxu0
    %v4996 = vadd.f32 %v4923, %v4995
    %4997 = vmatmul.bf16.gmra.mxu0 %v2510
    %v4998 = vpop.f32.mrf.mxu0
    %v4999 = vadd.f32 %v4926, %v4998
    %v5000 = vpop.f32.mrf.mxu0
    %v5001 = vadd.f32 %v4928, %v5000
    %5002 = vmatmul.bf16.gmra.mxu0 %v2514
    %v5003 = vpop.f32.mrf.mxu0
    %v5004 = vadd.f32 %v4931, %v5003
    %v5005 = vpop.f32.mrf.mxu0
    %v5006 = vadd.f32 %v4933, %v5005
    %5007 = vmatmul.bf16.gmra.mxu0 %v2518
    %v5008 = vpop.f32.mrf.mxu0
    %v5009 = vadd.f32 %v4936, %v5008
    %v5010 = vpop.f32.mrf.mxu0
    %v5011 = vadd.f32 %v4938, %v5010
    %5012 = vmatmul.bf16.gmra.mxu0 %v2522
    %v5013 = vpop.f32.mrf.mxu0
    %v5014 = vadd.f32 %v4941, %v5013
    %v5015 = vpop.f32.mrf.mxu0
    %v5016 = vadd.f32 %v4943, %v5015
    %5017 = vmatmul.bf16.gmra.mxu0 %v2526
    %v5018 = vpop.f32.mrf.mxu0
    %v5019 = vadd.f32 %v4946, %v5018
    %v5020 = vpop.f32.mrf.mxu0
    %v5021 = vadd.f32 %v4948, %v5020
    %5022 = vmatmul.bf16.gmra.mxu0 %v2530
    %v5023 = vpop.f32.mrf.mxu0
    %v5024 = vadd.f32 %v4951, %v5023
    %v5025 = vpop.f32.mrf.mxu0
    %v5026 = vadd.f32 %v4953, %v5025
    %5027 = vmatmul.bf16.gmra.mxu0 %v2534
    %v5028 = vpop.f32.mrf.mxu0
    %v5029 = vadd.f32 %v4956, %v5028
    %v5030 = vpop.f32.mrf.mxu0
    %v5031 = vadd.f32 %v4958, %v5030
    %5032 = vmatmul.bf16.gmra.mxu0 %v2538
    %v5033 = vpop.f32.mrf.mxu0
    %v5034 = vadd.f32 %v4961, %v5033
    %v5035 = vpop.f32.mrf.mxu0
    %v5036 = vadd.f32 %v4963, %v5035
    %5037 = vmatmul.bf16.gmra.mxu0 %v2542
    %v5038 = vpop.f32.mrf.mxu0
    %v5039 = vadd.f32 %v4966, %v5038
    %v5040 = vpop.f32.mrf.mxu0
    %v5041 = vadd.f32 %v4968, %v5040
    %5042 = vmatmul.bf16.gmra.mxu0 %v2546
    %v5043 = vpop.f32.mrf.mxu0
    %v5044 = vadd.f32 %v4971, %v5043
    %v5045 = vpop.f32.mrf.mxu0
    %5046 = vdwg.mxu0
    %5047 = vmatpush.bf16.msra.mxu0 %v3427
    %5048 = vmatpush.bf16.msra.mxu0 %v3419
    %5049 = vmatpush.bf16.msra.mxu0 %v3411
    %5050 = vmatpush.bf16.msra.mxu0 %v3403
    %5051 = vmatpush.bf16.msra.mxu0 %v3395
    %5052 = vmatpush.bf16.msra.mxu0 %v3387
    %5053 = vmatpush.bf16.msra.mxu0 %v3379
    %5054 = vmatpush.bf16.msra.mxu0 %v3371
    %5055 = vmatmul.bf16.gmra.mxu0 %v2495
    %v5056 = vpop.f32.mrf.mxu0
    %v5057 = vadd.f32 %v2333, %v5056
    %v5058 = vpop.f32.mrf.mxu0
    %v5059 = vadd.f32 %v2333, %v5058
    %5060 = vmatmul.bf16.gmra.mxu0 %v2499
    %v5061 = vpop.f32.mrf.mxu0
    %v5062 = vadd.f32 %v2333, %v5061
    %v5063 = vpop.f32.mrf.mxu0
    %v5064 = vadd.f32 %v2333, %v5063
    %5065 = vmatmul.bf16.gmra.mxu0 %v2503
    %v5066 = vpop.f32.mrf.mxu0
    %v5067 = vadd.f32 %v2333, %v5066
    %v5068 = vpop.f32.mrf.mxu0
    %v5069 = vadd.f32 %v2333, %v5068
    %5070 = vmatmul.bf16.gmra.mxu0 %v2507
    %v5071 = vpop.f32.mrf.mxu0
    %v5072 = vadd.f32 %v2333, %v5071
    %v5073 = vpop.f32.mrf.mxu0
    %v5074 = vadd.f32 %v2333, %v5073
    %5075 = vmatmul.bf16.gmra.mxu0 %v2511
    %v5076 = vpop.f32.mrf.mxu0
    %v5077 = vadd.f32 %v2333, %v5076
    %v5078 = vpop.f32.mrf.mxu0
    %v5079 = vadd.f32 %v2333, %v5078
    %5080 = vmatmul.bf16.gmra.mxu0 %v2515
    %v5081 = vpop.f32.mrf.mxu0
    %v5082 = vadd.f32 %v2333, %v5081
    %v5083 = vpop.f32.mrf.mxu0
    %v5084 = vadd.f32 %v2333, %v5083
    %5085 = vmatmul.bf16.gmra.mxu0 %v2519
    %v5086 = vpop.f32.mrf.mxu0
    %v5087 = vadd.f32 %v2333, %v5086
    %v5088 = vpop.f32.mrf.mxu0
    %v5089 = vadd.f32 %v2333, %v5088
    %5090 = vmatmul.bf16.gmra.mxu0 %v2523
    %v5091 = vpop.f32.mrf.mxu0
    %v5092 = vadd.f32 %v2333, %v5091
    %v5093 = vpop.f32.mrf.mxu0
    %v5094 = vadd.f32 %v2333, %v5093
    %5095 = vmatmul.bf16.gmra.mxu0 %v2527
    %v5096 = vpop.f32.mrf.mxu0
    %v5097 = vadd.f32 %v2333, %v5096
    %v5098 = vpop.f32.mrf.mxu0
    %v5099 = vadd.f32 %v2333, %v5098
    %5100 = vmatmul.bf16.gmra.mxu0 %v2531
    %v5101 = vpop.f32.mrf.mxu0
    %v5102 = vadd.f32 %v2333, %v5101
    %v5103 = vpop.f32.mrf.mxu0
    %v5104 = vadd.f32 %v2333, %v5103
    %5105 = vmatmul.bf16.gmra.mxu0 %v2535
    %v5106 = vpop.f32.mrf.mxu0
    %v5107 = vadd.f32 %v2333, %v5106
    %v5108 = vpop.f32.mrf.mxu0
    %v5109 = vadd.f32 %v2333, %v5108
    %5110 = vmatmul.bf16.gmra.mxu0 %v2539
    %v5111 = vpop.f32.mrf.mxu0
    %v5112 = vadd.f32 %v2333, %v5111
    %v5113 = vpop.f32.mrf.mxu0
    %v5114 = vadd.f32 %v2333, %v5113
    %5115 = vmatmul.bf16.gmra.mxu0 %v2543
    %v5116 = vpop.f32.mrf.mxu0
    %v5117 = vadd.f32 %v2333, %v5116
    %v5118 = vpop.f32.mrf.mxu0
    %5119 = vdwg.mxu0
    %5120 = vmatpush.bf16.msra.mxu0 %v3491
    %5121 = vmatpush.bf16.msra.mxu0 %v3483
    %5122 = vmatpush.bf16.msra.mxu0 %v3475
    %5123 = vmatpush.bf16.msra.mxu0 %v3467
    %5124 = vmatpush.bf16.msra.mxu0 %v3459
    %5125 = vmatpush.bf16.msra.mxu0 %v3451
    %5126 = vmatpush.bf16.msra.mxu0 %v3443
    %5127 = vmatpush.bf16.msra.mxu0 %v3435
    %5128 = vmatmul.bf16.gmra.mxu0 %v2496
    %v5129 = vpop.f32.mrf.mxu0
    %v5130 = vadd.f32 %v5057, %v5129
    %v5131 = vpop.f32.mrf.mxu0
    %v5132 = vadd.f32 %v5059, %v5131
    %5133 = vmatmul.bf16.gmra.mxu0 %v2500
    %v5134 = vpop.f32.mrf.mxu0
    %v5135 = vadd.f32 %v5062, %v5134
    %v5136 = vpop.f32.mrf.mxu0
    %v5137 = vadd.f32 %v5064, %v5136
    %5138 = vmatmul.bf16.gmra.mxu0 %v2504
    %v5139 = vpop.f32.mrf.mxu0
    %v5140 = vadd.f32 %v5067, %v5139
    %v5141 = vpop.f32.mrf.mxu0
    %v5142 = vadd.f32 %v5069, %v5141
    %5143 = vmatmul.bf16.gmra.mxu0 %v2508
    %v5144 = vpop.f32.mrf.mxu0
    %v5145 = vadd.f32 %v5072, %v5144
    %v5146 = vpop.f32.mrf.mxu0
    %v5147 = vadd.f32 %v5074, %v5146
    %5148 = vmatmul.bf16.gmra.mxu0 %v2512
    %v5149 = vpop.f32.mrf.mxu0
    %v5150 = vadd.f32 %v5077, %v5149
    %v5151 = vpop.f32.mrf.mxu0
    %v5152 = vadd.f32 %v5079, %v5151
    %5153 = vmatmul.bf16.gmra.mxu0 %v2516
    %v5154 = vpop.f32.mrf.mxu0
    %v5155 = vadd.f32 %v5082, %v5154
    %v5156 = vpop.f32.mrf.mxu0
    %v5157 = vadd.f32 %v5084, %v5156
    %5158 = vmatmul.bf16.gmra.mxu0 %v2520
    %v5159 = vpop.f32.mrf.mxu0
    %v5160 = vadd.f32 %v5087, %v5159
    %v5161 = vpop.f32.mrf.mxu0
    %v5162 = vadd.f32 %v5089, %v5161
    %5163 = vmatmul.bf16.gmra.mxu0 %v2524
    %v5164 = vpop.f32.mrf.mxu0
    %v5165 = vadd.f32 %v5092, %v5164
    %v5166 = vpop.f32.mrf.mxu0
    %v5167 = vadd.f32 %v5094, %v5166
    %5168 = vmatmul.bf16.gmra.mxu0 %v2528
    %v5169 = vpop.f32.mrf.mxu0
    %v5170 = vadd.f32 %v5097, %v5169
    %v5171 = vpop.f32.mrf.mxu0
    %v5172 = vadd.f32 %v5099, %v5171
    %5173 = vmatmul.bf16.gmra.mxu0 %v2532
    %v5174 = vpop.f32.mrf.mxu0
    %v5175 = vadd.f32 %v5102, %v5174
    %v5176 = vpop.f32.mrf.mxu0
    %v5177 = vadd.f32 %v5104, %v5176
    %5178 = vmatmul.bf16.gmra.mxu0 %v2536
    %v5179 = vpop.f32.mrf.mxu0
    %v5180 = vadd.f32 %v5107, %v5179
    %v5181 = vpop.f32.mrf.mxu0
    %v5182 = vadd.f32 %v5109, %v5181
    %5183 = vmatmul.bf16.gmra.mxu0 %v2540
    %v5184 = vpop.f32.mrf.mxu0
    %v5185 = vadd.f32 %v5112, %v5184
    %v5186 = vpop.f32.mrf.mxu0
    %v5187 = vadd.f32 %v5114, %v5186
    %5188 = vmatmul.bf16.gmra.mxu0 %v2544
    %v5189 = vpop.f32.mrf.mxu0
    %v5190 = vadd.f32 %v5117, %v5189
    %v5191 = vpop.f32.mrf.mxu0
    %5192 = vdwg.mxu0
    %5193 = vmatpush.bf16.msra.mxu0 %v3555
    %5194 = vmatpush.bf16.msra.mxu0 %v3547
    %5195 = vmatpush.bf16.msra.mxu0 %v3539
    %5196 = vmatpush.bf16.msra.mxu0 %v3531
    %5197 = vmatpush.bf16.msra.mxu0 %v3523
    %5198 = vmatpush.bf16.msra.mxu0 %v3515
    %5199 = vmatpush.bf16.msra.mxu0 %v3507
    %5200 = vmatpush.bf16.msra.mxu0 %v3499
    %5201 = vmatmul.bf16.gmra.mxu0 %v2497
    %v5202 = vpop.f32.mrf.mxu0
    %v5203 = vadd.f32 %v5130, %v5202
    %v5204 = vpop.f32.mrf.mxu0
    %v5205 = vadd.f32 %v5132, %v5204
    %5206 = vmatmul.bf16.gmra.mxu0 %v2501
    %v5207 = vpop.f32.mrf.mxu0
    %v5208 = vadd.f32 %v5135, %v5207
    %v5209 = vpop.f32.mrf.mxu0
    %v5210 = vadd.f32 %v5137, %v5209
    %5211 = vmatmul.bf16.gmra.mxu0 %v2505
    %v5212 = vpop.f32.mrf.mxu0
    %v5213 = vadd.f32 %v5140, %v5212
    %v5214 = vpop.f32.mrf.mxu0
    %v5215 = vadd.f32 %v5142, %v5214
    %5216 = vmatmul.bf16.gmra.mxu0 %v2509
    %v5217 = vpop.f32.mrf.mxu0
    %v5218 = vadd.f32 %v5145, %v5217
    %v5219 = vpop.f32.mrf.mxu0
    %v5220 = vadd.f32 %v5147, %v5219
    %5221 = vmatmul.bf16.gmra.mxu0 %v2513
    %v5222 = vpop.f32.mrf.mxu0
    %v5223 = vadd.f32 %v5150, %v5222
    %v5224 = vpop.f32.mrf.mxu0
    %v5225 = vadd.f32 %v5152, %v5224
    %5226 = vmatmul.bf16.gmra.mxu0 %v2517
    %v5227 = vpop.f32.mrf.mxu0
    %v5228 = vadd.f32 %v5155, %v5227
    %v5229 = vpop.f32.mrf.mxu0
    %v5230 = vadd.f32 %v5157, %v5229
    %5231 = vmatmul.bf16.gmra.mxu0 %v2521
    %v5232 = vpop.f32.mrf.mxu0
    %v5233 = vadd.f32 %v5160, %v5232
    %v5234 = vpop.f32.mrf.mxu0
    %v5235 = vadd.f32 %v5162, %v5234
    %5236 = vmatmul.bf16.gmra.mxu0 %v2525
    %v5237 = vpop.f32.mrf.mxu0
    %v5238 = vadd.f32 %v5165, %v5237
    %v5239 = vpop.f32.mrf.mxu0
    %v5240 = vadd.f32 %v5167, %v5239
    %5241 = vmatmul.bf16.gmra.mxu0 %v2529
    %v5242 = vpop.f32.mrf.mxu0
    %v5243 = vadd.f32 %v5170, %v5242
    %v5244 = vpop.f32.mrf.mxu0
    %v5245 = vadd.f32 %v5172, %v5244
    %5246 = vmatmul.bf16.gmra.mxu0 %v2533
    %v5247 = vpop.f32.mrf.mxu0
    %v5248 = vadd.f32 %v5175, %v5247
    %v5249 = vpop.f32.mrf.mxu0
    %v5250 = vadd.f32 %v5177, %v5249
    %5251 = vmatmul.bf16.gmra.mxu0 %v2537
    %v5252 = vpop.f32.mrf.mxu0
    %v5253 = vadd.f32 %v5180, %v5252
    %v5254 = vpop.f32.mrf.mxu0
    %v5255 = vadd.f32 %v5182, %v5254
    %5256 = vmatmul.bf16.gmra.mxu0 %v2541
    %v5257 = vpop.f32.mrf.mxu0
    %v5258 = vadd.f32 %v5185, %v5257
    %v5259 = vpop.f32.mrf.mxu0
    %v5260 = vadd.f32 %v5187, %v5259
    %5261 = vmatmul.bf16.gmra.mxu0 %v2545
    %v5262 = vpop.f32.mrf.mxu0
    %v5263 = vadd.f32 %v5190, %v5262
    %v5264 = vpop.f32.mrf.mxu0
    %5265 = vdwg.mxu0
    %5266 = vmatpush.bf16.msra.mxu0 %v3619
    %5267 = vmatpush.bf16.msra.mxu0 %v3611
    %5268 = vmatpush.bf16.msra.mxu0 %v3603
    %5269 = vmatpush.bf16.msra.mxu0 %v3595
    %5270 = vmatpush.bf16.msra.mxu0 %v3587
    %5271 = vmatpush.bf16.msra.mxu0 %v3579
    %5272 = vmatpush.bf16.msra.mxu0 %v3571
    %5273 = vmatpush.bf16.msra.mxu0 %v3563
    %5274 = vmatmul.bf16.gmra.mxu0 %v2498
    %v5275 = vpop.f32.mrf.mxu0
    %v5276 = vadd.f32 %v5203, %v5275
    %v5277 = vpop.f32.mrf.mxu0
    %v5278 = vadd.f32 %v5205, %v5277
    %5279 = vmatmul.bf16.gmra.mxu0 %v2502
    %v5280 = vpop.f32.mrf.mxu0
    %v5281 = vadd.f32 %v5208, %v5280
    %v5282 = vpop.f32.mrf.mxu0
    %v5283 = vadd.f32 %v5210, %v5282
    %5284 = vmatmul.bf16.gmra.mxu0 %v2506
    %v5285 = vpop.f32.mrf.mxu0
    %v5286 = vadd.f32 %v5213, %v5285
    %v5287 = vpop.f32.mrf.mxu0
    %v5288 = vadd.f32 %v5215, %v5287
    %5289 = vmatmul.bf16.gmra.mxu0 %v2510
    %v5290 = vpop.f32.mrf.mxu0
    %v5291 = vadd.f32 %v5218, %v5290
    %v5292 = vpop.f32.mrf.mxu0
    %v5293 = vadd.f32 %v5220, %v5292
    %5294 = vmatmul.bf16.gmra.mxu0 %v2514
    %v5295 = vpop.f32.mrf.mxu0
    %v5296 = vadd.f32 %v5223, %v5295
    %v5297 = vpop.f32.mrf.mxu0
    %v5298 = vadd.f32 %v5225, %v5297
    %5299 = vmatmul.bf16.gmra.mxu0 %v2518
    %v5300 = vpop.f32.mrf.mxu0
    %v5301 = vadd.f32 %v5228, %v5300
    %v5302 = vpop.f32.mrf.mxu0
    %v5303 = vadd.f32 %v5230, %v5302
    %5304 = vmatmul.bf16.gmra.mxu0 %v2522
    %v5305 = vpop.f32.mrf.mxu0
    %v5306 = vadd.f32 %v5233, %v5305
    %v5307 = vpop.f32.mrf.mxu0
    %v5308 = vadd.f32 %v5235, %v5307
    %5309 = vmatmul.bf16.gmra.mxu0 %v2526
    %v5310 = vpop.f32.mrf.mxu0
    %v5311 = vadd.f32 %v5238, %v5310
    %v5312 = vpop.f32.mrf.mxu0
    %v5313 = vadd.f32 %v5240, %v5312
    %5314 = vmatmul.bf16.gmra.mxu0 %v2530
    %v5315 = vpop.f32.mrf.mxu0
    %v5316 = vadd.f32 %v5243, %v5315
    %v5317 = vpop.f32.mrf.mxu0
    %v5318 = vadd.f32 %v5245, %v5317
    %5319 = vmatmul.bf16.gmra.mxu0 %v2534
    %v5320 = vpop.f32.mrf.mxu0
    %v5321 = vadd.f32 %v5248, %v5320
    %v5322 = vpop.f32.mrf.mxu0
    %v5323 = vadd.f32 %v5250, %v5322
    %5324 = vmatmul.bf16.gmra.mxu0 %v2538
    %v5325 = vpop.f32.mrf.mxu0
    %v5326 = vadd.f32 %v5253, %v5325
    %v5327 = vpop.f32.mrf.mxu0
    %v5328 = vadd.f32 %v5255, %v5327
    %5329 = vmatmul.bf16.gmra.mxu0 %v2542
    %v5330 = vpop.f32.mrf.mxu0
    %v5331 = vadd.f32 %v5258, %v5330
    %v5332 = vpop.f32.mrf.mxu0
    %v5333 = vadd.f32 %v5260, %v5332
    %5334 = vmatmul.bf16.gmra.mxu0 %v2546
    %v5335 = vpop.f32.mrf.mxu0
    %v5336 = vadd.f32 %v5263, %v5335
    %v5337 = vpop.f32.mrf.mxu0
    %5338 = vdwg.mxu0
    %5339 = vmatpush.bf16.msra.mxu0 %v3428
    %5340 = vmatpush.bf16.msra.mxu0 %v3420
    %5341 = vmatpush.bf16.msra.mxu0 %v3412
    %5342 = vmatpush.bf16.msra.mxu0 %v3404
    %5343 = vmatpush.bf16.msra.mxu0 %v3396
    %5344 = vmatpush.bf16.msra.mxu0 %v3388
    %5345 = vmatpush.bf16.msra.mxu0 %v3380
    %5346 = vmatpush.bf16.msra.mxu0 %v3372
    %5347 = vmatmul.bf16.gmra.mxu0 %v2495
    %v5348 = vpop.f32.mrf.mxu0
    %v5349 = vadd.f32 %v2334, %v5348
    %v5350 = vpop.f32.mrf.mxu0
    %v5351 = vadd.f32 %v2334, %v5350
    %5352 = vmatmul.bf16.gmra.mxu0 %v2499
    %v5353 = vpop.f32.mrf.mxu0
    %v5354 = vadd.f32 %v2334, %v5353
    %v5355 = vpop.f32.mrf.mxu0
    %v5356 = vadd.f32 %v2334, %v5355
    %5357 = vmatmul.bf16.gmra.mxu0 %v2503
    %v5358 = vpop.f32.mrf.mxu0
    %v5359 = vadd.f32 %v2334, %v5358
    %v5360 = vpop.f32.mrf.mxu0
    %v5361 = vadd.f32 %v2334, %v5360
    %5362 = vmatmul.bf16.gmra.mxu0 %v2507
    %v5363 = vpop.f32.mrf.mxu0
    %v5364 = vadd.f32 %v2334, %v5363
    %v5365 = vpop.f32.mrf.mxu0
    %v5366 = vadd.f32 %v2334, %v5365
    %5367 = vmatmul.bf16.gmra.mxu0 %v2511
    %v5368 = vpop.f32.mrf.mxu0
    %v5369 = vadd.f32 %v2334, %v5368
    %v5370 = vpop.f32.mrf.mxu0
    %v5371 = vadd.f32 %v2334, %v5370
    %5372 = vmatmul.bf16.gmra.mxu0 %v2515
    %v5373 = vpop.f32.mrf.mxu0
    %v5374 = vadd.f32 %v2334, %v5373
    %v5375 = vpop.f32.mrf.mxu0
    %v5376 = vadd.f32 %v2334, %v5375
    %5377 = vmatmul.bf16.gmra.mxu0 %v2519
    %v5378 = vpop.f32.mrf.mxu0
    %v5379 = vadd.f32 %v2334, %v5378
    %v5380 = vpop.f32.mrf.mxu0
    %v5381 = vadd.f32 %v2334, %v5380
    %5382 = vmatmul.bf16.gmra.mxu0 %v2523
    %v5383 = vpop.f32.mrf.mxu0
    %v5384 = vadd.f32 %v2334, %v5383
    %v5385 = vpop.f32.mrf.mxu0
    %v5386 = vadd.f32 %v2334, %v5385
    %5387 = vmatmul.bf16.gmra.mxu0 %v2527
    %v5388 = vpop.f32.mrf.mxu0
    %v5389 = vadd.f32 %v2334, %v5388
    %v5390 = vpop.f32.mrf.mxu0
    %v5391 = vadd.f32 %v2334, %v5390
    %5392 = vmatmul.bf16.gmra.mxu0 %v2531
    %v5393 = vpop.f32.mrf.mxu0
    %v5394 = vadd.f32 %v2334, %v5393
    %v5395 = vpop.f32.mrf.mxu0
    %v5396 = vadd.f32 %v2334, %v5395
    %5397 = vmatmul.bf16.gmra.mxu0 %v2535
    %v5398 = vpop.f32.mrf.mxu0
    %v5399 = vadd.f32 %v2334, %v5398
    %v5400 = vpop.f32.mrf.mxu0
    %v5401 = vadd.f32 %v2334, %v5400
    %5402 = vmatmul.bf16.gmra.mxu0 %v2539
    %v5403 = vpop.f32.mrf.mxu0
    %v5404 = vadd.f32 %v2334, %v5403
    %v5405 = vpop.f32.mrf.mxu0
    %v5406 = vadd.f32 %v2334, %v5405
    %5407 = vmatmul.bf16.gmra.mxu0 %v2543
    %v5408 = vpop.f32.mrf.mxu0
    %v5409 = vadd.f32 %v2334, %v5408
    %v5410 = vpop.f32.mrf.mxu0
    %5411 = vdwg.mxu0
    %5412 = vmatpush.bf16.msra.mxu0 %v3492
    %5413 = vmatpush.bf16.msra.mxu0 %v3484
    %5414 = vmatpush.bf16.msra.mxu0 %v3476
    %5415 = vmatpush.bf16.msra.mxu0 %v3468
    %5416 = vmatpush.bf16.msra.mxu0 %v3460
    %5417 = vmatpush.bf16.msra.mxu0 %v3452
    %5418 = vmatpush.bf16.msra.mxu0 %v3444
    %5419 = vmatpush.bf16.msra.mxu0 %v3436
    %5420 = vmatmul.bf16.gmra.mxu0 %v2496
    %v5421 = vpop.f32.mrf.mxu0
    %v5422 = vadd.f32 %v5349, %v5421
    %v5423 = vpop.f32.mrf.mxu0
    %v5424 = vadd.f32 %v5351, %v5423
    %5425 = vmatmul.bf16.gmra.mxu0 %v2500
    %v5426 = vpop.f32.mrf.mxu0
    %v5427 = vadd.f32 %v5354, %v5426
    %v5428 = vpop.f32.mrf.mxu0
    %v5429 = vadd.f32 %v5356, %v5428
    %5430 = vmatmul.bf16.gmra.mxu0 %v2504
    %v5431 = vpop.f32.mrf.mxu0
    %v5432 = vadd.f32 %v5359, %v5431
    %v5433 = vpop.f32.mrf.mxu0
    %v5434 = vadd.f32 %v5361, %v5433
    %5435 = vmatmul.bf16.gmra.mxu0 %v2508
    %v5436 = vpop.f32.mrf.mxu0
    %v5437 = vadd.f32 %v5364, %v5436
    %v5438 = vpop.f32.mrf.mxu0
    %v5439 = vadd.f32 %v5366, %v5438
    %5440 = vmatmul.bf16.gmra.mxu0 %v2512
    %v5441 = vpop.f32.mrf.mxu0
    %v5442 = vadd.f32 %v5369, %v5441
    %v5443 = vpop.f32.mrf.mxu0
    %v5444 = vadd.f32 %v5371, %v5443
    %5445 = vmatmul.bf16.gmra.mxu0 %v2516
    %v5446 = vpop.f32.mrf.mxu0
    %v5447 = vadd.f32 %v5374, %v5446
    %v5448 = vpop.f32.mrf.mxu0
    %v5449 = vadd.f32 %v5376, %v5448
    %5450 = vmatmul.bf16.gmra.mxu0 %v2520
    %v5451 = vpop.f32.mrf.mxu0
    %v5452 = vadd.f32 %v5379, %v5451
    %v5453 = vpop.f32.mrf.mxu0
    %v5454 = vadd.f32 %v5381, %v5453
    %5455 = vmatmul.bf16.gmra.mxu0 %v2524
    %v5456 = vpop.f32.mrf.mxu0
    %v5457 = vadd.f32 %v5384, %v5456
    %v5458 = vpop.f32.mrf.mxu0
    %v5459 = vadd.f32 %v5386, %v5458
    %5460 = vmatmul.bf16.gmra.mxu0 %v2528
    %v5461 = vpop.f32.mrf.mxu0
    %v5462 = vadd.f32 %v5389, %v5461
    %v5463 = vpop.f32.mrf.mxu0
    %v5464 = vadd.f32 %v5391, %v5463
    %5465 = vmatmul.bf16.gmra.mxu0 %v2532
    %v5466 = vpop.f32.mrf.mxu0
    %v5467 = vadd.f32 %v5394, %v5466
    %v5468 = vpop.f32.mrf.mxu0
    %v5469 = vadd.f32 %v5396, %v5468
    %5470 = vmatmul.bf16.gmra.mxu0 %v2536
    %v5471 = vpop.f32.mrf.mxu0
    %v5472 = vadd.f32 %v5399, %v5471
    %v5473 = vpop.f32.mrf.mxu0
    %v5474 = vadd.f32 %v5401, %v5473
    %5475 = vmatmul.bf16.gmra.mxu0 %v2540
    %v5476 = vpop.f32.mrf.mxu0
    %v5477 = vadd.f32 %v5404, %v5476
    %v5478 = vpop.f32.mrf.mxu0
    %v5479 = vadd.f32 %v5406, %v5478
    %5480 = vmatmul.bf16.gmra.mxu0 %v2544
    %v5481 = vpop.f32.mrf.mxu0
    %v5482 = vadd.f32 %v5409, %v5481
    %v5483 = vpop.f32.mrf.mxu0
    %5484 = vdwg.mxu0
    %5485 = vmatpush.bf16.msra.mxu0 %v3556
    %5486 = vmatpush.bf16.msra.mxu0 %v3548
    %5487 = vmatpush.bf16.msra.mxu0 %v3540
    %5488 = vmatpush.bf16.msra.mxu0 %v3532
    %5489 = vmatpush.bf16.msra.mxu0 %v3524
    %5490 = vmatpush.bf16.msra.mxu0 %v3516
    %5491 = vmatpush.bf16.msra.mxu0 %v3508
    %5492 = vmatpush.bf16.msra.mxu0 %v3500
    %5493 = vmatmul.bf16.gmra.mxu0 %v2497
    %v5494 = vpop.f32.mrf.mxu0
    %v5495 = vadd.f32 %v5422, %v5494
    %v5496 = vpop.f32.mrf.mxu0
    %v5497 = vadd.f32 %v5424, %v5496
    %5498 = vmatmul.bf16.gmra.mxu0 %v2501
    %v5499 = vpop.f32.mrf.mxu0
    %v5500 = vadd.f32 %v5427, %v5499
    %v5501 = vpop.f32.mrf.mxu0
    %v5502 = vadd.f32 %v5429, %v5501
    %5503 = vmatmul.bf16.gmra.mxu0 %v2505
    %v5504 = vpop.f32.mrf.mxu0
    %v5505 = vadd.f32 %v5432, %v5504
    %v5506 = vpop.f32.mrf.mxu0
    %v5507 = vadd.f32 %v5434, %v5506
    %5508 = vmatmul.bf16.gmra.mxu0 %v2509
    %v5509 = vpop.f32.mrf.mxu0
    %v5510 = vadd.f32 %v5437, %v5509
    %v5511 = vpop.f32.mrf.mxu0
    %v5512 = vadd.f32 %v5439, %v5511
    %5513 = vmatmul.bf16.gmra.mxu0 %v2513
    %v5514 = vpop.f32.mrf.mxu0
    %v5515 = vadd.f32 %v5442, %v5514
    %v5516 = vpop.f32.mrf.mxu0
    %v5517 = vadd.f32 %v5444, %v5516
    %5518 = vmatmul.bf16.gmra.mxu0 %v2517
    %v5519 = vpop.f32.mrf.mxu0
    %v5520 = vadd.f32 %v5447, %v5519
    %v5521 = vpop.f32.mrf.mxu0
    %v5522 = vadd.f32 %v5449, %v5521
    %5523 = vmatmul.bf16.gmra.mxu0 %v2521
    %v5524 = vpop.f32.mrf.mxu0
    %v5525 = vadd.f32 %v5452, %v5524
    %v5526 = vpop.f32.mrf.mxu0
    %v5527 = vadd.f32 %v5454, %v5526
    %5528 = vmatmul.bf16.gmra.mxu0 %v2525
    %v5529 = vpop.f32.mrf.mxu0
    %v5530 = vadd.f32 %v5457, %v5529
    %v5531 = vpop.f32.mrf.mxu0
    %v5532 = vadd.f32 %v5459, %v5531
    %5533 = vmatmul.bf16.gmra.mxu0 %v2529
    %v5534 = vpop.f32.mrf.mxu0
    %v5535 = vadd.f32 %v5462, %v5534
    %v5536 = vpop.f32.mrf.mxu0
    %v5537 = vadd.f32 %v5464, %v5536
    %5538 = vmatmul.bf16.gmra.mxu0 %v2533
    %v5539 = vpop.f32.mrf.mxu0
    %v5540 = vadd.f32 %v5467, %v5539
    %v5541 = vpop.f32.mrf.mxu0
    %v5542 = vadd.f32 %v5469, %v5541
    %5543 = vmatmul.bf16.gmra.mxu0 %v2537
    %v5544 = vpop.f32.mrf.mxu0
    %v5545 = vadd.f32 %v5472, %v5544
    %v5546 = vpop.f32.mrf.mxu0
    %v5547 = vadd.f32 %v5474, %v5546
    %5548 = vmatmul.bf16.gmra.mxu0 %v2541
    %v5549 = vpop.f32.mrf.mxu0
    %v5550 = vadd.f32 %v5477, %v5549
    %v5551 = vpop.f32.mrf.mxu0
    %v5552 = vadd.f32 %v5479, %v5551
    %5553 = vmatmul.bf16.gmra.mxu0 %v2545
    %v5554 = vpop.f32.mrf.mxu0
    %v5555 = vadd.f32 %v5482, %v5554
    %v5556 = vpop.f32.mrf.mxu0
    %5557 = vdwg.mxu0
    %5558 = vmatpush.bf16.msra.mxu0 %v3620
    %5559 = vmatpush.bf16.msra.mxu0 %v3612
    %5560 = vmatpush.bf16.msra.mxu0 %v3604
    %5561 = vmatpush.bf16.msra.mxu0 %v3596
    %5562 = vmatpush.bf16.msra.mxu0 %v3588
    %5563 = vmatpush.bf16.msra.mxu0 %v3580
    %5564 = vmatpush.bf16.msra.mxu0 %v3572
    %5565 = vmatpush.bf16.msra.mxu0 %v3564
    %5566 = vmatmul.bf16.gmra.mxu0 %v2498
    %v5567 = vpop.f32.mrf.mxu0
    %v5568 = vadd.f32 %v5495, %v5567
    %v5569 = vpop.f32.mrf.mxu0
    %v5570 = vadd.f32 %v5497, %v5569
    %5571 = vmatmul.bf16.gmra.mxu0 %v2502
    %v5572 = vpop.f32.mrf.mxu0
    %v5573 = vadd.f32 %v5500, %v5572
    %v5574 = vpop.f32.mrf.mxu0
    %v5575 = vadd.f32 %v5502, %v5574
    %5576 = vmatmul.bf16.gmra.mxu0 %v2506
    %v5577 = vpop.f32.mrf.mxu0
    %v5578 = vadd.f32 %v5505, %v5577
    %v5579 = vpop.f32.mrf.mxu0
    %v5580 = vadd.f32 %v5507, %v5579
    %5581 = vmatmul.bf16.gmra.mxu0 %v2510
    %v5582 = vpop.f32.mrf.mxu0
    %v5583 = vadd.f32 %v5510, %v5582
    %v5584 = vpop.f32.mrf.mxu0
    %v5585 = vadd.f32 %v5512, %v5584
    %5586 = vmatmul.bf16.gmra.mxu0 %v2514
    %v5587 = vpop.f32.mrf.mxu0
    %v5588 = vadd.f32 %v5515, %v5587
    %v5589 = vpop.f32.mrf.mxu0
    %v5590 = vadd.f32 %v5517, %v5589
    %5591 = vmatmul.bf16.gmra.mxu0 %v2518
    %v5592 = vpop.f32.mrf.mxu0
    %v5593 = vadd.f32 %v5520, %v5592
    %v5594 = vpop.f32.mrf.mxu0
    %v5595 = vadd.f32 %v5522, %v5594
    %5596 = vmatmul.bf16.gmra.mxu0 %v2522
    %v5597 = vpop.f32.mrf.mxu0
    %v5598 = vadd.f32 %v5525, %v5597
    %v5599 = vpop.f32.mrf.mxu0
    %v5600 = vadd.f32 %v5527, %v5599
    %5601 = vmatmul.bf16.gmra.mxu0 %v2526
    %v5602 = vpop.f32.mrf.mxu0
    %v5603 = vadd.f32 %v5530, %v5602
    %v5604 = vpop.f32.mrf.mxu0
    %v5605 = vadd.f32 %v5532, %v5604
    %5606 = vmatmul.bf16.gmra.mxu0 %v2530
    %v5607 = vpop.f32.mrf.mxu0
    %v5608 = vadd.f32 %v5535, %v5607
    %v5609 = vpop.f32.mrf.mxu0
    %v5610 = vadd.f32 %v5537, %v5609
    %5611 = vmatmul.bf16.gmra.mxu0 %v2534
    %v5612 = vpop.f32.mrf.mxu0
    %v5613 = vadd.f32 %v5540, %v5612
    %v5614 = vpop.f32.mrf.mxu0
    %v5615 = vadd.f32 %v5542, %v5614
    %5616 = vmatmul.bf16.gmra.mxu0 %v2538
    %v5617 = vpop.f32.mrf.mxu0
    %v5618 = vadd.f32 %v5545, %v5617
    %v5619 = vpop.f32.mrf.mxu0
    %v5620 = vadd.f32 %v5547, %v5619
    %5621 = vmatmul.bf16.gmra.mxu0 %v2542
    %v5622 = vpop.f32.mrf.mxu0
    %v5623 = vadd.f32 %v5550, %v5622
    %v5624 = vpop.f32.mrf.mxu0
    %v5625 = vadd.f32 %v5552, %v5624
    %5626 = vmatmul.bf16.gmra.mxu0 %v2546
    %v5627 = vpop.f32.mrf.mxu0
    %v5628 = vadd.f32 %v5555, %v5627
    %v5629 = vpop.f32.mrf.mxu0
    %5630 = vdwg.mxu0
    %5631 = vmatpush.bf16.msra.mxu0 %v3429
    %5632 = vmatpush.bf16.msra.mxu0 %v3421
    %5633 = vmatpush.bf16.msra.mxu0 %v3413
    %5634 = vmatpush.bf16.msra.mxu0 %v3405
    %5635 = vmatpush.bf16.msra.mxu0 %v3397
    %5636 = vmatpush.bf16.msra.mxu0 %v3389
    %5637 = vmatpush.bf16.msra.mxu0 %v3381
    %5638 = vmatpush.bf16.msra.mxu0 %v3373
    %5639 = vmatmul.bf16.gmra.mxu0 %v2495
    %v5640 = vpop.f32.mrf.mxu0
    %v5641 = vadd.f32 %v2335, %v5640
    %v5642 = vpop.f32.mrf.mxu0
    %v5643 = vadd.f32 %v2335, %v5642
    %5644 = vmatmul.bf16.gmra.mxu0 %v2499
    %v5645 = vpop.f32.mrf.mxu0
    %v5646 = vadd.f32 %v2335, %v5645
    %v5647 = vpop.f32.mrf.mxu0
    %v5648 = vadd.f32 %v2335, %v5647
    %5649 = vmatmul.bf16.gmra.mxu0 %v2503
    %v5650 = vpop.f32.mrf.mxu0
    %v5651 = vadd.f32 %v2335, %v5650
    %v5652 = vpop.f32.mrf.mxu0
    %v5653 = vadd.f32 %v2335, %v5652
    %5654 = vmatmul.bf16.gmra.mxu0 %v2507
    %v5655 = vpop.f32.mrf.mxu0
    %v5656 = vadd.f32 %v2335, %v5655
    %v5657 = vpop.f32.mrf.mxu0
    %v5658 = vadd.f32 %v2335, %v5657
    %5659 = vmatmul.bf16.gmra.mxu0 %v2511
    %v5660 = vpop.f32.mrf.mxu0
    %v5661 = vadd.f32 %v2335, %v5660
    %v5662 = vpop.f32.mrf.mxu0
    %v5663 = vadd.f32 %v2335, %v5662
    %5664 = vmatmul.bf16.gmra.mxu0 %v2515
    %v5665 = vpop.f32.mrf.mxu0
    %v5666 = vadd.f32 %v2335, %v5665
    %v5667 = vpop.f32.mrf.mxu0
    %v5668 = vadd.f32 %v2335, %v5667
    %5669 = vmatmul.bf16.gmra.mxu0 %v2519
    %v5670 = vpop.f32.mrf.mxu0
    %v5671 = vadd.f32 %v2335, %v5670
    %v5672 = vpop.f32.mrf.mxu0
    %v5673 = vadd.f32 %v2335, %v5672
    %5674 = vmatmul.bf16.gmra.mxu0 %v2523
    %v5675 = vpop.f32.mrf.mxu0
    %v5676 = vadd.f32 %v2335, %v5675
    %v5677 = vpop.f32.mrf.mxu0
    %v5678 = vadd.f32 %v2335, %v5677
    %5679 = vmatmul.bf16.gmra.mxu0 %v2527
    %v5680 = vpop.f32.mrf.mxu0
    %v5681 = vadd.f32 %v2335, %v5680
    %v5682 = vpop.f32.mrf.mxu0
    %v5683 = vadd.f32 %v2335, %v5682
    %5684 = vmatmul.bf16.gmra.mxu0 %v2531
    %v5685 = vpop.f32.mrf.mxu0
    %v5686 = vadd.f32 %v2335, %v5685
    %v5687 = vpop.f32.mrf.mxu0
    %v5688 = vadd.f32 %v2335, %v5687
    %5689 = vmatmul.bf16.gmra.mxu0 %v2535
    %v5690 = vpop.f32.mrf.mxu0
    %v5691 = vadd.f32 %v2335, %v5690
    %v5692 = vpop.f32.mrf.mxu0
    %v5693 = vadd.f32 %v2335, %v5692
    %5694 = vmatmul.bf16.gmra.mxu0 %v2539
    %v5695 = vpop.f32.mrf.mxu0
    %v5696 = vadd.f32 %v2335, %v5695
    %v5697 = vpop.f32.mrf.mxu0
    %v5698 = vadd.f32 %v2335, %v5697
    %5699 = vmatmul.bf16.gmra.mxu0 %v2543
    %v5700 = vpop.f32.mrf.mxu0
    %v5701 = vadd.f32 %v2335, %v5700
    %v5702 = vpop.f32.mrf.mxu0
    %5703 = vdwg.mxu0
    %5704 = vmatpush.bf16.msra.mxu0 %v3493
    %5705 = vmatpush.bf16.msra.mxu0 %v3485
    %5706 = vmatpush.bf16.msra.mxu0 %v3477
    %5707 = vmatpush.bf16.msra.mxu0 %v3469
    %5708 = vmatpush.bf16.msra.mxu0 %v3461
    %5709 = vmatpush.bf16.msra.mxu0 %v3453
    %5710 = vmatpush.bf16.msra.mxu0 %v3445
    %5711 = vmatpush.bf16.msra.mxu0 %v3437
    %5712 = vmatmul.bf16.gmra.mxu0 %v2496
    %v5713 = vpop.f32.mrf.mxu0
    %v5714 = vadd.f32 %v5641, %v5713
    %v5715 = vpop.f32.mrf.mxu0
    %v5716 = vadd.f32 %v5643, %v5715
    %5717 = vmatmul.bf16.gmra.mxu0 %v2500
    %v5718 = vpop.f32.mrf.mxu0
    %v5719 = vadd.f32 %v5646, %v5718
    %v5720 = vpop.f32.mrf.mxu0
    %v5721 = vadd.f32 %v5648, %v5720
    %5722 = vmatmul.bf16.gmra.mxu0 %v2504
    %v5723 = vpop.f32.mrf.mxu0
    %v5724 = vadd.f32 %v5651, %v5723
    %v5725 = vpop.f32.mrf.mxu0
    %v5726 = vadd.f32 %v5653, %v5725
    %5727 = vmatmul.bf16.gmra.mxu0 %v2508
    %v5728 = vpop.f32.mrf.mxu0
    %v5729 = vadd.f32 %v5656, %v5728
    %v5730 = vpop.f32.mrf.mxu0
    %v5731 = vadd.f32 %v5658, %v5730
    %5732 = vmatmul.bf16.gmra.mxu0 %v2512
    %v5733 = vpop.f32.mrf.mxu0
    %v5734 = vadd.f32 %v5661, %v5733
    %v5735 = vpop.f32.mrf.mxu0
    %v5736 = vadd.f32 %v5663, %v5735
    %5737 = vmatmul.bf16.gmra.mxu0 %v2516
    %v5738 = vpop.f32.mrf.mxu0
    %v5739 = vadd.f32 %v5666, %v5738
    %v5740 = vpop.f32.mrf.mxu0
    %v5741 = vadd.f32 %v5668, %v5740
    %5742 = vmatmul.bf16.gmra.mxu0 %v2520
    %v5743 = vpop.f32.mrf.mxu0
    %v5744 = vadd.f32 %v5671, %v5743
    %v5745 = vpop.f32.mrf.mxu0
    %v5746 = vadd.f32 %v5673, %v5745
    %5747 = vmatmul.bf16.gmra.mxu0 %v2524
    %v5748 = vpop.f32.mrf.mxu0
    %v5749 = vadd.f32 %v5676, %v5748
    %v5750 = vpop.f32.mrf.mxu0
    %v5751 = vadd.f32 %v5678, %v5750
    %5752 = vmatmul.bf16.gmra.mxu0 %v2528
    %v5753 = vpop.f32.mrf.mxu0
    %v5754 = vadd.f32 %v5681, %v5753
    %v5755 = vpop.f32.mrf.mxu0
    %v5756 = vadd.f32 %v5683, %v5755
    %5757 = vmatmul.bf16.gmra.mxu0 %v2532
    %v5758 = vpop.f32.mrf.mxu0
    %v5759 = vadd.f32 %v5686, %v5758
    %v5760 = vpop.f32.mrf.mxu0
    %v5761 = vadd.f32 %v5688, %v5760
    %5762 = vmatmul.bf16.gmra.mxu0 %v2536
    %v5763 = vpop.f32.mrf.mxu0
    %v5764 = vadd.f32 %v5691, %v5763
    %v5765 = vpop.f32.mrf.mxu0
    %v5766 = vadd.f32 %v5693, %v5765
    %5767 = vmatmul.bf16.gmra.mxu0 %v2540
    %v5768 = vpop.f32.mrf.mxu0
    %v5769 = vadd.f32 %v5696, %v5768
    %v5770 = vpop.f32.mrf.mxu0
    %v5771 = vadd.f32 %v5698, %v5770
    %5772 = vmatmul.bf16.gmra.mxu0 %v2544
    %v5773 = vpop.f32.mrf.mxu0
    %v5774 = vadd.f32 %v5701, %v5773
    %v5775 = vpop.f32.mrf.mxu0
    %5776 = vdwg.mxu0
    %5777 = vmatpush.bf16.msra.mxu0 %v3557
    %5778 = vmatpush.bf16.msra.mxu0 %v3549
    %5779 = vmatpush.bf16.msra.mxu0 %v3541
    %5780 = vmatpush.bf16.msra.mxu0 %v3533
    %5781 = vmatpush.bf16.msra.mxu0 %v3525
    %5782 = vmatpush.bf16.msra.mxu0 %v3517
    %5783 = vmatpush.bf16.msra.mxu0 %v3509
    %5784 = vmatpush.bf16.msra.mxu0 %v3501
    %5785 = vmatmul.bf16.gmra.mxu0 %v2497
    %v5786 = vpop.f32.mrf.mxu0
    %v5787 = vadd.f32 %v5714, %v5786
    %v5788 = vpop.f32.mrf.mxu0
    %v5789 = vadd.f32 %v5716, %v5788
    %5790 = vmatmul.bf16.gmra.mxu0 %v2501
    %v5791 = vpop.f32.mrf.mxu0
    %v5792 = vadd.f32 %v5719, %v5791
    %v5793 = vpop.f32.mrf.mxu0
    %v5794 = vadd.f32 %v5721, %v5793
    %5795 = vmatmul.bf16.gmra.mxu0 %v2505
    %v5796 = vpop.f32.mrf.mxu0
    %v5797 = vadd.f32 %v5724, %v5796
    %v5798 = vpop.f32.mrf.mxu0
    %v5799 = vadd.f32 %v5726, %v5798
    %5800 = vmatmul.bf16.gmra.mxu0 %v2509
    %v5801 = vpop.f32.mrf.mxu0
    %v5802 = vadd.f32 %v5729, %v5801
    %v5803 = vpop.f32.mrf.mxu0
    %v5804 = vadd.f32 %v5731, %v5803
    %5805 = vmatmul.bf16.gmra.mxu0 %v2513
    %v5806 = vpop.f32.mrf.mxu0
    %v5807 = vadd.f32 %v5734, %v5806
    %v5808 = vpop.f32.mrf.mxu0
    %v5809 = vadd.f32 %v5736, %v5808
    %5810 = vmatmul.bf16.gmra.mxu0 %v2517
    %v5811 = vpop.f32.mrf.mxu0
    %v5812 = vadd.f32 %v5739, %v5811
    %v5813 = vpop.f32.mrf.mxu0
    %v5814 = vadd.f32 %v5741, %v5813
    %5815 = vmatmul.bf16.gmra.mxu0 %v2521
    %v5816 = vpop.f32.mrf.mxu0
    %v5817 = vadd.f32 %v5744, %v5816
    %v5818 = vpop.f32.mrf.mxu0
    %v5819 = vadd.f32 %v5746, %v5818
    %5820 = vmatmul.bf16.gmra.mxu0 %v2525
    %v5821 = vpop.f32.mrf.mxu0
    %v5822 = vadd.f32 %v5749, %v5821
    %v5823 = vpop.f32.mrf.mxu0
    %v5824 = vadd.f32 %v5751, %v5823
    %5825 = vmatmul.bf16.gmra.mxu0 %v2529
    %v5826 = vpop.f32.mrf.mxu0
    %v5827 = vadd.f32 %v5754, %v5826
    %v5828 = vpop.f32.mrf.mxu0
    %v5829 = vadd.f32 %v5756, %v5828
    %5830 = vmatmul.bf16.gmra.mxu0 %v2533
    %v5831 = vpop.f32.mrf.mxu0
    %v5832 = vadd.f32 %v5759, %v5831
    %v5833 = vpop.f32.mrf.mxu0
    %v5834 = vadd.f32 %v5761, %v5833
    %5835 = vmatmul.bf16.gmra.mxu0 %v2537
    %v5836 = vpop.f32.mrf.mxu0
    %v5837 = vadd.f32 %v5764, %v5836
    %v5838 = vpop.f32.mrf.mxu0
    %v5839 = vadd.f32 %v5766, %v5838
    %5840 = vmatmul.bf16.gmra.mxu0 %v2541
    %v5841 = vpop.f32.mrf.mxu0
    %v5842 = vadd.f32 %v5769, %v5841
    %v5843 = vpop.f32.mrf.mxu0
    %v5844 = vadd.f32 %v5771, %v5843
    %5845 = vmatmul.bf16.gmra.mxu0 %v2545
    %v5846 = vpop.f32.mrf.mxu0
    %v5847 = vadd.f32 %v5774, %v5846
    %v5848 = vpop.f32.mrf.mxu0
    %5849 = vdwg.mxu0
    %5850 = vmatpush.bf16.msra.mxu0 %v3621
    %5851 = vmatpush.bf16.msra.mxu0 %v3613
    %5852 = vmatpush.bf16.msra.mxu0 %v3605
    %5853 = vmatpush.bf16.msra.mxu0 %v3597
    %5854 = vmatpush.bf16.msra.mxu0 %v3589
    %5855 = vmatpush.bf16.msra.mxu0 %v3581
    %5856 = vmatpush.bf16.msra.mxu0 %v3573
    %5857 = vmatpush.bf16.msra.mxu0 %v3565
    %5858 = vmatmul.bf16.gmra.mxu0 %v2498
    %v5859 = vpop.f32.mrf.mxu0
    %v5860 = vadd.f32 %v5787, %v5859
    %v5861 = vpop.f32.mrf.mxu0
    %v5862 = vadd.f32 %v5789, %v5861
    %5863 = vmatmul.bf16.gmra.mxu0 %v2502
    %v5864 = vpop.f32.mrf.mxu0
    %v5865 = vadd.f32 %v5792, %v5864
    %v5866 = vpop.f32.mrf.mxu0
    %v5867 = vadd.f32 %v5794, %v5866
    %5868 = vmatmul.bf16.gmra.mxu0 %v2506
    %v5869 = vpop.f32.mrf.mxu0
    %v5870 = vadd.f32 %v5797, %v5869
    %v5871 = vpop.f32.mrf.mxu0
    %v5872 = vadd.f32 %v5799, %v5871
    %5873 = vmatmul.bf16.gmra.mxu0 %v2510
    %v5874 = vpop.f32.mrf.mxu0
    %v5875 = vadd.f32 %v5802, %v5874
    %v5876 = vpop.f32.mrf.mxu0
    %v5877 = vadd.f32 %v5804, %v5876
    %5878 = vmatmul.bf16.gmra.mxu0 %v2514
    %v5879 = vpop.f32.mrf.mxu0
    %v5880 = vadd.f32 %v5807, %v5879
    %v5881 = vpop.f32.mrf.mxu0
    %v5882 = vadd.f32 %v5809, %v5881
    %5883 = vmatmul.bf16.gmra.mxu0 %v2518
    %v5884 = vpop.f32.mrf.mxu0
    %v5885 = vadd.f32 %v5812, %v5884
    %v5886 = vpop.f32.mrf.mxu0
    %v5887 = vadd.f32 %v5814, %v5886
    %5888 = vmatmul.bf16.gmra.mxu0 %v2522
    %v5889 = vpop.f32.mrf.mxu0
    %v5890 = vadd.f32 %v5817, %v5889
    %v5891 = vpop.f32.mrf.mxu0
    %v5892 = vadd.f32 %v5819, %v5891
    %5893 = vmatmul.bf16.gmra.mxu0 %v2526
    %v5894 = vpop.f32.mrf.mxu0
    %v5895 = vadd.f32 %v5822, %v5894
    %v5896 = vpop.f32.mrf.mxu0
    %v5897 = vadd.f32 %v5824, %v5896
    %5898 = vmatmul.bf16.gmra.mxu0 %v2530
    %v5899 = vpop.f32.mrf.mxu0
    %v5900 = vadd.f32 %v5827, %v5899
    %v5901 = vpop.f32.mrf.mxu0
    %v5902 = vadd.f32 %v5829, %v5901
    %5903 = vmatmul.bf16.gmra.mxu0 %v2534
    %v5904 = vpop.f32.mrf.mxu0
    %v5905 = vadd.f32 %v5832, %v5904
    %v5906 = vpop.f32.mrf.mxu0
    %v5907 = vadd.f32 %v5834, %v5906
    %5908 = vmatmul.bf16.gmra.mxu0 %v2538
    %v5909 = vpop.f32.mrf.mxu0
    %v5910 = vadd.f32 %v5837, %v5909
    %v5911 = vpop.f32.mrf.mxu0
    %v5912 = vadd.f32 %v5839, %v5911
    %5913 = vmatmul.bf16.gmra.mxu0 %v2542
    %v5914 = vpop.f32.mrf.mxu0
    %v5915 = vadd.f32 %v5842, %v5914
    %v5916 = vpop.f32.mrf.mxu0
    %v5917 = vadd.f32 %v5844, %v5916
    %5918 = vmatmul.bf16.gmra.mxu0 %v2546
    %v5919 = vpop.f32.mrf.mxu0
    %v5920 = vadd.f32 %v5847, %v5919
    %v5921 = vpop.f32.mrf.mxu0
    %5922 = vdwg.mxu0
    %5923 = vmatpush.bf16.msra.mxu0 %v3430
    %5924 = vmatpush.bf16.msra.mxu0 %v3422
    %5925 = vmatpush.bf16.msra.mxu0 %v3414
    %5926 = vmatpush.bf16.msra.mxu0 %v3406
    %5927 = vmatpush.bf16.msra.mxu0 %v3398
    %5928 = vmatpush.bf16.msra.mxu0 %v3390
    %5929 = vmatpush.bf16.msra.mxu0 %v3382
    %5930 = vmatpush.bf16.msra.mxu0 %v3374
    %5931 = vmatmul.bf16.gmra.mxu0 %v2495
    %v5932 = vpop.f32.mrf.mxu0
    %v5933 = vadd.f32 %v2336, %v5932
    %v5934 = vpop.f32.mrf.mxu0
    %v5935 = vadd.f32 %v2336, %v5934
    %5936 = vmatmul.bf16.gmra.mxu0 %v2499
    %v5937 = vpop.f32.mrf.mxu0
    %v5938 = vadd.f32 %v2336, %v5937
    %v5939 = vpop.f32.mrf.mxu0
    %v5940 = vadd.f32 %v2336, %v5939
    %5941 = vmatmul.bf16.gmra.mxu0 %v2503
    %v5942 = vpop.f32.mrf.mxu0
    %v5943 = vadd.f32 %v2336, %v5942
    %v5944 = vpop.f32.mrf.mxu0
    %v5945 = vadd.f32 %v2336, %v5944
    %5946 = vmatmul.bf16.gmra.mxu0 %v2507
    %v5947 = vpop.f32.mrf.mxu0
    %v5948 = vadd.f32 %v2336, %v5947
    %v5949 = vpop.f32.mrf.mxu0
    %v5950 = vadd.f32 %v2336, %v5949
    %5951 = vmatmul.bf16.gmra.mxu0 %v2511
    %v5952 = vpop.f32.mrf.mxu0
    %v5953 = vadd.f32 %v2336, %v5952
    %v5954 = vpop.f32.mrf.mxu0
    %v5955 = vadd.f32 %v2336, %v5954
    %5956 = vmatmul.bf16.gmra.mxu0 %v2515
    %v5957 = vpop.f32.mrf.mxu0
    %v5958 = vadd.f32 %v2336, %v5957
    %v5959 = vpop.f32.mrf.mxu0
    %v5960 = vadd.f32 %v2336, %v5959
    %5961 = vmatmul.bf16.gmra.mxu0 %v2519
    %v5962 = vpop.f32.mrf.mxu0
    %v5963 = vadd.f32 %v2336, %v5962
    %v5964 = vpop.f32.mrf.mxu0
    %v5965 = vadd.f32 %v2336, %v5964
    %5966 = vmatmul.bf16.gmra.mxu0 %v2523
    %v5967 = vpop.f32.mrf.mxu0
    %v5968 = vadd.f32 %v2336, %v5967
    %v5969 = vpop.f32.mrf.mxu0
    %v5970 = vadd.f32 %v2336, %v5969
    %5971 = vmatmul.bf16.gmra.mxu0 %v2527
    %v5972 = vpop.f32.mrf.mxu0
    %v5973 = vadd.f32 %v2336, %v5972
    %v5974 = vpop.f32.mrf.mxu0
    %v5975 = vadd.f32 %v2336, %v5974
    %5976 = vmatmul.bf16.gmra.mxu0 %v2531
    %v5977 = vpop.f32.mrf.mxu0
    %v5978 = vadd.f32 %v2336, %v5977
    %v5979 = vpop.f32.mrf.mxu0
    %v5980 = vadd.f32 %v2336, %v5979
    %5981 = vmatmul.bf16.gmra.mxu0 %v2535
    %v5982 = vpop.f32.mrf.mxu0
    %v5983 = vadd.f32 %v2336, %v5982
    %v5984 = vpop.f32.mrf.mxu0
    %v5985 = vadd.f32 %v2336, %v5984
    %5986 = vmatmul.bf16.gmra.mxu0 %v2539
    %v5987 = vpop.f32.mrf.mxu0
    %v5988 = vadd.f32 %v2336, %v5987
    %v5989 = vpop.f32.mrf.mxu0
    %v5990 = vadd.f32 %v2336, %v5989
    %5991 = vmatmul.bf16.gmra.mxu0 %v2543
    %v5992 = vpop.f32.mrf.mxu0
    %v5993 = vadd.f32 %v2336, %v5992
    %v5994 = vpop.f32.mrf.mxu0
    %5995 = vdwg.mxu0
    %5996 = vmatpush.bf16.msra.mxu0 %v3494
    %5997 = vmatpush.bf16.msra.mxu0 %v3486
    %5998 = vmatpush.bf16.msra.mxu0 %v3478
    %5999 = vmatpush.bf16.msra.mxu0 %v3470
    %6000 = vmatpush.bf16.msra.mxu0 %v3462
    %6001 = vmatpush.bf16.msra.mxu0 %v3454
    %6002 = vmatpush.bf16.msra.mxu0 %v3446
    %6003 = vmatpush.bf16.msra.mxu0 %v3438
    %6004 = vmatmul.bf16.gmra.mxu0 %v2496
    %v6005 = vpop.f32.mrf.mxu0
    %v6006 = vadd.f32 %v5933, %v6005
    %v6007 = vpop.f32.mrf.mxu0
    %v6008 = vadd.f32 %v5935, %v6007
    %6009 = vmatmul.bf16.gmra.mxu0 %v2500
    %v6010 = vpop.f32.mrf.mxu0
    %v6011 = vadd.f32 %v5938, %v6010
    %v6012 = vpop.f32.mrf.mxu0
    %v6013 = vadd.f32 %v5940, %v6012
    %6014 = vmatmul.bf16.gmra.mxu0 %v2504
    %v6015 = vpop.f32.mrf.mxu0
    %v6016 = vadd.f32 %v5943, %v6015
    %v6017 = vpop.f32.mrf.mxu0
    %v6018 = vadd.f32 %v5945, %v6017
    %6019 = vmatmul.bf16.gmra.mxu0 %v2508
    %v6020 = vpop.f32.mrf.mxu0
    %v6021 = vadd.f32 %v5948, %v6020
    %v6022 = vpop.f32.mrf.mxu0
    %v6023 = vadd.f32 %v5950, %v6022
    %6024 = vmatmul.bf16.gmra.mxu0 %v2512
    %v6025 = vpop.f32.mrf.mxu0
    %v6026 = vadd.f32 %v5953, %v6025
    %v6027 = vpop.f32.mrf.mxu0
    %v6028 = vadd.f32 %v5955, %v6027
    %6029 = vmatmul.bf16.gmra.mxu0 %v2516
    %v6030 = vpop.f32.mrf.mxu0
    %v6031 = vadd.f32 %v5958, %v6030
    %v6032 = vpop.f32.mrf.mxu0
    %v6033 = vadd.f32 %v5960, %v6032
    %6034 = vmatmul.bf16.gmra.mxu0 %v2520
    %v6035 = vpop.f32.mrf.mxu0
    %v6036 = vadd.f32 %v5963, %v6035
    %v6037 = vpop.f32.mrf.mxu0
    %v6038 = vadd.f32 %v5965, %v6037
    %6039 = vmatmul.bf16.gmra.mxu0 %v2524
    %v6040 = vpop.f32.mrf.mxu0
    %v6041 = vadd.f32 %v5968, %v6040
    %v6042 = vpop.f32.mrf.mxu0
    %v6043 = vadd.f32 %v5970, %v6042
    %6044 = vmatmul.bf16.gmra.mxu0 %v2528
    %v6045 = vpop.f32.mrf.mxu0
    %v6046 = vadd.f32 %v5973, %v6045
    %v6047 = vpop.f32.mrf.mxu0
    %v6048 = vadd.f32 %v5975, %v6047
    %6049 = vmatmul.bf16.gmra.mxu0 %v2532
    %v6050 = vpop.f32.mrf.mxu0
    %v6051 = vadd.f32 %v5978, %v6050
    %v6052 = vpop.f32.mrf.mxu0
    %v6053 = vadd.f32 %v5980, %v6052
    %6054 = vmatmul.bf16.gmra.mxu0 %v2536
    %v6055 = vpop.f32.mrf.mxu0
    %v6056 = vadd.f32 %v5983, %v6055
    %v6057 = vpop.f32.mrf.mxu0
    %v6058 = vadd.f32 %v5985, %v6057
    %6059 = vmatmul.bf16.gmra.mxu0 %v2540
    %v6060 = vpop.f32.mrf.mxu0
    %v6061 = vadd.f32 %v5988, %v6060
    %v6062 = vpop.f32.mrf.mxu0
    %v6063 = vadd.f32 %v5990, %v6062
    %6064 = vmatmul.bf16.gmra.mxu0 %v2544
    %v6065 = vpop.f32.mrf.mxu0
    %v6066 = vadd.f32 %v5993, %v6065
    %v6067 = vpop.f32.mrf.mxu0
    %6068 = vdwg.mxu0
    %6069 = vmatpush.bf16.msra.mxu0 %v3558
    %6070 = vmatpush.bf16.msra.mxu0 %v3550
    %6071 = vmatpush.bf16.msra.mxu0 %v3542
    %6072 = vmatpush.bf16.msra.mxu0 %v3534
    %6073 = vmatpush.bf16.msra.mxu0 %v3526
    %6074 = vmatpush.bf16.msra.mxu0 %v3518
    %6075 = vmatpush.bf16.msra.mxu0 %v3510
    %6076 = vmatpush.bf16.msra.mxu0 %v3502
    %6077 = vmatmul.bf16.gmra.mxu0 %v2497
    %v6078 = vpop.f32.mrf.mxu0
    %v6079 = vadd.f32 %v6006, %v6078
    %v6080 = vpop.f32.mrf.mxu0
    %v6081 = vadd.f32 %v6008, %v6080
    %6082 = vmatmul.bf16.gmra.mxu0 %v2501
    %v6083 = vpop.f32.mrf.mxu0
    %v6084 = vadd.f32 %v6011, %v6083
    %v6085 = vpop.f32.mrf.mxu0
    %v6086 = vadd.f32 %v6013, %v6085
    %6087 = vmatmul.bf16.gmra.mxu0 %v2505
    %v6088 = vpop.f32.mrf.mxu0
    %v6089 = vadd.f32 %v6016, %v6088
    %v6090 = vpop.f32.mrf.mxu0
    %v6091 = vadd.f32 %v6018, %v6090
    %6092 = vmatmul.bf16.gmra.mxu0 %v2509
    %v6093 = vpop.f32.mrf.mxu0
    %v6094 = vadd.f32 %v6021, %v6093
    %v6095 = vpop.f32.mrf.mxu0
    %v6096 = vadd.f32 %v6023, %v6095
    %6097 = vmatmul.bf16.gmra.mxu0 %v2513
    %v6098 = vpop.f32.mrf.mxu0
    %v6099 = vadd.f32 %v6026, %v6098
    %v6100 = vpop.f32.mrf.mxu0
    %v6101 = vadd.f32 %v6028, %v6100
    %6102 = vmatmul.bf16.gmra.mxu0 %v2517
    %v6103 = vpop.f32.mrf.mxu0
    %v6104 = vadd.f32 %v6031, %v6103
    %v6105 = vpop.f32.mrf.mxu0
    %v6106 = vadd.f32 %v6033, %v6105
    %6107 = vmatmul.bf16.gmra.mxu0 %v2521
    %v6108 = vpop.f32.mrf.mxu0
    %v6109 = vadd.f32 %v6036, %v6108
    %v6110 = vpop.f32.mrf.mxu0
    %v6111 = vadd.f32 %v6038, %v6110
    %6112 = vmatmul.bf16.gmra.mxu0 %v2525
    %v6113 = vpop.f32.mrf.mxu0
    %v6114 = vadd.f32 %v6041, %v6113
    %v6115 = vpop.f32.mrf.mxu0
    %v6116 = vadd.f32 %v6043, %v6115
    %6117 = vmatmul.bf16.gmra.mxu0 %v2529
    %v6118 = vpop.f32.mrf.mxu0
    %v6119 = vadd.f32 %v6046, %v6118
    %v6120 = vpop.f32.mrf.mxu0
    %v6121 = vadd.f32 %v6048, %v6120
    %6122 = vmatmul.bf16.gmra.mxu0 %v2533
    %v6123 = vpop.f32.mrf.mxu0
    %v6124 = vadd.f32 %v6051, %v6123
    %v6125 = vpop.f32.mrf.mxu0
    %v6126 = vadd.f32 %v6053, %v6125
    %6127 = vmatmul.bf16.gmra.mxu0 %v2537
    %v6128 = vpop.f32.mrf.mxu0
    %v6129 = vadd.f32 %v6056, %v6128
    %v6130 = vpop.f32.mrf.mxu0
    %v6131 = vadd.f32 %v6058, %v6130
    %6132 = vmatmul.bf16.gmra.mxu0 %v2541
    %v6133 = vpop.f32.mrf.mxu0
    %v6134 = vadd.f32 %v6061, %v6133
    %v6135 = vpop.f32.mrf.mxu0
    %v6136 = vadd.f32 %v6063, %v6135
    %6137 = vmatmul.bf16.gmra.mxu0 %v2545
    %v6138 = vpop.f32.mrf.mxu0
    %v6139 = vadd.f32 %v6066, %v6138
    %v6140 = vpop.f32.mrf.mxu0
    %6141 = vdwg.mxu0
    %6142 = vmatpush.bf16.msra.mxu0 %v3622
    %6143 = vmatpush.bf16.msra.mxu0 %v3614
    %6144 = vmatpush.bf16.msra.mxu0 %v3606
    %6145 = vmatpush.bf16.msra.mxu0 %v3598
    %6146 = vmatpush.bf16.msra.mxu0 %v3590
    %6147 = vmatpush.bf16.msra.mxu0 %v3582
    %6148 = vmatpush.bf16.msra.mxu0 %v3574
    %6149 = vmatpush.bf16.msra.mxu0 %v3566
    %6150 = vmatmul.bf16.gmra.mxu0 %v2498
    %v6151 = vpop.f32.mrf.mxu0
    %v6152 = vadd.f32 %v6079, %v6151
    %v6153 = vpop.f32.mrf.mxu0
    %v6154 = vadd.f32 %v6081, %v6153
    %6155 = vmatmul.bf16.gmra.mxu0 %v2502
    %v6156 = vpop.f32.mrf.mxu0
    %v6157 = vadd.f32 %v6084, %v6156
    %v6158 = vpop.f32.mrf.mxu0
    %v6159 = vadd.f32 %v6086, %v6158
    %6160 = vmatmul.bf16.gmra.mxu0 %v2506
    %v6161 = vpop.f32.mrf.mxu0
    %v6162 = vadd.f32 %v6089, %v6161
    %v6163 = vpop.f32.mrf.mxu0
    %v6164 = vadd.f32 %v6091, %v6163
    %6165 = vmatmul.bf16.gmra.mxu0 %v2510
    %v6166 = vpop.f32.mrf.mxu0
    %v6167 = vadd.f32 %v6094, %v6166
    %v6168 = vpop.f32.mrf.mxu0
    %v6169 = vadd.f32 %v6096, %v6168
    %6170 = vmatmul.bf16.gmra.mxu0 %v2514
    %v6171 = vpop.f32.mrf.mxu0
    %v6172 = vadd.f32 %v6099, %v6171
    %v6173 = vpop.f32.mrf.mxu0
    %v6174 = vadd.f32 %v6101, %v6173
    %6175 = vmatmul.bf16.gmra.mxu0 %v2518
    %v6176 = vpop.f32.mrf.mxu0
    %v6177 = vadd.f32 %v6104, %v6176
    %v6178 = vpop.f32.mrf.mxu0
    %v6179 = vadd.f32 %v6106, %v6178
    %6180 = vmatmul.bf16.gmra.mxu0 %v2522
    %v6181 = vpop.f32.mrf.mxu0
    %v6182 = vadd.f32 %v6109, %v6181
    %v6183 = vpop.f32.mrf.mxu0
    %v6184 = vadd.f32 %v6111, %v6183
    %6185 = vmatmul.bf16.gmra.mxu0 %v2526
    %v6186 = vpop.f32.mrf.mxu0
    %v6187 = vadd.f32 %v6114, %v6186
    %v6188 = vpop.f32.mrf.mxu0
    %v6189 = vadd.f32 %v6116, %v6188
    %6190 = vmatmul.bf16.gmra.mxu0 %v2530
    %v6191 = vpop.f32.mrf.mxu0
    %v6192 = vadd.f32 %v6119, %v6191
    %v6193 = vpop.f32.mrf.mxu0
    %v6194 = vadd.f32 %v6121, %v6193
    %6195 = vmatmul.bf16.gmra.mxu0 %v2534
    %v6196 = vpop.f32.mrf.mxu0
    %v6197 = vadd.f32 %v6124, %v6196
    %v6198 = vpop.f32.mrf.mxu0
    %v6199 = vadd.f32 %v6126, %v6198
    %6200 = vmatmul.bf16.gmra.mxu0 %v2538
    %v6201 = vpop.f32.mrf.mxu0
    %v6202 = vadd.f32 %v6129, %v6201
    %v6203 = vpop.f32.mrf.mxu0
    %v6204 = vadd.f32 %v6131, %v6203
    %6205 = vmatmul.bf16.gmra.mxu0 %v2542
    %v6206 = vpop.f32.mrf.mxu0
    %v6207 = vadd.f32 %v6134, %v6206
    %v6208 = vpop.f32.mrf.mxu0
    %v6209 = vadd.f32 %v6136, %v6208
    %6210 = vmatmul.bf16.gmra.mxu0 %v2546
    %v6211 = vpop.f32.mrf.mxu0
    %v6212 = vadd.f32 %v6139, %v6211
    %v6213 = vpop.f32.mrf.mxu0
    %6214 = vdwg.mxu0
    %vm6215 = vcmp.ge.f32.partialorder %v4108, 0.0
    %vm6216 = vcmp.ge.f32.partialorder %v4400, 0.0
    %vm6217 = vcmp.ge.f32.partialorder %v4692, 0.0
    %vm6218 = vcmp.ge.f32.partialorder %v4984, 0.0
    %vm6219 = vcmp.ge.f32.partialorder %v5276, 0.0
    %vm6220 = vcmp.ge.f32.partialorder %v5568, 0.0
    %vm6221 = vcmp.ge.f32.partialorder %v5860, 0.0
    %vm6222 = vcmp.ge.f32.partialorder %v6152, 0.0
    %vm6223 = vcmp.ge.f32.partialorder %v4110, 0.0
    %vm6224 = vcmp.ge.f32.partialorder %v4402, 0.0
    %vm6225 = vcmp.ge.f32.partialorder %v4694, 0.0
    %vm6226 = vcmp.ge.f32.partialorder %v4986, 0.0
    %vm6227 = vcmp.ge.f32.partialorder %v5278, 0.0
    %vm6228 = vcmp.ge.f32.partialorder %v5570, 0.0
    %vm6229 = vcmp.ge.f32.partialorder %v5862, 0.0
    %vm6230 = vcmp.ge.f32.partialorder %v6154, 0.0
    %vm6231 = vcmp.ge.f32.partialorder %v4113, 0.0
    %vm6232 = vcmp.ge.f32.partialorder %v4405, 0.0
    %vm6233 = vcmp.ge.f32.partialorder %v4697, 0.0
    %vm6234 = vcmp.ge.f32.partialorder %v4989, 0.0
    %vm6235 = vcmp.ge.f32.partialorder %v5281, 0.0
    %vm6236 = vcmp.ge.f32.partialorder %v5573, 0.0
    %vm6237 = vcmp.ge.f32.partialorder %v5865, 0.0
    %vm6238 = vcmp.ge.f32.partialorder %v6157, 0.0
    %vm6239 = vcmp.ge.f32.partialorder %v4115, 0.0
    %vm6240 = vcmp.ge.f32.partialorder %v4407, 0.0
    %vm6241 = vcmp.ge.f32.partialorder %v4699, 0.0
    %vm6242 = vcmp.ge.f32.partialorder %v4991, 0.0
    %vm6243 = vcmp.ge.f32.partialorder %v5283, 0.0
    %vm6244 = vcmp.ge.f32.partialorder %v5575, 0.0
    %vm6245 = vcmp.ge.f32.partialorder %v5867, 0.0
    %vm6246 = vcmp.ge.f32.partialorder %v6159, 0.0
    %vm6247 = vcmp.ge.f32.partialorder %v4118, 0.0
    %vm6248 = vcmp.ge.f32.partialorder %v4410, 0.0
    %vm6249 = vcmp.ge.f32.partialorder %v4702, 0.0
    %vm6250 = vcmp.ge.f32.partialorder %v4994, 0.0
    %vm6251 = vcmp.ge.f32.partialorder %v5286, 0.0
    %vm6252 = vcmp.ge.f32.partialorder %v5578, 0.0
    %vm6253 = vcmp.ge.f32.partialorder %v5870, 0.0
    %vm6254 = vcmp.ge.f32.partialorder %v6162, 0.0
    %vm6255 = vcmp.ge.f32.partialorder %v4120, 0.0
    %vm6256 = vcmp.ge.f32.partialorder %v4412, 0.0
    %vm6257 = vcmp.ge.f32.partialorder %v4704, 0.0
    %vm6258 = vcmp.ge.f32.partialorder %v4996, 0.0
    %vm6259 = vcmp.ge.f32.partialorder %v5288, 0.0
    %vm6260 = vcmp.ge.f32.partialorder %v5580, 0.0
    %vm6261 = vcmp.ge.f32.partialorder %v5872, 0.0
    %vm6262 = vcmp.ge.f32.partialorder %v6164, 0.0
    %vm6263 = vcmp.ge.f32.partialorder %v4123, 0.0
    %vm6264 = vcmp.ge.f32.partialorder %v4415, 0.0
    %vm6265 = vcmp.ge.f32.partialorder %v4707, 0.0
    %vm6266 = vcmp.ge.f32.partialorder %v4999, 0.0
    %vm6267 = vcmp.ge.f32.partialorder %v5291, 0.0
    %vm6268 = vcmp.ge.f32.partialorder %v5583, 0.0
    %vm6269 = vcmp.ge.f32.partialorder %v5875, 0.0
    %vm6270 = vcmp.ge.f32.partialorder %v6167, 0.0
    %vm6271 = vcmp.ge.f32.partialorder %v4125, 0.0
    %vm6272 = vcmp.ge.f32.partialorder %v4417, 0.0
    %vm6273 = vcmp.ge.f32.partialorder %v4709, 0.0
    %vm6274 = vcmp.ge.f32.partialorder %v5001, 0.0
    %vm6275 = vcmp.ge.f32.partialorder %v5293, 0.0
    %vm6276 = vcmp.ge.f32.partialorder %v5585, 0.0
    %vm6277 = vcmp.ge.f32.partialorder %v5877, 0.0
    %vm6278 = vcmp.ge.f32.partialorder %v6169, 0.0
    %vm6279 = vcmp.ge.f32.partialorder %v4128, 0.0
    %vm6280 = vcmp.ge.f32.partialorder %v4420, 0.0
    %vm6281 = vcmp.ge.f32.partialorder %v4712, 0.0
    %vm6282 = vcmp.ge.f32.partialorder %v5004, 0.0
    %vm6283 = vcmp.ge.f32.partialorder %v5296, 0.0
    %vm6284 = vcmp.ge.f32.partialorder %v5588, 0.0
    %vm6285 = vcmp.ge.f32.partialorder %v5880, 0.0
    %vm6286 = vcmp.ge.f32.partialorder %v6172, 0.0
    %vm6287 = vcmp.ge.f32.partialorder %v4130, 0.0
    %vm6288 = vcmp.ge.f32.partialorder %v4422, 0.0
    %vm6289 = vcmp.ge.f32.partialorder %v4714, 0.0
    %vm6290 = vcmp.ge.f32.partialorder %v5006, 0.0
    %vm6291 = vcmp.ge.f32.partialorder %v5298, 0.0
    %vm6292 = vcmp.ge.f32.partialorder %v5590, 0.0
    %vm6293 = vcmp.ge.f32.partialorder %v5882, 0.0
    %vm6294 = vcmp.ge.f32.partialorder %v6174, 0.0
    %vm6295 = vcmp.ge.f32.partialorder %v4133, 0.0
    %vm6296 = vcmp.ge.f32.partialorder %v4425, 0.0
    %vm6297 = vcmp.ge.f32.partialorder %v4717, 0.0
    %vm6298 = vcmp.ge.f32.partialorder %v5009, 0.0
    %vm6299 = vcmp.ge.f32.partialorder %v5301, 0.0
    %vm6300 = vcmp.ge.f32.partialorder %v5593, 0.0
    %vm6301 = vcmp.ge.f32.partialorder %v5885, 0.0
    %vm6302 = vcmp.ge.f32.partialorder %v6177, 0.0
    %vm6303 = vcmp.ge.f32.partialorder %v4135, 0.0
    %vm6304 = vcmp.ge.f32.partialorder %v4427, 0.0
    %vm6305 = vcmp.ge.f32.partialorder %v4719, 0.0
    %vm6306 = vcmp.ge.f32.partialorder %v5011, 0.0
    %vm6307 = vcmp.ge.f32.partialorder %v5303, 0.0
    %vm6308 = vcmp.ge.f32.partialorder %v5595, 0.0
    %vm6309 = vcmp.ge.f32.partialorder %v5887, 0.0
    %vm6310 = vcmp.ge.f32.partialorder %v6179, 0.0
    %vm6311 = vcmp.ge.f32.partialorder %v4138, 0.0
    %vm6312 = vcmp.ge.f32.partialorder %v4430, 0.0
    %vm6313 = vcmp.ge.f32.partialorder %v4722, 0.0
    %vm6314 = vcmp.ge.f32.partialorder %v5014, 0.0
    %vm6315 = vcmp.ge.f32.partialorder %v5306, 0.0
    %vm6316 = vcmp.ge.f32.partialorder %v5598, 0.0
    %vm6317 = vcmp.ge.f32.partialorder %v5890, 0.0
    %vm6318 = vcmp.ge.f32.partialorder %v6182, 0.0
    %vm6319 = vcmp.ge.f32.partialorder %v4140, 0.0
    %vm6320 = vcmp.ge.f32.partialorder %v4432, 0.0
    %vm6321 = vcmp.ge.f32.partialorder %v4724, 0.0
    %vm6322 = vcmp.ge.f32.partialorder %v5016, 0.0
    %vm6323 = vcmp.ge.f32.partialorder %v5308, 0.0
    %vm6324 = vcmp.ge.f32.partialorder %v5600, 0.0
    %vm6325 = vcmp.ge.f32.partialorder %v5892, 0.0
    %vm6326 = vcmp.ge.f32.partialorder %v6184, 0.0
    %vm6327 = vcmp.ge.f32.partialorder %v4143, 0.0
    %vm6328 = vcmp.ge.f32.partialorder %v4435, 0.0
    %vm6329 = vcmp.ge.f32.partialorder %v4727, 0.0
    %vm6330 = vcmp.ge.f32.partialorder %v5019, 0.0
    %vm6331 = vcmp.ge.f32.partialorder %v5311, 0.0
    %vm6332 = vcmp.ge.f32.partialorder %v5603, 0.0
    %vm6333 = vcmp.ge.f32.partialorder %v5895, 0.0
    %vm6334 = vcmp.ge.f32.partialorder %v6187, 0.0
    %vm6335 = vcmp.ge.f32.partialorder %v4145, 0.0
    %vm6336 = vcmp.ge.f32.partialorder %v4437, 0.0
    %vm6337 = vcmp.ge.f32.partialorder %v4729, 0.0
    %vm6338 = vcmp.ge.f32.partialorder %v5021, 0.0
    %vm6339 = vcmp.ge.f32.partialorder %v5313, 0.0
    %vm6340 = vcmp.ge.f32.partialorder %v5605, 0.0
    %vm6341 = vcmp.ge.f32.partialorder %v5897, 0.0
    %vm6342 = vcmp.ge.f32.partialorder %v6189, 0.0
    %vm6343 = vcmp.ge.f32.partialorder %v4148, 0.0
    %vm6344 = vcmp.ge.f32.partialorder %v4440, 0.0
    %vm6345 = vcmp.ge.f32.partialorder %v4732, 0.0
    %vm6346 = vcmp.ge.f32.partialorder %v5024, 0.0
    %vm6347 = vcmp.ge.f32.partialorder %v5316, 0.0
    %vm6348 = vcmp.ge.f32.partialorder %v5608, 0.0
    %vm6349 = vcmp.ge.f32.partialorder %v5900, 0.0
    %vm6350 = vcmp.ge.f32.partialorder %v6192, 0.0
    %vm6351 = vcmp.ge.f32.partialorder %v4150, 0.0
    %vm6352 = vcmp.ge.f32.partialorder %v4442, 0.0
    %vm6353 = vcmp.ge.f32.partialorder %v4734, 0.0
    %vm6354 = vcmp.ge.f32.partialorder %v5026, 0.0
    %vm6355 = vcmp.ge.f32.partialorder %v5318, 0.0
    %vm6356 = vcmp.ge.f32.partialorder %v5610, 0.0
    %vm6357 = vcmp.ge.f32.partialorder %v5902, 0.0
    %vm6358 = vcmp.ge.f32.partialorder %v6194, 0.0
    %vm6359 = vcmp.ge.f32.partialorder %v4153, 0.0
    %vm6360 = vcmp.ge.f32.partialorder %v4445, 0.0
    %vm6361 = vcmp.ge.f32.partialorder %v4737, 0.0
    %vm6362 = vcmp.ge.f32.partialorder %v5029, 0.0
    %vm6363 = vcmp.ge.f32.partialorder %v5321, 0.0
    %vm6364 = vcmp.ge.f32.partialorder %v5613, 0.0
    %vm6365 = vcmp.ge.f32.partialorder %v5905, 0.0
    %vm6366 = vcmp.ge.f32.partialorder %v6197, 0.0
    %vm6367 = vcmp.ge.f32.partialorder %v4155, 0.0
    %vm6368 = vcmp.ge.f32.partialorder %v4447, 0.0
    %vm6369 = vcmp.ge.f32.partialorder %v4739, 0.0
    %vm6370 = vcmp.ge.f32.partialorder %v5031, 0.0
    %vm6371 = vcmp.ge.f32.partialorder %v5323, 0.0
    %vm6372 = vcmp.ge.f32.partialorder %v5615, 0.0
    %vm6373 = vcmp.ge.f32.partialorder %v5907, 0.0
    %vm6374 = vcmp.ge.f32.partialorder %v6199, 0.0
    %vm6375 = vcmp.ge.f32.partialorder %v4158, 0.0
    %vm6376 = vcmp.ge.f32.partialorder %v4450, 0.0
    %vm6377 = vcmp.ge.f32.partialorder %v4742, 0.0
    %vm6378 = vcmp.ge.f32.partialorder %v5034, 0.0
    %vm6379 = vcmp.ge.f32.partialorder %v5326, 0.0
    %vm6380 = vcmp.ge.f32.partialorder %v5618, 0.0
    %vm6381 = vcmp.ge.f32.partialorder %v5910, 0.0
    %vm6382 = vcmp.ge.f32.partialorder %v6202, 0.0
    %vm6383 = vcmp.ge.f32.partialorder %v4160, 0.0
    %vm6384 = vcmp.ge.f32.partialorder %v4452, 0.0
    %vm6385 = vcmp.ge.f32.partialorder %v4744, 0.0
    %vm6386 = vcmp.ge.f32.partialorder %v5036, 0.0
    %vm6387 = vcmp.ge.f32.partialorder %v5328, 0.0
    %vm6388 = vcmp.ge.f32.partialorder %v5620, 0.0
    %vm6389 = vcmp.ge.f32.partialorder %v5912, 0.0
    %vm6390 = vcmp.ge.f32.partialorder %v6204, 0.0
    %vm6391 = vcmp.ge.f32.partialorder %v4163, 0.0
    %vm6392 = vcmp.ge.f32.partialorder %v4455, 0.0
    %vm6393 = vcmp.ge.f32.partialorder %v4747, 0.0
    %vm6394 = vcmp.ge.f32.partialorder %v5039, 0.0
    %vm6395 = vcmp.ge.f32.partialorder %v5331, 0.0
    %vm6396 = vcmp.ge.f32.partialorder %v5623, 0.0
    %vm6397 = vcmp.ge.f32.partialorder %v5915, 0.0
    %vm6398 = vcmp.ge.f32.partialorder %v6207, 0.0
    %vm6399 = vcmp.ge.f32.partialorder %v4165, 0.0
    %vm6400 = vcmp.ge.f32.partialorder %v4457, 0.0
    %vm6401 = vcmp.ge.f32.partialorder %v4749, 0.0
    %vm6402 = vcmp.ge.f32.partialorder %v5041, 0.0
    %vm6403 = vcmp.ge.f32.partialorder %v5333, 0.0
    %vm6404 = vcmp.ge.f32.partialorder %v5625, 0.0
    %vm6405 = vcmp.ge.f32.partialorder %v5917, 0.0
    %vm6406 = vcmp.ge.f32.partialorder %v6209, 0.0
    %vm6407 = vcmp.ge.f32.partialorder %v4168, 0.0
    %vm6408 = vcmp.ge.f32.partialorder %v4460, 0.0
    %vm6409 = vcmp.ge.f32.partialorder %v4752, 0.0
    %vm6410 = vcmp.ge.f32.partialorder %v5044, 0.0
    %vm6411 = vcmp.ge.f32.partialorder %v5336, 0.0
    %vm6412 = vcmp.ge.f32.partialorder %v5628, 0.0
    %vm6413 = vcmp.ge.f32.partialorder %v5920, 0.0
    %vm6414 = vcmp.ge.f32.partialorder %v6212, 0.0
    %v6415 = vmul.f32 %v4108, 0.01
    %v6416 = vmul.f32 %v4400, 0.01
    %v6417 = vmul.f32 %v4692, 0.01
    %v6418 = vmul.f32 %v4984, 0.01
    %v6419 = vmul.f32 %v5276, 0.01
    %v6420 = vmul.f32 %v5568, 0.01
    %v6421 = vmul.f32 %v5860, 0.01
    %v6422 = vmul.f32 %v6152, 0.01
    %v6423 = vmul.f32 %v4110, 0.01
    %v6424 = vmul.f32 %v4402, 0.01
    %v6425 = vmul.f32 %v4694, 0.01
    %v6426 = vmul.f32 %v4986, 0.01
    %v6427 = vmul.f32 %v5278, 0.01
    %v6428 = vmul.f32 %v5570, 0.01
    %v6429 = vmul.f32 %v5862, 0.01
    %v6430 = vmul.f32 %v6154, 0.01
    %v6431 = vmul.f32 %v4113, 0.01
    %v6432 = vmul.f32 %v4405, 0.01
    %v6433 = vmul.f32 %v4697, 0.01
    %v6434 = vmul.f32 %v4989, 0.01
    %v6435 = vmul.f32 %v5281, 0.01
    %v6436 = vmul.f32 %v5573, 0.01
    %v6437 = vmul.f32 %v5865, 0.01
    %v6438 = vmul.f32 %v6157, 0.01
    %v6439 = vmul.f32 %v4115, 0.01
    %v6440 = vmul.f32 %v4407, 0.01
    %v6441 = vmul.f32 %v4699, 0.01
    %v6442 = vmul.f32 %v4991, 0.01
    %v6443 = vmul.f32 %v5283, 0.01
    %v6444 = vmul.f32 %v5575, 0.01
    %v6445 = vmul.f32 %v5867, 0.01
    %v6446 = vmul.f32 %v6159, 0.01
    %v6447 = vmul.f32 %v4118, 0.01
    %v6448 = vmul.f32 %v4410, 0.01
    %v6449 = vmul.f32 %v4702, 0.01
    %v6450 = vmul.f32 %v4994, 0.01
    %v6451 = vmul.f32 %v5286, 0.01
    %v6452 = vmul.f32 %v5578, 0.01
    %v6453 = vmul.f32 %v5870, 0.01
    %v6454 = vmul.f32 %v6162, 0.01
    %v6455 = vmul.f32 %v4120, 0.01
    %v6456 = vmul.f32 %v4412, 0.01
    %v6457 = vmul.f32 %v4704, 0.01
    %v6458 = vmul.f32 %v4996, 0.01
    %v6459 = vmul.f32 %v5288, 0.01
    %v6460 = vmul.f32 %v5580, 0.01
    %v6461 = vmul.f32 %v5872, 0.01
    %v6462 = vmul.f32 %v6164, 0.01
    %v6463 = vmul.f32 %v4123, 0.01
    %v6464 = vmul.f32 %v4415, 0.01
    %v6465 = vmul.f32 %v4707, 0.01
    %v6466 = vmul.f32 %v4999, 0.01
    %v6467 = vmul.f32 %v5291, 0.01
    %v6468 = vmul.f32 %v5583, 0.01
    %v6469 = vmul.f32 %v5875, 0.01
    %v6470 = vmul.f32 %v6167, 0.01
    %v6471 = vmul.f32 %v4125, 0.01
    %v6472 = vmul.f32 %v4417, 0.01
    %v6473 = vmul.f32 %v4709, 0.01
    %v6474 = vmul.f32 %v5001, 0.01
    %v6475 = vmul.f32 %v5293, 0.01
    %v6476 = vmul.f32 %v5585, 0.01
    %v6477 = vmul.f32 %v5877, 0.01
    %v6478 = vmul.f32 %v6169, 0.01
    %v6479 = vmul.f32 %v4128, 0.01
    %v6480 = vmul.f32 %v4420, 0.01
    %v6481 = vmul.f32 %v4712, 0.01
    %v6482 = vmul.f32 %v5004, 0.01
    %v6483 = vmul.f32 %v5296, 0.01
    %v6484 = vmul.f32 %v5588, 0.01
    %v6485 = vmul.f32 %v5880, 0.01
    %v6486 = vmul.f32 %v6172, 0.01
    %v6487 = vmul.f32 %v4130, 0.01
    %v6488 = vmul.f32 %v4422, 0.01
    %v6489 = vmul.f32 %v4714, 0.01
    %v6490 = vmul.f32 %v5006, 0.01
    %v6491 = vmul.f32 %v5298, 0.01
    %v6492 = vmul.f32 %v5590, 0.01
    %v6493 = vmul.f32 %v5882, 0.01
    %v6494 = vmul.f32 %v6174, 0.01
    %v6495 = vmul.f32 %v4133, 0.01
    %v6496 = vmul.f32 %v4425, 0.01
    %v6497 = vmul.f32 %v4717, 0.01
    %v6498 = vmul.f32 %v5009, 0.01
    %v6499 = vmul.f32 %v5301, 0.01
    %v6500 = vmul.f32 %v5593, 0.01
    %v6501 = vmul.f32 %v5885, 0.01
    %v6502 = vmul.f32 %v6177, 0.01
    %v6503 = vmul.f32 %v4135, 0.01
    %v6504 = vmul.f32 %v4427, 0.01
    %v6505 = vmul.f32 %v4719, 0.01
    %v6506 = vmul.f32 %v5011, 0.01
    %v6507 = vmul.f32 %v5303, 0.01
    %v6508 = vmul.f32 %v5595, 0.01
    %v6509 = vmul.f32 %v5887, 0.01
    %v6510 = vmul.f32 %v6179, 0.01
    %v6511 = vmul.f32 %v4138, 0.01
    %v6512 = vmul.f32 %v4430, 0.01
    %v6513 = vmul.f32 %v4722, 0.01
    %v6514 = vmul.f32 %v5014, 0.01
    %v6515 = vmul.f32 %v5306, 0.01
    %v6516 = vmul.f32 %v5598, 0.01
    %v6517 = vmul.f32 %v5890, 0.01
    %v6518 = vmul.f32 %v6182, 0.01
    %v6519 = vmul.f32 %v4140, 0.01
    %v6520 = vmul.f32 %v4432, 0.01
    %v6521 = vmul.f32 %v4724, 0.01
    %v6522 = vmul.f32 %v5016, 0.01
    %v6523 = vmul.f32 %v5308, 0.01
    %v6524 = vmul.f32 %v5600, 0.01
    %v6525 = vmul.f32 %v5892, 0.01
    %v6526 = vmul.f32 %v6184, 0.01
    %v6527 = vmul.f32 %v4143, 0.01
    %v6528 = vmul.f32 %v4435, 0.01
    %v6529 = vmul.f32 %v4727, 0.01
    %v6530 = vmul.f32 %v5019, 0.01
    %v6531 = vmul.f32 %v5311, 0.01
    %v6532 = vmul.f32 %v5603, 0.01
    %v6533 = vmul.f32 %v5895, 0.01
    %v6534 = vmul.f32 %v6187, 0.01
    %v6535 = vmul.f32 %v4145, 0.01
    %v6536 = vmul.f32 %v4437, 0.01
    %v6537 = vmul.f32 %v4729, 0.01
    %v6538 = vmul.f32 %v5021, 0.01
    %v6539 = vmul.f32 %v5313, 0.01
    %v6540 = vmul.f32 %v5605, 0.01
    %v6541 = vmul.f32 %v5897, 0.01
    %v6542 = vmul.f32 %v6189, 0.01
    %v6543 = vmul.f32 %v4148, 0.01
    %v6544 = vmul.f32 %v4440, 0.01
    %v6545 = vmul.f32 %v4732, 0.01
    %v6546 = vmul.f32 %v5024, 0.01
    %v6547 = vmul.f32 %v5316, 0.01
    %v6548 = vmul.f32 %v5608, 0.01
    %v6549 = vmul.f32 %v5900, 0.01
    %v6550 = vmul.f32 %v6192, 0.01
    %v6551 = vmul.f32 %v4150, 0.01
    %v6552 = vmul.f32 %v4442, 0.01
    %v6553 = vmul.f32 %v4734, 0.01
    %v6554 = vmul.f32 %v5026, 0.01
    %v6555 = vmul.f32 %v5318, 0.01
    %v6556 = vmul.f32 %v5610, 0.01
    %v6557 = vmul.f32 %v5902, 0.01
    %v6558 = vmul.f32 %v6194, 0.01
    %v6559 = vmul.f32 %v4153, 0.01
    %v6560 = vmul.f32 %v4445, 0.01
    %v6561 = vmul.f32 %v4737, 0.01
    %v6562 = vmul.f32 %v5029, 0.01
    %v6563 = vmul.f32 %v5321, 0.01
    %v6564 = vmul.f32 %v5613, 0.01
    %v6565 = vmul.f32 %v5905, 0.01
    %v6566 = vmul.f32 %v6197, 0.01
    %v6567 = vmul.f32 %v4155, 0.01
    %v6568 = vmul.f32 %v4447, 0.01
    %v6569 = vmul.f32 %v4739, 0.01
    %v6570 = vmul.f32 %v5031, 0.01
    %v6571 = vmul.f32 %v5323, 0.01
    %v6572 = vmul.f32 %v5615, 0.01
    %v6573 = vmul.f32 %v5907, 0.01
    %v6574 = vmul.f32 %v6199, 0.01
    %v6575 = vmul.f32 %v4158, 0.01
    %v6576 = vmul.f32 %v4450, 0.01
    %v6577 = vmul.f32 %v4742, 0.01
    %v6578 = vmul.f32 %v5034, 0.01
    %v6579 = vmul.f32 %v5326, 0.01
    %v6580 = vmul.f32 %v5618, 0.01
    %v6581 = vmul.f32 %v5910, 0.01
    %v6582 = vmul.f32 %v6202, 0.01
    %v6583 = vmul.f32 %v4160, 0.01
    %v6584 = vmul.f32 %v4452, 0.01
    %v6585 = vmul.f32 %v4744, 0.01
    %v6586 = vmul.f32 %v5036, 0.01
    %v6587 = vmul.f32 %v5328, 0.01
    %v6588 = vmul.f32 %v5620, 0.01
    %v6589 = vmul.f32 %v5912, 0.01
    %v6590 = vmul.f32 %v6204, 0.01
    %v6591 = vmul.f32 %v4163, 0.01
    %v6592 = vmul.f32 %v4455, 0.01
    %v6593 = vmul.f32 %v4747, 0.01
    %v6594 = vmul.f32 %v5039, 0.01
    %v6595 = vmul.f32 %v5331, 0.01
    %v6596 = vmul.f32 %v5623, 0.01
    %v6597 = vmul.f32 %v5915, 0.01
    %v6598 = vmul.f32 %v6207, 0.01
    %v6599 = vmul.f32 %v4165, 0.01
    %v6600 = vmul.f32 %v4457, 0.01
    %v6601 = vmul.f32 %v4749, 0.01
    %v6602 = vmul.f32 %v5041, 0.01
    %v6603 = vmul.f32 %v5333, 0.01
    %v6604 = vmul.f32 %v5625, 0.01
    %v6605 = vmul.f32 %v5917, 0.01
    %v6606 = vmul.f32 %v6209, 0.01
    %v6607 = vmul.f32 %v4168, 0.01
    %v6608 = vmul.f32 %v4460, 0.01
    %v6609 = vmul.f32 %v4752, 0.01
    %v6610 = vmul.f32 %v5044, 0.01
    %v6611 = vmul.f32 %v5336, 0.01
    %v6612 = vmul.f32 %v5628, 0.01
    %v6613 = vmul.f32 %v5920, 0.01
    %v6614 = vmul.f32 %v6212, 0.01
    %v6615 = vsel %vm6215, %v4108, %v6415
    %v6616 = vsel %vm6216, %v4400, %v6416
    %v6617 = vsel %vm6217, %v4692, %v6417
    %v6618 = vsel %vm6218, %v4984, %v6418
    %v6619 = vsel %vm6219, %v5276, %v6419
    %v6620 = vsel %vm6220, %v5568, %v6420
    %v6621 = vsel %vm6221, %v5860, %v6421
    %v6622 = vsel %vm6222, %v6152, %v6422
    %v6623 = vsel %vm6223, %v4110, %v6423
    %v6624 = vsel %vm6224, %v4402, %v6424
    %v6625 = vsel %vm6225, %v4694, %v6425
    %v6626 = vsel %vm6226, %v4986, %v6426
    %v6627 = vsel %vm6227, %v5278, %v6427
    %v6628 = vsel %vm6228, %v5570, %v6428
    %v6629 = vsel %vm6229, %v5862, %v6429
    %v6630 = vsel %vm6230, %v6154, %v6430
    %v6631 = vsel %vm6231, %v4113, %v6431
    %v6632 = vsel %vm6232, %v4405, %v6432
    %v6633 = vsel %vm6233, %v4697, %v6433
    %v6634 = vsel %vm6234, %v4989, %v6434
    %v6635 = vsel %vm6235, %v5281, %v6435
    %v6636 = vsel %vm6236, %v5573, %v6436
    %v6637 = vsel %vm6237, %v5865, %v6437
    %v6638 = vsel %vm6238, %v6157, %v6438
    %v6639 = vsel %vm6239, %v4115, %v6439
    %v6640 = vsel %vm6240, %v4407, %v6440
    %v6641 = vsel %vm6241, %v4699, %v6441
    %v6642 = vsel %vm6242, %v4991, %v6442
    %v6643 = vsel %vm6243, %v5283, %v6443
    %v6644 = vsel %vm6244, %v5575, %v6444
    %v6645 = vsel %vm6245, %v5867, %v6445
    %v6646 = vsel %vm6246, %v6159, %v6446
    %v6647 = vsel %vm6247, %v4118, %v6447
    %v6648 = vsel %vm6248, %v4410, %v6448
    %v6649 = vsel %vm6249, %v4702, %v6449
    %v6650 = vsel %vm6250, %v4994, %v6450
    %v6651 = vsel %vm6251, %v5286, %v6451
    %v6652 = vsel %vm6252, %v5578, %v6452
    %v6653 = vsel %vm6253, %v5870, %v6453
    %v6654 = vsel %vm6254, %v6162, %v6454
    %v6655 = vsel %vm6255, %v4120, %v6455
    %v6656 = vsel %vm6256, %v4412, %v6456
    %v6657 = vsel %vm6257, %v4704, %v6457
    %v6658 = vsel %vm6258, %v4996, %v6458
    %v6659 = vsel %vm6259, %v5288, %v6459
    %v6660 = vsel %vm6260, %v5580, %v6460
    %v6661 = vsel %vm6261, %v5872, %v6461
    %v6662 = vsel %vm6262, %v6164, %v6462
    %v6663 = vsel %vm6263, %v4123, %v6463
    %v6664 = vsel %vm6264, %v4415, %v6464
    %v6665 = vsel %vm6265, %v4707, %v6465
    %v6666 = vsel %vm6266, %v4999, %v6466
    %v6667 = vsel %vm6267, %v5291, %v6467
    %v6668 = vsel %vm6268, %v5583, %v6468
    %v6669 = vsel %vm6269, %v5875, %v6469
    %v6670 = vsel %vm6270, %v6167, %v6470
    %v6671 = vsel %vm6271, %v4125, %v6471
    %v6672 = vsel %vm6272, %v4417, %v6472
    %v6673 = vsel %vm6273, %v4709, %v6473
    %v6674 = vsel %vm6274, %v5001, %v6474
    %v6675 = vsel %vm6275, %v5293, %v6475
    %v6676 = vsel %vm6276, %v5585, %v6476
    %v6677 = vsel %vm6277, %v5877, %v6477
    %v6678 = vsel %vm6278, %v6169, %v6478
    %v6679 = vsel %vm6279, %v4128, %v6479
    %v6680 = vsel %vm6280, %v4420, %v6480
    %v6681 = vsel %vm6281, %v4712, %v6481
    %v6682 = vsel %vm6282, %v5004, %v6482
    %v6683 = vsel %vm6283, %v5296, %v6483
    %v6684 = vsel %vm6284, %v5588, %v6484
    %v6685 = vsel %vm6285, %v5880, %v6485
    %v6686 = vsel %vm6286, %v6172, %v6486
    %v6687 = vsel %vm6287, %v4130, %v6487
    %v6688 = vsel %vm6288, %v4422, %v6488
    %v6689 = vsel %vm6289, %v4714, %v6489
    %v6690 = vsel %vm6290, %v5006, %v6490
    %v6691 = vsel %vm6291, %v5298, %v6491
    %v6692 = vsel %vm6292, %v5590, %v6492
    %v6693 = vsel %vm6293, %v5882, %v6493
    %v6694 = vsel %vm6294, %v6174, %v6494
    %v6695 = vsel %vm6295, %v4133, %v6495
    %v6696 = vsel %vm6296, %v4425, %v6496
    %v6697 = vsel %vm6297, %v4717, %v6497
    %v6698 = vsel %vm6298, %v5009, %v6498
    %v6699 = vsel %vm6299, %v5301, %v6499
    %v6700 = vsel %vm6300, %v5593, %v6500
    %v6701 = vsel %vm6301, %v5885, %v6501
    %v6702 = vsel %vm6302, %v6177, %v6502
    %v6703 = vsel %vm6303, %v4135, %v6503
    %v6704 = vsel %vm6304, %v4427, %v6504
    %v6705 = vsel %vm6305, %v4719, %v6505
    %v6706 = vsel %vm6306, %v5011, %v6506
    %v6707 = vsel %vm6307, %v5303, %v6507
    %v6708 = vsel %vm6308, %v5595, %v6508
    %v6709 = vsel %vm6309, %v5887, %v6509
    %v6710 = vsel %vm6310, %v6179, %v6510
    %v6711 = vsel %vm6311, %v4138, %v6511
    %v6712 = vsel %vm6312, %v4430, %v6512
    %v6713 = vsel %vm6313, %v4722, %v6513
    %v6714 = vsel %vm6314, %v5014, %v6514
    %v6715 = vsel %vm6315, %v5306, %v6515
    %v6716 = vsel %vm6316, %v5598, %v6516
    %v6717 = vsel %vm6317, %v5890, %v6517
    %v6718 = vsel %vm6318, %v6182, %v6518
    %v6719 = vsel %vm6319, %v4140, %v6519
    %v6720 = vsel %vm6320, %v4432, %v6520
    %v6721 = vsel %vm6321, %v4724, %v6521
    %v6722 = vsel %vm6322, %v5016, %v6522
    %v6723 = vsel %vm6323, %v5308, %v6523
    %v6724 = vsel %vm6324, %v5600, %v6524
    %v6725 = vsel %vm6325, %v5892, %v6525
    %v6726 = vsel %vm6326, %v6184, %v6526
    %v6727 = vsel %vm6327, %v4143, %v6527
    %v6728 = vsel %vm6328, %v4435, %v6528
    %v6729 = vsel %vm6329, %v4727, %v6529
    %v6730 = vsel %vm6330, %v5019, %v6530
    %v6731 = vsel %vm6331, %v5311, %v6531
    %v6732 = vsel %vm6332, %v5603, %v6532
    %v6733 = vsel %vm6333, %v5895, %v6533
    %v6734 = vsel %vm6334, %v6187, %v6534
    %v6735 = vsel %vm6335, %v4145, %v6535
    %v6736 = vsel %vm6336, %v4437, %v6536
    %v6737 = vsel %vm6337, %v4729, %v6537
    %v6738 = vsel %vm6338, %v5021, %v6538
    %v6739 = vsel %vm6339, %v5313, %v6539
    %v6740 = vsel %vm6340, %v5605, %v6540
    %v6741 = vsel %vm6341, %v5897, %v6541
    %v6742 = vsel %vm6342, %v6189, %v6542
    %v6743 = vsel %vm6343, %v4148, %v6543
    %v6744 = vsel %vm6344, %v4440, %v6544
    %v6745 = vsel %vm6345, %v4732, %v6545
    %v6746 = vsel %vm6346, %v5024, %v6546
    %v6747 = vsel %vm6347, %v5316, %v6547
    %v6748 = vsel %vm6348, %v5608, %v6548
    %v6749 = vsel %vm6349, %v5900, %v6549
    %v6750 = vsel %vm6350, %v6192, %v6550
    %v6751 = vsel %vm6351, %v4150, %v6551
    %v6752 = vsel %vm6352, %v4442, %v6552
    %v6753 = vsel %vm6353, %v4734, %v6553
    %v6754 = vsel %vm6354, %v5026, %v6554
    %v6755 = vsel %vm6355, %v5318, %v6555
    %v6756 = vsel %vm6356, %v5610, %v6556
    %v6757 = vsel %vm6357, %v5902, %v6557
    %v6758 = vsel %vm6358, %v6194, %v6558
    %v6759 = vsel %vm6359, %v4153, %v6559
    %v6760 = vsel %vm6360, %v4445, %v6560
    %v6761 = vsel %vm6361, %v4737, %v6561
    %v6762 = vsel %vm6362, %v5029, %v6562
    %v6763 = vsel %vm6363, %v5321, %v6563
    %v6764 = vsel %vm6364, %v5613, %v6564
    %v6765 = vsel %vm6365, %v5905, %v6565
    %v6766 = vsel %vm6366, %v6197, %v6566
    %v6767 = vsel %vm6367, %v4155, %v6567
    %v6768 = vsel %vm6368, %v4447, %v6568
    %v6769 = vsel %vm6369, %v4739, %v6569
    %v6770 = vsel %vm6370, %v5031, %v6570
    %v6771 = vsel %vm6371, %v5323, %v6571
    %v6772 = vsel %vm6372, %v5615, %v6572
    %v6773 = vsel %vm6373, %v5907, %v6573
    %v6774 = vsel %vm6374, %v6199, %v6574
    %v6775 = vsel %vm6375, %v4158, %v6575
    %v6776 = vsel %vm6376, %v4450, %v6576
    %v6777 = vsel %vm6377, %v4742, %v6577
    %v6778 = vsel %vm6378, %v5034, %v6578
    %v6779 = vsel %vm6379, %v5326, %v6579
    %v6780 = vsel %vm6380, %v5618, %v6580
    %v6781 = vsel %vm6381, %v5910, %v6581
    %v6782 = vsel %vm6382, %v6202, %v6582
    %v6783 = vsel %vm6383, %v4160, %v6583
    %v6784 = vsel %vm6384, %v4452, %v6584
    %v6785 = vsel %vm6385, %v4744, %v6585
    %v6786 = vsel %vm6386, %v5036, %v6586
    %v6787 = vsel %vm6387, %v5328, %v6587
    %v6788 = vsel %vm6388, %v5620, %v6588
    %v6789 = vsel %vm6389, %v5912, %v6589
    %v6790 = vsel %vm6390, %v6204, %v6590
    %v6791 = vsel %vm6391, %v4163, %v6591
    %v6792 = vsel %vm6392, %v4455, %v6592
    %v6793 = vsel %vm6393, %v4747, %v6593
    %v6794 = vsel %vm6394, %v5039, %v6594
    %v6795 = vsel %vm6395, %v5331, %v6595
    %v6796 = vsel %vm6396, %v5623, %v6596
    %v6797 = vsel %vm6397, %v5915, %v6597
    %v6798 = vsel %vm6398, %v6207, %v6598
    %v6799 = vsel %vm6399, %v4165, %v6599
    %v6800 = vsel %vm6400, %v4457, %v6600
    %v6801 = vsel %vm6401, %v4749, %v6601
    %v6802 = vsel %vm6402, %v5041, %v6602
    %v6803 = vsel %vm6403, %v5333, %v6603
    %v6804 = vsel %vm6404, %v5625, %v6604
    %v6805 = vsel %vm6405, %v5917, %v6605
    %v6806 = vsel %vm6406, %v6209, %v6606
    %v6807 = vsel %vm6407, %v4168, %v6607
    %v6808 = vsel %vm6408, %v4460, %v6608
    %v6809 = vsel %vm6409, %v4752, %v6609
    %v6810 = vsel %vm6410, %v5044, %v6610
    %v6811 = vsel %vm6411, %v5336, %v6611
    %v6812 = vsel %vm6412, %v5628, %v6612
    %v6813 = vsel %vm6413, %v5920, %v6613
    %v6814 = vsel %vm6414, %v6212, %v6614
    %v6815 = vld [vmem:[#allocation3] sm:$0xff]
    %v6816 = vld [vmem:[#allocation3 + $0x8] sm:$0xff]
    %v6817 = vld [vmem:[#allocation3 + $0x10] sm:$0xff]
    %v6818 = vld [vmem:[#allocation3 + $0x18] sm:$0xff]
    %v6819 = vld [vmem:[#allocation3 + $0x20] sm:$0xff]
    %v6820 = vld [vmem:[#allocation3 + $0x28] sm:$0xff]
    %v6821 = vld [vmem:[#allocation3 + $0x30] sm:$0xff]
    %v6822 = vld [vmem:[#allocation3 + $0x38] sm:$0xff]
    %v6823 = vld [vmem:[#allocation3 + $0x40] sm:$0xff]
    %v6824 = vld [vmem:[#allocation3 + $0x48] sm:$0xff]
    %v6825 = vld [vmem:[#allocation3 + $0x50] sm:$0xff]
    %v6826 = vld [vmem:[#allocation3 + $0x58] sm:$0xff]
    %v6827 = vld [vmem:[#allocation3 + $0x60] sm:$0xff]
    %v6828 = vld [vmem:[#allocation3 + $0x68] sm:$0xff]
    %v6829 = vld [vmem:[#allocation3 + $0x70] sm:$0xff]
    %v6830 = vld [vmem:[#allocation3 + $0x78] sm:$0xff]
    %v6831 = vld [vmem:[#allocation3 + $0x80] sm:$0xff]
    %v6832 = vld [vmem:[#allocation3 + $0x88] sm:$0xff]
    %v6833 = vld [vmem:[#allocation3 + $0x90] sm:$0xff]
    %v6834 = vld [vmem:[#allocation3 + $0x98] sm:$0xff]
    %v6835 = vld [vmem:[#allocation3 + $0xa0] sm:$0xff]
    %v6836 = vld [vmem:[#allocation3 + $0xa8] sm:$0xff]
    %v6837 = vld [vmem:[#allocation3 + $0xb0] sm:$0xff]
    %v6838 = vld [vmem:[#allocation3 + $0xb8] sm:$0xff]
    %v6839 = vld [vmem:[#allocation3 + $0xc0] sm:$0xff]
    %v6840 = vpack.c.bf16 %v6623, %v6615
    %v6841 = vpack.c.bf16 %v6624, %v6616
    %v6842 = vpack.c.bf16 %v6625, %v6617
    %v6843 = vpack.c.bf16 %v6626, %v6618
    %v6844 = vpack.c.bf16 %v6627, %v6619
    %v6845 = vpack.c.bf16 %v6628, %v6620
    %v6846 = vpack.c.bf16 %v6629, %v6621
    %v6847 = vpack.c.bf16 %v6630, %v6622
    %v6848 = vpack.c.bf16 %v6639, %v6631
    %v6849 = vpack.c.bf16 %v6640, %v6632
    %v6850 = vpack.c.bf16 %v6641, %v6633
    %v6851 = vpack.c.bf16 %v6642, %v6634
    %v6852 = vpack.c.bf16 %v6643, %v6635
    %v6853 = vpack.c.bf16 %v6644, %v6636
    %v6854 = vpack.c.bf16 %v6645, %v6637
    %v6855 = vpack.c.bf16 %v6646, %v6638
    %v6856 = vpack.c.bf16 %v6655, %v6647
    %v6857 = vpack.c.bf16 %v6656, %v6648
    %v6858 = vpack.c.bf16 %v6657, %v6649
    %v6859 = vpack.c.bf16 %v6658, %v6650
    %v6860 = vpack.c.bf16 %v6659, %v6651
    %v6861 = vpack.c.bf16 %v6660, %v6652
    %v6862 = vpack.c.bf16 %v6661, %v6653
    %v6863 = vpack.c.bf16 %v6662, %v6654
    %v6864 = vpack.c.bf16 %v6671, %v6663
    %v6865 = vpack.c.bf16 %v6672, %v6664
    %v6866 = vpack.c.bf16 %v6673, %v6665
    %v6867 = vpack.c.bf16 %v6674, %v6666
    %v6868 = vpack.c.bf16 %v6675, %v6667
    %v6869 = vpack.c.bf16 %v6676, %v6668
    %v6870 = vpack.c.bf16 %v6677, %v6669
    %v6871 = vpack.c.bf16 %v6678, %v6670
    %v6872 = vpack.c.bf16 %v6687, %v6679
    %v6873 = vpack.c.bf16 %v6688, %v6680
    %v6874 = vpack.c.bf16 %v6689, %v6681
    %v6875 = vpack.c.bf16 %v6690, %v6682
    %v6876 = vpack.c.bf16 %v6691, %v6683
    %v6877 = vpack.c.bf16 %v6692, %v6684
    %v6878 = vpack.c.bf16 %v6693, %v6685
    %v6879 = vpack.c.bf16 %v6694, %v6686
    %v6880 = vpack.c.bf16 %v6703, %v6695
    %v6881 = vpack.c.bf16 %v6704, %v6696
    %v6882 = vpack.c.bf16 %v6705, %v6697
    %v6883 = vpack.c.bf16 %v6706, %v6698
    %v6884 = vpack.c.bf16 %v6707, %v6699
    %v6885 = vpack.c.bf16 %v6708, %v6700
    %v6886 = vpack.c.bf16 %v6709, %v6701
    %v6887 = vpack.c.bf16 %v6710, %v6702
    %v6888 = vpack.c.bf16 %v6719, %v6711
    %v6889 = vpack.c.bf16 %v6720, %v6712
    %v6890 = vpack.c.bf16 %v6721, %v6713
    %v6891 = vpack.c.bf16 %v6722, %v6714
    %v6892 = vpack.c.bf16 %v6723, %v6715
    %v6893 = vpack.c.bf16 %v6724, %v6716
    %v6894 = vpack.c.bf16 %v6725, %v6717
    %v6895 = vpack.c.bf16 %v6726, %v6718
    %v6896 = vpack.c.bf16 %v6735, %v6727
    %v6897 = vpack.c.bf16 %v6736, %v6728
    %v6898 = vpack.c.bf16 %v6737, %v6729
    %v6899 = vpack.c.bf16 %v6738, %v6730
    %v6900 = vpack.c.bf16 %v6739, %v6731
    %v6901 = vpack.c.bf16 %v6740, %v6732
    %v6902 = vpack.c.bf16 %v6741, %v6733
    %v6903 = vpack.c.bf16 %v6742, %v6734
    %v6904 = vpack.c.bf16 %v6751, %v6743
    %v6905 = vpack.c.bf16 %v6752, %v6744
    %v6906 = vpack.c.bf16 %v6753, %v6745
    %v6907 = vpack.c.bf16 %v6754, %v6746
    %v6908 = vpack.c.bf16 %v6755, %v6747
    %v6909 = vpack.c.bf16 %v6756, %v6748
    %v6910 = vpack.c.bf16 %v6757, %v6749
    %v6911 = vpack.c.bf16 %v6758, %v6750
    %v6912 = vpack.c.bf16 %v6767, %v6759
    %v6913 = vpack.c.bf16 %v6768, %v6760
    %v6914 = vpack.c.bf16 %v6769, %v6761
    %v6915 = vpack.c.bf16 %v6770, %v6762
    %v6916 = vpack.c.bf16 %v6771, %v6763
    %v6917 = vpack.c.bf16 %v6772, %v6764
    %v6918 = vpack.c.bf16 %v6773, %v6765
    %v6919 = vpack.c.bf16 %v6774, %v6766
    %v6920 = vpack.c.bf16 %v6783, %v6775
    %v6921 = vpack.c.bf16 %v6784, %v6776
    %v6922 = vpack.c.bf16 %v6785, %v6777
    %v6923 = vpack.c.bf16 %v6786, %v6778
    %v6924 = vpack.c.bf16 %v6787, %v6779
    %v6925 = vpack.c.bf16 %v6788, %v6780
    %v6926 = vpack.c.bf16 %v6789, %v6781
    %v6927 = vpack.c.bf16 %v6790, %v6782
    %v6928 = vpack.c.bf16 %v6799, %v6791
    %v6929 = vpack.c.bf16 %v6800, %v6792
    %v6930 = vpack.c.bf16 %v6801, %v6793
    %v6931 = vpack.c.bf16 %v6802, %v6794
    %v6932 = vpack.c.bf16 %v6803, %v6795
    %v6933 = vpack.c.bf16 %v6804, %v6796
    %v6934 = vpack.c.bf16 %v6805, %v6797
    %v6935 = vpack.c.bf16 %v6806, %v6798
    %v6936 = vpack.c.bf16 %v6807, %v6807
    %v6937 = vpack.c.bf16 %v6808, %v6808
    %v6938 = vpack.c.bf16 %v6809, %v6809
    %v6939 = vpack.c.bf16 %v6810, %v6810
    %v6940 = vpack.c.bf16 %v6811, %v6811
    %v6941 = vpack.c.bf16 %v6812, %v6812
    %v6942 = vpack.c.bf16 %v6813, %v6813
    %v6943 = vpack.c.bf16 %v6814, %v6814
    %v6944 = vld [vmem:[#allocation16] sm:$0xf]
    %v6945 = vld [vmem:[#allocation16 + $0x4] sm:$0xf]
    %v6946 = vld [vmem:[#allocation16 + $0x8] sm:$0xf]
    %v6947 = vld [vmem:[#allocation16 + $0xc] sm:$0xf]
    %v6948 = vld [vmem:[#allocation16 + $0x10] sm:$0xf]
    %v6949 = vld [vmem:[#allocation16 + $0x14] sm:$0xf]
    %v6950 = vld [vmem:[#allocation16 + $0x18] sm:$0xf]
    %v6951 = vld [vmem:[#allocation16 + $0x1c] sm:$0xf]
    %v6952 = vld [vmem:[#allocation16 + $0x20] sm:$0xf]
    %v6953 = vld [vmem:[#allocation16 + $0x24] sm:$0xf]
    %v6954 = vld [vmem:[#allocation16 + $0x28] sm:$0xf]
    %v6955 = vld [vmem:[#allocation16 + $0x2c] sm:$0xf]
    %v6956 = vld [vmem:[#allocation16 + $0x30] sm:$0xf]
    %v6957 = vld [vmem:[#allocation16 + $0x34] sm:$0xf]
    %v6958 = vld [vmem:[#allocation16 + $0x38] sm:$0xf]
    %v6959 = vld [vmem:[#allocation16 + $0x3c] sm:$0xf]
    %v6960 = vld [vmem:[#allocation16 + $0x40] sm:$0xf]
    %v6961 = vld [vmem:[#allocation16 + $0x44] sm:$0xf]
    %v6962 = vld [vmem:[#allocation16 + $0x48] sm:$0xf]
    %v6963 = vld [vmem:[#allocation16 + $0x4c] sm:$0xf]
    %v6964 = vld [vmem:[#allocation16 + $0x50] sm:$0xf]
    %v6965 = vld [vmem:[#allocation16 + $0x54] sm:$0xf]
    %v6966 = vld [vmem:[#allocation16 + $0x58] sm:$0xf]
    %v6967 = vld [vmem:[#allocation16 + $0x5c] sm:$0xf]
    %v6968 = vld [vmem:[#allocation16 + $0x60] sm:$0xf]
    %v6969 = vld [vmem:[#allocation16 + $0x64] sm:$0xf]
    %v6970 = vld [vmem:[#allocation16 + $0x68] sm:$0xf]
    %v6971 = vld [vmem:[#allocation16 + $0x6c] sm:$0xf]
    %v6972 = vld [vmem:[#allocation16 + $0x70] sm:$0xf]
    %v6973 = vld [vmem:[#allocation16 + $0x74] sm:$0xf]
    %v6974 = vld [vmem:[#allocation16 + $0x78] sm:$0xf]
    %v6975 = vld [vmem:[#allocation16 + $0x7c] sm:$0xf]
    %v6976 = vld [vmem:[#allocation16 + $0x80] sm:$0xf]
    %v6977 = vld [vmem:[#allocation16 + $0x84] sm:$0xf]
    %v6978 = vld [vmem:[#allocation16 + $0x88] sm:$0xf]
    %v6979 = vld [vmem:[#allocation16 + $0x8c] sm:$0xf]
    %v6980 = vld [vmem:[#allocation16 + $0x90] sm:$0xf]
    %v6981 = vld [vmem:[#allocation16 + $0x94] sm:$0xf]
    %v6982 = vld [vmem:[#allocation16 + $0x98] sm:$0xf]
    %v6983 = vld [vmem:[#allocation16 + $0x9c] sm:$0xf]
    %v6984 = vld [vmem:[#allocation16 + $0xa0] sm:$0xf]
    %v6985 = vld [vmem:[#allocation16 + $0xa4] sm:$0xf]
    %v6986 = vld [vmem:[#allocation16 + $0xa8] sm:$0xf]
    %v6987 = vld [vmem:[#allocation16 + $0xac] sm:$0xf]
    %v6988 = vld [vmem:[#allocation16 + $0xb0] sm:$0xf]
    %v6989 = vld [vmem:[#allocation16 + $0xb4] sm:$0xf]
    %v6990 = vld [vmem:[#allocation16 + $0xb8] sm:$0xf]
    %v6991 = vld [vmem:[#allocation16 + $0xbc] sm:$0xf]
    %v6992 = vld [vmem:[#allocation16 + $0xc0] sm:$0xf]
    %v6993 = vld [vmem:[#allocation16 + $0xc4] sm:$0xf]
    %v6994 = vld [vmem:[#allocation16 + $0xc8] sm:$0xf]
    %v6995 = vld [vmem:[#allocation16 + $0xcc] sm:$0xf]
    %v6996 = vld [vmem:[#allocation16 + $0xd0] sm:$0xf]
    %v6997 = vld [vmem:[#allocation16 + $0xd4] sm:$0xf]
    %v6998 = vld [vmem:[#allocation16 + $0xd8] sm:$0xf]
    %v6999 = vld [vmem:[#allocation16 + $0xdc] sm:$0xf]
    %v7000 = vld [vmem:[#allocation16 + $0xe0] sm:$0xf]
    %v7001 = vld [vmem:[#allocation16 + $0xe4] sm:$0xf]
    %v7002 = vld [vmem:[#allocation16 + $0xe8] sm:$0xf]
    %v7003 = vld [vmem:[#allocation16 + $0xec] sm:$0xf]
    %v7004 = vld [vmem:[#allocation16 + $0xf0] sm:$0xf]
    %v7005 = vld [vmem:[#allocation16 + $0xf4] sm:$0xf]
    %v7006 = vld [vmem:[#allocation16 + $0xf8] sm:$0xf]
    %v7007 = vld [vmem:[#allocation16 + $0xfc] sm:$0xf]
    %v7008 = vld [vmem:[#allocation16 + $0x100] sm:$0xf]
    %v7009 = vld [vmem:[#allocation16 + $0x104] sm:$0xf]
    %v7010 = vld [vmem:[#allocation16 + $0x108] sm:$0xf]
    %v7011 = vld [vmem:[#allocation16 + $0x10c] sm:$0xf]
    %v7012 = vld [vmem:[#allocation16 + $0x110] sm:$0xf]
    %v7013 = vld [vmem:[#allocation16 + $0x114] sm:$0xf]
    %v7014 = vld [vmem:[#allocation16 + $0x118] sm:$0xf]
    %v7015 = vld [vmem:[#allocation16 + $0x11c] sm:$0xf]
    %v7016 = vld [vmem:[#allocation16 + $0x120] sm:$0xf]
    %v7017 = vld [vmem:[#allocation16 + $0x124] sm:$0xf]
    %v7018 = vld [vmem:[#allocation16 + $0x128] sm:$0xf]
    %v7019 = vld [vmem:[#allocation16 + $0x12c] sm:$0xf]
    %v7020 = vld [vmem:[#allocation16 + $0x130] sm:$0xf]
    %v7021 = vld [vmem:[#allocation16 + $0x134] sm:$0xf]
    %v7022 = vld [vmem:[#allocation16 + $0x138] sm:$0xf]
    %v7023 = vld [vmem:[#allocation16 + $0x13c] sm:$0xf]
    %v7024 = vld [vmem:[#allocation16 + $0x140] sm:$0xf]
    %v7025 = vld [vmem:[#allocation16 + $0x144] sm:$0xf]
    %v7026 = vld [vmem:[#allocation16 + $0x148] sm:$0xf]
    %v7027 = vld [vmem:[#allocation16 + $0x14c] sm:$0xf]
    %v7028 = vld [vmem:[#allocation16 + $0x150] sm:$0xf]
    %v7029 = vld [vmem:[#allocation16 + $0x154] sm:$0xf]
    %v7030 = vld [vmem:[#allocation16 + $0x158] sm:$0xf]
    %v7031 = vld [vmem:[#allocation16 + $0x15c] sm:$0xf]
    %v7032 = vld [vmem:[#allocation16 + $0x160] sm:$0xf]
    %v7033 = vld [vmem:[#allocation16 + $0x164] sm:$0xf]
    %v7034 = vld [vmem:[#allocation16 + $0x168] sm:$0xf]
    %v7035 = vld [vmem:[#allocation16 + $0x16c] sm:$0xf]
    %v7036 = vld [vmem:[#allocation16 + $0x170] sm:$0xf]
    %v7037 = vld [vmem:[#allocation16 + $0x174] sm:$0xf]
    %v7038 = vld [vmem:[#allocation16 + $0x178] sm:$0xf]
    %v7039 = vld [vmem:[#allocation16 + $0x17c] sm:$0xf]
    %v7040 = vld [vmem:[#allocation16 + $0x180] sm:$0xf]
    %v7041 = vld [vmem:[#allocation16 + $0x184] sm:$0xf]
    %v7042 = vld [vmem:[#allocation16 + $0x188] sm:$0xf]
    %v7043 = vld [vmem:[#allocation16 + $0x18c] sm:$0xf]
    %v7044 = vld [vmem:[#allocation16 + $0x190] sm:$0xf]
    %v7045 = vld [vmem:[#allocation16 + $0x194] sm:$0xf]
    %v7046 = vld [vmem:[#allocation16 + $0x198] sm:$0xf]
    %v7047 = vld [vmem:[#allocation16 + $0x19c] sm:$0xf]
    %v7048 = vld [vmem:[#allocation16 + $0x1a0] sm:$0xf]
    %v7049 = vld [vmem:[#allocation16 + $0x1a4] sm:$0xf]
    %v7050 = vld [vmem:[#allocation16 + $0x1a8] sm:$0xf]
    %v7051 = vld [vmem:[#allocation16 + $0x1ac] sm:$0xf]
    %v7052 = vld [vmem:[#allocation16 + $0x1b0] sm:$0xf]
    %v7053 = vld [vmem:[#allocation16 + $0x1b4] sm:$0xf]
    %v7054 = vld [vmem:[#allocation16 + $0x1b8] sm:$0xf]
    %v7055 = vld [vmem:[#allocation16 + $0x1bc] sm:$0xf]
    %v7056 = vld [vmem:[#allocation16 + $0x1c0] sm:$0xf]
    %v7057 = vld [vmem:[#allocation16 + $0x1c4] sm:$0xf]
    %v7058 = vld [vmem:[#allocation16 + $0x1c8] sm:$0xf]
    %v7059 = vld [vmem:[#allocation16 + $0x1cc] sm:$0xf]
    %v7060 = vld [vmem:[#allocation16 + $0x1d0] sm:$0xf]
    %v7061 = vld [vmem:[#allocation16 + $0x1d4] sm:$0xf]
    %v7062 = vld [vmem:[#allocation16 + $0x1d8] sm:$0xf]
    %v7063 = vld [vmem:[#allocation16 + $0x1dc] sm:$0xf]
    %v7064 = vld [vmem:[#allocation16 + $0x1e0] sm:$0xf]
    %v7065 = vld [vmem:[#allocation16 + $0x1e4] sm:$0xf]
    %v7066 = vld [vmem:[#allocation16 + $0x1e8] sm:$0xf]
    %v7067 = vld [vmem:[#allocation16 + $0x1ec] sm:$0xf]
    %v7068 = vld [vmem:[#allocation16 + $0x1f0] sm:$0xf]
    %v7069 = vld [vmem:[#allocation16 + $0x1f4] sm:$0xf]
    %v7070 = vld [vmem:[#allocation16 + $0x1f8] sm:$0xf]
    %v7071 = vld [vmem:[#allocation16 + $0x1fc] sm:$0xf]
    %v7200 = vunpack.c.l.b16 %v6944
    %v7201 = vunpack.c.l.b16 %v6945
    %v7202 = vunpack.c.l.b16 %v6946
    %v7203 = vunpack.c.l.b16 %v6947
    %v7204 = vunpack.c.l.b16 %v6948
    %v7205 = vunpack.c.l.b16 %v6949
    %v7206 = vunpack.c.l.b16 %v6950
    %v7207 = vunpack.c.l.b16 %v6951
    %v7208 = vunpack.c.l.b16 %v6952
    %v7209 = vunpack.c.l.b16 %v6953
    %v7210 = vunpack.c.l.b16 %v6954
    %v7211 = vunpack.c.l.b16 %v6955
    %v7212 = vunpack.c.l.b16 %v6956
    %v7213 = vunpack.c.l.b16 %v6957
    %v7214 = vunpack.c.l.b16 %v6958
    %v7215 = vunpack.c.l.b16 %v6959
    %v7216 = vunpack.c.l.b16 %v6960
    %v7217 = vunpack.c.l.b16 %v6961
    %v7218 = vunpack.c.l.b16 %v6962
    %v7219 = vunpack.c.l.b16 %v6963
    %v7220 = vunpack.c.l.b16 %v6964
    %v7221 = vunpack.c.l.b16 %v6965
    %v7222 = vunpack.c.l.b16 %v6966
    %v7223 = vunpack.c.l.b16 %v6967
    %v7224 = vunpack.c.l.b16 %v6968
    %v7225 = vunpack.c.l.b16 %v6969
    %v7226 = vunpack.c.l.b16 %v6970
    %v7227 = vunpack.c.l.b16 %v6971
    %v7228 = vunpack.c.l.b16 %v6972
    %v7229 = vunpack.c.l.b16 %v6973
    %v7230 = vunpack.c.l.b16 %v6974
    %v7231 = vunpack.c.l.b16 %v6975
    %v7232 = vunpack.c.l.b16 %v6976
    %v7233 = vunpack.c.l.b16 %v6977
    %v7234 = vunpack.c.l.b16 %v6978
    %v7235 = vunpack.c.l.b16 %v6979
    %v7236 = vunpack.c.l.b16 %v6980
    %v7237 = vunpack.c.l.b16 %v6981
    %v7238 = vunpack.c.l.b16 %v6982
    %v7239 = vunpack.c.l.b16 %v6983
    %v7240 = vunpack.c.l.b16 %v6984
    %v7241 = vunpack.c.l.b16 %v6985
    %v7242 = vunpack.c.l.b16 %v6986
    %v7243 = vunpack.c.l.b16 %v6987
    %v7244 = vunpack.c.l.b16 %v6988
    %v7245 = vunpack.c.l.b16 %v6989
    %v7246 = vunpack.c.l.b16 %v6990
    %v7247 = vunpack.c.l.b16 %v6991
    %v7248 = vunpack.c.l.b16 %v6992
    %v7249 = vunpack.c.l.b16 %v6993
    %v7250 = vunpack.c.l.b16 %v6994
    %v7251 = vunpack.c.l.b16 %v6995
    %v7252 = vunpack.c.l.b16 %v6996
    %v7253 = vunpack.c.l.b16 %v6997
    %v7254 = vunpack.c.l.b16 %v6998
    %v7255 = vunpack.c.l.b16 %v6999
    %v7256 = vunpack.c.l.b16 %v7000
    %v7257 = vunpack.c.l.b16 %v7001
    %v7258 = vunpack.c.l.b16 %v7002
    %v7259 = vunpack.c.l.b16 %v7003
    %v7260 = vunpack.c.l.b16 %v7004
    %v7261 = vunpack.c.l.b16 %v7005
    %v7262 = vunpack.c.l.b16 %v7006
    %v7263 = vunpack.c.l.b16 %v7007
    %v7264 = vunpack.c.l.b16 %v7008
    %v7265 = vunpack.c.l.b16 %v7009
    %v7266 = vunpack.c.l.b16 %v7010
    %v7267 = vunpack.c.l.b16 %v7011
    %v7268 = vunpack.c.l.b16 %v7012
    %v7269 = vunpack.c.l.b16 %v7013
    %v7270 = vunpack.c.l.b16 %v7014
    %v7271 = vunpack.c.l.b16 %v7015
    %v7272 = vunpack.c.l.b16 %v7016
    %v7273 = vunpack.c.l.b16 %v7017
    %v7274 = vunpack.c.l.b16 %v7018
    %v7275 = vunpack.c.l.b16 %v7019
    %v7276 = vunpack.c.l.b16 %v7020
    %v7277 = vunpack.c.l.b16 %v7021
    %v7278 = vunpack.c.l.b16 %v7022
    %v7279 = vunpack.c.l.b16 %v7023
    %v7280 = vunpack.c.l.b16 %v7024
    %v7281 = vunpack.c.l.b16 %v7025
    %v7282 = vunpack.c.l.b16 %v7026
    %v7283 = vunpack.c.l.b16 %v7027
    %v7284 = vunpack.c.l.b16 %v7028
    %v7285 = vunpack.c.l.b16 %v7029
    %v7286 = vunpack.c.l.b16 %v7030
    %v7287 = vunpack.c.l.b16 %v7031
    %v7288 = vunpack.c.l.b16 %v7032
    %v7289 = vunpack.c.l.b16 %v7033
    %v7290 = vunpack.c.l.b16 %v7034
    %v7291 = vunpack.c.l.b16 %v7035
    %v7292 = vunpack.c.l.b16 %v7036
    %v7293 = vunpack.c.l.b16 %v7037
    %v7294 = vunpack.c.l.b16 %v7038
    %v7295 = vunpack.c.l.b16 %v7039
    %v7296 = vunpack.c.l.b16 %v7040
    %v7297 = vunpack.c.l.b16 %v7041
    %v7298 = vunpack.c.l.b16 %v7042
    %v7299 = vunpack.c.l.b16 %v7043
    %v7300 = vunpack.c.l.b16 %v7044
    %v7301 = vunpack.c.l.b16 %v7045
    %v7302 = vunpack.c.l.b16 %v7046
    %v7303 = vunpack.c.l.b16 %v7047
    %v7304 = vunpack.c.l.b16 %v7048
    %v7305 = vunpack.c.l.b16 %v7049
    %v7306 = vunpack.c.l.b16 %v7050
    %v7307 = vunpack.c.l.b16 %v7051
    %v7308 = vunpack.c.l.b16 %v7052
    %v7309 = vunpack.c.l.b16 %v7053
    %v7310 = vunpack.c.l.b16 %v7054
    %v7311 = vunpack.c.l.b16 %v7055
    %v7312 = vunpack.c.l.b16 %v7056
    %v7313 = vunpack.c.l.b16 %v7057
    %v7314 = vunpack.c.l.b16 %v7058
    %v7315 = vunpack.c.l.b16 %v7059
    %v7316 = vunpack.c.l.b16 %v7060
    %v7317 = vunpack.c.l.b16 %v7061
    %v7318 = vunpack.c.l.b16 %v7062
    %v7319 = vunpack.c.l.b16 %v7063
    %v7320 = vunpack.c.l.b16 %v7064
    %v7321 = vunpack.c.l.b16 %v7065
    %v7322 = vunpack.c.l.b16 %v7066
    %v7323 = vunpack.c.l.b16 %v7067
    %v7324 = vunpack.c.l.b16 %v7068
    %v7325 = vunpack.c.l.b16 %v7069
    %v7326 = vunpack.c.l.b16 %v7070
    %v7327 = vunpack.c.l.b16 %v7071
    %v7328 = vpack.c.b16 %v7201, %v7200
    %v7329 = vpack.c.b16 %v7203, %v7202
    %v7330 = vpack.c.b16 %v7205, %v7204
    %v7331 = vpack.c.b16 %v7207, %v7206
    %v7332 = vpack.c.b16 %v7209, %v7208
    %v7333 = vpack.c.b16 %v7211, %v7210
    %v7334 = vpack.c.b16 %v7213, %v7212
    %v7335 = vpack.c.b16 %v7215, %v7214
    %v7336 = vpack.c.b16 %v7217, %v7216
    %v7337 = vpack.c.b16 %v7219, %v7218
    %v7338 = vpack.c.b16 %v7221, %v7220
    %v7339 = vpack.c.b16 %v7223, %v7222
    %v7340 = vpack.c.b16 %v7225, %v7224
    %v7341 = vpack.c.b16 %v7227, %v7226
    %v7342 = vpack.c.b16 %v7229, %v7228
    %v7343 = vpack.c.b16 %v7231, %v7230
    %v7344 = vpack.c.b16 %v7233, %v7232
    %v7345 = vpack.c.b16 %v7235, %v7234
    %v7346 = vpack.c.b16 %v7237, %v7236
    %v7347 = vpack.c.b16 %v7239, %v7238
    %v7348 = vpack.c.b16 %v7241, %v7240
    %v7349 = vpack.c.b16 %v7243, %v7242
    %v7350 = vpack.c.b16 %v7245, %v7244
    %v7351 = vpack.c.b16 %v7247, %v7246
    %v7352 = vpack.c.b16 %v7249, %v7248
    %v7353 = vpack.c.b16 %v7251, %v7250
    %v7354 = vpack.c.b16 %v7253, %v7252
    %v7355 = vpack.c.b16 %v7255, %v7254
    %v7356 = vpack.c.b16 %v7257, %v7256
    %v7357 = vpack.c.b16 %v7259, %v7258
    %v7358 = vpack.c.b16 %v7261, %v7260
    %v7359 = vpack.c.b16 %v7263, %v7262
    %v7360 = vpack.c.b16 %v7265, %v7264
    %v7361 = vpack.c.b16 %v7267, %v7266
    %v7362 = vpack.c.b16 %v7269, %v7268
    %v7363 = vpack.c.b16 %v7271, %v7270
    %v7364 = vpack.c.b16 %v7273, %v7272
    %v7365 = vpack.c.b16 %v7275, %v7274
    %v7366 = vpack.c.b16 %v7277, %v7276
    %v7367 = vpack.c.b16 %v7279, %v7278
    %v7368 = vpack.c.b16 %v7281, %v7280
    %v7369 = vpack.c.b16 %v7283, %v7282
    %v7370 = vpack.c.b16 %v7285, %v7284
    %v7371 = vpack.c.b16 %v7287, %v7286
    %v7372 = vpack.c.b16 %v7289, %v7288
    %v7373 = vpack.c.b16 %v7291, %v7290
    %v7374 = vpack.c.b16 %v7293, %v7292
    %v7375 = vpack.c.b16 %v7295, %v7294
    %v7376 = vpack.c.b16 %v7297, %v7296
    %v7377 = vpack.c.b16 %v7299, %v7298
    %v7378 = vpack.c.b16 %v7301, %v7300
    %v7379 = vpack.c.b16 %v7303, %v7302
    %v7380 = vpack.c.b16 %v7305, %v7304
    %v7381 = vpack.c.b16 %v7307, %v7306
    %v7382 = vpack.c.b16 %v7309, %v7308
    %v7383 = vpack.c.b16 %v7311, %v7310
    %v7384 = vpack.c.b16 %v7313, %v7312
    %v7385 = vpack.c.b16 %v7315, %v7314
    %v7386 = vpack.c.b16 %v7317, %v7316
    %v7387 = vpack.c.b16 %v7319, %v7318
    %v7388 = vpack.c.b16 %v7321, %v7320
    %v7389 = vpack.c.b16 %v7323, %v7322
    %v7390 = vpack.c.b16 %v7325, %v7324
    %v7391 = vpack.c.b16 %v7327, %v7326
    %7456 = vmatpush.bf16.msra.mxu0 %v7335
    %7457 = vmatpush.bf16.msra.mxu0 %v7334
    %7458 = vmatpush.bf16.msra.mxu0 %v7333
    %7459 = vmatpush.bf16.msra.mxu0 %v7332
    %7460 = vmatpush.bf16.msra.mxu0 %v7331
    %7461 = vmatpush.bf16.msra.mxu0 %v7330
    %7462 = vmatpush.bf16.msra.mxu0 %v7329
    %7463 = vmatpush.bf16.msra.mxu0 %v7328
    %7464 = vmatmul.bf16.gmra.mxu0 %v6840
    %v7465 = vpop.f32.mrf.mxu0
    %v7466 = vadd.f32 0.0, %v7465
    %v7467 = vpop.f32.mrf.mxu0
    %v7468 = vadd.f32 0.0, %v7467
    %7469 = vmatmul.bf16.gmra.mxu0 %v6848
    %v7470 = vpop.f32.mrf.mxu0
    %v7471 = vadd.f32 0.0, %v7470
    %v7472 = vpop.f32.mrf.mxu0
    %v7473 = vadd.f32 0.0, %v7472
    %7474 = vmatmul.bf16.gmra.mxu0 %v6856
    %v7475 = vpop.f32.mrf.mxu0
    %v7476 = vadd.f32 0.0, %v7475
    %v7477 = vpop.f32.mrf.mxu0
    %v7478 = vadd.f32 0.0, %v7477
    %7479 = vmatmul.bf16.gmra.mxu0 %v6864
    %v7480 = vpop.f32.mrf.mxu0
    %v7481 = vadd.f32 0.0, %v7480
    %v7482 = vpop.f32.mrf.mxu0
    %v7483 = vadd.f32 0.0, %v7482
    %7484 = vmatmul.bf16.gmra.mxu0 %v6872
    %v7485 = vpop.f32.mrf.mxu0
    %v7486 = vadd.f32 0.0, %v7485
    %v7487 = vpop.f32.mrf.mxu0
    %v7488 = vadd.f32 0.0, %v7487
    %7489 = vmatmul.bf16.gmra.mxu0 %v6880
    %v7490 = vpop.f32.mrf.mxu0
    %v7491 = vadd.f32 0.0, %v7490
    %v7492 = vpop.f32.mrf.mxu0
    %v7493 = vadd.f32 0.0, %v7492
    %7494 = vmatmul.bf16.gmra.mxu0 %v6888
    %v7495 = vpop.f32.mrf.mxu0
    %v7496 = vadd.f32 0.0, %v7495
    %v7497 = vpop.f32.mrf.mxu0
    %v7498 = vadd.f32 0.0, %v7497
    %7499 = vmatmul.bf16.gmra.mxu0 %v6896
    %v7500 = vpop.f32.mrf.mxu0
    %v7501 = vadd.f32 0.0, %v7500
    %v7502 = vpop.f32.mrf.mxu0
    %v7503 = vadd.f32 0.0, %v7502
    %7504 = vmatmul.bf16.gmra.mxu0 %v6904
    %v7505 = vpop.f32.mrf.mxu0
    %v7506 = vadd.f32 0.0, %v7505
    %v7507 = vpop.f32.mrf.mxu0
    %v7508 = vadd.f32 0.0, %v7507
    %7509 = vmatmul.bf16.gmra.mxu0 %v6912
    %v7510 = vpop.f32.mrf.mxu0
    %v7511 = vadd.f32 0.0, %v7510
    %v7512 = vpop.f32.mrf.mxu0
    %v7513 = vadd.f32 0.0, %v7512
    %7514 = vmatmul.bf16.gmra.mxu0 %v6920
    %v7515 = vpop.f32.mrf.mxu0
    %v7516 = vadd.f32 0.0, %v7515
    %v7517 = vpop.f32.mrf.mxu0
    %v7518 = vadd.f32 0.0, %v7517
    %7519 = vmatmul.bf16.gmra.mxu0 %v6928
    %v7520 = vpop.f32.mrf.mxu0
    %v7521 = vadd.f32 0.0, %v7520
    %v7522 = vpop.f32.mrf.mxu0
    %v7523 = vadd.f32 0.0, %v7522
    %7524 = vmatmul.bf16.gmra.mxu0 %v6936
    %v7525 = vpop.f32.mrf.mxu0
    %v7526 = vadd.f32 0.0, %v7525
    %v7527 = vpop.f32.mrf.mxu0
    %7528 = vdwg.mxu0
    %7529 = vmatpush.bf16.msra.mxu0 %v7343
    %7530 = vmatpush.bf16.msra.mxu0 %v7342
    %7531 = vmatpush.bf16.msra.mxu0 %v7341
    %7532 = vmatpush.bf16.msra.mxu0 %v7340
    %7533 = vmatpush.bf16.msra.mxu0 %v7339
    %7534 = vmatpush.bf16.msra.mxu0 %v7338
    %7535 = vmatpush.bf16.msra.mxu0 %v7337
    %7536 = vmatpush.bf16.msra.mxu0 %v7336
    %7537 = vmatmul.bf16.gmra.mxu0 %v6841
    %v7538 = vpop.f32.mrf.mxu0
    %v7539 = vadd.f32 %v7466, %v7538
    %v7540 = vpop.f32.mrf.mxu0
    %v7541 = vadd.f32 %v7468, %v7540
    %7542 = vmatmul.bf16.gmra.mxu0 %v6849
    %v7543 = vpop.f32.mrf.mxu0
    %v7544 = vadd.f32 %v7471, %v7543
    %v7545 = vpop.f32.mrf.mxu0
    %v7546 = vadd.f32 %v7473, %v7545
    %7547 = vmatmul.bf16.gmra.mxu0 %v6857
    %v7548 = vpop.f32.mrf.mxu0
    %v7549 = vadd.f32 %v7476, %v7548
    %v7550 = vpop.f32.mrf.mxu0
    %v7551 = vadd.f32 %v7478, %v7550
    %7552 = vmatmul.bf16.gmra.mxu0 %v6865
    %v7553 = vpop.f32.mrf.mxu0
    %v7554 = vadd.f32 %v7481, %v7553
    %v7555 = vpop.f32.mrf.mxu0
    %v7556 = vadd.f32 %v7483, %v7555
    %7557 = vmatmul.bf16.gmra.mxu0 %v6873
    %v7558 = vpop.f32.mrf.mxu0
    %v7559 = vadd.f32 %v7486, %v7558
    %v7560 = vpop.f32.mrf.mxu0
    %v7561 = vadd.f32 %v7488, %v7560
    %7562 = vmatmul.bf16.gmra.mxu0 %v6881
    %v7563 = vpop.f32.mrf.mxu0
    %v7564 = vadd.f32 %v7491, %v7563
    %v7565 = vpop.f32.mrf.mxu0
    %v7566 = vadd.f32 %v7493, %v7565
    %7567 = vmatmul.bf16.gmra.mxu0 %v6889
    %v7568 = vpop.f32.mrf.mxu0
    %v7569 = vadd.f32 %v7496, %v7568
    %v7570 = vpop.f32.mrf.mxu0
    %v7571 = vadd.f32 %v7498, %v7570
    %7572 = vmatmul.bf16.gmra.mxu0 %v6897
    %v7573 = vpop.f32.mrf.mxu0
    %v7574 = vadd.f32 %v7501, %v7573
    %v7575 = vpop.f32.mrf.mxu0
    %v7576 = vadd.f32 %v7503, %v7575
    %7577 = vmatmul.bf16.gmra.mxu0 %v6905
    %v7578 = vpop.f32.mrf.mxu0
    %v7579 = vadd.f32 %v7506, %v7578
    %v7580 = vpop.f32.mrf.mxu0
    %v7581 = vadd.f32 %v7508, %v7580
    %7582 = vmatmul.bf16.gmra.mxu0 %v6913
    %v7583 = vpop.f32.mrf.mxu0
    %v7584 = vadd.f32 %v7511, %v7583
    %v7585 = vpop.f32.mrf.mxu0
    %v7586 = vadd.f32 %v7513, %v7585
    %7587 = vmatmul.bf16.gmra.mxu0 %v6921
    %v7588 = vpop.f32.mrf.mxu0
    %v7589 = vadd.f32 %v7516, %v7588
    %v7590 = vpop.f32.mrf.mxu0
    %v7591 = vadd.f32 %v7518, %v7590
    %7592 = vmatmul.bf16.gmra.mxu0 %v6929
    %v7593 = vpop.f32.mrf.mxu0
    %v7594 = vadd.f32 %v7521, %v7593
    %v7595 = vpop.f32.mrf.mxu0
    %v7596 = vadd.f32 %v7523, %v7595
    %7597 = vmatmul.bf16.gmra.mxu0 %v6937
    %v7598 = vpop.f32.mrf.mxu0
    %v7599 = vadd.f32 %v7526, %v7598
    %v7600 = vpop.f32.mrf.mxu0
    %7601 = vdwg.mxu0
    %7602 = vmatpush.bf16.msra.mxu0 %v7351
    %7603 = vmatpush.bf16.msra.mxu0 %v7350
    %7604 = vmatpush.bf16.msra.mxu0 %v7349
    %7605 = vmatpush.bf16.msra.mxu0 %v7348
    %7606 = vmatpush.bf16.msra.mxu0 %v7347
    %7607 = vmatpush.bf16.msra.mxu0 %v7346
    %7608 = vmatpush.bf16.msra.mxu0 %v7345
    %7609 = vmatpush.bf16.msra.mxu0 %v7344
    %7610 = vmatmul.bf16.gmra.mxu0 %v6842
    %v7611 = vpop.f32.mrf.mxu0
    %v7612 = vadd.f32 %v7539, %v7611
    %v7613 = vpop.f32.mrf.mxu0
    %v7614 = vadd.f32 %v7541, %v7613
    %7615 = vmatmul.bf16.gmra.mxu0 %v6850
    %v7616 = vpop.f32.mrf.mxu0
    %v7617 = vadd.f32 %v7544, %v7616
    %v7618 = vpop.f32.mrf.mxu0
    %v7619 = vadd.f32 %v7546, %v7618
    %7620 = vmatmul.bf16.gmra.mxu0 %v6858
    %v7621 = vpop.f32.mrf.mxu0
    %v7622 = vadd.f32 %v7549, %v7621
    %v7623 = vpop.f32.mrf.mxu0
    %v7624 = vadd.f32 %v7551, %v7623
    %7625 = vmatmul.bf16.gmra.mxu0 %v6866
    %v7626 = vpop.f32.mrf.mxu0
    %v7627 = vadd.f32 %v7554, %v7626
    %v7628 = vpop.f32.mrf.mxu0
    %v7629 = vadd.f32 %v7556, %v7628
    %7630 = vmatmul.bf16.gmra.mxu0 %v6874
    %v7631 = vpop.f32.mrf.mxu0
    %v7632 = vadd.f32 %v7559, %v7631
    %v7633 = vpop.f32.mrf.mxu0
    %v7634 = vadd.f32 %v7561, %v7633
    %7635 = vmatmul.bf16.gmra.mxu0 %v6882
    %v7636 = vpop.f32.mrf.mxu0
    %v7637 = vadd.f32 %v7564, %v7636
    %v7638 = vpop.f32.mrf.mxu0
    %v7639 = vadd.f32 %v7566, %v7638
    %7640 = vmatmul.bf16.gmra.mxu0 %v6890
    %v7641 = vpop.f32.mrf.mxu0
    %v7642 = vadd.f32 %v7569, %v7641
    %v7643 = vpop.f32.mrf.mxu0
    %v7644 = vadd.f32 %v7571, %v7643
    %7645 = vmatmul.bf16.gmra.mxu0 %v6898
    %v7646 = vpop.f32.mrf.mxu0
    %v7647 = vadd.f32 %v7574, %v7646
    %v7648 = vpop.f32.mrf.mxu0
    %v7649 = vadd.f32 %v7576, %v7648
    %7650 = vmatmul.bf16.gmra.mxu0 %v6906
    %v7651 = vpop.f32.mrf.mxu0
    %v7652 = vadd.f32 %v7579, %v7651
    %v7653 = vpop.f32.mrf.mxu0
    %v7654 = vadd.f32 %v7581, %v7653
    %7655 = vmatmul.bf16.gmra.mxu0 %v6914
    %v7656 = vpop.f32.mrf.mxu0
    %v7657 = vadd.f32 %v7584, %v7656
    %v7658 = vpop.f32.mrf.mxu0
    %v7659 = vadd.f32 %v7586, %v7658
    %7660 = vmatmul.bf16.gmra.mxu0 %v6922
    %v7661 = vpop.f32.mrf.mxu0
    %v7662 = vadd.f32 %v7589, %v7661
    %v7663 = vpop.f32.mrf.mxu0
    %v7664 = vadd.f32 %v7591, %v7663
    %7665 = vmatmul.bf16.gmra.mxu0 %v6930
    %v7666 = vpop.f32.mrf.mxu0
    %v7667 = vadd.f32 %v7594, %v7666
    %v7668 = vpop.f32.mrf.mxu0
    %v7669 = vadd.f32 %v7596, %v7668
    %7670 = vmatmul.bf16.gmra.mxu0 %v6938
    %v7671 = vpop.f32.mrf.mxu0
    %v7672 = vadd.f32 %v7599, %v7671
    %v7673 = vpop.f32.mrf.mxu0
    %7674 = vdwg.mxu0
    %7675 = vmatpush.bf16.msra.mxu0 %v7359
    %7676 = vmatpush.bf16.msra.mxu0 %v7358
    %7677 = vmatpush.bf16.msra.mxu0 %v7357
    %7678 = vmatpush.bf16.msra.mxu0 %v7356
    %7679 = vmatpush.bf16.msra.mxu0 %v7355
    %7680 = vmatpush.bf16.msra.mxu0 %v7354
    %7681 = vmatpush.bf16.msra.mxu0 %v7353
    %7682 = vmatpush.bf16.msra.mxu0 %v7352
    %7683 = vmatmul.bf16.gmra.mxu0 %v6843
    %v7684 = vpop.f32.mrf.mxu0
    %v7685 = vadd.f32 %v7612, %v7684
    %v7686 = vpop.f32.mrf.mxu0
    %v7687 = vadd.f32 %v7614, %v7686
    %7688 = vmatmul.bf16.gmra.mxu0 %v6851
    %v7689 = vpop.f32.mrf.mxu0
    %v7690 = vadd.f32 %v7617, %v7689
    %v7691 = vpop.f32.mrf.mxu0
    %v7692 = vadd.f32 %v7619, %v7691
    %7693 = vmatmul.bf16.gmra.mxu0 %v6859
    %v7694 = vpop.f32.mrf.mxu0
    %v7695 = vadd.f32 %v7622, %v7694
    %v7696 = vpop.f32.mrf.mxu0
    %v7697 = vadd.f32 %v7624, %v7696
    %7698 = vmatmul.bf16.gmra.mxu0 %v6867
    %v7699 = vpop.f32.mrf.mxu0
    %v7700 = vadd.f32 %v7627, %v7699
    %v7701 = vpop.f32.mrf.mxu0
    %v7702 = vadd.f32 %v7629, %v7701
    %7703 = vmatmul.bf16.gmra.mxu0 %v6875
    %v7704 = vpop.f32.mrf.mxu0
    %v7705 = vadd.f32 %v7632, %v7704
    %v7706 = vpop.f32.mrf.mxu0
    %v7707 = vadd.f32 %v7634, %v7706
    %7708 = vmatmul.bf16.gmra.mxu0 %v6883
    %v7709 = vpop.f32.mrf.mxu0
    %v7710 = vadd.f32 %v7637, %v7709
    %v7711 = vpop.f32.mrf.mxu0
    %v7712 = vadd.f32 %v7639, %v7711
    %7713 = vmatmul.bf16.gmra.mxu0 %v6891
    %v7714 = vpop.f32.mrf.mxu0
    %v7715 = vadd.f32 %v7642, %v7714
    %v7716 = vpop.f32.mrf.mxu0
    %v7717 = vadd.f32 %v7644, %v7716
    %7718 = vmatmul.bf16.gmra.mxu0 %v6899
    %v7719 = vpop.f32.mrf.mxu0
    %v7720 = vadd.f32 %v7647, %v7719
    %v7721 = vpop.f32.mrf.mxu0
    %v7722 = vadd.f32 %v7649, %v7721
    %7723 = vmatmul.bf16.gmra.mxu0 %v6907
    %v7724 = vpop.f32.mrf.mxu0
    %v7725 = vadd.f32 %v7652, %v7724
    %v7726 = vpop.f32.mrf.mxu0
    %v7727 = vadd.f32 %v7654, %v7726
    %7728 = vmatmul.bf16.gmra.mxu0 %v6915
    %v7729 = vpop.f32.mrf.mxu0
    %v7730 = vadd.f32 %v7657, %v7729
    %v7731 = vpop.f32.mrf.mxu0
    %v7732 = vadd.f32 %v7659, %v7731
    %7733 = vmatmul.bf16.gmra.mxu0 %v6923
    %v7734 = vpop.f32.mrf.mxu0
    %v7735 = vadd.f32 %v7662, %v7734
    %v7736 = vpop.f32.mrf.mxu0
    %v7737 = vadd.f32 %v7664, %v7736
    %7738 = vmatmul.bf16.gmra.mxu0 %v6931
    %v7739 = vpop.f32.mrf.mxu0
    %v7740 = vadd.f32 %v7667, %v7739
    %v7741 = vpop.f32.mrf.mxu0
    %v7742 = vadd.f32 %v7669, %v7741
    %7743 = vmatmul.bf16.gmra.mxu0 %v6939
    %v7744 = vpop.f32.mrf.mxu0
    %v7745 = vadd.f32 %v7672, %v7744
    %v7746 = vpop.f32.mrf.mxu0
    %7747 = vdwg.mxu0
    %7748 = vmatpush.bf16.msra.mxu0 %v7367
    %7749 = vmatpush.bf16.msra.mxu0 %v7366
    %7750 = vmatpush.bf16.msra.mxu0 %v7365
    %7751 = vmatpush.bf16.msra.mxu0 %v7364
    %7752 = vmatpush.bf16.msra.mxu0 %v7363
    %7753 = vmatpush.bf16.msra.mxu0 %v7362
    %7754 = vmatpush.bf16.msra.mxu0 %v7361
    %7755 = vmatpush.bf16.msra.mxu0 %v7360
    %7756 = vmatmul.bf16.gmra.mxu0 %v6844
    %v7757 = vpop.f32.mrf.mxu0
    %v7758 = vadd.f32 %v7685, %v7757
    %v7759 = vpop.f32.mrf.mxu0
    %v7760 = vadd.f32 %v7687, %v7759
    %7761 = vmatmul.bf16.gmra.mxu0 %v6852
    %v7762 = vpop.f32.mrf.mxu0
    %v7763 = vadd.f32 %v7690, %v7762
    %v7764 = vpop.f32.mrf.mxu0
    %v7765 = vadd.f32 %v7692, %v7764
    %7766 = vmatmul.bf16.gmra.mxu0 %v6860
    %v7767 = vpop.f32.mrf.mxu0
    %v7768 = vadd.f32 %v7695, %v7767
    %v7769 = vpop.f32.mrf.mxu0
    %v7770 = vadd.f32 %v7697, %v7769
    %7771 = vmatmul.bf16.gmra.mxu0 %v6868
    %v7772 = vpop.f32.mrf.mxu0
    %v7773 = vadd.f32 %v7700, %v7772
    %v7774 = vpop.f32.mrf.mxu0
    %v7775 = vadd.f32 %v7702, %v7774
    %7776 = vmatmul.bf16.gmra.mxu0 %v6876
    %v7777 = vpop.f32.mrf.mxu0
    %v7778 = vadd.f32 %v7705, %v7777
    %v7779 = vpop.f32.mrf.mxu0
    %v7780 = vadd.f32 %v7707, %v7779
    %7781 = vmatmul.bf16.gmra.mxu0 %v6884
    %v7782 = vpop.f32.mrf.mxu0
    %v7783 = vadd.f32 %v7710, %v7782
    %v7784 = vpop.f32.mrf.mxu0
    %v7785 = vadd.f32 %v7712, %v7784
    %7786 = vmatmul.bf16.gmra.mxu0 %v6892
    %v7787 = vpop.f32.mrf.mxu0
    %v7788 = vadd.f32 %v7715, %v7787
    %v7789 = vpop.f32.mrf.mxu0
    %v7790 = vadd.f32 %v7717, %v7789
    %7791 = vmatmul.bf16.gmra.mxu0 %v6900
    %v7792 = vpop.f32.mrf.mxu0
    %v7793 = vadd.f32 %v7720, %v7792
    %v7794 = vpop.f32.mrf.mxu0
    %v7795 = vadd.f32 %v7722, %v7794
    %7796 = vmatmul.bf16.gmra.mxu0 %v6908
    %v7797 = vpop.f32.mrf.mxu0
    %v7798 = vadd.f32 %v7725, %v7797
    %v7799 = vpop.f32.mrf.mxu0
    %v7800 = vadd.f32 %v7727, %v7799
    %7801 = vmatmul.bf16.gmra.mxu0 %v6916
    %v7802 = vpop.f32.mrf.mxu0
    %v7803 = vadd.f32 %v7730, %v7802
    %v7804 = vpop.f32.mrf.mxu0
    %v7805 = vadd.f32 %v7732, %v7804
    %7806 = vmatmul.bf16.gmra.mxu0 %v6924
    %v7807 = vpop.f32.mrf.mxu0
    %v7808 = vadd.f32 %v7735, %v7807
    %v7809 = vpop.f32.mrf.mxu0
    %v7810 = vadd.f32 %v7737, %v7809
    %7811 = vmatmul.bf16.gmra.mxu0 %v6932
    %v7812 = vpop.f32.mrf.mxu0
    %v7813 = vadd.f32 %v7740, %v7812
    %v7814 = vpop.f32.mrf.mxu0
    %v7815 = vadd.f32 %v7742, %v7814
    %7816 = vmatmul.bf16.gmra.mxu0 %v6940
    %v7817 = vpop.f32.mrf.mxu0
    %v7818 = vadd.f32 %v7745, %v7817
    %v7819 = vpop.f32.mrf.mxu0
    %7820 = vdwg.mxu0
    %7821 = vmatpush.bf16.msra.mxu0 %v7375
    %7822 = vmatpush.bf16.msra.mxu0 %v7374
    %7823 = vmatpush.bf16.msra.mxu0 %v7373
    %7824 = vmatpush.bf16.msra.mxu0 %v7372
    %7825 = vmatpush.bf16.msra.mxu0 %v7371
    %7826 = vmatpush.bf16.msra.mxu0 %v7370
    %7827 = vmatpush.bf16.msra.mxu0 %v7369
    %7828 = vmatpush.bf16.msra.mxu0 %v7368
    %7829 = vmatmul.bf16.gmra.mxu0 %v6845
    %v7830 = vpop.f32.mrf.mxu0
    %v7831 = vadd.f32 %v7758, %v7830
    %v7832 = vpop.f32.mrf.mxu0
    %v7833 = vadd.f32 %v7760, %v7832
    %7834 = vmatmul.bf16.gmra.mxu0 %v6853
    %v7835 = vpop.f32.mrf.mxu0
    %v7836 = vadd.f32 %v7763, %v7835
    %v7837 = vpop.f32.mrf.mxu0
    %v7838 = vadd.f32 %v7765, %v7837
    %7839 = vmatmul.bf16.gmra.mxu0 %v6861
    %v7840 = vpop.f32.mrf.mxu0
    %v7841 = vadd.f32 %v7768, %v7840
    %v7842 = vpop.f32.mrf.mxu0
    %v7843 = vadd.f32 %v7770, %v7842
    %7844 = vmatmul.bf16.gmra.mxu0 %v6869
    %v7845 = vpop.f32.mrf.mxu0
    %v7846 = vadd.f32 %v7773, %v7845
    %v7847 = vpop.f32.mrf.mxu0
    %v7848 = vadd.f32 %v7775, %v7847
    %7849 = vmatmul.bf16.gmra.mxu0 %v6877
    %v7850 = vpop.f32.mrf.mxu0
    %v7851 = vadd.f32 %v7778, %v7850
    %v7852 = vpop.f32.mrf.mxu0
    %v7853 = vadd.f32 %v7780, %v7852
    %7854 = vmatmul.bf16.gmra.mxu0 %v6885
    %v7855 = vpop.f32.mrf.mxu0
    %v7856 = vadd.f32 %v7783, %v7855
    %v7857 = vpop.f32.mrf.mxu0
    %v7858 = vadd.f32 %v7785, %v7857
    %7859 = vmatmul.bf16.gmra.mxu0 %v6893
    %v7860 = vpop.f32.mrf.mxu0
    %v7861 = vadd.f32 %v7788, %v7860
    %v7862 = vpop.f32.mrf.mxu0
    %v7863 = vadd.f32 %v7790, %v7862
    %7864 = vmatmul.bf16.gmra.mxu0 %v6901
    %v7865 = vpop.f32.mrf.mxu0
    %v7866 = vadd.f32 %v7793, %v7865
    %v7867 = vpop.f32.mrf.mxu0
    %v7868 = vadd.f32 %v7795, %v7867
    %7869 = vmatmul.bf16.gmra.mxu0 %v6909
    %v7870 = vpop.f32.mrf.mxu0
    %v7871 = vadd.f32 %v7798, %v7870
    %v7872 = vpop.f32.mrf.mxu0
    %v7873 = vadd.f32 %v7800, %v7872
    %7874 = vmatmul.bf16.gmra.mxu0 %v6917
    %v7875 = vpop.f32.mrf.mxu0
    %v7876 = vadd.f32 %v7803, %v7875
    %v7877 = vpop.f32.mrf.mxu0
    %v7878 = vadd.f32 %v7805, %v7877
    %7879 = vmatmul.bf16.gmra.mxu0 %v6925
    %v7880 = vpop.f32.mrf.mxu0
    %v7881 = vadd.f32 %v7808, %v7880
    %v7882 = vpop.f32.mrf.mxu0
    %v7883 = vadd.f32 %v7810, %v7882
    %7884 = vmatmul.bf16.gmra.mxu0 %v6933
    %v7885 = vpop.f32.mrf.mxu0
    %v7886 = vadd.f32 %v7813, %v7885
    %v7887 = vpop.f32.mrf.mxu0
    %v7888 = vadd.f32 %v7815, %v7887
    %7889 = vmatmul.bf16.gmra.mxu0 %v6941
    %v7890 = vpop.f32.mrf.mxu0
    %v7891 = vadd.f32 %v7818, %v7890
    %v7892 = vpop.f32.mrf.mxu0
    %7893 = vdwg.mxu0
    %7894 = vmatpush.bf16.msra.mxu0 %v7383
    %7895 = vmatpush.bf16.msra.mxu0 %v7382
    %7896 = vmatpush.bf16.msra.mxu0 %v7381
    %7897 = vmatpush.bf16.msra.mxu0 %v7380
    %7898 = vmatpush.bf16.msra.mxu0 %v7379
    %7899 = vmatpush.bf16.msra.mxu0 %v7378
    %7900 = vmatpush.bf16.msra.mxu0 %v7377
    %7901 = vmatpush.bf16.msra.mxu0 %v7376
    %7902 = vmatmul.bf16.gmra.mxu0 %v6846
    %v7903 = vpop.f32.mrf.mxu0
    %v7904 = vadd.f32 %v7831, %v7903
    %v7905 = vpop.f32.mrf.mxu0
    %v7906 = vadd.f32 %v7833, %v7905
    %7907 = vmatmul.bf16.gmra.mxu0 %v6854
    %v7908 = vpop.f32.mrf.mxu0
    %v7909 = vadd.f32 %v7836, %v7908
    %v7910 = vpop.f32.mrf.mxu0
    %v7911 = vadd.f32 %v7838, %v7910
    %7912 = vmatmul.bf16.gmra.mxu0 %v6862
    %v7913 = vpop.f32.mrf.mxu0
    %v7914 = vadd.f32 %v7841, %v7913
    %v7915 = vpop.f32.mrf.mxu0
    %v7916 = vadd.f32 %v7843, %v7915
    %7917 = vmatmul.bf16.gmra.mxu0 %v6870
    %v7918 = vpop.f32.mrf.mxu0
    %v7919 = vadd.f32 %v7846, %v7918
    %v7920 = vpop.f32.mrf.mxu0
    %v7921 = vadd.f32 %v7848, %v7920
    %7922 = vmatmul.bf16.gmra.mxu0 %v6878
    %v7923 = vpop.f32.mrf.mxu0
    %v7924 = vadd.f32 %v7851, %v7923
    %v7925 = vpop.f32.mrf.mxu0
    %v7926 = vadd.f32 %v7853, %v7925
    %7927 = vmatmul.bf16.gmra.mxu0 %v6886
    %v7928 = vpop.f32.mrf.mxu0
    %v7929 = vadd.f32 %v7856, %v7928
    %v7930 = vpop.f32.mrf.mxu0
    %v7931 = vadd.f32 %v7858, %v7930
    %7932 = vmatmul.bf16.gmra.mxu0 %v6894
    %v7933 = vpop.f32.mrf.mxu0
    %v7934 = vadd.f32 %v7861, %v7933
    %v7935 = vpop.f32.mrf.mxu0
    %v7936 = vadd.f32 %v7863, %v7935
    %7937 = vmatmul.bf16.gmra.mxu0 %v6902
    %v7938 = vpop.f32.mrf.mxu0
    %v7939 = vadd.f32 %v7866, %v7938
    %v7940 = vpop.f32.mrf.mxu0
    %v7941 = vadd.f32 %v7868, %v7940
    %7942 = vmatmul.bf16.gmra.mxu0 %v6910
    %v7943 = vpop.f32.mrf.mxu0
    %v7944 = vadd.f32 %v7871, %v7943
    %v7945 = vpop.f32.mrf.mxu0
    %v7946 = vadd.f32 %v7873, %v7945
    %7947 = vmatmul.bf16.gmra.mxu0 %v6918
    %v7948 = vpop.f32.mrf.mxu0
    %v7949 = vadd.f32 %v7876, %v7948
    %v7950 = vpop.f32.mrf.mxu0
    %v7951 = vadd.f32 %v7878, %v7950
    %7952 = vmatmul.bf16.gmra.mxu0 %v6926
    %v7953 = vpop.f32.mrf.mxu0
    %v7954 = vadd.f32 %v7881, %v7953
    %v7955 = vpop.f32.mrf.mxu0
    %v7956 = vadd.f32 %v7883, %v7955
    %7957 = vmatmul.bf16.gmra.mxu0 %v6934
    %v7958 = vpop.f32.mrf.mxu0
    %v7959 = vadd.f32 %v7886, %v7958
    %v7960 = vpop.f32.mrf.mxu0
    %v7961 = vadd.f32 %v7888, %v7960
    %7962 = vmatmul.bf16.gmra.mxu0 %v6942
    %v7963 = vpop.f32.mrf.mxu0
    %v7964 = vadd.f32 %v7891, %v7963
    %v7965 = vpop.f32.mrf.mxu0
    %7966 = vdwg.mxu0
    %7967 = vmatpush.bf16.msra.mxu0 %v7391
    %7968 = vmatpush.bf16.msra.mxu0 %v7390
    %7969 = vmatpush.bf16.msra.mxu0 %v7389
    %7970 = vmatpush.bf16.msra.mxu0 %v7388
    %7971 = vmatpush.bf16.msra.mxu0 %v7387
    %7972 = vmatpush.bf16.msra.mxu0 %v7386
    %7973 = vmatpush.bf16.msra.mxu0 %v7385
    %7974 = vmatpush.bf16.msra.mxu0 %v7384
    %7975 = vmatmul.bf16.gmra.mxu0 %v6847
    %v7976 = vpop.f32.mrf.mxu0
    %v7977 = vadd.f32 %v7904, %v7976
    %v7978 = vpop.f32.mrf.mxu0
    %v7979 = vadd.f32 %v7906, %v7978
    %7980 = vmatmul.bf16.gmra.mxu0 %v6855
    %v7981 = vpop.f32.mrf.mxu0
    %v7982 = vadd.f32 %v7909, %v7981
    %v7983 = vpop.f32.mrf.mxu0
    %v7984 = vadd.f32 %v7911, %v7983
    %7985 = vmatmul.bf16.gmra.mxu0 %v6863
    %v7986 = vpop.f32.mrf.mxu0
    %v7987 = vadd.f32 %v7914, %v7986
    %v7988 = vpop.f32.mrf.mxu0
    %v7989 = vadd.f32 %v7916, %v7988
    %7990 = vmatmul.bf16.gmra.mxu0 %v6871
    %v7991 = vpop.f32.mrf.mxu0
    %v7992 = vadd.f32 %v7919, %v7991
    %v7993 = vpop.f32.mrf.mxu0
    %v7994 = vadd.f32 %v7921, %v7993
    %7995 = vmatmul.bf16.gmra.mxu0 %v6879
    %v7996 = vpop.f32.mrf.mxu0
    %v7997 = vadd.f32 %v7924, %v7996
    %v7998 = vpop.f32.mrf.mxu0
    %v7999 = vadd.f32 %v7926, %v7998
    %8000 = vmatmul.bf16.gmra.mxu0 %v6887
    %v8001 = vpop.f32.mrf.mxu0
    %v8002 = vadd.f32 %v7929, %v8001
    %v8003 = vpop.f32.mrf.mxu0
    %v8004 = vadd.f32 %v7931, %v8003
    %8005 = vmatmul.bf16.gmra.mxu0 %v6895
    %v8006 = vpop.f32.mrf.mxu0
    %v8007 = vadd.f32 %v7934, %v8006
    %v8008 = vpop.f32.mrf.mxu0
    %v8009 = vadd.f32 %v7936, %v8008
    %8010 = vmatmul.bf16.gmra.mxu0 %v6903
    %v8011 = vpop.f32.mrf.mxu0
    %v8012 = vadd.f32 %v7939, %v8011
    %v8013 = vpop.f32.mrf.mxu0
    %v8014 = vadd.f32 %v7941, %v8013
    %8015 = vmatmul.bf16.gmra.mxu0 %v6911
    %v8016 = vpop.f32.mrf.mxu0
    %v8017 = vadd.f32 %v7944, %v8016
    %v8018 = vpop.f32.mrf.mxu0
    %v8019 = vadd.f32 %v7946, %v8018
    %8020 = vmatmul.bf16.gmra.mxu0 %v6919
    %v8021 = vpop.f32.mrf.mxu0
    %v8022 = vadd.f32 %v7949, %v8021
    %v8023 = vpop.f32.mrf.mxu0
    %v8024 = vadd.f32 %v7951, %v8023
    %8025 = vmatmul.bf16.gmra.mxu0 %v6927
    %v8026 = vpop.f32.mrf.mxu0
    %v8027 = vadd.f32 %v7954, %v8026
    %v8028 = vpop.f32.mrf.mxu0
    %v8029 = vadd.f32 %v7956, %v8028
    %8030 = vmatmul.bf16.gmra.mxu0 %v6935
    %v8031 = vpop.f32.mrf.mxu0
    %v8032 = vadd.f32 %v7959, %v8031
    %v8033 = vpop.f32.mrf.mxu0
    %v8034 = vadd.f32 %v7961, %v8033
    %8035 = vmatmul.bf16.gmra.mxu0 %v6943
    %v8036 = vpop.f32.mrf.mxu0
    %v8037 = vadd.f32 %v7964, %v8036
    %v8038 = vpop.f32.mrf.mxu0
    %8039 = vdwg.mxu0
    %v8040 = vadd.f32 %v6815, %v7977
    %v8041 = vadd.f32 %v6816, %v7979
    %v8042 = vadd.f32 %v6817, %v7982
    %v8043 = vadd.f32 %v6818, %v7984
    %v8044 = vadd.f32 %v6819, %v7987
    %v8045 = vadd.f32 %v6820, %v7989
    %v8046 = vadd.f32 %v6821, %v7992
    %v8047 = vadd.f32 %v6822, %v7994
    %v8048 = vadd.f32 %v6823, %v7997
    %v8049 = vadd.f32 %v6824, %v7999
    %v8050 = vadd.f32 %v6825, %v8002
    %v8051 = vadd.f32 %v6826, %v8004
    %v8052 = vadd.f32 %v6827, %v8007
    %v8053 = vadd.f32 %v6828, %v8009
    %v8054 = vadd.f32 %v6829, %v8012
    %v8055 = vadd.f32 %v6830, %v8014
    %v8056 = vadd.f32 %v6831, %v8017
    %v8057 = vadd.f32 %v6832, %v8019
    %v8058 = vadd.f32 %v6833, %v8022
    %v8059 = vadd.f32 %v6834, %v8024
    %v8060 = vadd.f32 %v6835, %v8027
    %v8061 = vadd.f32 %v6836, %v8029
    %v8062 = vadd.f32 %v6837, %v8032
    %v8063 = vadd.f32 %v6838, %v8034
    %v8064 = vadd.f32 %v6839, %v8037
    %8065 = vst [vmem:[#allocation3] sm:$0xff] %v8040
    %8066 = vst [vmem:[#allocation3 + $0x8] sm:$0xff] %v8041
    %8067 = vst [vmem:[#allocation3 + $0x10] sm:$0xff] %v8042
    %8068 = vst [vmem:[#allocation3 + $0x18] sm:$0xff] %v8043
    %8069 = vst [vmem:[#allocation3 + $0x20] sm:$0xff] %v8044
    %8070 = vst [vmem:[#allocation3 + $0x28] sm:$0xff] %v8045
    %8071 = vst [vmem:[#allocation3 + $0x30] sm:$0xff] %v8046
    %8072 = vst [vmem:[#allocation3 + $0x38] sm:$0xff] %v8047
    %8073 = vst [vmem:[#allocation3 + $0x40] sm:$0xff] %v8048
    %8074 = vst [vmem:[#allocation3 + $0x48] sm:$0xff] %v8049
    %8075 = vst [vmem:[#allocation3 + $0x50] sm:$0xff] %v8050
    %8076 = vst [vmem:[#allocation3 + $0x58] sm:$0xff] %v8051
    %8077 = vst [vmem:[#allocation3 + $0x60] sm:$0xff] %v8052
    %8078 = vst [vmem:[#allocation3 + $0x68] sm:$0xff] %v8053
    %8079 = vst [vmem:[#allocation3 + $0x70] sm:$0xff] %v8054
    %8080 = vst [vmem:[#allocation3 + $0x78] sm:$0xff] %v8055
    %8081 = vst [vmem:[#allocation3 + $0x80] sm:$0xff] %v8056
    %8082 = vst [vmem:[#allocation3 + $0x88] sm:$0xff] %v8057
    %8083 = vst [vmem:[#allocation3 + $0x90] sm:$0xff] %v8058
    %8084 = vst [vmem:[#allocation3 + $0x98] sm:$0xff] %v8059
    %8085 = vst [vmem:[#allocation3 + $0xa0] sm:$0xff] %v8060
    %8086 = vst [vmem:[#allocation3 + $0xa8] sm:$0xff] %v8061
    %8087 = vst [vmem:[#allocation3 + $0xb0] sm:$0xff] %v8062
    %8088 = vst [vmem:[#allocation3 + $0xb8] sm:$0xff] %v8063
    %8089 = vst [vmem:[#allocation3 + $0xc0] sm:$0xff] %v8064
    // Predicated region
    $region74: #{tpu_custom_call.1} parent=1 // pred_check
      %p8090 = pneg %p152
    $region75: #{tpu_custom_call.1} parent=1 // pred_check_branch
      %8092 = sbr.rel (%p8090) target = $region77
    $region76: #{tpu_custom_call.1} parent=1 // pred_region
      %v8093 = vld [vmem:[#allocation3] sm:$0xff]
      %v8094 = vld [vmem:[#allocation3 + $0x8] sm:$0xff]
      %v8095 = vld [vmem:[#allocation3 + $0x10] sm:$0xff]
      %v8096 = vld [vmem:[#allocation3 + $0x18] sm:$0xff]
      %v8097 = vld [vmem:[#allocation3 + $0x20] sm:$0xff]
      %v8098 = vld [vmem:[#allocation3 + $0x28] sm:$0xff]
      %v8099 = vld [vmem:[#allocation3 + $0x30] sm:$0xff]
      %v8100 = vld [vmem:[#allocation3 + $0x38] sm:$0xff]
      %v8101 = vld [vmem:[#allocation3 + $0x40] sm:$0xff]
      %v8102 = vld [vmem:[#allocation3 + $0x48] sm:$0xff]
      %v8103 = vld [vmem:[#allocation3 + $0x50] sm:$0xff]
      %v8104 = vld [vmem:[#allocation3 + $0x58] sm:$0xff]
      %v8105 = vld [vmem:[#allocation3 + $0x60] sm:$0xff]
      %v8106 = vld [vmem:[#allocation3 + $0x68] sm:$0xff]
      %v8107 = vld [vmem:[#allocation3 + $0x70] sm:$0xff]
      %v8108 = vld [vmem:[#allocation3 + $0x78] sm:$0xff]
      %v8109 = vld [vmem:[#allocation3 + $0x80] sm:$0xff]
      %v8110 = vld [vmem:[#allocation3 + $0x88] sm:$0xff]
      %v8111 = vld [vmem:[#allocation3 + $0x90] sm:$0xff]
      %v8112 = vld [vmem:[#allocation3 + $0x98] sm:$0xff]
      %v8113 = vld [vmem:[#allocation3 + $0xa0] sm:$0xff]
      %v8114 = vld [vmem:[#allocation3 + $0xa8] sm:$0xff]
      %v8115 = vld [vmem:[#allocation3 + $0xb0] sm:$0xff]
      %v8116 = vld [vmem:[#allocation3 + $0xb8] sm:$0xff]
      %v8117 = vld [vmem:[#allocation3 + $0xc0] sm:$0xff]
      %v8118 = vld [vmem:[%s8] sm:$0x1]
      %v8120 = vperm.slane %v8118, 0
      %v8122 = vadd.f32 %v8093, %v8120
      %v8123 = vadd.f32 %v8094, %v8120
      %v8124 = vadd.f32 %v8095, %v8120
      %v8125 = vadd.f32 %v8096, %v8120
      %v8126 = vadd.f32 %v8097, %v8120
      %v8127 = vadd.f32 %v8098, %v8120
      %v8128 = vadd.f32 %v8099, %v8120
      %v8129 = vadd.f32 %v8100, %v8120
      %v8130 = vadd.f32 %v8101, %v8120
      %v8131 = vadd.f32 %v8102, %v8120
      %v8132 = vadd.f32 %v8103, %v8120
      %v8133 = vadd.f32 %v8104, %v8120
      %v8134 = vadd.f32 %v8105, %v8120
      %v8135 = vadd.f32 %v8106, %v8120
      %v8136 = vadd.f32 %v8107, %v8120
      %v8137 = vadd.f32 %v8108, %v8120
      %v8138 = vadd.f32 %v8109, %v8120
      %v8139 = vadd.f32 %v8110, %v8120
      %v8140 = vadd.f32 %v8111, %v8120
      %v8141 = vadd.f32 %v8112, %v8120
      %v8142 = vadd.f32 %v8113, %v8120
      %v8143 = vadd.f32 %v8114, %v8120
      %v8144 = vadd.f32 %v8115, %v8120
      %v8145 = vadd.f32 %v8116, %v8120
      %v8146 = vadd.f32 %v8117, %v8120
      %8147 = vst [vmem:[#allocation18] sm:$0xff] %v8122
      %8148 = vst [vmem:[#allocation18 + $0x8] sm:$0xff] %v8123
      %8149 = vst [vmem:[#allocation18 + $0x10] sm:$0xff] %v8124
      %8150 = vst [vmem:[#allocation18 + $0x18] sm:$0xff] %v8125
      %8151 = vst [vmem:[#allocation18 + $0x20] sm:$0xff] %v8126
      %8152 = vst [vmem:[#allocation18 + $0x28] sm:$0xff] %v8127
      %8153 = vst [vmem:[#allocation18 + $0x30] sm:$0xff] %v8128
      %8154 = vst [vmem:[#allocation18 + $0x38] sm:$0xff] %v8129
      %8155 = vst [vmem:[#allocation18 + $0x40] sm:$0xff] %v8130
      %8156 = vst [vmem:[#allocation18 + $0x48] sm:$0xff] %v8131
      %8157 = vst [vmem:[#allocation18 + $0x50] sm:$0xff] %v8132
      %8158 = vst [vmem:[#allocation18 + $0x58] sm:$0xff] %v8133
      %8159 = vst [vmem:[#allocation18 + $0x60] sm:$0xff] %v8134
      %8160 = vst [vmem:[#allocation18 + $0x68] sm:$0xff] %v8135
      %8161 = vst [vmem:[#allocation18 + $0x70] sm:$0xff] %v8136
      %8162 = vst [vmem:[#allocation18 + $0x78] sm:$0xff] %v8137
      %8163 = vst [vmem:[#allocation18 + $0x80] sm:$0xff] %v8138
      %8164 = vst [vmem:[#allocation18 + $0x88] sm:$0xff] %v8139
      %8165 = vst [vmem:[#allocation18 + $0x90] sm:$0xff] %v8140
      %8166 = vst [vmem:[#allocation18 + $0x98] sm:$0xff] %v8141
      %8167 = vst [vmem:[#allocation18 + $0xa0] sm:$0xff] %v8142
      %8168 = vst [vmem:[#allocation18 + $0xa8] sm:$0xff] %v8143
      %8169 = vst [vmem:[#allocation18 + $0xb0] sm:$0xff] %v8144
      %8170 = vst [vmem:[#allocation18 + $0xb8] sm:$0xff] %v8145
      %8171 = vst [vmem:[#allocation18 + $0xc0] sm:$0xff] %v8146
    $region77: #{tpu_custom_call.1} parent=1 // pred_fallthru
      _
    // Predicated region
    $region78: #{tpu_custom_call.1} parent=1 // pred_check
      _
    $region79: #{tpu_custom_call.1} parent=1 // pred_check_branch
      %8173 = sbr.rel (0) target = $region81
    $region80: #{tpu_custom_call.1} parent=1 // pred_region
      %8175 = vsyncadd [#allocation6], 0
      %s8176 = sshll.u32 [#allocation18], 4
      %s8177 = int_to_ptr.vmem [resolvable:$true] %s8176
      %s8178 = sshll.u32 %s9, 4
      %s8179 = int_to_ptr.hbm [resolvable:$true] %s8178
      %8184 = dma.vmem_to_hbm [thread:$0]  %s8177, 3200, %s8179, [#allocation6], 128, 128, 8
    $region81: #{tpu_custom_call.1} parent=1 // pred_fallthru
      _
    // Predicated region
    $region82: #{tpu_custom_call.1} parent=1 // pred_check
      _
    $region83: #{tpu_custom_call.1} parent=1 // pred_check_branch
      %8186 = sbr.rel (0) target = $region85
    $region84: #{tpu_custom_call.1} parent=1 // pred_region
      %8188 = dma.done [#allocation6], 3200
    $region85: #{tpu_custom_call.1} parent=1 // pred_fallthru
      _
    %8189 = vsyncpa [#allocation5], 1
    %8190 = vsyncpa [#allocation8], 1
    %8191 = vsyncpa [#allocation11], 1
    %8192 = vsyncpa [#allocation14], 1
    %8193 = vsyncpa [#allocation17], 1
    %8194 = vsyncpa [#allocation6], 1

</llo_original>
